<compile_context>
chip_gen: v7x
topology: tpu7x:2x2x1
jax: 0.10.0
libtpu: 0.0.40
codegen_flags: <defaults>
</compile_context>

<pallas_src>
import functools

import numpy as np
import jax
import jax.numpy as jnp
from jax.experimental import pallas as pl
from jax.experimental.pallas import tpu as pltpu


# ----------------------------------------------------------------------------
# helpers usable inside kernels
# ----------------------------------------------------------------------------
def _erf(z):
    # Abramowitz & Stegun 7.1.26 rational approximation, |err| < 1.5e-7.
    a1, a2, a3, a4, a5 = 0.254829592, -0.284496736, 1.421413741, -1.453152027, 1.061405429
    p = 0.3275911
    s = jnp.where(z >= 0.0, 1.0, -1.0)
    az = jnp.abs(z)
    t = 1.0 / (1.0 + p * az)
    poly = t * (a1 + t * (a2 + t * (a3 + t * (a4 + t * a5))))
    return s * (1.0 - poly * jnp.exp(-az * az))


def _gelu_exact(x):
    # nn.GELU() default (erf based)
    return 0.5 * x * (1.0 + _erf(x * 0.7071067811865476))


def _sigmoid(x):
    return 1.0 / (1.0 + jnp.exp(-x))


# ----------------------------------------------------------------------------
# the single fused kernel (one grid step == one batch element)
# ----------------------------------------------------------------------------
def _fastformer_kernel(
    x_ref, xs_ref,
    wq_ref, wk_ref, wv_ref, wc_ref, bc_ref, lng_ref, lnb_ref, wp_ref, bp_ref,
    mc1_ref, mc2_ref, mc3_ref,
    expand_ref, bleye_ref, k2_ref, k3_ref, pat_ref,
    cmask_ref, c0w_ref, c0b_ref, c1w_ref, c1b_ref, c2w_ref, c2b_ref,
    csw1_ref, csb1_ref, csw2_ref, csb2_ref,
    ng_ref, nb_ref, m1w_ref, m1b_ref, m2w_ref, m2b_ref,
    o_ref,
    pad_ref, im2col_ref,
    *, C3, H, W, scale, padw):
  f32 = jnp.float32
  M = H * W
  dn_rr = (((1,), (1,)), ((), ()))        # contract last dims: a @ b^T (no transposes)

  def layer_norm(v, g, b):
    mu = jnp.mean(v, axis=0, keepdims=True)
    var = jnp.mean(jnp.square(v - mu), axis=0, keepdims=True)
    return (v - mu) * jax.lax.rsqrt(var + 1e-5) * g + b

  def fsa_row(xT, l, mc):
    # Collapsed FastSelfAttention: xT (C, N) scrambled tokens -> (1, C) row.
    qT = jnp.dot(wq_ref[l], xT, preferred_element_type=f32)                  # (nh, N)
    qs = jnp.sum(qT, axis=0, keepdims=True)                                  # (1, N)
    xcT = jnp.dot(wc_ref[l], xT, preferred_element_type=f32) + bc_ref[l]     # 1x1 conv
    xaT = _gelu_exact(layer_norm(xcT, lng_ref[l], lnb_ref[l]))               # (C, N)
    kT = jnp.dot(wk_ref[l], xaT, preferred_element_type=f32)                 # (nh, N)
    vT = jnp.dot(wv_ref[l], xaT, preferred_element_type=f32)                 # (C, N)
    pT = qs * kT                                                             # (nh, N)
    p_up = jax.lax.dot_general(pT, mc, dn_rr, preferred_element_type=f32)    # pool+bilinear
    t = p_up * scale
    e = jnp.exp(t - jnp.max(t, axis=-1, keepdims=True))
    att = e / jnp.sum(e, axis=-1, keepdims=True)                             # (nh, N)
    att_row = jnp.sum(att, axis=0, keepdims=True)                            # (1, N)
    out_row = jax.lax.dot_general(att_row, vT, dn_rr, preferred_element_type=f32)
    return jax.lax.dot_general(out_row, wp_ref[l], dn_rr,
                               preferred_element_type=f32) + bp_ref[l]       # (1, C)

  def kron(row):
    # row (1, C) -> R (C, C*C) with R[c, C*j + c] = row[j]; R @ <pattern stack>
    # expands any per-(channel, position) linear pattern of the row with one
    # MXU matmul (no gather / reshape / transpose).
    tiled = jnp.dot(row, expand_ref[...], preferred_element_type=f32)        # (1, C*C)
    return bleye_ref[...] * tiled                                            # (C, C*C)

  # ---- LayerNorm 1 on the physical channel-major slab --------------------------
  x = x_ref[0].astype(f32)                                                   # (C, M)
  xn = layer_norm(x, ng_ref[...], nb_ref[...])

  # ---- FastSelfAttention pyramid (exact collapsed form) -------------------------
  row1 = fsa_row(xs_ref[0].astype(f32), 0, mc1_ref[...])
  R1 = kron(row1)
  row2 = fsa_row(jnp.dot(R1, k2_ref[...], preferred_element_type=f32), 1, mc2_ref[...])
  R2 = kron(row2)
  row3 = fsa_row(jnp.dot(R2, k3_ref[...], preferred_element_type=f32), 2, mc3_ref[...])
  R3 = kron(row3)

  # Broadcast rows back to physical NCHW slabs (torch raw-reshape + nearest-up).
  attn1 = jnp.dot(R1, pat_ref[0], preferred_element_type=f32)                # (C, M)
  attn2 = jnp.dot(R2, pat_ref[1], preferred_element_type=f32)
  attn3 = jnp.dot(R3, pat_ref[2], preferred_element_type=f32)

  # ---- CS gate (eval-mode BN folded into fc1) -----------------------------------
  ones_row = jnp.ones((1, M), f32)
  sc = jax.lax.dot_general(ones_row, attn2 + attn3, dn_rr,
                           preferred_element_type=f32) * (1.0 / M)           # (1, C)
  zc = jnp.maximum(jax.lax.dot_general(sc, csw1_ref[...], dn_rr,
                                       preferred_element_type=f32) + csb1_ref[...], 0.0)
  z = _sigmoid(jax.lax.dot_general(zc, csw2_ref[...], dn_rr,
                                   preferred_element_type=f32) + csb2_ref[...])  # (1, C)
  # ans = z*attn2 + (1-z)*attn3, per-channel gate folded into the pattern matmuls.
  zpat = jnp.dot(z, bleye_ref[...], preferred_element_type=f32)              # (1, C*C)
  ans = (jnp.dot(R2 * zpat, pat_ref[1], preferred_element_type=f32)
         + jnp.dot(R3 * (1.0 - zpat), pat_ref[2], preferred_element_type=f32))

  # ---- conv0 on the three levels (1x1 conv == lane-dense channel matmul) --------
  c0w = c0w_ref[...]
  U1 = jnp.dot(c0w, attn1, preferred_element_type=f32) + c0b_ref[...]        # (C3, M)
  U2 = jnp.dot(c0w, attn2, preferred_element_type=f32) + c0b_ref[...]
  U3 = jnp.dot(c0w, attn3, preferred_element_type=f32) + c0b_ref[...]
  avg_row = jnp.sum(U1 + U2 + U3, axis=0, keepdims=True) * (1.0 / (3.0 * C3))
  max_row = jnp.max(jnp.maximum(jnp.maximum(U1, U2), U3), axis=0, keepdims=True)

  # ---- 7x7 conv (padding 3): im2col over a lane-padded row + ONE MXU matmul -----
  pad_ref[...] = jnp.zeros_like(pad_ref)            # cheap (2 x ~360); parallel-grid safe
  pad_ref[0:1, padw:padw + M] = avg_row
  pad_ref[1:2, padw:padw + M] = max_row
  for r in range(49):
    off = W * (r // 7 - 3) + (r % 7 - 3)
    win = pad_ref[:, padw + off:padw + off + M] * cmask_ref[r:r + 1, :]
    im2col_ref[2 * r:2 * r + 2, :] = win
  gate = _sigmoid(jnp.dot(c1w_ref[...], im2col_ref[...],
                          preferred_element_type=f32) + c1b_ref[...])        # (3, M)

  # ---- mask combine + conv2 + gated residual ------------------------------------
  attn_mix = U1 * gate[0:1, :] + U2 * gate[1:2, :] + U3 * gate[2:3, :]       # (C3, M)
  S = jnp.dot(c2w_ref[...], attn_mix, preferred_element_type=f32) + c2b_ref[...]
  x1 = xn + S * xn + ans                                                     # (C, M)

  # ---- LayerNorm 2 (same params as norm 1) + MLP (1x1 convs) + residual ---------
  xn2 = layer_norm(x1, ng_ref[...], nb_ref[...])
  h = _gelu_exact(jnp.dot(m1w_ref[...], xn2, preferred_element_type=f32) + m1b_ref[...])
  y = jnp.dot(m2w_ref[...], h, preferred_element_type=f32) + m2b_ref[...]
  o_ref[0] = (xn2 + y).astype(o_ref.dtype)


# ----------------------------------------------------------------------------
# host-side (numpy) constants encoding the reference's raw-reshape layouts
# ----------------------------------------------------------------------------
def _pool_upsample_matrix(n):
    # AvgPool2d((2,1)) along tokens followed by bilinear x2 (align_corners=False),
    # folded into one (n, n) matrix.
    pool = np.zeros((n // 2, n), np.float32)
    idx = np.arange(n // 2)
    pool[idx, 2 * idx] = 0.5
    pool[idx, 2 * idx + 1] = 0.5
    n_in, n_out = n // 2, n
    dst = np.arange(n_out, dtype=np.float64)
    src = np.maximum((dst + 0.5) * (n_in / n_out) - 0.5, 0.0)
    i0 = np.minimum(np.floor(src).astype(np.int64), n_in - 1)
    i1 = np.minimum(i0 + 1, n_in - 1)
    w1 = (src - i0).astype(np.float32)
    w0 = (1.0 - w1).astype(np.float32)
    itp = np.zeros((n_out, n_in), np.float32)
    itp[np.arange(n_out), i0] += w0
    itp[np.arange(n_out), i1] += w1
    return (itp @ pool).astype(np.float32)


def build_pattern_constants(C, H, W):
    f = np.float32
    M, W2, W3 = H * W, W // 2, W // 4
    N2, N3 = (H // 2) * W2, (H // 4) * W3

    expand = np.zeros((C, C * C), f)      # expand[j, k] = [k // C == j]
    bleye = np.zeros((C, C * C), f)       # bleye[c, k]  = [k %  C == c]
    for j in range(C):
        expand[j, j * C:(j + 1) * C] = 1.0
        bleye[j, j::C] = 1.0

    def pattern_stack(idx_fn):
        # P[C*j + cp, m] = 1  <=>  slab[cp, m] = row[j]
        P = np.zeros((C * C, M), f)
        for cp in range(C):
            for m in range(M):
                P[C * idx_fn(cp, m) + cp, m] = 1.0
        return P

    p1 = pattern_stack(lambda cp, m: (cp * M + m) % C)                                   # FSA1 out
    p2 = pattern_stack(lambda cp, m: (cp * N2 + (m // W // 2) * W2 + (m % W) // 2) % C)  # up2(FSA2)
    p3 = pattern_stack(lambda cp, m: (cp * N3 + (m // W // 4) * W3 + (m % W) // 4) % C)  # up4(FSA3)
    pat = np.stack([p1, p2, p3])

    def pooled_stack(n_next, w_next, src_n, src_w):
        # xT_next[c, n] = sum_j row_prev[j] * K[C*j + c, n]  (2x2 avg-pool + raw reshape)
        K = np.zeros((C * C, n_next), f)
        for c in range(C):
            for n in range(n_next):
                k = n * C + c
                cp, rem = k // n_next, k % n_next
                hn, wn = rem // w_next, rem % w_next
                for a in range(2):
                    for b in range(2):
                        j = (cp * src_n + (2 * hn + a) * src_w + (2 * wn + b)) % C
                        K[C * j + c, n] += 0.25
        return K

    k2 = pooled_stack(N2, W2, M, W)
    k3 = pooled_stack(N3, W3, N2, W2)

    cmask = np.zeros((49, M), f)          # 7x7 window validity (padding 3)
    for r in range(49):
        dy, dx = r // 7 - 3, r % 7 - 3
        for m in range(M):
            y, xw = m // W, m % W
            if 0 <= y + dy < H and 0 <= xw + dx < W:
                cmask[r, m] = 1.0

    return dict(expand=expand, bleye=bleye, pat=pat, k2=k2, k3=k3, cmask=cmask,
                mc1=_pool_upsample_matrix(M), mc2=_pool_upsample_matrix(N2),
                mc3=_pool_upsample_matrix(N3))


KERNEL_ARG_ORDER = (
    "wq", "wk", "wv", "wc", "bc", "lng", "lnb", "wp", "bp",
    "mc1", "mc2", "mc3",
    "expand", "bleye", "k2", "k3", "pat",
    "cmask", "c0w", "c0b", "c1w", "c1b", "c2w", "c2b",
    "csw1", "csb1", "csw2", "csb2",
    "ng", "nb", "m1w", "m1b", "m2w", "m2b",
)


def pack_inputs(params, consts):
    """Stack per-level FSA weights / reshape biases once (eager, outside jit)."""
    def stack(key):
        return jnp.stack([params["lk1"][key], params["lk2"][key], params["lk3"][key]])
    col = lambda v: jnp.reshape(v, (-1, 1))
    row = lambda v: jnp.reshape(v, (1, -1))
    # conv1 (3,2,7,7) -> (3, 98) matching im2col rows [2*(7*dy+dx) + ci]
    conv1_mat = jnp.reshape(
        jnp.transpose(jnp.reshape(params["conv1_w"], (3, 2, 49)), (0, 2, 1)), (3, 98))
    return dict(
        wq=stack("wq"), wk=stack("wk"), wv=stack("wv"), wc=stack("wc"), bc=stack("bc"),
        lng=stack("ln_g"), lnb=stack("ln_b"), wp=stack("wp"), bp=stack("bp"),
        mc1=jnp.asarray(consts["mc1"]), mc2=jnp.asarray(consts["mc2"]),
        mc3=jnp.asarray(consts["mc3"]),
        expand=jnp.asarray(consts["expand"]), bleye=jnp.asarray(consts["bleye"]),
        k2=jnp.asarray(consts["k2"]), k3=jnp.asarray(consts["k3"]),
        pat=jnp.asarray(consts["pat"]), cmask=jnp.asarray(consts["cmask"]),
        c0w=params["conv0_w"], c0b=col(params["conv0_b"]),
        c1w=conv1_mat, c1b=col(params["conv1_b"]),
        c2w=params["conv2_w"], c2b=col(params["conv2_b"]),
        csw1=params["cs_fc1_w"], csb1=row(params["cs_fc1_b"]),
        csw2=params["cs_fc2_w"], csb2=row(params["cs_fc2_b"]),
        ng=col(params["norm_g"]), nb=col(params["norm_b"]),
        m1w=params["mlp_fc1_w"], m1b=col(params["mlp_fc1_b"]),
        m2w=params["mlp_fc2_w"], m2b=col(params["mlp_fc2_b"]),
    )


# ----------------------------------------------------------------------------
# forward
# ----------------------------------------------------------------------------
def fastformer_forward(x, packed):
    B, C, H, W = x.shape
    M = H * W
    nh = packed["wq"].shape[1]
    C3 = packed["c0w"].shape[0]
    scale = float((C // nh) ** -0.5)
    padw = 3 * W + 3

    # Minimal XLA glue: first LayerNorm + the reference's raw (B,H*W,C) reshape of
    # the NCHW tensor, transposed to channel-major scrambled tokens.
    xm = x.reshape(B, C, M)
    mu = jnp.mean(xm, axis=1, keepdims=True)
    var = jnp.mean(jnp.square(xm - mu), axis=1, keepdims=True)
    xn = (xm - mu) * jax.lax.rsqrt(var + 1e-5) * packed["ng"][None] + packed["nb"][None]
    xs = jnp.swapaxes(xn.reshape(B, M, C), 1, 2)                 # (B, C, M) scrambled

    const_args = [packed[k] for k in KERNEL_ARG_ORDER]
    bspec = pl.BlockSpec((1, C, M), lambda b: (b, 0, 0))

    def cspec(a):
        if a.ndim == 2:
            return pl.BlockSpec(a.shape, lambda b: (0, 0))
        return pl.BlockSpec(a.shape, lambda b: (0, 0, 0))

    out = pl.pallas_call(
        functools.partial(_fastformer_kernel, C3=C3, H=H, W=W, scale=scale, padw=padw),
        out_shape=jax.ShapeDtypeStruct((B, C, M), x.dtype),
        grid=(B,),
        in_specs=[bspec, bspec] + [cspec(a) for a in const_args],
        out_specs=bspec,
        scratch_shapes=[pltpu.VMEM((2, M + 2 * padw), jnp.float32),   # lane-padded avg/max row
                        pltpu.VMEM((98, M), jnp.float32)],            # 7x7 im2col slab
        compiler_params=pltpu.CompilerParams(dimension_semantics=("parallel",)),
    )(xm, xs, *const_args)
    return out.reshape(B, C, H, W)


# ----------------------------------------------------------------------------
# deterministic parameter init (shapes from the PyTorch __init__)
# ----------------------------------------------------------------------------
def init_params(key, dim, num_head):
    C, nh = dim, num_head
    C3, C2 = dim // 3, dim // 2
    keys = iter(jax.random.split(key, 64))

    def rnd(shape, s=0.1):
        return s * jax.random.normal(next(keys), shape, dtype=jnp.float32)

    def fsa_params():
        return dict(
            wq=rnd((nh, C)), wk=rnd((nh, C)), wv=rnd((C, C)),      # Linear (out,in), no bias
            wc=rnd((C, C)), bc=rnd((C, 1)),                        # Conv2d 1x1
            ln_g=jnp.ones((C, 1), jnp.float32), ln_b=jnp.zeros((C, 1), jnp.float32),
            wp=rnd((C, C)), bp=rnd((1, C)))                        # proj Linear

    fc1_w, fc1_b = rnd((C2, C)), rnd((C2,))
    bn_scale = 1.0 / np.sqrt(1.0 + 1e-5)    # eval-mode BatchNorm1d (mean 0, var 1) folded
    return dict(
        norm_g=jnp.ones((C,), jnp.float32), norm_b=jnp.zeros((C,), jnp.float32),
        lk1=fsa_params(), lk2=fsa_params(), lk3=fsa_params(),
        conv0_w=rnd((C3, C)), conv0_b=rnd((C3,)),
        conv1_w=rnd((3, 2, 7, 7)), conv1_b=rnd((3,)),
        conv2_w=rnd((C, C3)), conv2_b=rnd((C,)),
        cs_fc1_w=fc1_w * bn_scale, cs_fc1_b=fc1_b * bn_scale,
        cs_fc2_w=rnd((C, C2)), cs_fc2_b=rnd((C,)),
        mlp_fc1_w=rnd((C, C)), mlp_fc1_b=rnd((C,)),
        mlp_fc2_w=rnd((C, C)), mlp_fc2_b=rnd((C,)),
    )


if __name__ == "__main__":
    key = jax.random.PRNGKey(0)
    dim, num_head, image_size, B = 12, 4, 16, 2
    pkey, xkey = jax.random.split(key)
    params = init_params(pkey, dim, num_head)
    consts = build_pattern_constants(dim, image_size, image_size)
    packed = pack_inputs(params, consts)
    x = jax.random.normal(xkey, (B, dim, image_size, image_size), dtype=jnp.float32)

    out = jax.jit(fastformer_forward)(x, packed)
    jax.block_until_ready(out)
    assert out.shape == (B, dim, image_size, image_size)
    assert bool(jnp.all(jnp.isfinite(out)))
    print("KERNEL_OK")
</pallas_src>

<mosaic_0001>
module attributes {stable_mosaic.version = 11 : i64} {
  func.func @_fastformer_kernel(%arg0: i32, %arg1: memref<1x12x256xf32, #tpu.memory_space<vmem>>, %arg2: memref<1x12x256xf32, #tpu.memory_space<vmem>>, %arg3: memref<3x4x12xf32, #tpu.memory_space<vmem>>, %arg4: memref<3x4x12xf32, #tpu.memory_space<vmem>>, %arg5: memref<3x12x12xf32, #tpu.memory_space<vmem>>, %arg6: memref<3x12x12xf32, #tpu.memory_space<vmem>>, %arg7: memref<3x12x1xf32, #tpu.memory_space<vmem>>, %arg8: memref<3x12x1xf32, #tpu.memory_space<vmem>>, %arg9: memref<3x12x1xf32, #tpu.memory_space<vmem>>, %arg10: memref<3x12x12xf32, #tpu.memory_space<vmem>>, %arg11: memref<3x1x12xf32, #tpu.memory_space<vmem>>, %arg12: memref<256x256xf32, #tpu.memory_space<vmem>>, %arg13: memref<64x64xf32, #tpu.memory_space<vmem>>, %arg14: memref<16x16xf32, #tpu.memory_space<vmem>>, %arg15: memref<12x144xf32, #tpu.memory_space<vmem>>, %arg16: memref<12x144xf32, #tpu.memory_space<vmem>>, %arg17: memref<144x64xf32, #tpu.memory_space<vmem>>, %arg18: memref<144x16xf32, #tpu.memory_space<vmem>>, %arg19: memref<3x144x256xf32, #tpu.memory_space<vmem>>, %arg20: memref<49x256xf32, #tpu.memory_space<vmem>>, %arg21: memref<4x12xf32, #tpu.memory_space<vmem>>, %arg22: memref<4x1xf32, #tpu.memory_space<vmem>>, %arg23: memref<3x98xf32, #tpu.memory_space<vmem>>, %arg24: memref<3x1xf32, #tpu.memory_space<vmem>>, %arg25: memref<12x4xf32, #tpu.memory_space<vmem>>, %arg26: memref<12x1xf32, #tpu.memory_space<vmem>>, %arg27: memref<6x12xf32, #tpu.memory_space<vmem>>, %arg28: memref<1x6xf32, #tpu.memory_space<vmem>>, %arg29: memref<12x6xf32, #tpu.memory_space<vmem>>, %arg30: memref<1x12xf32, #tpu.memory_space<vmem>>, %arg31: memref<12x1xf32, #tpu.memory_space<vmem>>, %arg32: memref<12x1xf32, #tpu.memory_space<vmem>>, %arg33: memref<12x12xf32, #tpu.memory_space<vmem>>, %arg34: memref<12x1xf32, #tpu.memory_space<vmem>>, %arg35: memref<12x12xf32, #tpu.memory_space<vmem>>, %arg36: memref<12x1xf32, #tpu.memory_space<vmem>>, %arg37: memref<1x12x256xf32, #tpu.memory_space<vmem>>, %arg38: memref<2x358xf32, #tpu.memory_space<vmem>>, %arg39: memref<98x256xf32, #tpu.memory_space<vmem>>) attributes {dimension_semantics = [#tpu.dimension_semantics<parallel>], iteration_bounds = array<i64: 2>, scalar_prefetch = 0 : i64, scratch_operands = 2 : i64, tpu.core_type = #tpu.core_type<tc>, window_params = [{transform_indices = @transform_0, window_bounds = array<i64: 1, 12, 256>}, {transform_indices = @transform_1, window_bounds = array<i64: 1, 12, 256>}, {pipeline_mode = #tpu.pipeline_mode<synchronous>, transform_indices = @transform_2, window_bounds = array<i64: 3, 4, 12>}, {pipeline_mode = #tpu.pipeline_mode<synchronous>, transform_indices = @transform_3, window_bounds = array<i64: 3, 4, 12>}, {pipeline_mode = #tpu.pipeline_mode<synchronous>, transform_indices = @transform_4, window_bounds = array<i64: 3, 12, 12>}, {pipeline_mode = #tpu.pipeline_mode<synchronous>, transform_indices = @transform_5, window_bounds = array<i64: 3, 12, 12>}, {pipeline_mode = #tpu.pipeline_mode<synchronous>, transform_indices = @transform_6, window_bounds = array<i64: 3, 12, 1>}, {pipeline_mode = #tpu.pipeline_mode<synchronous>, transform_indices = @transform_7, window_bounds = array<i64: 3, 12, 1>}, {pipeline_mode = #tpu.pipeline_mode<synchronous>, transform_indices = @transform_8, window_bounds = array<i64: 3, 12, 1>}, {pipeline_mode = #tpu.pipeline_mode<synchronous>, transform_indices = @transform_9, window_bounds = array<i64: 3, 12, 12>}, {pipeline_mode = #tpu.pipeline_mode<synchronous>, transform_indices = @transform_10, window_bounds = array<i64: 3, 1, 12>}, {pipeline_mode = #tpu.pipeline_mode<synchronous>, transform_indices = @transform_11, window_bounds = array<i64: 256, 256>}, {pipeline_mode = #tpu.pipeline_mode<synchronous>, transform_indices = @transform_12, window_bounds = array<i64: 64, 64>}, {pipeline_mode = #tpu.pipeline_mode<synchronous>, transform_indices = @transform_13, window_bounds = array<i64: 16, 16>}, {pipeline_mode = #tpu.pipeline_mode<synchronous>, transform_indices = @transform_14, window_bounds = array<i64: 12, 144>}, {pipeline_mode = #tpu.pipeline_mode<synchronous>, transform_indices = @transform_15, window_bounds = array<i64: 12, 144>}, {pipeline_mode = #tpu.pipeline_mode<synchronous>, transform_indices = @transform_16, window_bounds = array<i64: 144, 64>}, {pipeline_mode = #tpu.pipeline_mode<synchronous>, transform_indices = @transform_17, window_bounds = array<i64: 144, 16>}, {pipeline_mode = #tpu.pipeline_mode<synchronous>, transform_indices = @transform_18, window_bounds = array<i64: 3, 144, 256>}, {pipeline_mode = #tpu.pipeline_mode<synchronous>, transform_indices = @transform_19, window_bounds = array<i64: 49, 256>}, {pipeline_mode = #tpu.pipeline_mode<synchronous>, transform_indices = @transform_20, window_bounds = array<i64: 4, 12>}, {pipeline_mode = #tpu.pipeline_mode<synchronous>, transform_indices = @transform_21, window_bounds = array<i64: 4, 1>}, {pipeline_mode = #tpu.pipeline_mode<synchronous>, transform_indices = @transform_22, window_bounds = array<i64: 3, 98>}, {pipeline_mode = #tpu.pipeline_mode<synchronous>, transform_indices = @transform_23, window_bounds = array<i64: 3, 1>}, {pipeline_mode = #tpu.pipeline_mode<synchronous>, transform_indices = @transform_24, window_bounds = array<i64: 12, 4>}, {pipeline_mode = #tpu.pipeline_mode<synchronous>, transform_indices = @transform_25, window_bounds = array<i64: 12, 1>}, {pipeline_mode = #tpu.pipeline_mode<synchronous>, transform_indices = @transform_26, window_bounds = array<i64: 6, 12>}, {pipeline_mode = #tpu.pipeline_mode<synchronous>, transform_indices = @transform_27, window_bounds = array<i64: 1, 6>}, {pipeline_mode = #tpu.pipeline_mode<synchronous>, transform_indices = @transform_28, window_bounds = array<i64: 12, 6>}, {pipeline_mode = #tpu.pipeline_mode<synchronous>, transform_indices = @transform_29, window_bounds = array<i64: 1, 12>}, {pipeline_mode = #tpu.pipeline_mode<synchronous>, transform_indices = @transform_30, window_bounds = array<i64: 12, 1>}, {pipeline_mode = #tpu.pipeline_mode<synchronous>, transform_indices = @transform_31, window_bounds = array<i64: 12, 1>}, {pipeline_mode = #tpu.pipeline_mode<synchronous>, transform_indices = @transform_32, window_bounds = array<i64: 12, 12>}, {pipeline_mode = #tpu.pipeline_mode<synchronous>, transform_indices = @transform_33, window_bounds = array<i64: 12, 1>}, {pipeline_mode = #tpu.pipeline_mode<synchronous>, transform_indices = @transform_34, window_bounds = array<i64: 12, 12>}, {pipeline_mode = #tpu.pipeline_mode<synchronous>, transform_indices = @transform_35, window_bounds = array<i64: 12, 1>}, {transform_indices = @transform_36, window_bounds = array<i64: 1, 12, 256>}]} {
    %c0 = arith.constant 0 : index
    %c0_0 = arith.constant 0 : index
    %c0_1 = arith.constant 0 : index
    %0 = vector.load %arg1[%c0, %c0_0, %c0_1] : memref<1x12x256xf32, #tpu.memory_space<vmem>>, vector<1x12x256xf32>
    %1 = vector.shape_cast %0 : vector<1x12x256xf32> to vector<12x256xf32>
    %c0_2 = arith.constant 0 : index
    %c0_3 = arith.constant 0 : index
    %2 = vector.load %arg31[%c0_2, %c0_3] : memref<12x1xf32, #tpu.memory_space<vmem>>, vector<12x1xf32>
    %c0_4 = arith.constant 0 : index
    %c0_5 = arith.constant 0 : index
    %3 = vector.load %arg32[%c0_4, %c0_5] : memref<12x1xf32, #tpu.memory_space<vmem>>, vector<12x1xf32>
    %cst = arith.constant dense<0.000000e+00> : vector<256xf32>
    %4 = vector.multi_reduction <add>, %1, %cst [0] : vector<12x256xf32> to vector<256xf32>
    %5 = vector.shape_cast %4 : vector<256xf32> to vector<1x256xf32>
    %cst_6 = arith.constant 1.200000e+01 : f32
    %6 = vector.broadcast %cst_6 : f32 to vector<1x256xf32>
    %7 = arith.divf %5, %6 : vector<1x256xf32>
    %8 = vector.broadcast %7 : vector<1x256xf32> to vector<12x256xf32>
    %9 = arith.subf %1, %8 : vector<12x256xf32>
    %10 = arith.mulf %9, %9 : vector<12x256xf32>
    %cst_7 = arith.constant dense<0.000000e+00> : vector<256xf32>
    %11 = vector.multi_reduction <add>, %10, %cst_7 [0] : vector<12x256xf32> to vector<256xf32>
    %12 = vector.shape_cast %11 : vector<256xf32> to vector<1x256xf32>
    %cst_8 = arith.constant 1.200000e+01 : f32
    %13 = vector.broadcast %cst_8 : f32 to vector<1x256xf32>
    %14 = arith.divf %12, %13 : vector<1x256xf32>
    %15 = vector.broadcast %7 : vector<1x256xf32> to vector<12x256xf32>
    %16 = arith.subf %1, %15 : vector<12x256xf32>
    %cst_9 = arith.constant 9.99999974E-6 : f32
    %17 = vector.broadcast %cst_9 : f32 to vector<1x256xf32>
    %18 = arith.addf %14, %17 : vector<1x256xf32>
    %19 = math.rsqrt %18 : vector<1x256xf32>
    %20 = vector.broadcast %19 : vector<1x256xf32> to vector<12x256xf32>
    %21 = arith.mulf %16, %20 : vector<12x256xf32>
    %22 = vector.broadcast %2 : vector<12x1xf32> to vector<12x256xf32>
    %23 = arith.mulf %21, %22 : vector<12x256xf32>
    %24 = vector.broadcast %3 : vector<12x1xf32> to vector<12x256xf32>
    %25 = arith.addf %23, %24 : vector<12x256xf32>
    %c0_10 = arith.constant 0 : index
    %c0_11 = arith.constant 0 : index
    %c0_12 = arith.constant 0 : index
    %26 = vector.load %arg2[%c0_10, %c0_11, %c0_12] : memref<1x12x256xf32, #tpu.memory_space<vmem>>, vector<1x12x256xf32>
    %27 = vector.shape_cast %26 : vector<1x12x256xf32> to vector<12x256xf32>
    %c0_13 = arith.constant 0 : index
    %c0_14 = arith.constant 0 : index
    %28 = vector.load %arg12[%c0_13, %c0_14] : memref<256x256xf32, #tpu.memory_space<vmem>>, vector<256x256xf32>
    %c0_15 = arith.constant 0 : index
    %c0_16 = arith.constant 0 : index
    %c0_17 = arith.constant 0 : index
    %29 = vector.load %arg3[%c0_15, %c0_16, %c0_17] : memref<3x4x12xf32, #tpu.memory_space<vmem>>, vector<1x4x12xf32>
    %30 = vector.shape_cast %29 : vector<1x4x12xf32> to vector<4x12xf32>
    %cst_18 = arith.constant dense<0.000000e+00> : vector<4x256xf32>
    %31 = tpu.matmul %30, %27, %cst_18 {dimension_numbers = #tpu.dot_dimension_numbers<[1], [0], [0], [1], [0, 0, 1, 1], [], []>} : vector<4x12xf32>, vector<12x256xf32>, vector<4x256xf32> -> vector<4x256xf32>
    %cst_19 = arith.constant dense<0.000000e+00> : vector<256xf32>
    %32 = vector.multi_reduction <add>, %31, %cst_19 [0] : vector<4x256xf32> to vector<256xf32>
    %33 = vector.shape_cast %32 : vector<256xf32> to vector<1x256xf32>
    %c0_20 = arith.constant 0 : index
    %c0_21 = arith.constant 0 : index
    %c0_22 = arith.constant 0 : index
    %34 = vector.load %arg6[%c0_20, %c0_21, %c0_22] : memref<3x12x12xf32, #tpu.memory_space<vmem>>, vector<1x12x12xf32>
    %35 = vector.shape_cast %34 : vector<1x12x12xf32> to vector<12x12xf32>
    %cst_23 = arith.constant dense<0.000000e+00> : vector<12x256xf32>
    %36 = tpu.matmul %35, %27, %cst_23 {dimension_numbers = #tpu.dot_dimension_numbers<[1], [0], [0], [1], [0, 0, 1, 1], [], []>} : vector<12x12xf32>, vector<12x256xf32>, vector<12x256xf32> -> vector<12x256xf32>
    %c0_24 = arith.constant 0 : index
    %c0_25 = arith.constant 0 : index
    %c0_26 = arith.constant 0 : index
    %37 = vector.load %arg7[%c0_24, %c0_25, %c0_26] : memref<3x12x1xf32, #tpu.memory_space<vmem>>, vector<1x12x1xf32>
    %38 = vector.shape_cast %37 : vector<1x12x1xf32> to vector<12x1xf32>
    %39 = vector.broadcast %38 : vector<12x1xf32> to vector<12x256xf32>
    %40 = arith.addf %36, %39 : vector<12x256xf32>
    %c0_27 = arith.constant 0 : index
    %c0_28 = arith.constant 0 : index
    %c0_29 = arith.constant 0 : index
    %41 = vector.load %arg8[%c0_27, %c0_28, %c0_29] : memref<3x12x1xf32, #tpu.memory_space<vmem>>, vector<1x12x1xf32>
    %42 = vector.shape_cast %41 : vector<1x12x1xf32> to vector<12x1xf32>
    %c0_30 = arith.constant 0 : index
    %c0_31 = arith.constant 0 : index
    %c0_32 = arith.constant 0 : index
    %43 = vector.load %arg9[%c0_30, %c0_31, %c0_32] : memref<3x12x1xf32, #tpu.memory_space<vmem>>, vector<1x12x1xf32>
    %44 = vector.shape_cast %43 : vector<1x12x1xf32> to vector<12x1xf32>
    %cst_33 = arith.constant dense<0.000000e+00> : vector<256xf32>
    %45 = vector.multi_reduction <add>, %40, %cst_33 [0] : vector<12x256xf32> to vector<256xf32>
    %46 = vector.shape_cast %45 : vector<256xf32> to vector<1x256xf32>
    %cst_34 = arith.constant 1.200000e+01 : f32
    %47 = vector.broadcast %cst_34 : f32 to vector<1x256xf32>
    %48 = arith.divf %46, %47 : vector<1x256xf32>
    %49 = vector.broadcast %48 : vector<1x256xf32> to vector<12x256xf32>
    %50 = arith.subf %40, %49 : vector<12x256xf32>
    %51 = arith.mulf %50, %50 : vector<12x256xf32>
    %cst_35 = arith.constant dense<0.000000e+00> : vector<256xf32>
    %52 = vector.multi_reduction <add>, %51, %cst_35 [0] : vector<12x256xf32> to vector<256xf32>
    %53 = vector.shape_cast %52 : vector<256xf32> to vector<1x256xf32>
    %cst_36 = arith.constant 1.200000e+01 : f32
    %54 = vector.broadcast %cst_36 : f32 to vector<1x256xf32>
    %55 = arith.divf %53, %54 : vector<1x256xf32>
    %56 = vector.broadcast %48 : vector<1x256xf32> to vector<12x256xf32>
    %57 = arith.subf %40, %56 : vector<12x256xf32>
    %cst_37 = arith.constant 9.99999974E-6 : f32
    %58 = vector.broadcast %cst_37 : f32 to vector<1x256xf32>
    %59 = arith.addf %55, %58 : vector<1x256xf32>
    %60 = math.rsqrt %59 : vector<1x256xf32>
    %61 = vector.broadcast %60 : vector<1x256xf32> to vector<12x256xf32>
    %62 = arith.mulf %57, %61 : vector<12x256xf32>
    %63 = vector.broadcast %42 : vector<12x1xf32> to vector<12x256xf32>
    %64 = arith.mulf %62, %63 : vector<12x256xf32>
    %65 = vector.broadcast %44 : vector<12x1xf32> to vector<12x256xf32>
    %66 = arith.addf %64, %65 : vector<12x256xf32>
    %cst_38 = arith.constant 5.000000e-01 : f32
    %67 = vector.broadcast %cst_38 : f32 to vector<12x256xf32>
    %68 = arith.mulf %67, %66 : vector<12x256xf32>
    %cst_39 = arith.constant 0.707106769 : f32
    %69 = vector.broadcast %cst_39 : f32 to vector<12x256xf32>
    %70 = arith.mulf %66, %69 : vector<12x256xf32>
    %cst_40 = arith.constant 0.000000e+00 : f32
    %71 = vector.broadcast %cst_40 : f32 to vector<12x256xf32>
    %72 = arith.cmpf oge, %70, %71 : vector<12x256xf32>
    %cst_41 = arith.constant 1.000000e+00 : f32
    %cst_42 = arith.constant -1.000000e+00 : f32
    %73 = vector.broadcast %cst_41 : f32 to vector<12x256xf32>
    %74 = vector.broadcast %cst_42 : f32 to vector<12x256xf32>
    %75 = arith.select %72, %73, %74 : vector<12x256xi1>, vector<12x256xf32>
    %76 = math.absf %70 : vector<12x256xf32>
    %cst_43 = arith.constant 0.327591091 : f32
    %77 = vector.broadcast %cst_43 : f32 to vector<12x256xf32>
    %78 = arith.mulf %77, %76 : vector<12x256xf32>
    %cst_44 = arith.constant 1.000000e+00 : f32
    %79 = vector.broadcast %cst_44 : f32 to vector<12x256xf32>
    %80 = arith.addf %79, %78 : vector<12x256xf32>
    %cst_45 = arith.constant 1.000000e+00 : f32
    %81 = vector.broadcast %cst_45 : f32 to vector<12x256xf32>
    %82 = arith.divf %81, %80 : vector<12x256xf32>
    %cst_46 = arith.constant 1.06140542 : f32
    %83 = vector.broadcast %cst_46 : f32 to vector<12x256xf32>
    %84 = arith.mulf %82, %83 : vector<12x256xf32>
    %cst_47 = arith.constant -1.45315206 : f32
    %85 = vector.broadcast %cst_47 : f32 to vector<12x256xf32>
    %86 = arith.addf %85, %84 : vector<12x256xf32>
    %87 = arith.mulf %82, %86 : vector<12x256xf32>
    %cst_48 = arith.constant 1.42141378 : f32
    %88 = vector.broadcast %cst_48 : f32 to vector<12x256xf32>
    %89 = arith.addf %88, %87 : vector<12x256xf32>
    %90 = arith.mulf %82, %89 : vector<12x256xf32>
    %cst_49 = arith.constant -0.284496725 : f32
    %91 = vector.broadcast %cst_49 : f32 to vector<12x256xf32>
    %92 = arith.addf %91, %90 : vector<12x256xf32>
    %93 = arith.mulf %82, %92 : vector<12x256xf32>
    %cst_50 = arith.constant 0.254829586 : f32
    %94 = vector.broadcast %cst_50 : f32 to vector<12x256xf32>
    %95 = arith.addf %94, %93 : vector<12x256xf32>
    %96 = arith.mulf %82, %95 : vector<12x256xf32>
    %cst_51 = arith.constant 0.000000e+00 : f32
    %97 = vector.broadcast %cst_51 : f32 to vector<12x256xf32>
    %98 = arith.subf %97, %76 : vector<12x256xf32>
    %99 = arith.mulf %98, %76 : vector<12x256xf32>
    %100 = math.exp %99 : vector<12x256xf32>
    %101 = arith.mulf %96, %100 : vector<12x256xf32>
    %cst_52 = arith.constant 1.000000e+00 : f32
    %102 = vector.broadcast %cst_52 : f32 to vector<12x256xf32>
    %103 = arith.subf %102, %101 : vector<12x256xf32>
    %104 = arith.mulf %75, %103 : vector<12x256xf32>
    %cst_53 = arith.constant 1.000000e+00 : f32
    %105 = vector.broadcast %cst_53 : f32 to vector<12x256xf32>
    %106 = arith.addf %105, %104 : vector<12x256xf32>
    %107 = arith.mulf %68, %106 : vector<12x256xf32>
    %c0_54 = arith.constant 0 : index
    %c0_55 = arith.constant 0 : index
    %c0_56 = arith.constant 0 : index
    %108 = vector.load %arg4[%c0_54, %c0_55, %c0_56] : memref<3x4x12xf32, #tpu.memory_space<vmem>>, vector<1x4x12xf32>
    %109 = vector.shape_cast %108 : vector<1x4x12xf32> to vector<4x12xf32>
    %cst_57 = arith.constant dense<0.000000e+00> : vector<4x256xf32>
    %110 = tpu.matmul %109, %107, %cst_57 {dimension_numbers = #tpu.dot_dimension_numbers<[1], [0], [0], [1], [0, 0, 1, 1], [], []>} : vector<4x12xf32>, vector<12x256xf32>, vector<4x256xf32> -> vector<4x256xf32>
    %c0_58 = arith.constant 0 : index
    %c0_59 = arith.constant 0 : index
    %c0_60 = arith.constant 0 : index
    %111 = vector.load %arg5[%c0_58, %c0_59, %c0_60] : memref<3x12x12xf32, #tpu.memory_space<vmem>>, vector<1x12x12xf32>
    %112 = vector.shape_cast %111 : vector<1x12x12xf32> to vector<12x12xf32>
    %cst_61 = arith.constant dense<0.000000e+00> : vector<12x256xf32>
    %113 = tpu.matmul %112, %107, %cst_61 {dimension_numbers = #tpu.dot_dimension_numbers<[1], [0], [0], [1], [0, 0, 1, 1], [], []>} : vector<12x12xf32>, vector<12x256xf32>, vector<12x256xf32> -> vector<12x256xf32>
    %114 = vector.broadcast %33 : vector<1x256xf32> to vector<4x256xf32>
    %115 = arith.mulf %114, %110 : vector<4x256xf32>
    %cst_62 = arith.constant dense<0.000000e+00> : vector<4x256xf32>
    %116 = tpu.matmul %115, %28, %cst_62 {dimension_numbers = #tpu.dot_dimension_numbers<[1], [1], [0], [0], [0, 0, 1, 0], [], []>} : vector<4x256xf32>, vector<256x256xf32>, vector<4x256xf32> -> vector<4x256xf32>
    %cst_63 = arith.constant 0.577350259 : f32
    %117 = vector.broadcast %cst_63 : f32 to vector<4x256xf32>
    %118 = arith.mulf %116, %117 : vector<4x256xf32>
    %cst_64 = arith.constant dense<0xFF800000> : vector<4xf32>
    %119 = vector.multi_reduction <maximumf>, %118, %cst_64 [1] : vector<4x256xf32> to vector<4xf32>
    %120 = vector.shape_cast %119 : vector<4xf32> to vector<4x1xf32>
    %121 = vector.broadcast %120 : vector<4x1xf32> to vector<4x256xf32>
    %122 = arith.subf %118, %121 : vector<4x256xf32>
    %123 = math.exp %122 : vector<4x256xf32>
    %cst_65 = arith.constant dense<0.000000e+00> : vector<4xf32>
    %124 = vector.multi_reduction <add>, %123, %cst_65 [1] : vector<4x256xf32> to vector<4xf32>
    %125 = vector.shape_cast %124 : vector<4xf32> to vector<4x1xf32>
    %126 = vector.broadcast %125 : vector<4x1xf32> to vector<4x256xf32>
    %127 = arith.divf %123, %126 : vector<4x256xf32>
    %cst_66 = arith.constant dense<0.000000e+00> : vector<256xf32>
    %128 = vector.multi_reduction <add>, %127, %cst_66 [0] : vector<4x256xf32> to vector<256xf32>
    %129 = vector.shape_cast %128 : vector<256xf32> to vector<1x256xf32>
    %cst_67 = arith.constant dense<0.000000e+00> : vector<1x12xf32>
    %130 = tpu.matmul %129, %113, %cst_67 {dimension_numbers = #tpu.dot_dimension_numbers<[1], [1], [0], [0], [0, 0, 1, 0], [], []>} : vector<1x256xf32>, vector<12x256xf32>, vector<1x12xf32> -> vector<1x12xf32>
    %c0_68 = arith.constant 0 : index
    %c0_69 = arith.constant 0 : index
    %c0_70 = arith.constant 0 : index
    %131 = vector.load %arg10[%c0_68, %c0_69, %c0_70] : memref<3x12x12xf32, #tpu.memory_space<vmem>>, vector<1x12x12xf32>
    %132 = vector.shape_cast %131 : vector<1x12x12xf32> to vector<12x12xf32>
    %cst_71 = arith.constant dense<0.000000e+00> : vector<1x12xf32>
    %133 = tpu.matmul %130, %132, %cst_71 {dimension_numbers = #tpu.dot_dimension_numbers<[1], [1], [0], [0], [0, 0, 1, 0], [], []>} : vector<1x12xf32>, vector<12x12xf32>, vector<1x12xf32> -> vector<1x12xf32>
    %c0_72 = arith.constant 0 : index
    %c0_73 = arith.constant 0 : index
    %c0_74 = arith.constant 0 : index
    %134 = vector.load %arg11[%c0_72, %c0_73, %c0_74] : memref<3x1x12xf32, #tpu.memory_space<vmem>>, vector<1x1x12xf32>
    %135 = vector.shape_cast %134 : vector<1x1x12xf32> to vector<1x12xf32>
    %136 = arith.addf %133, %135 : vector<1x12xf32>
    %c0_75 = arith.constant 0 : index
    %c0_76 = arith.constant 0 : index
    %137 = vector.load %arg15[%c0_75, %c0_76] : memref<12x144xf32, #tpu.memory_space<vmem>>, vector<12x144xf32>
    %cst_77 = arith.constant dense<0.000000e+00> : vector<1x144xf32>
    %138 = tpu.matmul %136, %137, %cst_77 {dimension_numbers = #tpu.dot_dimension_numbers<[1], [0], [0], [1], [0, 0, 1, 1], [], []>} : vector<1x12xf32>, vector<12x144xf32>, vector<1x144xf32> -> vector<1x144xf32>
    %c0_78 = arith.constant 0 : index
    %c0_79 = arith.constant 0 : index
    %139 = vector.load %arg16[%c0_78, %c0_79] : memref<12x144xf32, #tpu.memory_space<vmem>>, vector<12x144xf32>
    %140 = vector.broadcast %138 : vector<1x144xf32> to vector<12x144xf32>
    %141 = arith.mulf %139, %140 : vector<12x144xf32>
    %c0_80 = arith.constant 0 : index
    %c0_81 = arith.constant 0 : index
    %142 = vector.load %arg17[%c0_80, %c0_81] : memref<144x64xf32, #tpu.memory_space<vmem>>, vector<144x64xf32>
    %cst_82 = arith.constant dense<0.000000e+00> : vector<12x64xf32>
    %143 = tpu.matmul %141, %142, %cst_82 {dimension_numbers = #tpu.dot_dimension_numbers<[1], [0], [0], [1], [0, 0, 1, 1], [], []>} : vector<12x144xf32>, vector<144x64xf32>, vector<12x64xf32> -> vector<12x64xf32>
    %c0_83 = arith.constant 0 : index
    %c0_84 = arith.constant 0 : index
    %144 = vector.load %arg13[%c0_83, %c0_84] : memref<64x64xf32, #tpu.memory_space<vmem>>, vector<64x64xf32>
    %c1 = arith.constant 1 : index
    %c0_85 = arith.constant 0 : index
    %c0_86 = arith.constant 0 : index
    %145 = vector.load %arg3[%c1, %c0_85, %c0_86] : memref<3x4x12xf32, #tpu.memory_space<vmem>>, vector<1x4x12xf32>
    %146 = vector.shape_cast %145 : vector<1x4x12xf32> to vector<4x12xf32>
    %cst_87 = arith.constant dense<0.000000e+00> : vector<4x64xf32>
    %147 = tpu.matmul %146, %143, %cst_87 {dimension_numbers = #tpu.dot_dimension_numbers<[1], [0], [0], [1], [0, 0, 1, 1], [], []>} : vector<4x12xf32>, vector<12x64xf32>, vector<4x64xf32> -> vector<4x64xf32>
    %cst_88 = arith.constant dense<0.000000e+00> : vector<64xf32>
    %148 = vector.multi_reduction <add>, %147, %cst_88 [0] : vector<4x64xf32> to vector<64xf32>
    %149 = vector.shape_cast %148 : vector<64xf32> to vector<1x64xf32>
    %c1_89 = arith.constant 1 : index
    %c0_90 = arith.constant 0 : index
    %c0_91 = arith.constant 0 : index
    %150 = vector.load %arg6[%c1_89, %c0_90, %c0_91] : memref<3x12x12xf32, #tpu.memory_space<vmem>>, vector<1x12x12xf32>
    %151 = vector.shape_cast %150 : vector<1x12x12xf32> to vector<12x12xf32>
    %cst_92 = arith.constant dense<0.000000e+00> : vector<12x64xf32>
    %152 = tpu.matmul %151, %143, %cst_92 {dimension_numbers = #tpu.dot_dimension_numbers<[1], [0], [0], [1], [0, 0, 1, 1], [], []>} : vector<12x12xf32>, vector<12x64xf32>, vector<12x64xf32> -> vector<12x64xf32>
    %c1_93 = arith.constant 1 : index
    %c0_94 = arith.constant 0 : index
    %c0_95 = arith.constant 0 : index
    %153 = vector.load %arg7[%c1_93, %c0_94, %c0_95] : memref<3x12x1xf32, #tpu.memory_space<vmem>>, vector<1x12x1xf32>
    %154 = vector.shape_cast %153 : vector<1x12x1xf32> to vector<12x1xf32>
    %155 = vector.broadcast %154 : vector<12x1xf32> to vector<12x64xf32>
    %156 = arith.addf %152, %155 : vector<12x64xf32>
    %c1_96 = arith.constant 1 : index
    %c0_97 = arith.constant 0 : index
    %c0_98 = arith.constant 0 : index
    %157 = vector.load %arg8[%c1_96, %c0_97, %c0_98] : memref<3x12x1xf32, #tpu.memory_space<vmem>>, vector<1x12x1xf32>
    %158 = vector.shape_cast %157 : vector<1x12x1xf32> to vector<12x1xf32>
    %c1_99 = arith.constant 1 : index
    %c0_100 = arith.constant 0 : index
    %c0_101 = arith.constant 0 : index
    %159 = vector.load %arg9[%c1_99, %c0_100, %c0_101] : memref<3x12x1xf32, #tpu.memory_space<vmem>>, vector<1x12x1xf32>
    %160 = vector.shape_cast %159 : vector<1x12x1xf32> to vector<12x1xf32>
    %cst_102 = arith.constant dense<0.000000e+00> : vector<64xf32>
    %161 = vector.multi_reduction <add>, %156, %cst_102 [0] : vector<12x64xf32> to vector<64xf32>
    %162 = vector.shape_cast %161 : vector<64xf32> to vector<1x64xf32>
    %cst_103 = arith.constant 1.200000e+01 : f32
    %163 = vector.broadcast %cst_103 : f32 to vector<1x64xf32>
    %164 = arith.divf %162, %163 : vector<1x64xf32>
    %165 = vector.broadcast %164 : vector<1x64xf32> to vector<12x64xf32>
    %166 = arith.subf %156, %165 : vector<12x64xf32>
    %167 = arith.mulf %166, %166 : vector<12x64xf32>
    %cst_104 = arith.constant dense<0.000000e+00> : vector<64xf32>
    %168 = vector.multi_reduction <add>, %167, %cst_104 [0] : vector<12x64xf32> to vector<64xf32>
    %169 = vector.shape_cast %168 : vector<64xf32> to vector<1x64xf32>
    %cst_105 = arith.constant 1.200000e+01 : f32
    %170 = vector.broadcast %cst_105 : f32 to vector<1x64xf32>
    %171 = arith.divf %169, %170 : vector<1x64xf32>
    %172 = vector.broadcast %164 : vector<1x64xf32> to vector<12x64xf32>
    %173 = arith.subf %156, %172 : vector<12x64xf32>
    %cst_106 = arith.constant 9.99999974E-6 : f32
    %174 = vector.broadcast %cst_106 : f32 to vector<1x64xf32>
    %175 = arith.addf %171, %174 : vector<1x64xf32>
    %176 = math.rsqrt %175 : vector<1x64xf32>
    %177 = vector.broadcast %176 : vector<1x64xf32> to vector<12x64xf32>
    %178 = arith.mulf %173, %177 : vector<12x64xf32>
    %179 = vector.broadcast %158 : vector<12x1xf32> to vector<12x64xf32>
    %180 = arith.mulf %178, %179 : vector<12x64xf32>
    %181 = vector.broadcast %160 : vector<12x1xf32> to vector<12x64xf32>
    %182 = arith.addf %180, %181 : vector<12x64xf32>
    %cst_107 = arith.constant 5.000000e-01 : f32
    %183 = vector.broadcast %cst_107 : f32 to vector<12x64xf32>
    %184 = arith.mulf %183, %182 : vector<12x64xf32>
    %cst_108 = arith.constant 0.707106769 : f32
    %185 = vector.broadcast %cst_108 : f32 to vector<12x64xf32>
    %186 = arith.mulf %182, %185 : vector<12x64xf32>
    %cst_109 = arith.constant 0.000000e+00 : f32
    %187 = vector.broadcast %cst_109 : f32 to vector<12x64xf32>
    %188 = arith.cmpf oge, %186, %187 : vector<12x64xf32>
    %cst_110 = arith.constant 1.000000e+00 : f32
    %cst_111 = arith.constant -1.000000e+00 : f32
    %189 = vector.broadcast %cst_110 : f32 to vector<12x64xf32>
    %190 = vector.broadcast %cst_111 : f32 to vector<12x64xf32>
    %191 = arith.select %188, %189, %190 : vector<12x64xi1>, vector<12x64xf32>
    %192 = math.absf %186 : vector<12x64xf32>
    %cst_112 = arith.constant 0.327591091 : f32
    %193 = vector.broadcast %cst_112 : f32 to vector<12x64xf32>
    %194 = arith.mulf %193, %192 : vector<12x64xf32>
    %cst_113 = arith.constant 1.000000e+00 : f32
    %195 = vector.broadcast %cst_113 : f32 to vector<12x64xf32>
    %196 = arith.addf %195, %194 : vector<12x64xf32>
    %cst_114 = arith.constant 1.000000e+00 : f32
    %197 = vector.broadcast %cst_114 : f32 to vector<12x64xf32>
    %198 = arith.divf %197, %196 : vector<12x64xf32>
    %cst_115 = arith.constant 1.06140542 : f32
    %199 = vector.broadcast %cst_115 : f32 to vector<12x64xf32>
    %200 = arith.mulf %198, %199 : vector<12x64xf32>
    %cst_116 = arith.constant -1.45315206 : f32
    %201 = vector.broadcast %cst_116 : f32 to vector<12x64xf32>
    %202 = arith.addf %201, %200 : vector<12x64xf32>
    %203 = arith.mulf %198, %202 : vector<12x64xf32>
    %cst_117 = arith.constant 1.42141378 : f32
    %204 = vector.broadcast %cst_117 : f32 to vector<12x64xf32>
    %205 = arith.addf %204, %203 : vector<12x64xf32>
    %206 = arith.mulf %198, %205 : vector<12x64xf32>
    %cst_118 = arith.constant -0.284496725 : f32
    %207 = vector.broadcast %cst_118 : f32 to vector<12x64xf32>
    %208 = arith.addf %207, %206 : vector<12x64xf32>
    %209 = arith.mulf %198, %208 : vector<12x64xf32>
    %cst_119 = arith.constant 0.254829586 : f32
    %210 = vector.broadcast %cst_119 : f32 to vector<12x64xf32>
    %211 = arith.addf %210, %209 : vector<12x64xf32>
    %212 = arith.mulf %198, %211 : vector<12x64xf32>
    %cst_120 = arith.constant 0.000000e+00 : f32
    %213 = vector.broadcast %cst_120 : f32 to vector<12x64xf32>
    %214 = arith.subf %213, %192 : vector<12x64xf32>
    %215 = arith.mulf %214, %192 : vector<12x64xf32>
    %216 = math.exp %215 : vector<12x64xf32>
    %217 = arith.mulf %212, %216 : vector<12x64xf32>
    %cst_121 = arith.constant 1.000000e+00 : f32
    %218 = vector.broadcast %cst_121 : f32 to vector<12x64xf32>
    %219 = arith.subf %218, %217 : vector<12x64xf32>
    %220 = arith.mulf %191, %219 : vector<12x64xf32>
    %cst_122 = arith.constant 1.000000e+00 : f32
    %221 = vector.broadcast %cst_122 : f32 to vector<12x64xf32>
    %222 = arith.addf %221, %220 : vector<12x64xf32>
    %223 = arith.mulf %184, %222 : vector<12x64xf32>
    %c1_123 = arith.constant 1 : index
    %c0_124 = arith.constant 0 : index
    %c0_125 = arith.constant 0 : index
    %224 = vector.load %arg4[%c1_123, %c0_124, %c0_125] : memref<3x4x12xf32, #tpu.memory_space<vmem>>, vector<1x4x12xf32>
    %225 = vector.shape_cast %224 : vector<1x4x12xf32> to vector<4x12xf32>
    %cst_126 = arith.constant dense<0.000000e+00> : vector<4x64xf32>
    %226 = tpu.matmul %225, %223, %cst_126 {dimension_numbers = #tpu.dot_dimension_numbers<[1], [0], [0], [1], [0, 0, 1, 1], [], []>} : vector<4x12xf32>, vector<12x64xf32>, vector<4x64xf32> -> vector<4x64xf32>
    %c1_127 = arith.constant 1 : index
    %c0_128 = arith.constant 0 : index
    %c0_129 = arith.constant 0 : index
    %227 = vector.load %arg5[%c1_127, %c0_128, %c0_129] : memref<3x12x12xf32, #tpu.memory_space<vmem>>, vector<1x12x12xf32>
    %228 = vector.shape_cast %227 : vector<1x12x12xf32> to vector<12x12xf32>
    %cst_130 = arith.constant dense<0.000000e+00> : vector<12x64xf32>
    %229 = tpu.matmul %228, %223, %cst_130 {dimension_numbers = #tpu.dot_dimension_numbers<[1], [0], [0], [1], [0, 0, 1, 1], [], []>} : vector<12x12xf32>, vector<12x64xf32>, vector<12x64xf32> -> vector<12x64xf32>
    %230 = vector.broadcast %149 : vector<1x64xf32> to vector<4x64xf32>
    %231 = arith.mulf %230, %226 : vector<4x64xf32>
    %cst_131 = arith.constant dense<0.000000e+00> : vector<4x64xf32>
    %232 = tpu.matmul %231, %144, %cst_131 {dimension_numbers = #tpu.dot_dimension_numbers<[1], [1], [0], [0], [0, 0, 1, 0], [], []>} : vector<4x64xf32>, vector<64x64xf32>, vector<4x64xf32> -> vector<4x64xf32>
    %cst_132 = arith.constant 0.577350259 : f32
    %233 = vector.broadcast %cst_132 : f32 to vector<4x64xf32>
    %234 = arith.mulf %232, %233 : vector<4x64xf32>
    %cst_133 = arith.constant dense<0xFF800000> : vector<4xf32>
    %235 = vector.multi_reduction <maximumf>, %234, %cst_133 [1] : vector<4x64xf32> to vector<4xf32>
    %236 = vector.shape_cast %235 : vector<4xf32> to vector<4x1xf32>
    %237 = vector.broadcast %236 : vector<4x1xf32> to vector<4x64xf32>
    %238 = arith.subf %234, %237 : vector<4x64xf32>
    %239 = math.exp %238 : vector<4x64xf32>
    %cst_134 = arith.constant dense<0.000000e+00> : vector<4xf32>
    %240 = vector.multi_reduction <add>, %239, %cst_134 [1] : vector<4x64xf32> to vector<4xf32>
    %241 = vector.shape_cast %240 : vector<4xf32> to vector<4x1xf32>
    %242 = vector.broadcast %241 : vector<4x1xf32> to vector<4x64xf32>
    %243 = arith.divf %239, %242 : vector<4x64xf32>
    %cst_135 = arith.constant dense<0.000000e+00> : vector<64xf32>
    %244 = vector.multi_reduction <add>, %243, %cst_135 [0] : vector<4x64xf32> to vector<64xf32>
    %245 = vector.shape_cast %244 : vector<64xf32> to vector<1x64xf32>
    %cst_136 = arith.constant dense<0.000000e+00> : vector<1x12xf32>
    %246 = tpu.matmul %245, %229, %cst_136 {dimension_numbers = #tpu.dot_dimension_numbers<[1], [1], [0], [0], [0, 0, 1, 0], [], []>} : vector<1x64xf32>, vector<12x64xf32>, vector<1x12xf32> -> vector<1x12xf32>
    %c1_137 = arith.constant 1 : index
    %c0_138 = arith.constant 0 : index
    %c0_139 = arith.constant 0 : index
    %247 = vector.load %arg10[%c1_137, %c0_138, %c0_139] : memref<3x12x12xf32, #tpu.memory_space<vmem>>, vector<1x12x12xf32>
    %248 = vector.shape_cast %247 : vector<1x12x12xf32> to vector<12x12xf32>
    %cst_140 = arith.constant dense<0.000000e+00> : vector<1x12xf32>
    %249 = tpu.matmul %246, %248, %cst_140 {dimension_numbers = #tpu.dot_dimension_numbers<[1], [1], [0], [0], [0, 0, 1, 0], [], []>} : vector<1x12xf32>, vector<12x12xf32>, vector<1x12xf32> -> vector<1x12xf32>
    %c1_141 = arith.constant 1 : index
    %c0_142 = arith.constant 0 : index
    %c0_143 = arith.constant 0 : index
    %250 = vector.load %arg11[%c1_141, %c0_142, %c0_143] : memref<3x1x12xf32, #tpu.memory_space<vmem>>, vector<1x1x12xf32>
    %251 = vector.shape_cast %250 : vector<1x1x12xf32> to vector<1x12xf32>
    %252 = arith.addf %249, %251 : vector<1x12xf32>
    %c0_144 = arith.constant 0 : index
    %c0_145 = arith.constant 0 : index
    %253 = vector.load %arg15[%c0_144, %c0_145] : memref<12x144xf32, #tpu.memory_space<vmem>>, vector<12x144xf32>
    %cst_146 = arith.constant dense<0.000000e+00> : vector<1x144xf32>
    %254 = tpu.matmul %252, %253, %cst_146 {dimension_numbers = #tpu.dot_dimension_numbers<[1], [0], [0], [1], [0, 0, 1, 1], [], []>} : vector<1x12xf32>, vector<12x144xf32>, vector<1x144xf32> -> vector<1x144xf32>
    %c0_147 = arith.constant 0 : index
    %c0_148 = arith.constant 0 : index
    %255 = vector.load %arg16[%c0_147, %c0_148] : memref<12x144xf32, #tpu.memory_space<vmem>>, vector<12x144xf32>
    %256 = vector.broadcast %254 : vector<1x144xf32> to vector<12x144xf32>
    %257 = arith.mulf %255, %256 : vector<12x144xf32>
    %c0_149 = arith.constant 0 : index
    %c0_150 = arith.constant 0 : index
    %258 = vector.load %arg18[%c0_149, %c0_150] : memref<144x16xf32, #tpu.memory_space<vmem>>, vector<144x16xf32>
    %cst_151 = arith.constant dense<0.000000e+00> : vector<12x16xf32>
    %259 = tpu.matmul %257, %258, %cst_151 {dimension_numbers = #tpu.dot_dimension_numbers<[1], [0], [0], [1], [0, 0, 1, 1], [], []>} : vector<12x144xf32>, vector<144x16xf32>, vector<12x16xf32> -> vector<12x16xf32>
    %c0_152 = arith.constant 0 : index
    %c0_153 = arith.constant 0 : index
    %260 = vector.load %arg14[%c0_152, %c0_153] : memref<16x16xf32, #tpu.memory_space<vmem>>, vector<16x16xf32>
    %c2 = arith.constant 2 : index
    %c0_154 = arith.constant 0 : index
    %c0_155 = arith.constant 0 : index
    %261 = vector.load %arg3[%c2, %c0_154, %c0_155] : memref<3x4x12xf32, #tpu.memory_space<vmem>>, vector<1x4x12xf32>
    %262 = vector.shape_cast %261 : vector<1x4x12xf32> to vector<4x12xf32>
    %cst_156 = arith.constant dense<0.000000e+00> : vector<4x16xf32>
    %263 = tpu.matmul %262, %259, %cst_156 {dimension_numbers = #tpu.dot_dimension_numbers<[1], [0], [0], [1], [0, 0, 1, 1], [], []>} : vector<4x12xf32>, vector<12x16xf32>, vector<4x16xf32> -> vector<4x16xf32>
    %cst_157 = arith.constant dense<0.000000e+00> : vector<16xf32>
    %264 = vector.multi_reduction <add>, %263, %cst_157 [0] : vector<4x16xf32> to vector<16xf32>
    %265 = vector.shape_cast %264 : vector<16xf32> to vector<1x16xf32>
    %c2_158 = arith.constant 2 : index
    %c0_159 = arith.constant 0 : index
    %c0_160 = arith.constant 0 : index
    %266 = vector.load %arg6[%c2_158, %c0_159, %c0_160] : memref<3x12x12xf32, #tpu.memory_space<vmem>>, vector<1x12x12xf32>
    %267 = vector.shape_cast %266 : vector<1x12x12xf32> to vector<12x12xf32>
    %cst_161 = arith.constant dense<0.000000e+00> : vector<12x16xf32>
    %268 = tpu.matmul %267, %259, %cst_161 {dimension_numbers = #tpu.dot_dimension_numbers<[1], [0], [0], [1], [0, 0, 1, 1], [], []>} : vector<12x12xf32>, vector<12x16xf32>, vector<12x16xf32> -> vector<12x16xf32>
    %c2_162 = arith.constant 2 : index
    %c0_163 = arith.constant 0 : index
    %c0_164 = arith.constant 0 : index
    %269 = vector.load %arg7[%c2_162, %c0_163, %c0_164] : memref<3x12x1xf32, #tpu.memory_space<vmem>>, vector<1x12x1xf32>
    %270 = vector.shape_cast %269 : vector<1x12x1xf32> to vector<12x1xf32>
    %271 = vector.broadcast %270 : vector<12x1xf32> to vector<12x16xf32>
    %272 = arith.addf %268, %271 : vector<12x16xf32>
    %c2_165 = arith.constant 2 : index
    %c0_166 = arith.constant 0 : index
    %c0_167 = arith.constant 0 : index
    %273 = vector.load %arg8[%c2_165, %c0_166, %c0_167] : memref<3x12x1xf32, #tpu.memory_space<vmem>>, vector<1x12x1xf32>
    %274 = vector.shape_cast %273 : vector<1x12x1xf32> to vector<12x1xf32>
    %c2_168 = arith.constant 2 : index
    %c0_169 = arith.constant 0 : index
    %c0_170 = arith.constant 0 : index
    %275 = vector.load %arg9[%c2_168, %c0_169, %c0_170] : memref<3x12x1xf32, #tpu.memory_space<vmem>>, vector<1x12x1xf32>
    %276 = vector.shape_cast %275 : vector<1x12x1xf32> to vector<12x1xf32>
    %cst_171 = arith.constant dense<0.000000e+00> : vector<16xf32>
    %277 = vector.multi_reduction <add>, %272, %cst_171 [0] : vector<12x16xf32> to vector<16xf32>
    %278 = vector.shape_cast %277 : vector<16xf32> to vector<1x16xf32>
    %cst_172 = arith.constant 1.200000e+01 : f32
    %279 = vector.broadcast %cst_172 : f32 to vector<1x16xf32>
    %280 = arith.divf %278, %279 : vector<1x16xf32>
    %281 = vector.broadcast %280 : vector<1x16xf32> to vector<12x16xf32>
    %282 = arith.subf %272, %281 : vector<12x16xf32>
    %283 = arith.mulf %282, %282 : vector<12x16xf32>
    %cst_173 = arith.constant dense<0.000000e+00> : vector<16xf32>
    %284 = vector.multi_reduction <add>, %283, %cst_173 [0] : vector<12x16xf32> to vector<16xf32>
    %285 = vector.shape_cast %284 : vector<16xf32> to vector<1x16xf32>
    %cst_174 = arith.constant 1.200000e+01 : f32
    %286 = vector.broadcast %cst_174 : f32 to vector<1x16xf32>
    %287 = arith.divf %285, %286 : vector<1x16xf32>
    %288 = vector.broadcast %280 : vector<1x16xf32> to vector<12x16xf32>
    %289 = arith.subf %272, %288 : vector<12x16xf32>
    %cst_175 = arith.constant 9.99999974E-6 : f32
    %290 = vector.broadcast %cst_175 : f32 to vector<1x16xf32>
    %291 = arith.addf %287, %290 : vector<1x16xf32>
    %292 = math.rsqrt %291 : vector<1x16xf32>
    %293 = vector.broadcast %292 : vector<1x16xf32> to vector<12x16xf32>
    %294 = arith.mulf %289, %293 : vector<12x16xf32>
    %295 = vector.broadcast %274 : vector<12x1xf32> to vector<12x16xf32>
    %296 = arith.mulf %294, %295 : vector<12x16xf32>
    %297 = vector.broadcast %276 : vector<12x1xf32> to vector<12x16xf32>
    %298 = arith.addf %296, %297 : vector<12x16xf32>
    %cst_176 = arith.constant 5.000000e-01 : f32
    %299 = vector.broadcast %cst_176 : f32 to vector<12x16xf32>
    %300 = arith.mulf %299, %298 : vector<12x16xf32>
    %cst_177 = arith.constant 0.707106769 : f32
    %301 = vector.broadcast %cst_177 : f32 to vector<12x16xf32>
    %302 = arith.mulf %298, %301 : vector<12x16xf32>
    %cst_178 = arith.constant 0.000000e+00 : f32
    %303 = vector.broadcast %cst_178 : f32 to vector<12x16xf32>
    %304 = arith.cmpf oge, %302, %303 : vector<12x16xf32>
    %cst_179 = arith.constant 1.000000e+00 : f32
    %cst_180 = arith.constant -1.000000e+00 : f32
    %305 = vector.broadcast %cst_179 : f32 to vector<12x16xf32>
    %306 = vector.broadcast %cst_180 : f32 to vector<12x16xf32>
    %307 = arith.select %304, %305, %306 : vector<12x16xi1>, vector<12x16xf32>
    %308 = math.absf %302 : vector<12x16xf32>
    %cst_181 = arith.constant 0.327591091 : f32
    %309 = vector.broadcast %cst_181 : f32 to vector<12x16xf32>
    %310 = arith.mulf %309, %308 : vector<12x16xf32>
    %cst_182 = arith.constant 1.000000e+00 : f32
    %311 = vector.broadcast %cst_182 : f32 to vector<12x16xf32>
    %312 = arith.addf %311, %310 : vector<12x16xf32>
    %cst_183 = arith.constant 1.000000e+00 : f32
    %313 = vector.broadcast %cst_183 : f32 to vector<12x16xf32>
    %314 = arith.divf %313, %312 : vector<12x16xf32>
    %cst_184 = arith.constant 1.06140542 : f32
    %315 = vector.broadcast %cst_184 : f32 to vector<12x16xf32>
    %316 = arith.mulf %314, %315 : vector<12x16xf32>
    %cst_185 = arith.constant -1.45315206 : f32
    %317 = vector.broadcast %cst_185 : f32 to vector<12x16xf32>
    %318 = arith.addf %317, %316 : vector<12x16xf32>
    %319 = arith.mulf %314, %318 : vector<12x16xf32>
    %cst_186 = arith.constant 1.42141378 : f32
    %320 = vector.broadcast %cst_186 : f32 to vector<12x16xf32>
    %321 = arith.addf %320, %319 : vector<12x16xf32>
    %322 = arith.mulf %314, %321 : vector<12x16xf32>
    %cst_187 = arith.constant -0.284496725 : f32
    %323 = vector.broadcast %cst_187 : f32 to vector<12x16xf32>
    %324 = arith.addf %323, %322 : vector<12x16xf32>
    %325 = arith.mulf %314, %324 : vector<12x16xf32>
    %cst_188 = arith.constant 0.254829586 : f32
    %326 = vector.broadcast %cst_188 : f32 to vector<12x16xf32>
    %327 = arith.addf %326, %325 : vector<12x16xf32>
    %328 = arith.mulf %314, %327 : vector<12x16xf32>
    %cst_189 = arith.constant 0.000000e+00 : f32
    %329 = vector.broadcast %cst_189 : f32 to vector<12x16xf32>
    %330 = arith.subf %329, %308 : vector<12x16xf32>
    %331 = arith.mulf %330, %308 : vector<12x16xf32>
    %332 = math.exp %331 : vector<12x16xf32>
    %333 = arith.mulf %328, %332 : vector<12x16xf32>
    %cst_190 = arith.constant 1.000000e+00 : f32
    %334 = vector.broadcast %cst_190 : f32 to vector<12x16xf32>
    %335 = arith.subf %334, %333 : vector<12x16xf32>
    %336 = arith.mulf %307, %335 : vector<12x16xf32>
    %cst_191 = arith.constant 1.000000e+00 : f32
    %337 = vector.broadcast %cst_191 : f32 to vector<12x16xf32>
    %338 = arith.addf %337, %336 : vector<12x16xf32>
    %339 = arith.mulf %300, %338 : vector<12x16xf32>
    %c2_192 = arith.constant 2 : index
    %c0_193 = arith.constant 0 : index
    %c0_194 = arith.constant 0 : index
    %340 = vector.load %arg4[%c2_192, %c0_193, %c0_194] : memref<3x4x12xf32, #tpu.memory_space<vmem>>, vector<1x4x12xf32>
    %341 = vector.shape_cast %340 : vector<1x4x12xf32> to vector<4x12xf32>
    %cst_195 = arith.constant dense<0.000000e+00> : vector<4x16xf32>
    %342 = tpu.matmul %341, %339, %cst_195 {dimension_numbers = #tpu.dot_dimension_numbers<[1], [0], [0], [1], [0, 0, 1, 1], [], []>} : vector<4x12xf32>, vector<12x16xf32>, vector<4x16xf32> -> vector<4x16xf32>
    %c2_196 = arith.constant 2 : index
    %c0_197 = arith.constant 0 : index
    %c0_198 = arith.constant 0 : index
    %343 = vector.load %arg5[%c2_196, %c0_197, %c0_198] : memref<3x12x12xf32, #tpu.memory_space<vmem>>, vector<1x12x12xf32>
    %344 = vector.shape_cast %343 : vector<1x12x12xf32> to vector<12x12xf32>
    %cst_199 = arith.constant dense<0.000000e+00> : vector<12x16xf32>
    %345 = tpu.matmul %344, %339, %cst_199 {dimension_numbers = #tpu.dot_dimension_numbers<[1], [0], [0], [1], [0, 0, 1, 1], [], []>} : vector<12x12xf32>, vector<12x16xf32>, vector<12x16xf32> -> vector<12x16xf32>
    %346 = vector.broadcast %265 : vector<1x16xf32> to vector<4x16xf32>
    %347 = arith.mulf %346, %342 : vector<4x16xf32>
    %cst_200 = arith.constant dense<0.000000e+00> : vector<4x16xf32>
    %348 = tpu.matmul %347, %260, %cst_200 {dimension_numbers = #tpu.dot_dimension_numbers<[1], [1], [0], [0], [0, 0, 1, 0], [], []>} : vector<4x16xf32>, vector<16x16xf32>, vector<4x16xf32> -> vector<4x16xf32>
    %cst_201 = arith.constant 0.577350259 : f32
    %349 = vector.broadcast %cst_201 : f32 to vector<4x16xf32>
    %350 = arith.mulf %348, %349 : vector<4x16xf32>
    %cst_202 = arith.constant dense<0xFF800000> : vector<4xf32>
    %351 = vector.multi_reduction <maximumf>, %350, %cst_202 [1] : vector<4x16xf32> to vector<4xf32>
    %352 = vector.shape_cast %351 : vector<4xf32> to vector<4x1xf32>
    %353 = vector.broadcast %352 : vector<4x1xf32> to vector<4x16xf32>
    %354 = arith.subf %350, %353 : vector<4x16xf32>
    %355 = math.exp %354 : vector<4x16xf32>
    %cst_203 = arith.constant dense<0.000000e+00> : vector<4xf32>
    %356 = vector.multi_reduction <add>, %355, %cst_203 [1] : vector<4x16xf32> to vector<4xf32>
    %357 = vector.shape_cast %356 : vector<4xf32> to vector<4x1xf32>
    %358 = vector.broadcast %357 : vector<4x1xf32> to vector<4x16xf32>
    %359 = arith.divf %355, %358 : vector<4x16xf32>
    %cst_204 = arith.constant dense<0.000000e+00> : vector<16xf32>
    %360 = vector.multi_reduction <add>, %359, %cst_204 [0] : vector<4x16xf32> to vector<16xf32>
    %361 = vector.shape_cast %360 : vector<16xf32> to vector<1x16xf32>
    %cst_205 = arith.constant dense<0.000000e+00> : vector<1x12xf32>
    %362 = tpu.matmul %361, %345, %cst_205 {dimension_numbers = #tpu.dot_dimension_numbers<[1], [1], [0], [0], [0, 0, 1, 0], [], []>} : vector<1x16xf32>, vector<12x16xf32>, vector<1x12xf32> -> vector<1x12xf32>
    %c2_206 = arith.constant 2 : index
    %c0_207 = arith.constant 0 : index
    %c0_208 = arith.constant 0 : index
    %363 = vector.load %arg10[%c2_206, %c0_207, %c0_208] : memref<3x12x12xf32, #tpu.memory_space<vmem>>, vector<1x12x12xf32>
    %364 = vector.shape_cast %363 : vector<1x12x12xf32> to vector<12x12xf32>
    %cst_209 = arith.constant dense<0.000000e+00> : vector<1x12xf32>
    %365 = tpu.matmul %362, %364, %cst_209 {dimension_numbers = #tpu.dot_dimension_numbers<[1], [1], [0], [0], [0, 0, 1, 0], [], []>} : vector<1x12xf32>, vector<12x12xf32>, vector<1x12xf32> -> vector<1x12xf32>
    %c2_210 = arith.constant 2 : index
    %c0_211 = arith.constant 0 : index
    %c0_212 = arith.constant 0 : index
    %366 = vector.load %arg11[%c2_210, %c0_211, %c0_212] : memref<3x1x12xf32, #tpu.memory_space<vmem>>, vector<1x1x12xf32>
    %367 = vector.shape_cast %366 : vector<1x1x12xf32> to vector<1x12xf32>
    %368 = arith.addf %365, %367 : vector<1x12xf32>
    %c0_213 = arith.constant 0 : index
    %c0_214 = arith.constant 0 : index
    %369 = vector.load %arg15[%c0_213, %c0_214] : memref<12x144xf32, #tpu.memory_space<vmem>>, vector<12x144xf32>
    %cst_215 = arith.constant dense<0.000000e+00> : vector<1x144xf32>
    %370 = tpu.matmul %368, %369, %cst_215 {dimension_numbers = #tpu.dot_dimension_numbers<[1], [0], [0], [1], [0, 0, 1, 1], [], []>} : vector<1x12xf32>, vector<12x144xf32>, vector<1x144xf32> -> vector<1x144xf32>
    %c0_216 = arith.constant 0 : index
    %c0_217 = arith.constant 0 : index
    %371 = vector.load %arg16[%c0_216, %c0_217] : memref<12x144xf32, #tpu.memory_space<vmem>>, vector<12x144xf32>
    %372 = vector.broadcast %370 : vector<1x144xf32> to vector<12x144xf32>
    %373 = arith.mulf %371, %372 : vector<12x144xf32>
    %c0_218 = arith.constant 0 : index
    %c0_219 = arith.constant 0 : index
    %c0_220 = arith.constant 0 : index
    %374 = vector.load %arg19[%c0_218, %c0_219, %c0_220] : memref<3x144x256xf32, #tpu.memory_space<vmem>>, vector<1x144x256xf32>
    %375 = vector.shape_cast %374 : vector<1x144x256xf32> to vector<144x256xf32>
    %cst_221 = arith.constant dense<0.000000e+00> : vector<12x256xf32>
    %376 = tpu.matmul %141, %375, %cst_221 {dimension_numbers = #tpu.dot_dimension_numbers<[1], [0], [0], [1], [0, 0, 1, 1], [], []>} : vector<12x144xf32>, vector<144x256xf32>, vector<12x256xf32> -> vector<12x256xf32>
    %c1_222 = arith.constant 1 : index
    %c0_223 = arith.constant 0 : index
    %c0_224 = arith.constant 0 : index
    %377 = vector.load %arg19[%c1_222, %c0_223, %c0_224] : memref<3x144x256xf32, #tpu.memory_space<vmem>>, vector<1x144x256xf32>
    %378 = vector.shape_cast %377 : vector<1x144x256xf32> to vector<144x256xf32>
    %cst_225 = arith.constant dense<0.000000e+00> : vector<12x256xf32>
    %379 = tpu.matmul %257, %378, %cst_225 {dimension_numbers = #tpu.dot_dimension_numbers<[1], [0], [0], [1], [0, 0, 1, 1], [], []>} : vector<12x144xf32>, vector<144x256xf32>, vector<12x256xf32> -> vector<12x256xf32>
    %c2_226 = arith.constant 2 : index
    %c0_227 = arith.constant 0 : index
    %c0_228 = arith.constant 0 : index
    %380 = vector.load %arg19[%c2_226, %c0_227, %c0_228] : memref<3x144x256xf32, #tpu.memory_space<vmem>>, vector<1x144x256xf32>
    %381 = vector.shape_cast %380 : vector<1x144x256xf32> to vector<144x256xf32>
    %cst_229 = arith.constant dense<0.000000e+00> : vector<12x256xf32>
    %382 = tpu.matmul %373, %381, %cst_229 {dimension_numbers = #tpu.dot_dimension_numbers<[1], [0], [0], [1], [0, 0, 1, 1], [], []>} : vector<12x144xf32>, vector<144x256xf32>, vector<12x256xf32> -> vector<12x256xf32>
    %cst_230 = arith.constant 1.000000e+00 : f32
    %383 = vector.broadcast %cst_230 : f32 to vector<1x256xf32>
    %384 = arith.addf %379, %382 : vector<12x256xf32>
    %cst_231 = arith.constant dense<0.000000e+00> : vector<1x12xf32>
    %385 = tpu.matmul %383, %384, %cst_231 {dimension_numbers = #tpu.dot_dimension_numbers<[1], [1], [0], [0], [0, 0, 1, 0], [], []>} : vector<1x256xf32>, vector<12x256xf32>, vector<1x12xf32> -> vector<1x12xf32>
    %cst_232 = arith.constant 3.906250e-03 : f32
    %386 = vector.broadcast %cst_232 : f32 to vector<1x12xf32>
    %387 = arith.mulf %385, %386 : vector<1x12xf32>
    %c0_233 = arith.constant 0 : index
    %c0_234 = arith.constant 0 : index
    %388 = vector.load %arg27[%c0_233, %c0_234] : memref<6x12xf32, #tpu.memory_space<vmem>>, vector<6x12xf32>
    %cst_235 = arith.constant dense<0.000000e+00> : vector<1x6xf32>
    %389 = tpu.matmul %387, %388, %cst_235 {dimension_numbers = #tpu.dot_dimension_numbers<[1], [1], [0], [0], [0, 0, 1, 0], [], []>} : vector<1x12xf32>, vector<6x12xf32>, vector<1x6xf32> -> vector<1x6xf32>
    %c0_236 = arith.constant 0 : index
    %c0_237 = arith.constant 0 : index
    %390 = vector.load %arg28[%c0_236, %c0_237] : memref<1x6xf32, #tpu.memory_space<vmem>>, vector<1x6xf32>
    %391 = arith.addf %389, %390 : vector<1x6xf32>
    %cst_238 = arith.constant 0.000000e+00 : f32
    %392 = vector.broadcast %cst_238 : f32 to vector<1x6xf32>
    %393 = arith.maximumf %391, %392 : vector<1x6xf32>
    %c0_239 = arith.constant 0 : index
    %c0_240 = arith.constant 0 : index
    %394 = vector.load %arg29[%c0_239, %c0_240] : memref<12x6xf32, #tpu.memory_space<vmem>>, vector<12x6xf32>
    %cst_241 = arith.constant dense<0.000000e+00> : vector<1x12xf32>
    %395 = tpu.matmul %393, %394, %cst_241 {dimension_numbers = #tpu.dot_dimension_numbers<[1], [1], [0], [0], [0, 0, 1, 0], [], []>} : vector<1x6xf32>, vector<12x6xf32>, vector<1x12xf32> -> vector<1x12xf32>
    %c0_242 = arith.constant 0 : index
    %c0_243 = arith.constant 0 : index
    %396 = vector.load %arg30[%c0_242, %c0_243] : memref<1x12xf32, #tpu.memory_space<vmem>>, vector<1x12xf32>
    %397 = arith.addf %395, %396 : vector<1x12xf32>
    %cst_244 = arith.constant 0.000000e+00 : f32
    %398 = vector.broadcast %cst_244 : f32 to vector<1x12xf32>
    %399 = arith.subf %398, %397 : vector<1x12xf32>
    %400 = math.exp %399 : vector<1x12xf32>
    %cst_245 = arith.constant 1.000000e+00 : f32
    %401 = vector.broadcast %cst_245 : f32 to vector<1x12xf32>
    %402 = arith.addf %401, %400 : vector<1x12xf32>
    %cst_246 = arith.constant 1.000000e+00 : f32
    %403 = vector.broadcast %cst_246 : f32 to vector<1x12xf32>
    %404 = arith.divf %403, %402 : vector<1x12xf32>
    %c0_247 = arith.constant 0 : index
    %c0_248 = arith.constant 0 : index
    %405 = vector.load %arg16[%c0_247, %c0_248] : memref<12x144xf32, #tpu.memory_space<vmem>>, vector<12x144xf32>
    %cst_249 = arith.constant dense<0.000000e+00> : vector<1x144xf32>
    %406 = tpu.matmul %404, %405, %cst_249 {dimension_numbers = #tpu.dot_dimension_numbers<[1], [0], [0], [1], [0, 0, 1, 1], [], []>} : vector<1x12xf32>, vector<12x144xf32>, vector<1x144xf32> -> vector<1x144xf32>
    %407 = vector.broadcast %406 : vector<1x144xf32> to vector<12x144xf32>
    %408 = arith.mulf %257, %407 : vector<12x144xf32>
    %c1_250 = arith.constant 1 : index
    %c0_251 = arith.constant 0 : index
    %c0_252 = arith.constant 0 : index
    %409 = vector.load %arg19[%c1_250, %c0_251, %c0_252] : memref<3x144x256xf32, #tpu.memory_space<vmem>>, vector<1x144x256xf32>
    %410 = vector.shape_cast %409 : vector<1x144x256xf32> to vector<144x256xf32>
    %cst_253 = arith.constant dense<0.000000e+00> : vector<12x256xf32>
    %411 = tpu.matmul %408, %410, %cst_253 {dimension_numbers = #tpu.dot_dimension_numbers<[1], [0], [0], [1], [0, 0, 1, 1], [], []>} : vector<12x144xf32>, vector<144x256xf32>, vector<12x256xf32> -> vector<12x256xf32>
    %cst_254 = arith.constant 1.000000e+00 : f32
    %412 = vector.broadcast %cst_254 : f32 to vector<1x144xf32>
    %413 = arith.subf %412, %406 : vector<1x144xf32>
    %414 = vector.broadcast %413 : vector<1x144xf32> to vector<12x144xf32>
    %415 = arith.mulf %373, %414 : vector<12x144xf32>
    %c2_255 = arith.constant 2 : index
    %c0_256 = arith.constant 0 : index
    %c0_257 = arith.constant 0 : index
    %416 = vector.load %arg19[%c2_255, %c0_256, %c0_257] : memref<3x144x256xf32, #tpu.memory_space<vmem>>, vector<1x144x256xf32>
    %417 = vector.shape_cast %416 : vector<1x144x256xf32> to vector<144x256xf32>
    %cst_258 = arith.constant dense<0.000000e+00> : vector<12x256xf32>
    %418 = tpu.matmul %415, %417, %cst_258 {dimension_numbers = #tpu.dot_dimension_numbers<[1], [0], [0], [1], [0, 0, 1, 1], [], []>} : vector<12x144xf32>, vector<144x256xf32>, vector<12x256xf32> -> vector<12x256xf32>
    %419 = arith.addf %411, %418 : vector<12x256xf32>
    %c0_259 = arith.constant 0 : index
    %c0_260 = arith.constant 0 : index
    %420 = vector.load %arg21[%c0_259, %c0_260] : memref<4x12xf32, #tpu.memory_space<vmem>>, vector<4x12xf32>
    %cst_261 = arith.constant dense<0.000000e+00> : vector<4x256xf32>
    %421 = tpu.matmul %420, %376, %cst_261 {dimension_numbers = #tpu.dot_dimension_numbers<[1], [0], [0], [1], [0, 0, 1, 1], [], []>} : vector<4x12xf32>, vector<12x256xf32>, vector<4x256xf32> -> vector<4x256xf32>
    %c0_262 = arith.constant 0 : index
    %c0_263 = arith.constant 0 : index
    %422 = vector.load %arg22[%c0_262, %c0_263] : memref<4x1xf32, #tpu.memory_space<vmem>>, vector<4x1xf32>
    %423 = vector.broadcast %422 : vector<4x1xf32> to vector<4x256xf32>
    %424 = arith.addf %421, %423 : vector<4x256xf32>
    %cst_264 = arith.constant dense<0.000000e+00> : vector<4x256xf32>
    %425 = tpu.matmul %420, %379, %cst_264 {dimension_numbers = #tpu.dot_dimension_numbers<[1], [0], [0], [1], [0, 0, 1, 1], [], []>} : vector<4x12xf32>, vector<12x256xf32>, vector<4x256xf32> -> vector<4x256xf32>
    %c0_265 = arith.constant 0 : index
    %c0_266 = arith.constant 0 : index
    %426 = vector.load %arg22[%c0_265, %c0_266] : memref<4x1xf32, #tpu.memory_space<vmem>>, vector<4x1xf32>
    %427 = vector.broadcast %426 : vector<4x1xf32> to vector<4x256xf32>
    %428 = arith.addf %425, %427 : vector<4x256xf32>
    %cst_267 = arith.constant dense<0.000000e+00> : vector<4x256xf32>
    %429 = tpu.matmul %420, %382, %cst_267 {dimension_numbers = #tpu.dot_dimension_numbers<[1], [0], [0], [1], [0, 0, 1, 1], [], []>} : vector<4x12xf32>, vector<12x256xf32>, vector<4x256xf32> -> vector<4x256xf32>
    %c0_268 = arith.constant 0 : index
    %c0_269 = arith.constant 0 : index
    %430 = vector.load %arg22[%c0_268, %c0_269] : memref<4x1xf32, #tpu.memory_space<vmem>>, vector<4x1xf32>
    %431 = vector.broadcast %430 : vector<4x1xf32> to vector<4x256xf32>
    %432 = arith.addf %429, %431 : vector<4x256xf32>
    %433 = arith.addf %424, %428 : vector<4x256xf32>
    %434 = arith.addf %433, %432 : vector<4x256xf32>
    %cst_270 = arith.constant dense<0.000000e+00> : vector<256xf32>
    %435 = vector.multi_reduction <add>, %434, %cst_270 [0] : vector<4x256xf32> to vector<256xf32>
    %436 = vector.shape_cast %435 : vector<256xf32> to vector<1x256xf32>
    %cst_271 = arith.constant 0.0833333358 : f32
    %437 = vector.broadcast %cst_271 : f32 to vector<1x256xf32>
    %438 = arith.mulf %436, %437 : vector<1x256xf32>
    %439 = arith.maximumf %424, %428 : vector<4x256xf32>
    %440 = arith.maximumf %439, %432 : vector<4x256xf32>
    %cst_272 = arith.constant dense<0xFF800000> : vector<256xf32>
    %441 = vector.multi_reduction <maximumf>, %440, %cst_272 [0] : vector<4x256xf32> to vector<256xf32>
    %442 = vector.shape_cast %441 : vector<256xf32> to vector<1x256xf32>
    %cst_273 = arith.constant 0.000000e+00 : f32
    %443 = vector.broadcast %cst_273 : f32 to vector<2x358xf32>
    %c0_274 = arith.constant 0 : index
    %c0_275 = arith.constant 0 : index
    %444 = vector.load %arg38[%c0_274, %c0_275] : memref<2x358xf32, #tpu.memory_space<vmem>>, vector<2x358xf32>
    tpu.vector_store %arg38[%c0_274, %c0_275], %443 {strides = array<i32>} : memref<2x358xf32, #tpu.memory_space<vmem>>, vector<2x358xf32>,
    %c0_276 = arith.constant 0 : index
    %c51 = arith.constant 51 : index
    %445 = vector.load %arg38[%c0_276, %c51] : memref<2x358xf32, #tpu.memory_space<vmem>>, vector<1x256xf32>
    tpu.vector_store %arg38[%c0_276, %c51], %438 {strides = array<i32>} : memref<2x358xf32, #tpu.memory_space<vmem>>, vector<1x256xf32>,
    %c1_277 = arith.constant 1 : index
    %c51_278 = arith.constant 51 : index
    %446 = vector.load %arg38[%c1_277, %c51_278] : memref<2x358xf32, #tpu.memory_space<vmem>>, vector<1x256xf32>
    tpu.vector_store %arg38[%c1_277, %c51_278], %442 {strides = array<i32>} : memref<2x358xf32, #tpu.memory_space<vmem>>, vector<1x256xf32>,
    %c0_279 = arith.constant 0 : index
    %c0_280 = arith.constant 0 : index
    %447 = vector.load %arg38[%c0_279, %c0_280] : memref<2x358xf32, #tpu.memory_space<vmem>>, vector<2x256xf32>
    %c0_281 = arith.constant 0 : index
    %c0_282 = arith.constant 0 : index
    %448 = vector.load %arg20[%c0_281, %c0_282] : memref<49x256xf32, #tpu.memory_space<vmem>>, vector<1x256xf32>
    %449 = vector.broadcast %448 : vector<1x256xf32> to vector<2x256xf32>
    %450 = arith.mulf %447, %449 : vector<2x256xf32>
    %c0_283 = arith.constant 0 : index
    %c0_284 = arith.constant 0 : index
    %451 = vector.load %arg39[%c0_283, %c0_284] : memref<98x256xf32, #tpu.memory_space<vmem>>, vector<2x256xf32>
    tpu.vector_store %arg39[%c0_283, %c0_284], %450 {strides = array<i32>} : memref<98x256xf32, #tpu.memory_space<vmem>>, vector<2x256xf32>,
    %c0_285 = arith.constant 0 : index
    %c1_286 = arith.constant 1 : index
    %452 = vector.load %arg38[%c0_285, %c1_286] : memref<2x358xf32, #tpu.memory_space<vmem>>, vector<2x256xf32>
    %c1_287 = arith.constant 1 : index
    %c0_288 = arith.constant 0 : index
    %453 = vector.load %arg20[%c1_287, %c0_288] : memref<49x256xf32, #tpu.memory_space<vmem>>, vector<1x256xf32>
    %454 = vector.broadcast %453 : vector<1x256xf32> to vector<2x256xf32>
    %455 = arith.mulf %452, %454 : vector<2x256xf32>
    %c2_289 = arith.constant 2 : index
    %c0_290 = arith.constant 0 : index
    %456 = vector.load %arg39[%c2_289, %c0_290] : memref<98x256xf32, #tpu.memory_space<vmem>>, vector<2x256xf32>
    tpu.vector_store %arg39[%c2_289, %c0_290], %455 {strides = array<i32>} : memref<98x256xf32, #tpu.memory_space<vmem>>, vector<2x256xf32>,
    %c0_291 = arith.constant 0 : index
    %c2_292 = arith.constant 2 : index
    %457 = vector.load %arg38[%c0_291, %c2_292] : memref<2x358xf32, #tpu.memory_space<vmem>>, vector<2x256xf32>
    %c2_293 = arith.constant 2 : index
    %c0_294 = arith.constant 0 : index
    %458 = vector.load %arg20[%c2_293, %c0_294] : memref<49x256xf32, #tpu.memory_space<vmem>>, vector<1x256xf32>
    %459 = vector.broadcast %458 : vector<1x256xf32> to vector<2x256xf32>
    %460 = arith.mulf %457, %459 : vector<2x256xf32>
    %c4 = arith.constant 4 : index
    %c0_295 = arith.constant 0 : index
    %461 = vector.load %arg39[%c4, %c0_295] : memref<98x256xf32, #tpu.memory_space<vmem>>, vector<2x256xf32>
    tpu.vector_store %arg39[%c4, %c0_295], %460 {strides = array<i32>} : memref<98x256xf32, #tpu.memory_space<vmem>>, vector<2x256xf32>,
    %c0_296 = arith.constant 0 : index
    %c3 = arith.constant 3 : index
    %462 = vector.load %arg38[%c0_296, %c3] : memref<2x358xf32, #tpu.memory_space<vmem>>, vector<2x256xf32>
    %c3_297 = arith.constant 3 : index
    %c0_298 = arith.constant 0 : index
    %463 = vector.load %arg20[%c3_297, %c0_298] : memref<49x256xf32, #tpu.memory_space<vmem>>, vector<1x256xf32>
    %464 = vector.broadcast %463 : vector<1x256xf32> to vector<2x256xf32>
    %465 = arith.mulf %462, %464 : vector<2x256xf32>
    %c6 = arith.constant 6 : index
    %c0_299 = arith.constant 0 : index
    %466 = vector.load %arg39[%c6, %c0_299] : memref<98x256xf32, #tpu.memory_space<vmem>>, vector<2x256xf32>
    tpu.vector_store %arg39[%c6, %c0_299], %465 {strides = array<i32>} : memref<98x256xf32, #tpu.memory_space<vmem>>, vector<2x256xf32>,
    %c0_300 = arith.constant 0 : index
    %c4_301 = arith.constant 4 : index
    %467 = vector.load %arg38[%c0_300, %c4_301] : memref<2x358xf32, #tpu.memory_space<vmem>>, vector<2x256xf32>
    %c4_302 = arith.constant 4 : index
    %c0_303 = arith.constant 0 : index
    %468 = vector.load %arg20[%c4_302, %c0_303] : memref<49x256xf32, #tpu.memory_space<vmem>>, vector<1x256xf32>
    %469 = vector.broadcast %468 : vector<1x256xf32> to vector<2x256xf32>
    %470 = arith.mulf %467, %469 : vector<2x256xf32>
    %c8 = arith.constant 8 : index
    %c0_304 = arith.constant 0 : index
    %471 = vector.load %arg39[%c8, %c0_304] : memref<98x256xf32, #tpu.memory_space<vmem>>, vector<2x256xf32>
    tpu.vector_store %arg39[%c8, %c0_304], %470 {strides = array<i32>} : memref<98x256xf32, #tpu.memory_space<vmem>>, vector<2x256xf32>,
    %c0_305 = arith.constant 0 : index
    %c5 = arith.constant 5 : index
    %472 = vector.load %arg38[%c0_305, %c5] : memref<2x358xf32, #tpu.memory_space<vmem>>, vector<2x256xf32>
    %c5_306 = arith.constant 5 : index
    %c0_307 = arith.constant 0 : index
    %473 = vector.load %arg20[%c5_306, %c0_307] : memref<49x256xf32, #tpu.memory_space<vmem>>, vector<1x256xf32>
    %474 = vector.broadcast %473 : vector<1x256xf32> to vector<2x256xf32>
    %475 = arith.mulf %472, %474 : vector<2x256xf32>
    %c10 = arith.constant 10 : index
    %c0_308 = arith.constant 0 : index
    %476 = vector.load %arg39[%c10, %c0_308] : memref<98x256xf32, #tpu.memory_space<vmem>>, vector<2x256xf32>
    tpu.vector_store %arg39[%c10, %c0_308], %475 {strides = array<i32>} : memref<98x256xf32, #tpu.memory_space<vmem>>, vector<2x256xf32>,
    %c0_309 = arith.constant 0 : index
    %c6_310 = arith.constant 6 : index
    %477 = vector.load %arg38[%c0_309, %c6_310] : memref<2x358xf32, #tpu.memory_space<vmem>>, vector<2x256xf32>
    %c6_311 = arith.constant 6 : index
    %c0_312 = arith.constant 0 : index
    %478 = vector.load %arg20[%c6_311, %c0_312] : memref<49x256xf32, #tpu.memory_space<vmem>>, vector<1x256xf32>
    %479 = vector.broadcast %478 : vector<1x256xf32> to vector<2x256xf32>
    %480 = arith.mulf %477, %479 : vector<2x256xf32>
    %c12 = arith.constant 12 : index
    %c0_313 = arith.constant 0 : index
    %481 = vector.load %arg39[%c12, %c0_313] : memref<98x256xf32, #tpu.memory_space<vmem>>, vector<2x256xf32>
    tpu.vector_store %arg39[%c12, %c0_313], %480 {strides = array<i32>} : memref<98x256xf32, #tpu.memory_space<vmem>>, vector<2x256xf32>,
    %c0_314 = arith.constant 0 : index
    %c16 = arith.constant 16 : index
    %482 = vector.load %arg38[%c0_314, %c16] : memref<2x358xf32, #tpu.memory_space<vmem>>, vector<2x256xf32>
    %c7 = arith.constant 7 : index
    %c0_315 = arith.constant 0 : index
    %483 = vector.load %arg20[%c7, %c0_315] : memref<49x256xf32, #tpu.memory_space<vmem>>, vector<1x256xf32>
    %484 = vector.broadcast %483 : vector<1x256xf32> to vector<2x256xf32>
    %485 = arith.mulf %482, %484 : vector<2x256xf32>
    %c14 = arith.constant 14 : index
    %c0_316 = arith.constant 0 : index
    %486 = vector.load %arg39[%c14, %c0_316] : memref<98x256xf32, #tpu.memory_space<vmem>>, vector<2x256xf32>
    tpu.vector_store %arg39[%c14, %c0_316], %485 {strides = array<i32>} : memref<98x256xf32, #tpu.memory_space<vmem>>, vector<2x256xf32>,
    %c0_317 = arith.constant 0 : index
    %c17 = arith.constant 17 : index
    %487 = vector.load %arg38[%c0_317, %c17] : memref<2x358xf32, #tpu.memory_space<vmem>>, vector<2x256xf32>
    %c8_318 = arith.constant 8 : index
    %c0_319 = arith.constant 0 : index
    %488 = vector.load %arg20[%c8_318, %c0_319] : memref<49x256xf32, #tpu.memory_space<vmem>>, vector<1x256xf32>
    %489 = vector.broadcast %488 : vector<1x256xf32> to vector<2x256xf32>
    %490 = arith.mulf %487, %489 : vector<2x256xf32>
    %c16_320 = arith.constant 16 : index
    %c0_321 = arith.constant 0 : index
    %491 = vector.load %arg39[%c16_320, %c0_321] : memref<98x256xf32, #tpu.memory_space<vmem>>, vector<2x256xf32>
    tpu.vector_store %arg39[%c16_320, %c0_321], %490 {strides = array<i32>} : memref<98x256xf32, #tpu.memory_space<vmem>>, vector<2x256xf32>,
    %c0_322 = arith.constant 0 : index
    %c18 = arith.constant 18 : index
    %492 = vector.load %arg38[%c0_322, %c18] : memref<2x358xf32, #tpu.memory_space<vmem>>, vector<2x256xf32>
    %c9 = arith.constant 9 : index
    %c0_323 = arith.constant 0 : index
    %493 = vector.load %arg20[%c9, %c0_323] : memref<49x256xf32, #tpu.memory_space<vmem>>, vector<1x256xf32>
    %494 = vector.broadcast %493 : vector<1x256xf32> to vector<2x256xf32>
    %495 = arith.mulf %492, %494 : vector<2x256xf32>
    %c18_324 = arith.constant 18 : index
    %c0_325 = arith.constant 0 : index
    %496 = vector.load %arg39[%c18_324, %c0_325] : memref<98x256xf32, #tpu.memory_space<vmem>>, vector<2x256xf32>
    tpu.vector_store %arg39[%c18_324, %c0_325], %495 {strides = array<i32>} : memref<98x256xf32, #tpu.memory_space<vmem>>, vector<2x256xf32>,
    %c0_326 = arith.constant 0 : index
    %c19 = arith.constant 19 : index
    %497 = vector.load %arg38[%c0_326, %c19] : memref<2x358xf32, #tpu.memory_space<vmem>>, vector<2x256xf32>
    %c10_327 = arith.constant 10 : index
    %c0_328 = arith.constant 0 : index
    %498 = vector.load %arg20[%c10_327, %c0_328] : memref<49x256xf32, #tpu.memory_space<vmem>>, vector<1x256xf32>
    %499 = vector.broadcast %498 : vector<1x256xf32> to vector<2x256xf32>
    %500 = arith.mulf %497, %499 : vector<2x256xf32>
    %c20 = arith.constant 20 : index
    %c0_329 = arith.constant 0 : index
    %501 = vector.load %arg39[%c20, %c0_329] : memref<98x256xf32, #tpu.memory_space<vmem>>, vector<2x256xf32>
    tpu.vector_store %arg39[%c20, %c0_329], %500 {strides = array<i32>} : memref<98x256xf32, #tpu.memory_space<vmem>>, vector<2x256xf32>,
    %c0_330 = arith.constant 0 : index
    %c20_331 = arith.constant 20 : index
    %502 = vector.load %arg38[%c0_330, %c20_331] : memref<2x358xf32, #tpu.memory_space<vmem>>, vector<2x256xf32>
    %c11 = arith.constant 11 : index
    %c0_332 = arith.constant 0 : index
    %503 = vector.load %arg20[%c11, %c0_332] : memref<49x256xf32, #tpu.memory_space<vmem>>, vector<1x256xf32>
    %504 = vector.broadcast %503 : vector<1x256xf32> to vector<2x256xf32>
    %505 = arith.mulf %502, %504 : vector<2x256xf32>
    %c22 = arith.constant 22 : index
    %c0_333 = arith.constant 0 : index
    %506 = vector.load %arg39[%c22, %c0_333] : memref<98x256xf32, #tpu.memory_space<vmem>>, vector<2x256xf32>
    tpu.vector_store %arg39[%c22, %c0_333], %505 {strides = array<i32>} : memref<98x256xf32, #tpu.memory_space<vmem>>, vector<2x256xf32>,
    %c0_334 = arith.constant 0 : index
    %c21 = arith.constant 21 : index
    %507 = vector.load %arg38[%c0_334, %c21] : memref<2x358xf32, #tpu.memory_space<vmem>>, vector<2x256xf32>
    %c12_335 = arith.constant 12 : index
    %c0_336 = arith.constant 0 : index
    %508 = vector.load %arg20[%c12_335, %c0_336] : memref<49x256xf32, #tpu.memory_space<vmem>>, vector<1x256xf32>
    %509 = vector.broadcast %508 : vector<1x256xf32> to vector<2x256xf32>
    %510 = arith.mulf %507, %509 : vector<2x256xf32>
    %c24 = arith.constant 24 : index
    %c0_337 = arith.constant 0 : index
    %511 = vector.load %arg39[%c24, %c0_337] : memref<98x256xf32, #tpu.memory_space<vmem>>, vector<2x256xf32>
    tpu.vector_store %arg39[%c24, %c0_337], %510 {strides = array<i32>} : memref<98x256xf32, #tpu.memory_space<vmem>>, vector<2x256xf32>,
    %c0_338 = arith.constant 0 : index
    %c22_339 = arith.constant 22 : index
    %512 = vector.load %arg38[%c0_338, %c22_339] : memref<2x358xf32, #tpu.memory_space<vmem>>, vector<2x256xf32>
    %c13 = arith.constant 13 : index
    %c0_340 = arith.constant 0 : index
    %513 = vector.load %arg20[%c13, %c0_340] : memref<49x256xf32, #tpu.memory_space<vmem>>, vector<1x256xf32>
    %514 = vector.broadcast %513 : vector<1x256xf32> to vector<2x256xf32>
    %515 = arith.mulf %512, %514 : vector<2x256xf32>
    %c26 = arith.constant 26 : index
    %c0_341 = arith.constant 0 : index
    %516 = vector.load %arg39[%c26, %c0_341] : memref<98x256xf32, #tpu.memory_space<vmem>>, vector<2x256xf32>
    tpu.vector_store %arg39[%c26, %c0_341], %515 {strides = array<i32>} : memref<98x256xf32, #tpu.memory_space<vmem>>, vector<2x256xf32>,
    %c0_342 = arith.constant 0 : index
    %c32 = arith.constant 32 : index
    %517 = vector.load %arg38[%c0_342, %c32] : memref<2x358xf32, #tpu.memory_space<vmem>>, vector<2x256xf32>
    %c14_343 = arith.constant 14 : index
    %c0_344 = arith.constant 0 : index
    %518 = vector.load %arg20[%c14_343, %c0_344] : memref<49x256xf32, #tpu.memory_space<vmem>>, vector<1x256xf32>
    %519 = vector.broadcast %518 : vector<1x256xf32> to vector<2x256xf32>
    %520 = arith.mulf %517, %519 : vector<2x256xf32>
    %c28 = arith.constant 28 : index
    %c0_345 = arith.constant 0 : index
    %521 = vector.load %arg39[%c28, %c0_345] : memref<98x256xf32, #tpu.memory_space<vmem>>, vector<2x256xf32>
    tpu.vector_store %arg39[%c28, %c0_345], %520 {strides = array<i32>} : memref<98x256xf32, #tpu.memory_space<vmem>>, vector<2x256xf32>,
    %c0_346 = arith.constant 0 : index
    %c33 = arith.constant 33 : index
    %522 = vector.load %arg38[%c0_346, %c33] : memref<2x358xf32, #tpu.memory_space<vmem>>, vector<2x256xf32>
    %c15 = arith.constant 15 : index
    %c0_347 = arith.constant 0 : index
    %523 = vector.load %arg20[%c15, %c0_347] : memref<49x256xf32, #tpu.memory_space<vmem>>, vector<1x256xf32>
    %524 = vector.broadcast %523 : vector<1x256xf32> to vector<2x256xf32>
    %525 = arith.mulf %522, %524 : vector<2x256xf32>
    %c30 = arith.constant 30 : index
    %c0_348 = arith.constant 0 : index
    %526 = vector.load %arg39[%c30, %c0_348] : memref<98x256xf32, #tpu.memory_space<vmem>>, vector<2x256xf32>
    tpu.vector_store %arg39[%c30, %c0_348], %525 {strides = array<i32>} : memref<98x256xf32, #tpu.memory_space<vmem>>, vector<2x256xf32>,
    %c0_349 = arith.constant 0 : index
    %c34 = arith.constant 34 : index
    %527 = vector.load %arg38[%c0_349, %c34] : memref<2x358xf32, #tpu.memory_space<vmem>>, vector<2x256xf32>
    %c16_350 = arith.constant 16 : index
    %c0_351 = arith.constant 0 : index
    %528 = vector.load %arg20[%c16_350, %c0_351] : memref<49x256xf32, #tpu.memory_space<vmem>>, vector<1x256xf32>
    %529 = vector.broadcast %528 : vector<1x256xf32> to vector<2x256xf32>
    %530 = arith.mulf %527, %529 : vector<2x256xf32>
    %c32_352 = arith.constant 32 : index
    %c0_353 = arith.constant 0 : index
    %531 = vector.load %arg39[%c32_352, %c0_353] : memref<98x256xf32, #tpu.memory_space<vmem>>, vector<2x256xf32>
    tpu.vector_store %arg39[%c32_352, %c0_353], %530 {strides = array<i32>} : memref<98x256xf32, #tpu.memory_space<vmem>>, vector<2x256xf32>,
    %c0_354 = arith.constant 0 : index
    %c35 = arith.constant 35 : index
    %532 = vector.load %arg38[%c0_354, %c35] : memref<2x358xf32, #tpu.memory_space<vmem>>, vector<2x256xf32>
    %c17_355 = arith.constant 17 : index
    %c0_356 = arith.constant 0 : index
    %533 = vector.load %arg20[%c17_355, %c0_356] : memref<49x256xf32, #tpu.memory_space<vmem>>, vector<1x256xf32>
    %534 = vector.broadcast %533 : vector<1x256xf32> to vector<2x256xf32>
    %535 = arith.mulf %532, %534 : vector<2x256xf32>
    %c34_357 = arith.constant 34 : index
    %c0_358 = arith.constant 0 : index
    %536 = vector.load %arg39[%c34_357, %c0_358] : memref<98x256xf32, #tpu.memory_space<vmem>>, vector<2x256xf32>
    tpu.vector_store %arg39[%c34_357, %c0_358], %535 {strides = array<i32>} : memref<98x256xf32, #tpu.memory_space<vmem>>, vector<2x256xf32>,
    %c0_359 = arith.constant 0 : index
    %c36 = arith.constant 36 : index
    %537 = vector.load %arg38[%c0_359, %c36] : memref<2x358xf32, #tpu.memory_space<vmem>>, vector<2x256xf32>
    %c18_360 = arith.constant 18 : index
    %c0_361 = arith.constant 0 : index
    %538 = vector.load %arg20[%c18_360, %c0_361] : memref<49x256xf32, #tpu.memory_space<vmem>>, vector<1x256xf32>
    %539 = vector.broadcast %538 : vector<1x256xf32> to vector<2x256xf32>
    %540 = arith.mulf %537, %539 : vector<2x256xf32>
    %c36_362 = arith.constant 36 : index
    %c0_363 = arith.constant 0 : index
    %541 = vector.load %arg39[%c36_362, %c0_363] : memref<98x256xf32, #tpu.memory_space<vmem>>, vector<2x256xf32>
    tpu.vector_store %arg39[%c36_362, %c0_363], %540 {strides = array<i32>} : memref<98x256xf32, #tpu.memory_space<vmem>>, vector<2x256xf32>,
    %c0_364 = arith.constant 0 : index
    %c37 = arith.constant 37 : index
    %542 = vector.load %arg38[%c0_364, %c37] : memref<2x358xf32, #tpu.memory_space<vmem>>, vector<2x256xf32>
    %c19_365 = arith.constant 19 : index
    %c0_366 = arith.constant 0 : index
    %543 = vector.load %arg20[%c19_365, %c0_366] : memref<49x256xf32, #tpu.memory_space<vmem>>, vector<1x256xf32>
    %544 = vector.broadcast %543 : vector<1x256xf32> to vector<2x256xf32>
    %545 = arith.mulf %542, %544 : vector<2x256xf32>
    %c38 = arith.constant 38 : index
    %c0_367 = arith.constant 0 : index
    %546 = vector.load %arg39[%c38, %c0_367] : memref<98x256xf32, #tpu.memory_space<vmem>>, vector<2x256xf32>
    tpu.vector_store %arg39[%c38, %c0_367], %545 {strides = array<i32>} : memref<98x256xf32, #tpu.memory_space<vmem>>, vector<2x256xf32>,
    %c0_368 = arith.constant 0 : index
    %c38_369 = arith.constant 38 : index
    %547 = vector.load %arg38[%c0_368, %c38_369] : memref<2x358xf32, #tpu.memory_space<vmem>>, vector<2x256xf32>
    %c20_370 = arith.constant 20 : index
    %c0_371 = arith.constant 0 : index
    %548 = vector.load %arg20[%c20_370, %c0_371] : memref<49x256xf32, #tpu.memory_space<vmem>>, vector<1x256xf32>
    %549 = vector.broadcast %548 : vector<1x256xf32> to vector<2x256xf32>
    %550 = arith.mulf %547, %549 : vector<2x256xf32>
    %c40 = arith.constant 40 : index
    %c0_372 = arith.constant 0 : index
    %551 = vector.load %arg39[%c40, %c0_372] : memref<98x256xf32, #tpu.memory_space<vmem>>, vector<2x256xf32>
    tpu.vector_store %arg39[%c40, %c0_372], %550 {strides = array<i32>} : memref<98x256xf32, #tpu.memory_space<vmem>>, vector<2x256xf32>,
    %c0_373 = arith.constant 0 : index
    %c48 = arith.constant 48 : index
    %552 = vector.load %arg38[%c0_373, %c48] : memref<2x358xf32, #tpu.memory_space<vmem>>, vector<2x256xf32>
    %c21_374 = arith.constant 21 : index
    %c0_375 = arith.constant 0 : index
    %553 = vector.load %arg20[%c21_374, %c0_375] : memref<49x256xf32, #tpu.memory_space<vmem>>, vector<1x256xf32>
    %554 = vector.broadcast %553 : vector<1x256xf32> to vector<2x256xf32>
    %555 = arith.mulf %552, %554 : vector<2x256xf32>
    %c42 = arith.constant 42 : index
    %c0_376 = arith.constant 0 : index
    %556 = vector.load %arg39[%c42, %c0_376] : memref<98x256xf32, #tpu.memory_space<vmem>>, vector<2x256xf32>
    tpu.vector_store %arg39[%c42, %c0_376], %555 {strides = array<i32>} : memref<98x256xf32, #tpu.memory_space<vmem>>, vector<2x256xf32>,
    %c0_377 = arith.constant 0 : index
    %c49 = arith.constant 49 : index
    %557 = vector.load %arg38[%c0_377, %c49] : memref<2x358xf32, #tpu.memory_space<vmem>>, vector<2x256xf32>
    %c22_378 = arith.constant 22 : index
    %c0_379 = arith.constant 0 : index
    %558 = vector.load %arg20[%c22_378, %c0_379] : memref<49x256xf32, #tpu.memory_space<vmem>>, vector<1x256xf32>
    %559 = vector.broadcast %558 : vector<1x256xf32> to vector<2x256xf32>
    %560 = arith.mulf %557, %559 : vector<2x256xf32>
    %c44 = arith.constant 44 : index
    %c0_380 = arith.constant 0 : index
    %561 = vector.load %arg39[%c44, %c0_380] : memref<98x256xf32, #tpu.memory_space<vmem>>, vector<2x256xf32>
    tpu.vector_store %arg39[%c44, %c0_380], %560 {strides = array<i32>} : memref<98x256xf32, #tpu.memory_space<vmem>>, vector<2x256xf32>,
    %c0_381 = arith.constant 0 : index
    %c50 = arith.constant 50 : index
    %562 = vector.load %arg38[%c0_381, %c50] : memref<2x358xf32, #tpu.memory_space<vmem>>, vector<2x256xf32>
    %c23 = arith.constant 23 : index
    %c0_382 = arith.constant 0 : index
    %563 = vector.load %arg20[%c23, %c0_382] : memref<49x256xf32, #tpu.memory_space<vmem>>, vector<1x256xf32>
    %564 = vector.broadcast %563 : vector<1x256xf32> to vector<2x256xf32>
    %565 = arith.mulf %562, %564 : vector<2x256xf32>
    %c46 = arith.constant 46 : index
    %c0_383 = arith.constant 0 : index
    %566 = vector.load %arg39[%c46, %c0_383] : memref<98x256xf32, #tpu.memory_space<vmem>>, vector<2x256xf32>
    tpu.vector_store %arg39[%c46, %c0_383], %565 {strides = array<i32>} : memref<98x256xf32, #tpu.memory_space<vmem>>, vector<2x256xf32>,
    %c0_384 = arith.constant 0 : index
    %c51_385 = arith.constant 51 : index
    %567 = vector.load %arg38[%c0_384, %c51_385] : memref<2x358xf32, #tpu.memory_space<vmem>>, vector<2x256xf32>
    %c24_386 = arith.constant 24 : index
    %c0_387 = arith.constant 0 : index
    %568 = vector.load %arg20[%c24_386, %c0_387] : memref<49x256xf32, #tpu.memory_space<vmem>>, vector<1x256xf32>
    %569 = vector.broadcast %568 : vector<1x256xf32> to vector<2x256xf32>
    %570 = arith.mulf %567, %569 : vector<2x256xf32>
    %c48_388 = arith.constant 48 : index
    %c0_389 = arith.constant 0 : index
    %571 = vector.load %arg39[%c48_388, %c0_389] : memref<98x256xf32, #tpu.memory_space<vmem>>, vector<2x256xf32>
    tpu.vector_store %arg39[%c48_388, %c0_389], %570 {strides = array<i32>} : memref<98x256xf32, #tpu.memory_space<vmem>>, vector<2x256xf32>,
    %c0_390 = arith.constant 0 : index
    %c52 = arith.constant 52 : index
    %572 = vector.load %arg38[%c0_390, %c52] : memref<2x358xf32, #tpu.memory_space<vmem>>, vector<2x256xf32>
    %c25 = arith.constant 25 : index
    %c0_391 = arith.constant 0 : index
    %573 = vector.load %arg20[%c25, %c0_391] : memref<49x256xf32, #tpu.memory_space<vmem>>, vector<1x256xf32>
    %574 = vector.broadcast %573 : vector<1x256xf32> to vector<2x256xf32>
    %575 = arith.mulf %572, %574 : vector<2x256xf32>
    %c50_392 = arith.constant 50 : index
    %c0_393 = arith.constant 0 : index
    %576 = vector.load %arg39[%c50_392, %c0_393] : memref<98x256xf32, #tpu.memory_space<vmem>>, vector<2x256xf32>
    tpu.vector_store %arg39[%c50_392, %c0_393], %575 {strides = array<i32>} : memref<98x256xf32, #tpu.memory_space<vmem>>, vector<2x256xf32>,
    %c0_394 = arith.constant 0 : index
    %c53 = arith.constant 53 : index
    %577 = vector.load %arg38[%c0_394, %c53] : memref<2x358xf32, #tpu.memory_space<vmem>>, vector<2x256xf32>
    %c26_395 = arith.constant 26 : index
    %c0_396 = arith.constant 0 : index
    %578 = vector.load %arg20[%c26_395, %c0_396] : memref<49x256xf32, #tpu.memory_space<vmem>>, vector<1x256xf32>
    %579 = vector.broadcast %578 : vector<1x256xf32> to vector<2x256xf32>
    %580 = arith.mulf %577, %579 : vector<2x256xf32>
    %c52_397 = arith.constant 52 : index
    %c0_398 = arith.constant 0 : index
    %581 = vector.load %arg39[%c52_397, %c0_398] : memref<98x256xf32, #tpu.memory_space<vmem>>, vector<2x256xf32>
    tpu.vector_store %arg39[%c52_397, %c0_398], %580 {strides = array<i32>} : memref<98x256xf32, #tpu.memory_space<vmem>>, vector<2x256xf32>,
    %c0_399 = arith.constant 0 : index
    %c54 = arith.constant 54 : index
    %582 = vector.load %arg38[%c0_399, %c54] : memref<2x358xf32, #tpu.memory_space<vmem>>, vector<2x256xf32>
    %c27 = arith.constant 27 : index
    %c0_400 = arith.constant 0 : index
    %583 = vector.load %arg20[%c27, %c0_400] : memref<49x256xf32, #tpu.memory_space<vmem>>, vector<1x256xf32>
    %584 = vector.broadcast %583 : vector<1x256xf32> to vector<2x256xf32>
    %585 = arith.mulf %582, %584 : vector<2x256xf32>
    %c54_401 = arith.constant 54 : index
    %c0_402 = arith.constant 0 : index
    %586 = vector.load %arg39[%c54_401, %c0_402] : memref<98x256xf32, #tpu.memory_space<vmem>>, vector<2x256xf32>
    tpu.vector_store %arg39[%c54_401, %c0_402], %585 {strides = array<i32>} : memref<98x256xf32, #tpu.memory_space<vmem>>, vector<2x256xf32>,
    %c0_403 = arith.constant 0 : index
    %c64 = arith.constant 64 : index
    %587 = vector.load %arg38[%c0_403, %c64] : memref<2x358xf32, #tpu.memory_space<vmem>>, vector<2x256xf32>
    %c28_404 = arith.constant 28 : index
    %c0_405 = arith.constant 0 : index
    %588 = vector.load %arg20[%c28_404, %c0_405] : memref<49x256xf32, #tpu.memory_space<vmem>>, vector<1x256xf32>
    %589 = vector.broadcast %588 : vector<1x256xf32> to vector<2x256xf32>
    %590 = arith.mulf %587, %589 : vector<2x256xf32>
    %c56 = arith.constant 56 : index
    %c0_406 = arith.constant 0 : index
    %591 = vector.load %arg39[%c56, %c0_406] : memref<98x256xf32, #tpu.memory_space<vmem>>, vector<2x256xf32>
    tpu.vector_store %arg39[%c56, %c0_406], %590 {strides = array<i32>} : memref<98x256xf32, #tpu.memory_space<vmem>>, vector<2x256xf32>,
    %c0_407 = arith.constant 0 : index
    %c65 = arith.constant 65 : index
    %592 = vector.load %arg38[%c0_407, %c65] : memref<2x358xf32, #tpu.memory_space<vmem>>, vector<2x256xf32>
    %c29 = arith.constant 29 : index
    %c0_408 = arith.constant 0 : index
    %593 = vector.load %arg20[%c29, %c0_408] : memref<49x256xf32, #tpu.memory_space<vmem>>, vector<1x256xf32>
    %594 = vector.broadcast %593 : vector<1x256xf32> to vector<2x256xf32>
    %595 = arith.mulf %592, %594 : vector<2x256xf32>
    %c58 = arith.constant 58 : index
    %c0_409 = arith.constant 0 : index
    %596 = vector.load %arg39[%c58, %c0_409] : memref<98x256xf32, #tpu.memory_space<vmem>>, vector<2x256xf32>
    tpu.vector_store %arg39[%c58, %c0_409], %595 {strides = array<i32>} : memref<98x256xf32, #tpu.memory_space<vmem>>, vector<2x256xf32>,
    %c0_410 = arith.constant 0 : index
    %c66 = arith.constant 66 : index
    %597 = vector.load %arg38[%c0_410, %c66] : memref<2x358xf32, #tpu.memory_space<vmem>>, vector<2x256xf32>
    %c30_411 = arith.constant 30 : index
    %c0_412 = arith.constant 0 : index
    %598 = vector.load %arg20[%c30_411, %c0_412] : memref<49x256xf32, #tpu.memory_space<vmem>>, vector<1x256xf32>
    %599 = vector.broadcast %598 : vector<1x256xf32> to vector<2x256xf32>
    %600 = arith.mulf %597, %599 : vector<2x256xf32>
    %c60 = arith.constant 60 : index
    %c0_413 = arith.constant 0 : index
    %601 = vector.load %arg39[%c60, %c0_413] : memref<98x256xf32, #tpu.memory_space<vmem>>, vector<2x256xf32>
    tpu.vector_store %arg39[%c60, %c0_413], %600 {strides = array<i32>} : memref<98x256xf32, #tpu.memory_space<vmem>>, vector<2x256xf32>,
    %c0_414 = arith.constant 0 : index
    %c67 = arith.constant 67 : index
    %602 = vector.load %arg38[%c0_414, %c67] : memref<2x358xf32, #tpu.memory_space<vmem>>, vector<2x256xf32>
    %c31 = arith.constant 31 : index
    %c0_415 = arith.constant 0 : index
    %603 = vector.load %arg20[%c31, %c0_415] : memref<49x256xf32, #tpu.memory_space<vmem>>, vector<1x256xf32>
    %604 = vector.broadcast %603 : vector<1x256xf32> to vector<2x256xf32>
    %605 = arith.mulf %602, %604 : vector<2x256xf32>
    %c62 = arith.constant 62 : index
    %c0_416 = arith.constant 0 : index
    %606 = vector.load %arg39[%c62, %c0_416] : memref<98x256xf32, #tpu.memory_space<vmem>>, vector<2x256xf32>
    tpu.vector_store %arg39[%c62, %c0_416], %605 {strides = array<i32>} : memref<98x256xf32, #tpu.memory_space<vmem>>, vector<2x256xf32>,
    %c0_417 = arith.constant 0 : index
    %c68 = arith.constant 68 : index
    %607 = vector.load %arg38[%c0_417, %c68] : memref<2x358xf32, #tpu.memory_space<vmem>>, vector<2x256xf32>
    %c32_418 = arith.constant 32 : index
    %c0_419 = arith.constant 0 : index
    %608 = vector.load %arg20[%c32_418, %c0_419] : memref<49x256xf32, #tpu.memory_space<vmem>>, vector<1x256xf32>
    %609 = vector.broadcast %608 : vector<1x256xf32> to vector<2x256xf32>
    %610 = arith.mulf %607, %609 : vector<2x256xf32>
    %c64_420 = arith.constant 64 : index
    %c0_421 = arith.constant 0 : index
    %611 = vector.load %arg39[%c64_420, %c0_421] : memref<98x256xf32, #tpu.memory_space<vmem>>, vector<2x256xf32>
    tpu.vector_store %arg39[%c64_420, %c0_421], %610 {strides = array<i32>} : memref<98x256xf32, #tpu.memory_space<vmem>>, vector<2x256xf32>,
    %c0_422 = arith.constant 0 : index
    %c69 = arith.constant 69 : index
    %612 = vector.load %arg38[%c0_422, %c69] : memref<2x358xf32, #tpu.memory_space<vmem>>, vector<2x256xf32>
    %c33_423 = arith.constant 33 : index
    %c0_424 = arith.constant 0 : index
    %613 = vector.load %arg20[%c33_423, %c0_424] : memref<49x256xf32, #tpu.memory_space<vmem>>, vector<1x256xf32>
    %614 = vector.broadcast %613 : vector<1x256xf32> to vector<2x256xf32>
    %615 = arith.mulf %612, %614 : vector<2x256xf32>
    %c66_425 = arith.constant 66 : index
    %c0_426 = arith.constant 0 : index
    %616 = vector.load %arg39[%c66_425, %c0_426] : memref<98x256xf32, #tpu.memory_space<vmem>>, vector<2x256xf32>
    tpu.vector_store %arg39[%c66_425, %c0_426], %615 {strides = array<i32>} : memref<98x256xf32, #tpu.memory_space<vmem>>, vector<2x256xf32>,
    %c0_427 = arith.constant 0 : index
    %c70 = arith.constant 70 : index
    %617 = vector.load %arg38[%c0_427, %c70] : memref<2x358xf32, #tpu.memory_space<vmem>>, vector<2x256xf32>
    %c34_428 = arith.constant 34 : index
    %c0_429 = arith.constant 0 : index
    %618 = vector.load %arg20[%c34_428, %c0_429] : memref<49x256xf32, #tpu.memory_space<vmem>>, vector<1x256xf32>
    %619 = vector.broadcast %618 : vector<1x256xf32> to vector<2x256xf32>
    %620 = arith.mulf %617, %619 : vector<2x256xf32>
    %c68_430 = arith.constant 68 : index
    %c0_431 = arith.constant 0 : index
    %621 = vector.load %arg39[%c68_430, %c0_431] : memref<98x256xf32, #tpu.memory_space<vmem>>, vector<2x256xf32>
    tpu.vector_store %arg39[%c68_430, %c0_431], %620 {strides = array<i32>} : memref<98x256xf32, #tpu.memory_space<vmem>>, vector<2x256xf32>,
    %c0_432 = arith.constant 0 : index
    %c80 = arith.constant 80 : index
    %622 = vector.load %arg38[%c0_432, %c80] : memref<2x358xf32, #tpu.memory_space<vmem>>, vector<2x256xf32>
    %c35_433 = arith.constant 35 : index
    %c0_434 = arith.constant 0 : index
    %623 = vector.load %arg20[%c35_433, %c0_434] : memref<49x256xf32, #tpu.memory_space<vmem>>, vector<1x256xf32>
    %624 = vector.broadcast %623 : vector<1x256xf32> to vector<2x256xf32>
    %625 = arith.mulf %622, %624 : vector<2x256xf32>
    %c70_435 = arith.constant 70 : index
    %c0_436 = arith.constant 0 : index
    %626 = vector.load %arg39[%c70_435, %c0_436] : memref<98x256xf32, #tpu.memory_space<vmem>>, vector<2x256xf32>
    tpu.vector_store %arg39[%c70_435, %c0_436], %625 {strides = array<i32>} : memref<98x256xf32, #tpu.memory_space<vmem>>, vector<2x256xf32>,
    %c0_437 = arith.constant 0 : index
    %c81 = arith.constant 81 : index
    %627 = vector.load %arg38[%c0_437, %c81] : memref<2x358xf32, #tpu.memory_space<vmem>>, vector<2x256xf32>
    %c36_438 = arith.constant 36 : index
    %c0_439 = arith.constant 0 : index
    %628 = vector.load %arg20[%c36_438, %c0_439] : memref<49x256xf32, #tpu.memory_space<vmem>>, vector<1x256xf32>
    %629 = vector.broadcast %628 : vector<1x256xf32> to vector<2x256xf32>
    %630 = arith.mulf %627, %629 : vector<2x256xf32>
    %c72 = arith.constant 72 : index
    %c0_440 = arith.constant 0 : index
    %631 = vector.load %arg39[%c72, %c0_440] : memref<98x256xf32, #tpu.memory_space<vmem>>, vector<2x256xf32>
    tpu.vector_store %arg39[%c72, %c0_440], %630 {strides = array<i32>} : memref<98x256xf32, #tpu.memory_space<vmem>>, vector<2x256xf32>,
    %c0_441 = arith.constant 0 : index
    %c82 = arith.constant 82 : index
    %632 = vector.load %arg38[%c0_441, %c82] : memref<2x358xf32, #tpu.memory_space<vmem>>, vector<2x256xf32>
    %c37_442 = arith.constant 37 : index
    %c0_443 = arith.constant 0 : index
    %633 = vector.load %arg20[%c37_442, %c0_443] : memref<49x256xf32, #tpu.memory_space<vmem>>, vector<1x256xf32>
    %634 = vector.broadcast %633 : vector<1x256xf32> to vector<2x256xf32>
    %635 = arith.mulf %632, %634 : vector<2x256xf32>
    %c74 = arith.constant 74 : index
    %c0_444 = arith.constant 0 : index
    %636 = vector.load %arg39[%c74, %c0_444] : memref<98x256xf32, #tpu.memory_space<vmem>>, vector<2x256xf32>
    tpu.vector_store %arg39[%c74, %c0_444], %635 {strides = array<i32>} : memref<98x256xf32, #tpu.memory_space<vmem>>, vector<2x256xf32>,
    %c0_445 = arith.constant 0 : index
    %c83 = arith.constant 83 : index
    %637 = vector.load %arg38[%c0_445, %c83] : memref<2x358xf32, #tpu.memory_space<vmem>>, vector<2x256xf32>
    %c38_446 = arith.constant 38 : index
    %c0_447 = arith.constant 0 : index
    %638 = vector.load %arg20[%c38_446, %c0_447] : memref<49x256xf32, #tpu.memory_space<vmem>>, vector<1x256xf32>
    %639 = vector.broadcast %638 : vector<1x256xf32> to vector<2x256xf32>
    %640 = arith.mulf %637, %639 : vector<2x256xf32>
    %c76 = arith.constant 76 : index
    %c0_448 = arith.constant 0 : index
    %641 = vector.load %arg39[%c76, %c0_448] : memref<98x256xf32, #tpu.memory_space<vmem>>, vector<2x256xf32>
    tpu.vector_store %arg39[%c76, %c0_448], %640 {strides = array<i32>} : memref<98x256xf32, #tpu.memory_space<vmem>>, vector<2x256xf32>,
    %c0_449 = arith.constant 0 : index
    %c84 = arith.constant 84 : index
    %642 = vector.load %arg38[%c0_449, %c84] : memref<2x358xf32, #tpu.memory_space<vmem>>, vector<2x256xf32>
    %c39 = arith.constant 39 : index
    %c0_450 = arith.constant 0 : index
    %643 = vector.load %arg20[%c39, %c0_450] : memref<49x256xf32, #tpu.memory_space<vmem>>, vector<1x256xf32>
    %644 = vector.broadcast %643 : vector<1x256xf32> to vector<2x256xf32>
    %645 = arith.mulf %642, %644 : vector<2x256xf32>
    %c78 = arith.constant 78 : index
    %c0_451 = arith.constant 0 : index
    %646 = vector.load %arg39[%c78, %c0_451] : memref<98x256xf32, #tpu.memory_space<vmem>>, vector<2x256xf32>
    tpu.vector_store %arg39[%c78, %c0_451], %645 {strides = array<i32>} : memref<98x256xf32, #tpu.memory_space<vmem>>, vector<2x256xf32>,
    %c0_452 = arith.constant 0 : index
    %c85 = arith.constant 85 : index
    %647 = vector.load %arg38[%c0_452, %c85] : memref<2x358xf32, #tpu.memory_space<vmem>>, vector<2x256xf32>
    %c40_453 = arith.constant 40 : index
    %c0_454 = arith.constant 0 : index
    %648 = vector.load %arg20[%c40_453, %c0_454] : memref<49x256xf32, #tpu.memory_space<vmem>>, vector<1x256xf32>
    %649 = vector.broadcast %648 : vector<1x256xf32> to vector<2x256xf32>
    %650 = arith.mulf %647, %649 : vector<2x256xf32>
    %c80_455 = arith.constant 80 : index
    %c0_456 = arith.constant 0 : index
    %651 = vector.load %arg39[%c80_455, %c0_456] : memref<98x256xf32, #tpu.memory_space<vmem>>, vector<2x256xf32>
    tpu.vector_store %arg39[%c80_455, %c0_456], %650 {strides = array<i32>} : memref<98x256xf32, #tpu.memory_space<vmem>>, vector<2x256xf32>,
    %c0_457 = arith.constant 0 : index
    %c86 = arith.constant 86 : index
    %652 = vector.load %arg38[%c0_457, %c86] : memref<2x358xf32, #tpu.memory_space<vmem>>, vector<2x256xf32>
    %c41 = arith.constant 41 : index
    %c0_458 = arith.constant 0 : index
    %653 = vector.load %arg20[%c41, %c0_458] : memref<49x256xf32, #tpu.memory_space<vmem>>, vector<1x256xf32>
    %654 = vector.broadcast %653 : vector<1x256xf32> to vector<2x256xf32>
    %655 = arith.mulf %652, %654 : vector<2x256xf32>
    %c82_459 = arith.constant 82 : index
    %c0_460 = arith.constant 0 : index
    %656 = vector.load %arg39[%c82_459, %c0_460] : memref<98x256xf32, #tpu.memory_space<vmem>>, vector<2x256xf32>
    tpu.vector_store %arg39[%c82_459, %c0_460], %655 {strides = array<i32>} : memref<98x256xf32, #tpu.memory_space<vmem>>, vector<2x256xf32>,
    %c0_461 = arith.constant 0 : index
    %c96 = arith.constant 96 : index
    %657 = vector.load %arg38[%c0_461, %c96] : memref<2x358xf32, #tpu.memory_space<vmem>>, vector<2x256xf32>
    %c42_462 = arith.constant 42 : index
    %c0_463 = arith.constant 0 : index
    %658 = vector.load %arg20[%c42_462, %c0_463] : memref<49x256xf32, #tpu.memory_space<vmem>>, vector<1x256xf32>
    %659 = vector.broadcast %658 : vector<1x256xf32> to vector<2x256xf32>
    %660 = arith.mulf %657, %659 : vector<2x256xf32>
    %c84_464 = arith.constant 84 : index
    %c0_465 = arith.constant 0 : index
    %661 = vector.load %arg39[%c84_464, %c0_465] : memref<98x256xf32, #tpu.memory_space<vmem>>, vector<2x256xf32>
    tpu.vector_store %arg39[%c84_464, %c0_465], %660 {strides = array<i32>} : memref<98x256xf32, #tpu.memory_space<vmem>>, vector<2x256xf32>,
    %c0_466 = arith.constant 0 : index
    %c97 = arith.constant 97 : index
    %662 = vector.load %arg38[%c0_466, %c97] : memref<2x358xf32, #tpu.memory_space<vmem>>, vector<2x256xf32>
    %c43 = arith.constant 43 : index
    %c0_467 = arith.constant 0 : index
    %663 = vector.load %arg20[%c43, %c0_467] : memref<49x256xf32, #tpu.memory_space<vmem>>, vector<1x256xf32>
    %664 = vector.broadcast %663 : vector<1x256xf32> to vector<2x256xf32>
    %665 = arith.mulf %662, %664 : vector<2x256xf32>
    %c86_468 = arith.constant 86 : index
    %c0_469 = arith.constant 0 : index
    %666 = vector.load %arg39[%c86_468, %c0_469] : memref<98x256xf32, #tpu.memory_space<vmem>>, vector<2x256xf32>
    tpu.vector_store %arg39[%c86_468, %c0_469], %665 {strides = array<i32>} : memref<98x256xf32, #tpu.memory_space<vmem>>, vector<2x256xf32>,
    %c0_470 = arith.constant 0 : index
    %c98 = arith.constant 98 : index
    %667 = vector.load %arg38[%c0_470, %c98] : memref<2x358xf32, #tpu.memory_space<vmem>>, vector<2x256xf32>
    %c44_471 = arith.constant 44 : index
    %c0_472 = arith.constant 0 : index
    %668 = vector.load %arg20[%c44_471, %c0_472] : memref<49x256xf32, #tpu.memory_space<vmem>>, vector<1x256xf32>
    %669 = vector.broadcast %668 : vector<1x256xf32> to vector<2x256xf32>
    %670 = arith.mulf %667, %669 : vector<2x256xf32>
    %c88 = arith.constant 88 : index
    %c0_473 = arith.constant 0 : index
    %671 = vector.load %arg39[%c88, %c0_473] : memref<98x256xf32, #tpu.memory_space<vmem>>, vector<2x256xf32>
    tpu.vector_store %arg39[%c88, %c0_473], %670 {strides = array<i32>} : memref<98x256xf32, #tpu.memory_space<vmem>>, vector<2x256xf32>,
    %c0_474 = arith.constant 0 : index
    %c99 = arith.constant 99 : index
    %672 = vector.load %arg38[%c0_474, %c99] : memref<2x358xf32, #tpu.memory_space<vmem>>, vector<2x256xf32>
    %c45 = arith.constant 45 : index
    %c0_475 = arith.constant 0 : index
    %673 = vector.load %arg20[%c45, %c0_475] : memref<49x256xf32, #tpu.memory_space<vmem>>, vector<1x256xf32>
    %674 = vector.broadcast %673 : vector<1x256xf32> to vector<2x256xf32>
    %675 = arith.mulf %672, %674 : vector<2x256xf32>
    %c90 = arith.constant 90 : index
    %c0_476 = arith.constant 0 : index
    %676 = vector.load %arg39[%c90, %c0_476] : memref<98x256xf32, #tpu.memory_space<vmem>>, vector<2x256xf32>
    tpu.vector_store %arg39[%c90, %c0_476], %675 {strides = array<i32>} : memref<98x256xf32, #tpu.memory_space<vmem>>, vector<2x256xf32>,
    %c0_477 = arith.constant 0 : index
    %c100 = arith.constant 100 : index
    %677 = vector.load %arg38[%c0_477, %c100] : memref<2x358xf32, #tpu.memory_space<vmem>>, vector<2x256xf32>
    %c46_478 = arith.constant 46 : index
    %c0_479 = arith.constant 0 : index
    %678 = vector.load %arg20[%c46_478, %c0_479] : memref<49x256xf32, #tpu.memory_space<vmem>>, vector<1x256xf32>
    %679 = vector.broadcast %678 : vector<1x256xf32> to vector<2x256xf32>
    %680 = arith.mulf %677, %679 : vector<2x256xf32>
    %c92 = arith.constant 92 : index
    %c0_480 = arith.constant 0 : index
    %681 = vector.load %arg39[%c92, %c0_480] : memref<98x256xf32, #tpu.memory_space<vmem>>, vector<2x256xf32>
    tpu.vector_store %arg39[%c92, %c0_480], %680 {strides = array<i32>} : memref<98x256xf32, #tpu.memory_space<vmem>>, vector<2x256xf32>,
    %c0_481 = arith.constant 0 : index
    %c101 = arith.constant 101 : index
    %682 = vector.load %arg38[%c0_481, %c101] : memref<2x358xf32, #tpu.memory_space<vmem>>, vector<2x256xf32>
    %c47 = arith.constant 47 : index
    %c0_482 = arith.constant 0 : index
    %683 = vector.load %arg20[%c47, %c0_482] : memref<49x256xf32, #tpu.memory_space<vmem>>, vector<1x256xf32>
    %684 = vector.broadcast %683 : vector<1x256xf32> to vector<2x256xf32>
    %685 = arith.mulf %682, %684 : vector<2x256xf32>
    %c94 = arith.constant 94 : index
    %c0_483 = arith.constant 0 : index
    %686 = vector.load %arg39[%c94, %c0_483] : memref<98x256xf32, #tpu.memory_space<vmem>>, vector<2x256xf32>
    tpu.vector_store %arg39[%c94, %c0_483], %685 {strides = array<i32>} : memref<98x256xf32, #tpu.memory_space<vmem>>, vector<2x256xf32>,
    %c0_484 = arith.constant 0 : index
    %c102 = arith.constant 102 : index
    %687 = vector.load %arg38[%c0_484, %c102] : memref<2x358xf32, #tpu.memory_space<vmem>>, vector<2x256xf32>
    %c48_485 = arith.constant 48 : index
    %c0_486 = arith.constant 0 : index
    %688 = vector.load %arg20[%c48_485, %c0_486] : memref<49x256xf32, #tpu.memory_space<vmem>>, vector<1x256xf32>
    %689 = vector.broadcast %688 : vector<1x256xf32> to vector<2x256xf32>
    %690 = arith.mulf %687, %689 : vector<2x256xf32>
    %c96_487 = arith.constant 96 : index
    %c0_488 = arith.constant 0 : index
    %691 = vector.load %arg39[%c96_487, %c0_488] : memref<98x256xf32, #tpu.memory_space<vmem>>, vector<2x256xf32>
    tpu.vector_store %arg39[%c96_487, %c0_488], %690 {strides = array<i32>} : memref<98x256xf32, #tpu.memory_space<vmem>>, vector<2x256xf32>,
    %c0_489 = arith.constant 0 : index
    %c0_490 = arith.constant 0 : index
    %692 = vector.load %arg23[%c0_489, %c0_490] : memref<3x98xf32, #tpu.memory_space<vmem>>, vector<3x98xf32>
    %c0_491 = arith.constant 0 : index
    %c0_492 = arith.constant 0 : index
    %693 = vector.load %arg39[%c0_491, %c0_492] : memref<98x256xf32, #tpu.memory_space<vmem>>, vector<98x256xf32>
    %cst_493 = arith.constant dense<0.000000e+00> : vector<3x256xf32>
    %694 = tpu.matmul %692, %693, %cst_493 {dimension_numbers = #tpu.dot_dimension_numbers<[1], [0], [0], [1], [0, 0, 1, 1], [], []>} : vector<3x98xf32>, vector<98x256xf32>, vector<3x256xf32> -> vector<3x256xf32>
    %c0_494 = arith.constant 0 : index
    %c0_495 = arith.constant 0 : index
    %695 = vector.load %arg24[%c0_494, %c0_495] : memref<3x1xf32, #tpu.memory_space<vmem>>, vector<3x1xf32>
    %696 = vector.broadcast %695 : vector<3x1xf32> to vector<3x256xf32>
    %697 = arith.addf %694, %696 : vector<3x256xf32>
    %cst_496 = arith.constant 0.000000e+00 : f32
    %698 = vector.broadcast %cst_496 : f32 to vector<3x256xf32>
    %699 = arith.subf %698, %697 : vector<3x256xf32>
    %700 = math.exp %699 : vector<3x256xf32>
    %cst_497 = arith.constant 1.000000e+00 : f32
    %701 = vector.broadcast %cst_497 : f32 to vector<3x256xf32>
    %702 = arith.addf %701, %700 : vector<3x256xf32>
    %cst_498 = arith.constant 1.000000e+00 : f32
    %703 = vector.broadcast %cst_498 : f32 to vector<3x256xf32>
    %704 = arith.divf %703, %702 : vector<3x256xf32>
    %705 = vector.extract_strided_slice %704 {offsets = [0, 0], sizes = [1, 256], strides = [1, 1]} : vector<3x256xf32> to vector<1x256xf32>
    %706 = vector.broadcast %705 : vector<1x256xf32> to vector<4x256xf32>
    %707 = arith.mulf %424, %706 : vector<4x256xf32>
    %708 = vector.extract_strided_slice %704 {offsets = [1, 0], sizes = [1, 256], strides = [1, 1]} : vector<3x256xf32> to vector<1x256xf32>
    %709 = vector.broadcast %708 : vector<1x256xf32> to vector<4x256xf32>
    %710 = arith.mulf %428, %709 : vector<4x256xf32>
    %711 = arith.addf %707, %710 : vector<4x256xf32>
    %712 = vector.extract_strided_slice %704 {offsets = [2, 0], sizes = [1, 256], strides = [1, 1]} : vector<3x256xf32> to vector<1x256xf32>
    %713 = vector.broadcast %712 : vector<1x256xf32> to vector<4x256xf32>
    %714 = arith.mulf %432, %713 : vector<4x256xf32>
    %715 = arith.addf %711, %714 : vector<4x256xf32>
    %c0_499 = arith.constant 0 : index
    %c0_500 = arith.constant 0 : index
    %716 = vector.load %arg25[%c0_499, %c0_500] : memref<12x4xf32, #tpu.memory_space<vmem>>, vector<12x4xf32>
    %cst_501 = arith.constant dense<0.000000e+00> : vector<12x256xf32>
    %717 = tpu.matmul %716, %715, %cst_501 {dimension_numbers = #tpu.dot_dimension_numbers<[1], [0], [0], [1], [0, 0, 1, 1], [], []>} : vector<12x4xf32>, vector<4x256xf32>, vector<12x256xf32> -> vector<12x256xf32>
    %c0_502 = arith.constant 0 : index
    %c0_503 = arith.constant 0 : index
    %718 = vector.load %arg26[%c0_502, %c0_503] : memref<12x1xf32, #tpu.memory_space<vmem>>, vector<12x1xf32>
    %719 = vector.broadcast %718 : vector<12x1xf32> to vector<12x256xf32>
    %720 = arith.addf %717, %719 : vector<12x256xf32>
    %721 = arith.mulf %720, %25 : vector<12x256xf32>
    %722 = arith.addf %25, %721 : vector<12x256xf32>
    %723 = arith.addf %722, %419 : vector<12x256xf32>
    %c0_504 = arith.constant 0 : index
    %c0_505 = arith.constant 0 : index
    %724 = vector.load %arg31[%c0_504, %c0_505] : memref<12x1xf32, #tpu.memory_space<vmem>>, vector<12x1xf32>
    %c0_506 = arith.constant 0 : index
    %c0_507 = arith.constant 0 : index
    %725 = vector.load %arg32[%c0_506, %c0_507] : memref<12x1xf32, #tpu.memory_space<vmem>>, vector<12x1xf32>
    %cst_508 = arith.constant dense<0.000000e+00> : vector<256xf32>
    %726 = vector.multi_reduction <add>, %723, %cst_508 [0] : vector<12x256xf32> to vector<256xf32>
    %727 = vector.shape_cast %726 : vector<256xf32> to vector<1x256xf32>
    %cst_509 = arith.constant 1.200000e+01 : f32
    %728 = vector.broadcast %cst_509 : f32 to vector<1x256xf32>
    %729 = arith.divf %727, %728 : vector<1x256xf32>
    %730 = vector.broadcast %729 : vector<1x256xf32> to vector<12x256xf32>
    %731 = arith.subf %723, %730 : vector<12x256xf32>
    %732 = arith.mulf %731, %731 : vector<12x256xf32>
    %cst_510 = arith.constant dense<0.000000e+00> : vector<256xf32>
    %733 = vector.multi_reduction <add>, %732, %cst_510 [0] : vector<12x256xf32> to vector<256xf32>
    %734 = vector.shape_cast %733 : vector<256xf32> to vector<1x256xf32>
    %cst_511 = arith.constant 1.200000e+01 : f32
    %735 = vector.broadcast %cst_511 : f32 to vector<1x256xf32>
    %736 = arith.divf %734, %735 : vector<1x256xf32>
    %737 = vector.broadcast %729 : vector<1x256xf32> to vector<12x256xf32>
    %738 = arith.subf %723, %737 : vector<12x256xf32>
    %cst_512 = arith.constant 9.99999974E-6 : f32
    %739 = vector.broadcast %cst_512 : f32 to vector<1x256xf32>
    %740 = arith.addf %736, %739 : vector<1x256xf32>
    %741 = math.rsqrt %740 : vector<1x256xf32>
    %742 = vector.broadcast %741 : vector<1x256xf32> to vector<12x256xf32>
    %743 = arith.mulf %738, %742 : vector<12x256xf32>
    %744 = vector.broadcast %724 : vector<12x1xf32> to vector<12x256xf32>
    %745 = arith.mulf %743, %744 : vector<12x256xf32>
    %746 = vector.broadcast %725 : vector<12x1xf32> to vector<12x256xf32>
    %747 = arith.addf %745, %746 : vector<12x256xf32>
    %c0_513 = arith.constant 0 : index
    %c0_514 = arith.constant 0 : index
    %748 = vector.load %arg33[%c0_513, %c0_514] : memref<12x12xf32, #tpu.memory_space<vmem>>, vector<12x12xf32>
    %cst_515 = arith.constant dense<0.000000e+00> : vector<12x256xf32>
    %749 = tpu.matmul %748, %747, %cst_515 {dimension_numbers = #tpu.dot_dimension_numbers<[1], [0], [0], [1], [0, 0, 1, 1], [], []>} : vector<12x12xf32>, vector<12x256xf32>, vector<12x256xf32> -> vector<12x256xf32>
    %c0_516 = arith.constant 0 : index
    %c0_517 = arith.constant 0 : index
    %750 = vector.load %arg34[%c0_516, %c0_517] : memref<12x1xf32, #tpu.memory_space<vmem>>, vector<12x1xf32>
    %751 = vector.broadcast %750 : vector<12x1xf32> to vector<12x256xf32>
    %752 = arith.addf %749, %751 : vector<12x256xf32>
    %cst_518 = arith.constant 5.000000e-01 : f32
    %753 = vector.broadcast %cst_518 : f32 to vector<12x256xf32>
    %754 = arith.mulf %753, %752 : vector<12x256xf32>
    %cst_519 = arith.constant 0.707106769 : f32
    %755 = vector.broadcast %cst_519 : f32 to vector<12x256xf32>
    %756 = arith.mulf %752, %755 : vector<12x256xf32>
    %cst_520 = arith.constant 0.000000e+00 : f32
    %757 = vector.broadcast %cst_520 : f32 to vector<12x256xf32>
    %758 = arith.cmpf oge, %756, %757 : vector<12x256xf32>
    %cst_521 = arith.constant 1.000000e+00 : f32
    %cst_522 = arith.constant -1.000000e+00 : f32
    %759 = vector.broadcast %cst_521 : f32 to vector<12x256xf32>
    %760 = vector.broadcast %cst_522 : f32 to vector<12x256xf32>
    %761 = arith.select %758, %759, %760 : vector<12x256xi1>, vector<12x256xf32>
    %762 = math.absf %756 : vector<12x256xf32>
    %cst_523 = arith.constant 0.327591091 : f32
    %763 = vector.broadcast %cst_523 : f32 to vector<12x256xf32>
    %764 = arith.mulf %763, %762 : vector<12x256xf32>
    %cst_524 = arith.constant 1.000000e+00 : f32
    %765 = vector.broadcast %cst_524 : f32 to vector<12x256xf32>
    %766 = arith.addf %765, %764 : vector<12x256xf32>
    %cst_525 = arith.constant 1.000000e+00 : f32
    %767 = vector.broadcast %cst_525 : f32 to vector<12x256xf32>
    %768 = arith.divf %767, %766 : vector<12x256xf32>
    %cst_526 = arith.constant 1.06140542 : f32
    %769 = vector.broadcast %cst_526 : f32 to vector<12x256xf32>
    %770 = arith.mulf %768, %769 : vector<12x256xf32>
    %cst_527 = arith.constant -1.45315206 : f32
    %771 = vector.broadcast %cst_527 : f32 to vector<12x256xf32>
    %772 = arith.addf %771, %770 : vector<12x256xf32>
    %773 = arith.mulf %768, %772 : vector<12x256xf32>
    %cst_528 = arith.constant 1.42141378 : f32
    %774 = vector.broadcast %cst_528 : f32 to vector<12x256xf32>
    %775 = arith.addf %774, %773 : vector<12x256xf32>
    %776 = arith.mulf %768, %775 : vector<12x256xf32>
    %cst_529 = arith.constant -0.284496725 : f32
    %777 = vector.broadcast %cst_529 : f32 to vector<12x256xf32>
    %778 = arith.addf %777, %776 : vector<12x256xf32>
    %779 = arith.mulf %768, %778 : vector<12x256xf32>
    %cst_530 = arith.constant 0.254829586 : f32
    %780 = vector.broadcast %cst_530 : f32 to vector<12x256xf32>
    %781 = arith.addf %780, %779 : vector<12x256xf32>
    %782 = arith.mulf %768, %781 : vector<12x256xf32>
    %cst_531 = arith.constant 0.000000e+00 : f32
    %783 = vector.broadcast %cst_531 : f32 to vector<12x256xf32>
    %784 = arith.subf %783, %762 : vector<12x256xf32>
    %785 = arith.mulf %784, %762 : vector<12x256xf32>
    %786 = math.exp %785 : vector<12x256xf32>
    %787 = arith.mulf %782, %786 : vector<12x256xf32>
    %cst_532 = arith.constant 1.000000e+00 : f32
    %788 = vector.broadcast %cst_532 : f32 to vector<12x256xf32>
    %789 = arith.subf %788, %787 : vector<12x256xf32>
    %790 = arith.mulf %761, %789 : vector<12x256xf32>
    %cst_533 = arith.constant 1.000000e+00 : f32
    %791 = vector.broadcast %cst_533 : f32 to vector<12x256xf32>
    %792 = arith.addf %791, %790 : vector<12x256xf32>
    %793 = arith.mulf %754, %792 : vector<12x256xf32>
    %c0_534 = arith.constant 0 : index
    %c0_535 = arith.constant 0 : index
    %794 = vector.load %arg35[%c0_534, %c0_535] : memref<12x12xf32, #tpu.memory_space<vmem>>, vector<12x12xf32>
    %cst_536 = arith.constant dense<0.000000e+00> : vector<12x256xf32>
    %795 = tpu.matmul %794, %793, %cst_536 {dimension_numbers = #tpu.dot_dimension_numbers<[1], [0], [0], [1], [0, 0, 1, 1], [], []>} : vector<12x12xf32>, vector<12x256xf32>, vector<12x256xf32> -> vector<12x256xf32>
    %c0_537 = arith.constant 0 : index
    %c0_538 = arith.constant 0 : index
    %796 = vector.load %arg36[%c0_537, %c0_538] : memref<12x1xf32, #tpu.memory_space<vmem>>, vector<12x1xf32>
    %797 = vector.broadcast %796 : vector<12x1xf32> to vector<12x256xf32>
    %798 = arith.addf %795, %797 : vector<12x256xf32>
    %799 = arith.addf %747, %798 : vector<12x256xf32>
    %c0_539 = arith.constant 0 : index
    %c0_540 = arith.constant 0 : index
    %c0_541 = arith.constant 0 : index
    %800 = vector.load %arg37[%c0_539, %c0_540, %c0_541] : memref<1x12x256xf32, #tpu.memory_space<vmem>>, vector<1x12x256xf32>
    %801 = vector.shape_cast %800 : vector<1x12x256xf32> to vector<12x256xf32>
    %802 = vector.shape_cast %799 : vector<12x256xf32> to vector<1x12x256xf32>
    tpu.vector_store %arg37[%c0_539, %c0_540, %c0_541], %802 {strides = array<i32>} : memref<1x12x256xf32, #tpu.memory_space<vmem>>, vector<1x12x256xf32>,
    return
  }
  func.func @transform_0(%arg0: i32) -> (i32, i32, i32) {
    %c0_i32 = arith.constant 0 : i32
    %c0_i32_0 = arith.constant 0 : i32
    %c0_i32_1 = arith.constant 0 : i32
    return %arg0, %c0_i32, %c0_i32_0 : i32, i32, i32
  }
  func.func @transform_1(%arg0: i32) -> (i32, i32, i32) {
    %c0_i32 = arith.constant 0 : i32
    %c0_i32_0 = arith.constant 0 : i32
    %c0_i32_1 = arith.constant 0 : i32
    return %arg0, %c0_i32, %c0_i32_0 : i32, i32, i32
  }
  func.func @transform_2(%arg0: i32) -> (i32, i32, i32) {
    %c0_i32 = arith.constant 0 : i32
    %c0_i32_0 = arith.constant 0 : i32
    %c0_i32_1 = arith.constant 0 : i32
    %c0_i32_2 = arith.constant 0 : i32
    return %c0_i32, %c0_i32_0, %c0_i32_1 : i32, i32, i32
  }
  func.func @transform_3(%arg0: i32) -> (i32, i32, i32) {
    %c0_i32 = arith.constant 0 : i32
    %c0_i32_0 = arith.constant 0 : i32
    %c0_i32_1 = arith.constant 0 : i32
    %c0_i32_2 = arith.constant 0 : i32
    return %c0_i32, %c0_i32_0, %c0_i32_1 : i32, i32, i32
  }
  func.func @transform_4(%arg0: i32) -> (i32, i32, i32) {
    %c0_i32 = arith.constant 0 : i32
    %c0_i32_0 = arith.constant 0 : i32
    %c0_i32_1 = arith.constant 0 : i32
    %c0_i32_2 = arith.constant 0 : i32
    return %c0_i32, %c0_i32_0, %c0_i32_1 : i32, i32, i32
  }
  func.func @transform_5(%arg0: i32) -> (i32, i32, i32) {
    %c0_i32 = arith.constant 0 : i32
    %c0_i32_0 = arith.constant 0 : i32
    %c0_i32_1 = arith.constant 0 : i32
    %c0_i32_2 = arith.constant 0 : i32
    return %c0_i32, %c0_i32_0, %c0_i32_1 : i32, i32, i32
  }
  func.func @transform_6(%arg0: i32) -> (i32, i32, i32) {
    %c0_i32 = arith.constant 0 : i32
    %c0_i32_0 = arith.constant 0 : i32
    %c0_i32_1 = arith.constant 0 : i32
    %c0_i32_2 = arith.constant 0 : i32
    return %c0_i32, %c0_i32_0, %c0_i32_1 : i32, i32, i32
  }
  func.func @transform_7(%arg0: i32) -> (i32, i32, i32) {
    %c0_i32 = arith.constant 0 : i32
    %c0_i32_0 = arith.constant 0 : i32
    %c0_i32_1 = arith.constant 0 : i32
    %c0_i32_2 = arith.constant 0 : i32
    return %c0_i32, %c0_i32_0, %c0_i32_1 : i32, i32, i32
  }
  func.func @transform_8(%arg0: i32) -> (i32, i32, i32) {
    %c0_i32 = arith.constant 0 : i32
    %c0_i32_0 = arith.constant 0 : i32
    %c0_i32_1 = arith.constant 0 : i32
    %c0_i32_2 = arith.constant 0 : i32
    return %c0_i32, %c0_i32_0, %c0_i32_1 : i32, i32, i32
  }
  func.func @transform_9(%arg0: i32) -> (i32, i32, i32) {
    %c0_i32 = arith.constant 0 : i32
    %c0_i32_0 = arith.constant 0 : i32
    %c0_i32_1 = arith.constant 0 : i32
    %c0_i32_2 = arith.constant 0 : i32
    return %c0_i32, %c0_i32_0, %c0_i32_1 : i32, i32, i32
  }
  func.func @transform_10(%arg0: i32) -> (i32, i32, i32) {
    %c0_i32 = arith.constant 0 : i32
    %c0_i32_0 = arith.constant 0 : i32
    %c0_i32_1 = arith.constant 0 : i32
    %c0_i32_2 = arith.constant 0 : i32
    return %c0_i32, %c0_i32_0, %c0_i32_1 : i32, i32, i32
  }
  func.func @transform_11(%arg0: i32) -> (i32, i32) {
    %c0_i32 = arith.constant 0 : i32
    %c0_i32_0 = arith.constant 0 : i32
    %c0_i32_1 = arith.constant 0 : i32
    return %c0_i32, %c0_i32_0 : i32, i32
  }
  func.func @transform_12(%arg0: i32) -> (i32, i32) {
    %c0_i32 = arith.constant 0 : i32
    %c0_i32_0 = arith.constant 0 : i32
    %c0_i32_1 = arith.constant 0 : i32
    return %c0_i32, %c0_i32_0 : i32, i32
  }
  func.func @transform_13(%arg0: i32) -> (i32, i32) {
    %c0_i32 = arith.constant 0 : i32
    %c0_i32_0 = arith.constant 0 : i32
    %c0_i32_1 = arith.constant 0 : i32
    return %c0_i32, %c0_i32_0 : i32, i32
  }
  func.func @transform_14(%arg0: i32) -> (i32, i32) {
    %c0_i32 = arith.constant 0 : i32
    %c0_i32_0 = arith.constant 0 : i32
    %c0_i32_1 = arith.constant 0 : i32
    return %c0_i32, %c0_i32_0 : i32, i32
  }
  func.func @transform_15(%arg0: i32) -> (i32, i32) {
    %c0_i32 = arith.constant 0 : i32
    %c0_i32_0 = arith.constant 0 : i32
    %c0_i32_1 = arith.constant 0 : i32
    return %c0_i32, %c0_i32_0 : i32, i32
  }
  func.func @transform_16(%arg0: i32) -> (i32, i32) {
    %c0_i32 = arith.constant 0 : i32
    %c0_i32_0 = arith.constant 0 : i32
    %c0_i32_1 = arith.constant 0 : i32
    return %c0_i32, %c0_i32_0 : i32, i32
  }
  func.func @transform_17(%arg0: i32) -> (i32, i32) {
    %c0_i32 = arith.constant 0 : i32
    %c0_i32_0 = arith.constant 0 : i32
    %c0_i32_1 = arith.constant 0 : i32
    return %c0_i32, %c0_i32_0 : i32, i32
  }
  func.func @transform_18(%arg0: i32) -> (i32, i32, i32) {
    %c0_i32 = arith.constant 0 : i32
    %c0_i32_0 = arith.constant 0 : i32
    %c0_i32_1 = arith.constant 0 : i32
    %c0_i32_2 = arith.constant 0 : i32
    return %c0_i32, %c0_i32_0, %c0_i32_1 : i32, i32, i32
  }
  func.func @transform_19(%arg0: i32) -> (i32, i32) {
    %c0_i32 = arith.constant 0 : i32
    %c0_i32_0 = arith.constant 0 : i32
    %c0_i32_1 = arith.constant 0 : i32
    return %c0_i32, %c0_i32_0 : i32, i32
  }
  func.func @transform_20(%arg0: i32) -> (i32, i32) {
    %c0_i32 = arith.constant 0 : i32
    %c0_i32_0 = arith.constant 0 : i32
    %c0_i32_1 = arith.constant 0 : i32
    return %c0_i32, %c0_i32_0 : i32, i32
  }
  func.func @transform_21(%arg0: i32) -> (i32, i32) {
    %c0_i32 = arith.constant 0 : i32
    %c0_i32_0 = arith.constant 0 : i32
    %c0_i32_1 = arith.constant 0 : i32
    return %c0_i32, %c0_i32_0 : i32, i32
  }
  func.func @transform_22(%arg0: i32) -> (i32, i32) {
    %c0_i32 = arith.constant 0 : i32
    %c0_i32_0 = arith.constant 0 : i32
    %c0_i32_1 = arith.constant 0 : i32
    return %c0_i32, %c0_i32_0 : i32, i32
  }
  func.func @transform_23(%arg0: i32) -> (i32, i32) {
    %c0_i32 = arith.constant 0 : i32
    %c0_i32_0 = arith.constant 0 : i32
    %c0_i32_1 = arith.constant 0 : i32
    return %c0_i32, %c0_i32_0 : i32, i32
  }
  func.func @transform_24(%arg0: i32) -> (i32, i32) {
    %c0_i32 = arith.constant 0 : i32
    %c0_i32_0 = arith.constant 0 : i32
    %c0_i32_1 = arith.constant 0 : i32
    return %c0_i32, %c0_i32_0 : i32, i32
  }
  func.func @transform_25(%arg0: i32) -> (i32, i32) {
    %c0_i32 = arith.constant 0 : i32
    %c0_i32_0 = arith.constant 0 : i32
    %c0_i32_1 = arith.constant 0 : i32
    return %c0_i32, %c0_i32_0 : i32, i32
  }
  func.func @transform_26(%arg0: i32) -> (i32, i32) {
    %c0_i32 = arith.constant 0 : i32
    %c0_i32_0 = arith.constant 0 : i32
    %c0_i32_1 = arith.constant 0 : i32
    return %c0_i32, %c0_i32_0 : i32, i32
  }
  func.func @transform_27(%arg0: i32) -> (i32, i32) {
    %c0_i32 = arith.constant 0 : i32
    %c0_i32_0 = arith.constant 0 : i32
    %c0_i32_1 = arith.constant 0 : i32
    return %c0_i32, %c0_i32_0 : i32, i32
  }
  func.func @transform_28(%arg0: i32) -> (i32, i32) {
    %c0_i32 = arith.constant 0 : i32
    %c0_i32_0 = arith.constant 0 : i32
    %c0_i32_1 = arith.constant 0 : i32
    return %c0_i32, %c0_i32_0 : i32, i32
  }
  func.func @transform_29(%arg0: i32) -> (i32, i32) {
    %c0_i32 = arith.constant 0 : i32
    %c0_i32_0 = arith.constant 0 : i32
    %c0_i32_1 = arith.constant 0 : i32
    return %c0_i32, %c0_i32_0 : i32, i32
  }
  func.func @transform_30(%arg0: i32) -> (i32, i32) {
    %c0_i32 = arith.constant 0 : i32
    %c0_i32_0 = arith.constant 0 : i32
    %c0_i32_1 = arith.constant 0 : i32
    return %c0_i32, %c0_i32_0 : i32, i32
  }
  func.func @transform_31(%arg0: i32) -> (i32, i32) {
    %c0_i32 = arith.constant 0 : i32
    %c0_i32_0 = arith.constant 0 : i32
    %c0_i32_1 = arith.constant 0 : i32
    return %c0_i32, %c0_i32_0 : i32, i32
  }
  func.func @transform_32(%arg0: i32) -> (i32, i32) {
    %c0_i32 = arith.constant 0 : i32
    %c0_i32_0 = arith.constant 0 : i32
    %c0_i32_1 = arith.constant 0 : i32
    return %c0_i32, %c0_i32_0 : i32, i32
  }
  func.func @transform_33(%arg0: i32) -> (i32, i32) {
    %c0_i32 = arith.constant 0 : i32
    %c0_i32_0 = arith.constant 0 : i32
    %c0_i32_1 = arith.constant 0 : i32
    return %c0_i32, %c0_i32_0 : i32, i32
  }
  func.func @transform_34(%arg0: i32) -> (i32, i32) {
    %c0_i32 = arith.constant 0 : i32
    %c0_i32_0 = arith.constant 0 : i32
    %c0_i32_1 = arith.constant 0 : i32
    return %c0_i32, %c0_i32_0 : i32, i32
  }
  func.func @transform_35(%arg0: i32) -> (i32, i32) {
    %c0_i32 = arith.constant 0 : i32
    %c0_i32_0 = arith.constant 0 : i32
    %c0_i32_1 = arith.constant 0 : i32
    return %c0_i32, %c0_i32_0 : i32, i32
  }
  func.func @transform_36(%arg0: i32) -> (i32, i32, i32) {
    %c0_i32 = arith.constant 0 : i32
    %c0_i32_0 = arith.constant 0 : i32
    %c0_i32_1 = arith.constant 0 : i32
    return %arg0, %c0_i32, %c0_i32_0 : i32, i32, i32
  }
}

</mosaic_0001>

<llo_original>
// kernel: fastformer_forward.1
$region0: #{fastformer_forward.1}
  #allocation0 [shape = 'u32[]', space=smem, size = 0x4, offset = 0x4, fixed_abs, tag = 'smem constant byte address 0x4 - core index']
  #allocation1 [shape = 'u32[144,128]{1,0:T(1,128)}', space=vmem, size = 0x12000, scoped, tag = 'internal scratch']
  #allocation2 [shape = 'f32[2,358]{1,0:T(2,128)}', space=vmem, size = 0xc00, scoped, tag = 'scratch operand']
  #allocation3 [shape = 'f32[98,256]{1,0:T(8,128)}', space=vmem, size = 0x1a000, scoped, tag = 'scratch operand']
  %s0 = inlined_call_operand.smem [shape: u32[37], index: -1, kind: input, shape index: {}]
  %s1 = sld [smem:[%s0]]
  %s2 = scalar_lea.smem %s0, 1
  %s3 = sld [smem:[%s2]]
  %s4 = scalar_lea.smem %s0, 2
  %s5 = sld [smem:[%s4]]
  %s6 = scalar_lea.smem %s0, 3
  %s7 = sld [smem:[%s6]]
  %s8 = scalar_lea.smem %s0, 4
  %s9 = sld [smem:[%s8]]
  %s10 = scalar_lea.smem %s0, 5
  %s11 = sld [smem:[%s10]]
  %s12 = scalar_lea.smem %s0, 6
  %s13 = sld [smem:[%s12]]
  %s14 = scalar_lea.smem %s0, 7
  %s15 = sld [smem:[%s14]]
  %s16 = scalar_lea.smem %s0, 8
  %s17 = sld [smem:[%s16]]
  %s18 = scalar_lea.smem %s0, 9
  %s19 = sld [smem:[%s18]]
  %s20 = scalar_lea.smem %s0, 10
  %s21 = sld [smem:[%s20]]
  %s22 = scalar_lea.smem %s0, 11
  %s23 = sld [smem:[%s22]]
  %s24 = scalar_lea.smem %s0, 12
  %s25 = sld [smem:[%s24]]
  %s26 = scalar_lea.smem %s0, 13
  %s27 = sld [smem:[%s26]]
  %s28 = scalar_lea.smem %s0, 14
  %s29 = sld [smem:[%s28]]
  %s30 = scalar_lea.smem %s0, 15
  %s31 = sld [smem:[%s30]]
  %s32 = scalar_lea.smem %s0, 16
  %s33 = sld [smem:[%s32]]
  %s34 = scalar_lea.smem %s0, 17
  %s35 = sld [smem:[%s34]]
  %s36 = scalar_lea.smem %s0, 18
  %s37 = sld [smem:[%s36]]
  %s38 = scalar_lea.smem %s0, 19
  %s39 = sld [smem:[%s38]]
  %s40 = scalar_lea.smem %s0, 20
  %s41 = sld [smem:[%s40]]
  %s42 = scalar_lea.smem %s0, 21
  %s43 = sld [smem:[%s42]]
  %s44 = scalar_lea.smem %s0, 22
  %s45 = sld [smem:[%s44]]
  %s46 = scalar_lea.smem %s0, 23
  %s47 = sld [smem:[%s46]]
  %s48 = scalar_lea.smem %s0, 24
  %s49 = sld [smem:[%s48]]
  %s50 = scalar_lea.smem %s0, 25
  %s51 = sld [smem:[%s50]]
  %s52 = scalar_lea.smem %s0, 26
  %s53 = sld [smem:[%s52]]
  %s54 = scalar_lea.smem %s0, 27
  %s55 = sld [smem:[%s54]]
  %s56 = scalar_lea.smem %s0, 28
  %s57 = sld [smem:[%s56]]
  %s58 = scalar_lea.smem %s0, 29
  %s59 = sld [smem:[%s58]]
  %s60 = scalar_lea.smem %s0, 30
  %s61 = sld [smem:[%s60]]
  %s62 = scalar_lea.smem %s0, 31
  %s63 = sld [smem:[%s62]]
  %s64 = scalar_lea.smem %s0, 32
  %s65 = sld [smem:[%s64]]
  %s66 = scalar_lea.smem %s0, 33
  %s67 = sld [smem:[%s66]]
  %s68 = scalar_lea.smem %s0, 34
  %s69 = sld [smem:[%s68]]
  %s70 = scalar_lea.smem %s0, 35
  %s71 = sld [smem:[%s70]]
  %s72 = scalar_lea.smem %s0, 36
  %s73 = sld [smem:[%s72]]
  %s74 = sld [smem:[#allocation0]]
  $region177: #{fastformer_forward.1} parent=0
    _
  %s76 = ssub.s32 1, %s74
  %s77 = scalar_select 0, %s76, %s74
  loop: start=0, step=1, limit=4
  $region2: #{fastformer_forward.1} parent=0 // loop_pre_header
    _
  $region3: #{fastformer_forward.1} parent=0 // loop_header
    %s79 = sphi 0, %s83
    %p80 = scmp.ge.s32.totalorder %s79, 4
    %s89 = sphi 0, %s91
    %s92 = sphi 0, %s89
    %s93 = sphi 0, %s92
    %s109 = sphi 0, %s93
    %s115 = sphi 0, %s117
    %s118 = sphi 0, %s115
    %s119 = sphi 0, %s118
    %s135 = sphi 0, %s119
    %s139 = sphi 0, %s139
    %s141 = sphi 0, %s139
    %s142 = sphi 0, %s141
    %s156 = sphi 0, %s142
    %s160 = sphi 0, %s160
    %s162 = sphi 0, %s160
    %s163 = sphi 0, %s162
    %s177 = sphi 0, %s163
    %s181 = sphi 0, %s181
    %s183 = sphi 0, %s181
    %s184 = sphi 0, %s183
    %s198 = sphi 0, %s184
    %s202 = sphi 0, %s202
    %s204 = sphi 0, %s202
    %s205 = sphi 0, %s204
    %s219 = sphi 0, %s205
    %s223 = sphi 0, %s223
    %s225 = sphi 0, %s223
    %s226 = sphi 0, %s225
    %s240 = sphi 0, %s226
    %s244 = sphi 0, %s244
    %s246 = sphi 0, %s244
    %s247 = sphi 0, %s246
    %s261 = sphi 0, %s247
    %s265 = sphi 0, %s265
    %s267 = sphi 0, %s265
    %s268 = sphi 0, %s267
    %s282 = sphi 0, %s268
    %s286 = sphi 0, %s286
    %s288 = sphi 0, %s286
    %s289 = sphi 0, %s288
    %s303 = sphi 0, %s289
    %s307 = sphi 0, %s307
    %s309 = sphi 0, %s307
    %s310 = sphi 0, %s309
    %s324 = sphi 0, %s310
    %s328 = sphi 0, %s328
    %s330 = sphi 0, %s328
    %s331 = sphi 0, %s330
    %s345 = sphi 0, %s331
    %s349 = sphi 0, %s349
    %s351 = sphi 0, %s349
    %s352 = sphi 0, %s351
    %s366 = sphi 0, %s352
    %s370 = sphi 0, %s370
    %s372 = sphi 0, %s370
    %s373 = sphi 0, %s372
    %s387 = sphi 0, %s373
    %s391 = sphi 0, %s391
    %s393 = sphi 0, %s391
    %s394 = sphi 0, %s393
    %s408 = sphi 0, %s394
    %s412 = sphi 0, %s412
    %s414 = sphi 0, %s412
    %s415 = sphi 0, %s414
    %s429 = sphi 0, %s415
    %s433 = sphi 0, %s433
    %s435 = sphi 0, %s433
    %s436 = sphi 0, %s435
    %s450 = sphi 0, %s436
    %s454 = sphi 0, %s454
    %s456 = sphi 0, %s454
    %s457 = sphi 0, %s456
    %s471 = sphi 0, %s457
    %s475 = sphi 0, %s475
    %s477 = sphi 0, %s475
    %s478 = sphi 0, %s477
    %s492 = sphi 0, %s478
    %s496 = sphi 0, %s496
    %s498 = sphi 0, %s496
    %s499 = sphi 0, %s498
    %s513 = sphi 0, %s499
    %s517 = sphi 0, %s517
    %s519 = sphi 0, %s517
    %s520 = sphi 0, %s519
    %s534 = sphi 0, %s520
    %s538 = sphi 0, %s538
    %s540 = sphi 0, %s538
    %s541 = sphi 0, %s540
    %s555 = sphi 0, %s541
    %s559 = sphi 0, %s559
    %s561 = sphi 0, %s559
    %s562 = sphi 0, %s561
    %s576 = sphi 0, %s562
    %s580 = sphi 0, %s580
    %s582 = sphi 0, %s580
    %s583 = sphi 0, %s582
    %s597 = sphi 0, %s583
    %s601 = sphi 0, %s601
    %s603 = sphi 0, %s601
    %s604 = sphi 0, %s603
    %s618 = sphi 0, %s604
    %s622 = sphi 0, %s622
    %s624 = sphi 0, %s622
    %s625 = sphi 0, %s624
    %s639 = sphi 0, %s625
    %s643 = sphi 0, %s643
    %s645 = sphi 0, %s643
    %s646 = sphi 0, %s645
    %s660 = sphi 0, %s646
    %s664 = sphi 0, %s664
    %s666 = sphi 0, %s664
    %s667 = sphi 0, %s666
    %s681 = sphi 0, %s667
    %s685 = sphi 0, %s685
    %s687 = sphi 0, %s685
    %s688 = sphi 0, %s687
    %s702 = sphi 0, %s688
    %s706 = sphi 0, %s706
    %s708 = sphi 0, %s706
    %s709 = sphi 0, %s708
    %s723 = sphi 0, %s709
    %s727 = sphi 0, %s727
    %s729 = sphi 0, %s727
    %s730 = sphi 0, %s729
    %s744 = sphi 0, %s730
    %s748 = sphi 0, %s748
    %s750 = sphi 0, %s748
    %s751 = sphi 0, %s750
    %s765 = sphi 0, %s751
    %s769 = sphi 0, %s769
    %s771 = sphi 0, %s769
    %s772 = sphi 0, %s771
    %s786 = sphi 0, %s772
    %s790 = sphi 0, %s790
    %s792 = sphi 0, %s790
    %s793 = sphi 0, %s792
    %s807 = sphi 0, %s793
    %s811 = sphi 0, %s811
    %s813 = sphi 0, %s811
    %s814 = sphi 0, %s813
    %s828 = sphi 0, %s814
    %s832 = sphi 0, %s832
    %s834 = sphi 0, %s832
    %s835 = sphi 0, %s834
    %s849 = sphi 0, %s835
    %s855 = sphi 0, %s857
    %s858 = sphi 0, %s855
    %s859 = sphi 0, %s858
    %s875 = sphi 0, %s859
  $region4: #{fastformer_forward.1} parent=0 // loop_header_branch
    %82 = sbr.rel (%p80) target = $region8
  $region5: #{fastformer_forward.1} parent=0 // loop_body
    %s84 = ssub.s32 %s79, 1
    %s85 = ssub.s32 %s79, 2
    %s86 = sadd.s32 %s79, 1
    %s87 = ssub.s32 %s79, %s86
    %p88 = scmp.eq.s32.totalorder %s87, 0
    %s90 = sadd.s32 %s89, 1
    %s91 = scalar_select %p88, %s89, %s90
    %p94 = pneg %p88
    %p95 = scmp.eq.s32.totalorder %s79, 1
    %p96 = por %p94, %p95
    %p97 = scmp.ne.s32.totalorder %s89, %s92
    %p98 = scmp.eq.s32.totalorder %s79, 0
    %p99 = por %p97, %p98
    %p100 = scmp.ne.s32.totalorder %s89, %s92
    %p101 = scmp.eq.s32.totalorder %s84, 1
    %p102 = por %p100, %p101
    %p103 = scmp.ne.s32.totalorder %s92, %s93
    %p104 = scmp.eq.s32.totalorder %s84, 0
    %p105 = por %p103, %p104
    %p106 = scmp.ne.s32.totalorder %s92, %s93
    %p107 = scmp.eq.s32.totalorder %s85, 1
    %p108 = por %p106, %p107
    %p110 = scmp.ne.s32.totalorder %s93, %s109
    %p111 = scmp.eq.s32.totalorder %s85, 0
    %p112 = por %p110, %p111
    %s113 = ssub.s32 %s79, %s86
    %p114 = scmp.eq.s32.totalorder %s113, 0
    %s116 = sadd.s32 %s115, 1
    %s117 = scalar_select %p114, %s115, %s116
    %p120 = pneg %p114
    %p121 = scmp.eq.s32.totalorder %s79, 1
    %p122 = por %p120, %p121
    %p123 = scmp.ne.s32.totalorder %s115, %s118
    %p124 = scmp.eq.s32.totalorder %s79, 0
    %p125 = por %p123, %p124
    %p126 = scmp.ne.s32.totalorder %s115, %s118
    %p127 = scmp.eq.s32.totalorder %s84, 1
    %p128 = por %p126, %p127
    %p129 = scmp.ne.s32.totalorder %s118, %s119
    %p130 = scmp.eq.s32.totalorder %s84, 0
    %p131 = por %p129, %p130
    %p132 = scmp.ne.s32.totalorder %s118, %s119
    %p133 = scmp.eq.s32.totalorder %s85, 1
    %p134 = por %p132, %p133
    %p136 = scmp.ne.s32.totalorder %s119, %s135
    %p137 = scmp.eq.s32.totalorder %s85, 0
    %p138 = por %p136, %p137
    %s140 = sadd.s32 %s139, 1
    %p143 = scmp.eq.s32.totalorder %s79, 1
    %p144 = scmp.ne.s32.totalorder %s139, %s141
    %p145 = scmp.eq.s32.totalorder %s79, 0
    %p146 = por %p144, %p145
    %p147 = scmp.ne.s32.totalorder %s139, %s141
    %p148 = scmp.eq.s32.totalorder %s84, 1
    %p149 = por %p147, %p148
    %p150 = scmp.ne.s32.totalorder %s141, %s142
    %p151 = scmp.eq.s32.totalorder %s84, 0
    %p152 = por %p150, %p151
    %p153 = scmp.ne.s32.totalorder %s141, %s142
    %p154 = scmp.eq.s32.totalorder %s85, 1
    %p155 = por %p153, %p154
    %p157 = scmp.ne.s32.totalorder %s142, %s156
    %p158 = scmp.eq.s32.totalorder %s85, 0
    %p159 = por %p157, %p158
    %s161 = sadd.s32 %s160, 1
    %p164 = scmp.eq.s32.totalorder %s79, 1
    %p165 = scmp.ne.s32.totalorder %s160, %s162
    %p166 = scmp.eq.s32.totalorder %s79, 0
    %p167 = por %p165, %p166
    %p168 = scmp.ne.s32.totalorder %s160, %s162
    %p169 = scmp.eq.s32.totalorder %s84, 1
    %p170 = por %p168, %p169
    %p171 = scmp.ne.s32.totalorder %s162, %s163
    %p172 = scmp.eq.s32.totalorder %s84, 0
    %p173 = por %p171, %p172
    %p174 = scmp.ne.s32.totalorder %s162, %s163
    %p175 = scmp.eq.s32.totalorder %s85, 1
    %p176 = por %p174, %p175
    %p178 = scmp.ne.s32.totalorder %s163, %s177
    %p179 = scmp.eq.s32.totalorder %s85, 0
    %p180 = por %p178, %p179
    %s182 = sadd.s32 %s181, 1
    %p185 = scmp.eq.s32.totalorder %s79, 1
    %p186 = scmp.ne.s32.totalorder %s181, %s183
    %p187 = scmp.eq.s32.totalorder %s79, 0
    %p188 = por %p186, %p187
    %p189 = scmp.ne.s32.totalorder %s181, %s183
    %p190 = scmp.eq.s32.totalorder %s84, 1
    %p191 = por %p189, %p190
    %p192 = scmp.ne.s32.totalorder %s183, %s184
    %p193 = scmp.eq.s32.totalorder %s84, 0
    %p194 = por %p192, %p193
    %p195 = scmp.ne.s32.totalorder %s183, %s184
    %p196 = scmp.eq.s32.totalorder %s85, 1
    %p197 = por %p195, %p196
    %p199 = scmp.ne.s32.totalorder %s184, %s198
    %p200 = scmp.eq.s32.totalorder %s85, 0
    %p201 = por %p199, %p200
    %s203 = sadd.s32 %s202, 1
    %p206 = scmp.eq.s32.totalorder %s79, 1
    %p207 = scmp.ne.s32.totalorder %s202, %s204
    %p208 = scmp.eq.s32.totalorder %s79, 0
    %p209 = por %p207, %p208
    %p210 = scmp.ne.s32.totalorder %s202, %s204
    %p211 = scmp.eq.s32.totalorder %s84, 1
    %p212 = por %p210, %p211
    %p213 = scmp.ne.s32.totalorder %s204, %s205
    %p214 = scmp.eq.s32.totalorder %s84, 0
    %p215 = por %p213, %p214
    %p216 = scmp.ne.s32.totalorder %s204, %s205
    %p217 = scmp.eq.s32.totalorder %s85, 1
    %p218 = por %p216, %p217
    %p220 = scmp.ne.s32.totalorder %s205, %s219
    %p221 = scmp.eq.s32.totalorder %s85, 0
    %p222 = por %p220, %p221
    %s224 = sadd.s32 %s223, 1
    %p227 = scmp.eq.s32.totalorder %s79, 1
    %p228 = scmp.ne.s32.totalorder %s223, %s225
    %p229 = scmp.eq.s32.totalorder %s79, 0
    %p230 = por %p228, %p229
    %p231 = scmp.ne.s32.totalorder %s223, %s225
    %p232 = scmp.eq.s32.totalorder %s84, 1
    %p233 = por %p231, %p232
    %p234 = scmp.ne.s32.totalorder %s225, %s226
    %p235 = scmp.eq.s32.totalorder %s84, 0
    %p236 = por %p234, %p235
    %p237 = scmp.ne.s32.totalorder %s225, %s226
    %p238 = scmp.eq.s32.totalorder %s85, 1
    %p239 = por %p237, %p238
    %p241 = scmp.ne.s32.totalorder %s226, %s240
    %p242 = scmp.eq.s32.totalorder %s85, 0
    %p243 = por %p241, %p242
    %s245 = sadd.s32 %s244, 1
    %p248 = scmp.eq.s32.totalorder %s79, 1
    %p249 = scmp.ne.s32.totalorder %s244, %s246
    %p250 = scmp.eq.s32.totalorder %s79, 0
    %p251 = por %p249, %p250
    %p252 = scmp.ne.s32.totalorder %s244, %s246
    %p253 = scmp.eq.s32.totalorder %s84, 1
    %p254 = por %p252, %p253
    %p255 = scmp.ne.s32.totalorder %s246, %s247
    %p256 = scmp.eq.s32.totalorder %s84, 0
    %p257 = por %p255, %p256
    %p258 = scmp.ne.s32.totalorder %s246, %s247
    %p259 = scmp.eq.s32.totalorder %s85, 1
    %p260 = por %p258, %p259
    %p262 = scmp.ne.s32.totalorder %s247, %s261
    %p263 = scmp.eq.s32.totalorder %s85, 0
    %p264 = por %p262, %p263
    %s266 = sadd.s32 %s265, 1
    %p269 = scmp.eq.s32.totalorder %s79, 1
    %p270 = scmp.ne.s32.totalorder %s265, %s267
    %p271 = scmp.eq.s32.totalorder %s79, 0
    %p272 = por %p270, %p271
    %p273 = scmp.ne.s32.totalorder %s265, %s267
    %p274 = scmp.eq.s32.totalorder %s84, 1
    %p275 = por %p273, %p274
    %p276 = scmp.ne.s32.totalorder %s267, %s268
    %p277 = scmp.eq.s32.totalorder %s84, 0
    %p278 = por %p276, %p277
    %p279 = scmp.ne.s32.totalorder %s267, %s268
    %p280 = scmp.eq.s32.totalorder %s85, 1
    %p281 = por %p279, %p280
    %p283 = scmp.ne.s32.totalorder %s268, %s282
    %p284 = scmp.eq.s32.totalorder %s85, 0
    %p285 = por %p283, %p284
    %s287 = sadd.s32 %s286, 1
    %p290 = scmp.eq.s32.totalorder %s79, 1
    %p291 = scmp.ne.s32.totalorder %s286, %s288
    %p292 = scmp.eq.s32.totalorder %s79, 0
    %p293 = por %p291, %p292
    %p294 = scmp.ne.s32.totalorder %s286, %s288
    %p295 = scmp.eq.s32.totalorder %s84, 1
    %p296 = por %p294, %p295
    %p297 = scmp.ne.s32.totalorder %s288, %s289
    %p298 = scmp.eq.s32.totalorder %s84, 0
    %p299 = por %p297, %p298
    %p300 = scmp.ne.s32.totalorder %s288, %s289
    %p301 = scmp.eq.s32.totalorder %s85, 1
    %p302 = por %p300, %p301
    %p304 = scmp.ne.s32.totalorder %s289, %s303
    %p305 = scmp.eq.s32.totalorder %s85, 0
    %p306 = por %p304, %p305
    %s308 = sadd.s32 %s307, 1
    %p311 = scmp.eq.s32.totalorder %s79, 1
    %p312 = scmp.ne.s32.totalorder %s307, %s309
    %p313 = scmp.eq.s32.totalorder %s79, 0
    %p314 = por %p312, %p313
    %p315 = scmp.ne.s32.totalorder %s307, %s309
    %p316 = scmp.eq.s32.totalorder %s84, 1
    %p317 = por %p315, %p316
    %p318 = scmp.ne.s32.totalorder %s309, %s310
    %p319 = scmp.eq.s32.totalorder %s84, 0
    %p320 = por %p318, %p319
    %p321 = scmp.ne.s32.totalorder %s309, %s310
    %p322 = scmp.eq.s32.totalorder %s85, 1
    %p323 = por %p321, %p322
    %p325 = scmp.ne.s32.totalorder %s310, %s324
    %p326 = scmp.eq.s32.totalorder %s85, 0
    %p327 = por %p325, %p326
    %s329 = sadd.s32 %s328, 1
    %p332 = scmp.eq.s32.totalorder %s79, 1
    %p333 = scmp.ne.s32.totalorder %s328, %s330
    %p334 = scmp.eq.s32.totalorder %s79, 0
    %p335 = por %p333, %p334
    %p336 = scmp.ne.s32.totalorder %s328, %s330
    %p337 = scmp.eq.s32.totalorder %s84, 1
    %p338 = por %p336, %p337
    %p339 = scmp.ne.s32.totalorder %s330, %s331
    %p340 = scmp.eq.s32.totalorder %s84, 0
    %p341 = por %p339, %p340
    %p342 = scmp.ne.s32.totalorder %s330, %s331
    %p343 = scmp.eq.s32.totalorder %s85, 1
    %p344 = por %p342, %p343
    %p346 = scmp.ne.s32.totalorder %s331, %s345
    %p347 = scmp.eq.s32.totalorder %s85, 0
    %p348 = por %p346, %p347
    %s350 = sadd.s32 %s349, 1
    %p353 = scmp.eq.s32.totalorder %s79, 1
    %p354 = scmp.ne.s32.totalorder %s349, %s351
    %p355 = scmp.eq.s32.totalorder %s79, 0
    %p356 = por %p354, %p355
    %p357 = scmp.ne.s32.totalorder %s349, %s351
    %p358 = scmp.eq.s32.totalorder %s84, 1
    %p359 = por %p357, %p358
    %p360 = scmp.ne.s32.totalorder %s351, %s352
    %p361 = scmp.eq.s32.totalorder %s84, 0
    %p362 = por %p360, %p361
    %p363 = scmp.ne.s32.totalorder %s351, %s352
    %p364 = scmp.eq.s32.totalorder %s85, 1
    %p365 = por %p363, %p364
    %p367 = scmp.ne.s32.totalorder %s352, %s366
    %p368 = scmp.eq.s32.totalorder %s85, 0
    %p369 = por %p367, %p368
    %s371 = sadd.s32 %s370, 1
    %p374 = scmp.eq.s32.totalorder %s79, 1
    %p375 = scmp.ne.s32.totalorder %s370, %s372
    %p376 = scmp.eq.s32.totalorder %s79, 0
    %p377 = por %p375, %p376
    %p378 = scmp.ne.s32.totalorder %s370, %s372
    %p379 = scmp.eq.s32.totalorder %s84, 1
    %p380 = por %p378, %p379
    %p381 = scmp.ne.s32.totalorder %s372, %s373
    %p382 = scmp.eq.s32.totalorder %s84, 0
    %p383 = por %p381, %p382
    %p384 = scmp.ne.s32.totalorder %s372, %s373
    %p385 = scmp.eq.s32.totalorder %s85, 1
    %p386 = por %p384, %p385
    %p388 = scmp.ne.s32.totalorder %s373, %s387
    %p389 = scmp.eq.s32.totalorder %s85, 0
    %p390 = por %p388, %p389
    %s392 = sadd.s32 %s391, 1
    %p395 = scmp.eq.s32.totalorder %s79, 1
    %p396 = scmp.ne.s32.totalorder %s391, %s393
    %p397 = scmp.eq.s32.totalorder %s79, 0
    %p398 = por %p396, %p397
    %p399 = scmp.ne.s32.totalorder %s391, %s393
    %p400 = scmp.eq.s32.totalorder %s84, 1
    %p401 = por %p399, %p400
    %p402 = scmp.ne.s32.totalorder %s393, %s394
    %p403 = scmp.eq.s32.totalorder %s84, 0
    %p404 = por %p402, %p403
    %p405 = scmp.ne.s32.totalorder %s393, %s394
    %p406 = scmp.eq.s32.totalorder %s85, 1
    %p407 = por %p405, %p406
    %p409 = scmp.ne.s32.totalorder %s394, %s408
    %p410 = scmp.eq.s32.totalorder %s85, 0
    %p411 = por %p409, %p410
    %s413 = sadd.s32 %s412, 1
    %p416 = scmp.eq.s32.totalorder %s79, 1
    %p417 = scmp.ne.s32.totalorder %s412, %s414
    %p418 = scmp.eq.s32.totalorder %s79, 0
    %p419 = por %p417, %p418
    %p420 = scmp.ne.s32.totalorder %s412, %s414
    %p421 = scmp.eq.s32.totalorder %s84, 1
    %p422 = por %p420, %p421
    %p423 = scmp.ne.s32.totalorder %s414, %s415
    %p424 = scmp.eq.s32.totalorder %s84, 0
    %p425 = por %p423, %p424
    %p426 = scmp.ne.s32.totalorder %s414, %s415
    %p427 = scmp.eq.s32.totalorder %s85, 1
    %p428 = por %p426, %p427
    %p430 = scmp.ne.s32.totalorder %s415, %s429
    %p431 = scmp.eq.s32.totalorder %s85, 0
    %p432 = por %p430, %p431
    %s434 = sadd.s32 %s433, 1
    %p437 = scmp.eq.s32.totalorder %s79, 1
    %p438 = scmp.ne.s32.totalorder %s433, %s435
    %p439 = scmp.eq.s32.totalorder %s79, 0
    %p440 = por %p438, %p439
    %p441 = scmp.ne.s32.totalorder %s433, %s435
    %p442 = scmp.eq.s32.totalorder %s84, 1
    %p443 = por %p441, %p442
    %p444 = scmp.ne.s32.totalorder %s435, %s436
    %p445 = scmp.eq.s32.totalorder %s84, 0
    %p446 = por %p444, %p445
    %p447 = scmp.ne.s32.totalorder %s435, %s436
    %p448 = scmp.eq.s32.totalorder %s85, 1
    %p449 = por %p447, %p448
    %p451 = scmp.ne.s32.totalorder %s436, %s450
    %p452 = scmp.eq.s32.totalorder %s85, 0
    %p453 = por %p451, %p452
    %s455 = sadd.s32 %s454, 1
    %p458 = scmp.eq.s32.totalorder %s79, 1
    %p459 = scmp.ne.s32.totalorder %s454, %s456
    %p460 = scmp.eq.s32.totalorder %s79, 0
    %p461 = por %p459, %p460
    %p462 = scmp.ne.s32.totalorder %s454, %s456
    %p463 = scmp.eq.s32.totalorder %s84, 1
    %p464 = por %p462, %p463
    %p465 = scmp.ne.s32.totalorder %s456, %s457
    %p466 = scmp.eq.s32.totalorder %s84, 0
    %p467 = por %p465, %p466
    %p468 = scmp.ne.s32.totalorder %s456, %s457
    %p469 = scmp.eq.s32.totalorder %s85, 1
    %p470 = por %p468, %p469
    %p472 = scmp.ne.s32.totalorder %s457, %s471
    %p473 = scmp.eq.s32.totalorder %s85, 0
    %p474 = por %p472, %p473
    %s476 = sadd.s32 %s475, 1
    %p479 = scmp.eq.s32.totalorder %s79, 1
    %p480 = scmp.ne.s32.totalorder %s475, %s477
    %p481 = scmp.eq.s32.totalorder %s79, 0
    %p482 = por %p480, %p481
    %p483 = scmp.ne.s32.totalorder %s475, %s477
    %p484 = scmp.eq.s32.totalorder %s84, 1
    %p485 = por %p483, %p484
    %p486 = scmp.ne.s32.totalorder %s477, %s478
    %p487 = scmp.eq.s32.totalorder %s84, 0
    %p488 = por %p486, %p487
    %p489 = scmp.ne.s32.totalorder %s477, %s478
    %p490 = scmp.eq.s32.totalorder %s85, 1
    %p491 = por %p489, %p490
    %p493 = scmp.ne.s32.totalorder %s478, %s492
    %p494 = scmp.eq.s32.totalorder %s85, 0
    %p495 = por %p493, %p494
    %s497 = sadd.s32 %s496, 1
    %p500 = scmp.eq.s32.totalorder %s79, 1
    %p501 = scmp.ne.s32.totalorder %s496, %s498
    %p502 = scmp.eq.s32.totalorder %s79, 0
    %p503 = por %p501, %p502
    %p504 = scmp.ne.s32.totalorder %s496, %s498
    %p505 = scmp.eq.s32.totalorder %s84, 1
    %p506 = por %p504, %p505
    %p507 = scmp.ne.s32.totalorder %s498, %s499
    %p508 = scmp.eq.s32.totalorder %s84, 0
    %p509 = por %p507, %p508
    %p510 = scmp.ne.s32.totalorder %s498, %s499
    %p511 = scmp.eq.s32.totalorder %s85, 1
    %p512 = por %p510, %p511
    %p514 = scmp.ne.s32.totalorder %s499, %s513
    %p515 = scmp.eq.s32.totalorder %s85, 0
    %p516 = por %p514, %p515
    %s518 = sadd.s32 %s517, 1
    %p521 = scmp.eq.s32.totalorder %s79, 1
    %p522 = scmp.ne.s32.totalorder %s517, %s519
    %p523 = scmp.eq.s32.totalorder %s79, 0
    %p524 = por %p522, %p523
    %p525 = scmp.ne.s32.totalorder %s517, %s519
    %p526 = scmp.eq.s32.totalorder %s84, 1
    %p527 = por %p525, %p526
    %p528 = scmp.ne.s32.totalorder %s519, %s520
    %p529 = scmp.eq.s32.totalorder %s84, 0
    %p530 = por %p528, %p529
    %p531 = scmp.ne.s32.totalorder %s519, %s520
    %p532 = scmp.eq.s32.totalorder %s85, 1
    %p533 = por %p531, %p532
    %p535 = scmp.ne.s32.totalorder %s520, %s534
    %p536 = scmp.eq.s32.totalorder %s85, 0
    %p537 = por %p535, %p536
    %s539 = sadd.s32 %s538, 1
    %p542 = scmp.eq.s32.totalorder %s79, 1
    %p543 = scmp.ne.s32.totalorder %s538, %s540
    %p544 = scmp.eq.s32.totalorder %s79, 0
    %p545 = por %p543, %p544
    %p546 = scmp.ne.s32.totalorder %s538, %s540
    %p547 = scmp.eq.s32.totalorder %s84, 1
    %p548 = por %p546, %p547
    %p549 = scmp.ne.s32.totalorder %s540, %s541
    %p550 = scmp.eq.s32.totalorder %s84, 0
    %p551 = por %p549, %p550
    %p552 = scmp.ne.s32.totalorder %s540, %s541
    %p553 = scmp.eq.s32.totalorder %s85, 1
    %p554 = por %p552, %p553
    %p556 = scmp.ne.s32.totalorder %s541, %s555
    %p557 = scmp.eq.s32.totalorder %s85, 0
    %p558 = por %p556, %p557
    %s560 = sadd.s32 %s559, 1
    %p563 = scmp.eq.s32.totalorder %s79, 1
    %p564 = scmp.ne.s32.totalorder %s559, %s561
    %p565 = scmp.eq.s32.totalorder %s79, 0
    %p566 = por %p564, %p565
    %p567 = scmp.ne.s32.totalorder %s559, %s561
    %p568 = scmp.eq.s32.totalorder %s84, 1
    %p569 = por %p567, %p568
    %p570 = scmp.ne.s32.totalorder %s561, %s562
    %p571 = scmp.eq.s32.totalorder %s84, 0
    %p572 = por %p570, %p571
    %p573 = scmp.ne.s32.totalorder %s561, %s562
    %p574 = scmp.eq.s32.totalorder %s85, 1
    %p575 = por %p573, %p574
    %p577 = scmp.ne.s32.totalorder %s562, %s576
    %p578 = scmp.eq.s32.totalorder %s85, 0
    %p579 = por %p577, %p578
    %s581 = sadd.s32 %s580, 1
    %p584 = scmp.eq.s32.totalorder %s79, 1
    %p585 = scmp.ne.s32.totalorder %s580, %s582
    %p586 = scmp.eq.s32.totalorder %s79, 0
    %p587 = por %p585, %p586
    %p588 = scmp.ne.s32.totalorder %s580, %s582
    %p589 = scmp.eq.s32.totalorder %s84, 1
    %p590 = por %p588, %p589
    %p591 = scmp.ne.s32.totalorder %s582, %s583
    %p592 = scmp.eq.s32.totalorder %s84, 0
    %p593 = por %p591, %p592
    %p594 = scmp.ne.s32.totalorder %s582, %s583
    %p595 = scmp.eq.s32.totalorder %s85, 1
    %p596 = por %p594, %p595
    %p598 = scmp.ne.s32.totalorder %s583, %s597
    %p599 = scmp.eq.s32.totalorder %s85, 0
    %p600 = por %p598, %p599
    %s602 = sadd.s32 %s601, 1
    %p605 = scmp.eq.s32.totalorder %s79, 1
    %p606 = scmp.ne.s32.totalorder %s601, %s603
    %p607 = scmp.eq.s32.totalorder %s79, 0
    %p608 = por %p606, %p607
    %p609 = scmp.ne.s32.totalorder %s601, %s603
    %p610 = scmp.eq.s32.totalorder %s84, 1
    %p611 = por %p609, %p610
    %p612 = scmp.ne.s32.totalorder %s603, %s604
    %p613 = scmp.eq.s32.totalorder %s84, 0
    %p614 = por %p612, %p613
    %p615 = scmp.ne.s32.totalorder %s603, %s604
    %p616 = scmp.eq.s32.totalorder %s85, 1
    %p617 = por %p615, %p616
    %p619 = scmp.ne.s32.totalorder %s604, %s618
    %p620 = scmp.eq.s32.totalorder %s85, 0
    %p621 = por %p619, %p620
    %s623 = sadd.s32 %s622, 1
    %p626 = scmp.eq.s32.totalorder %s79, 1
    %p627 = scmp.ne.s32.totalorder %s622, %s624
    %p628 = scmp.eq.s32.totalorder %s79, 0
    %p629 = por %p627, %p628
    %p630 = scmp.ne.s32.totalorder %s622, %s624
    %p631 = scmp.eq.s32.totalorder %s84, 1
    %p632 = por %p630, %p631
    %p633 = scmp.ne.s32.totalorder %s624, %s625
    %p634 = scmp.eq.s32.totalorder %s84, 0
    %p635 = por %p633, %p634
    %p636 = scmp.ne.s32.totalorder %s624, %s625
    %p637 = scmp.eq.s32.totalorder %s85, 1
    %p638 = por %p636, %p637
    %p640 = scmp.ne.s32.totalorder %s625, %s639
    %p641 = scmp.eq.s32.totalorder %s85, 0
    %p642 = por %p640, %p641
    %s644 = sadd.s32 %s643, 1
    %p647 = scmp.eq.s32.totalorder %s79, 1
    %p648 = scmp.ne.s32.totalorder %s643, %s645
    %p649 = scmp.eq.s32.totalorder %s79, 0
    %p650 = por %p648, %p649
    %p651 = scmp.ne.s32.totalorder %s643, %s645
    %p652 = scmp.eq.s32.totalorder %s84, 1
    %p653 = por %p651, %p652
    %p654 = scmp.ne.s32.totalorder %s645, %s646
    %p655 = scmp.eq.s32.totalorder %s84, 0
    %p656 = por %p654, %p655
    %p657 = scmp.ne.s32.totalorder %s645, %s646
    %p658 = scmp.eq.s32.totalorder %s85, 1
    %p659 = por %p657, %p658
    %p661 = scmp.ne.s32.totalorder %s646, %s660
    %p662 = scmp.eq.s32.totalorder %s85, 0
    %p663 = por %p661, %p662
    %s665 = sadd.s32 %s664, 1
    %p668 = scmp.eq.s32.totalorder %s79, 1
    %p669 = scmp.ne.s32.totalorder %s664, %s666
    %p670 = scmp.eq.s32.totalorder %s79, 0
    %p671 = por %p669, %p670
    %p672 = scmp.ne.s32.totalorder %s664, %s666
    %p673 = scmp.eq.s32.totalorder %s84, 1
    %p674 = por %p672, %p673
    %p675 = scmp.ne.s32.totalorder %s666, %s667
    %p676 = scmp.eq.s32.totalorder %s84, 0
    %p677 = por %p675, %p676
    %p678 = scmp.ne.s32.totalorder %s666, %s667
    %p679 = scmp.eq.s32.totalorder %s85, 1
    %p680 = por %p678, %p679
    %p682 = scmp.ne.s32.totalorder %s667, %s681
    %p683 = scmp.eq.s32.totalorder %s85, 0
    %p684 = por %p682, %p683
    %s686 = sadd.s32 %s685, 1
    %p689 = scmp.eq.s32.totalorder %s79, 1
    %p690 = scmp.ne.s32.totalorder %s685, %s687
    %p691 = scmp.eq.s32.totalorder %s79, 0
    %p692 = por %p690, %p691
    %p693 = scmp.ne.s32.totalorder %s685, %s687
    %p694 = scmp.eq.s32.totalorder %s84, 1
    %p695 = por %p693, %p694
    %p696 = scmp.ne.s32.totalorder %s687, %s688
    %p697 = scmp.eq.s32.totalorder %s84, 0
    %p698 = por %p696, %p697
    %p699 = scmp.ne.s32.totalorder %s687, %s688
    %p700 = scmp.eq.s32.totalorder %s85, 1
    %p701 = por %p699, %p700
    %p703 = scmp.ne.s32.totalorder %s688, %s702
    %p704 = scmp.eq.s32.totalorder %s85, 0
    %p705 = por %p703, %p704
    %s707 = sadd.s32 %s706, 1
    %p710 = scmp.eq.s32.totalorder %s79, 1
    %p711 = scmp.ne.s32.totalorder %s706, %s708
    %p712 = scmp.eq.s32.totalorder %s79, 0
    %p713 = por %p711, %p712
    %p714 = scmp.ne.s32.totalorder %s706, %s708
    %p715 = scmp.eq.s32.totalorder %s84, 1
    %p716 = por %p714, %p715
    %p717 = scmp.ne.s32.totalorder %s708, %s709
    %p718 = scmp.eq.s32.totalorder %s84, 0
    %p719 = por %p717, %p718
    %p720 = scmp.ne.s32.totalorder %s708, %s709
    %p721 = scmp.eq.s32.totalorder %s85, 1
    %p722 = por %p720, %p721
    %p724 = scmp.ne.s32.totalorder %s709, %s723
    %p725 = scmp.eq.s32.totalorder %s85, 0
    %p726 = por %p724, %p725
    %s728 = sadd.s32 %s727, 1
    %p731 = scmp.eq.s32.totalorder %s79, 1
    %p732 = scmp.ne.s32.totalorder %s727, %s729
    %p733 = scmp.eq.s32.totalorder %s79, 0
    %p734 = por %p732, %p733
    %p735 = scmp.ne.s32.totalorder %s727, %s729
    %p736 = scmp.eq.s32.totalorder %s84, 1
    %p737 = por %p735, %p736
    %p738 = scmp.ne.s32.totalorder %s729, %s730
    %p739 = scmp.eq.s32.totalorder %s84, 0
    %p740 = por %p738, %p739
    %p741 = scmp.ne.s32.totalorder %s729, %s730
    %p742 = scmp.eq.s32.totalorder %s85, 1
    %p743 = por %p741, %p742
    %p745 = scmp.ne.s32.totalorder %s730, %s744
    %p746 = scmp.eq.s32.totalorder %s85, 0
    %p747 = por %p745, %p746
    %s749 = sadd.s32 %s748, 1
    %p752 = scmp.eq.s32.totalorder %s79, 1
    %p753 = scmp.ne.s32.totalorder %s748, %s750
    %p754 = scmp.eq.s32.totalorder %s79, 0
    %p755 = por %p753, %p754
    %p756 = scmp.ne.s32.totalorder %s748, %s750
    %p757 = scmp.eq.s32.totalorder %s84, 1
    %p758 = por %p756, %p757
    %p759 = scmp.ne.s32.totalorder %s750, %s751
    %p760 = scmp.eq.s32.totalorder %s84, 0
    %p761 = por %p759, %p760
    %p762 = scmp.ne.s32.totalorder %s750, %s751
    %p763 = scmp.eq.s32.totalorder %s85, 1
    %p764 = por %p762, %p763
    %p766 = scmp.ne.s32.totalorder %s751, %s765
    %p767 = scmp.eq.s32.totalorder %s85, 0
    %p768 = por %p766, %p767
    %s770 = sadd.s32 %s769, 1
    %p773 = scmp.eq.s32.totalorder %s79, 1
    %p774 = scmp.ne.s32.totalorder %s769, %s771
    %p775 = scmp.eq.s32.totalorder %s79, 0
    %p776 = por %p774, %p775
    %p777 = scmp.ne.s32.totalorder %s769, %s771
    %p778 = scmp.eq.s32.totalorder %s84, 1
    %p779 = por %p777, %p778
    %p780 = scmp.ne.s32.totalorder %s771, %s772
    %p781 = scmp.eq.s32.totalorder %s84, 0
    %p782 = por %p780, %p781
    %p783 = scmp.ne.s32.totalorder %s771, %s772
    %p784 = scmp.eq.s32.totalorder %s85, 1
    %p785 = por %p783, %p784
    %p787 = scmp.ne.s32.totalorder %s772, %s786
    %p788 = scmp.eq.s32.totalorder %s85, 0
    %p789 = por %p787, %p788
    %s791 = sadd.s32 %s790, 1
    %p794 = scmp.eq.s32.totalorder %s79, 1
    %p795 = scmp.ne.s32.totalorder %s790, %s792
    %p796 = scmp.eq.s32.totalorder %s79, 0
    %p797 = por %p795, %p796
    %p798 = scmp.ne.s32.totalorder %s790, %s792
    %p799 = scmp.eq.s32.totalorder %s84, 1
    %p800 = por %p798, %p799
    %p801 = scmp.ne.s32.totalorder %s792, %s793
    %p802 = scmp.eq.s32.totalorder %s84, 0
    %p803 = por %p801, %p802
    %p804 = scmp.ne.s32.totalorder %s792, %s793
    %p805 = scmp.eq.s32.totalorder %s85, 1
    %p806 = por %p804, %p805
    %p808 = scmp.ne.s32.totalorder %s793, %s807
    %p809 = scmp.eq.s32.totalorder %s85, 0
    %p810 = por %p808, %p809
    %s812 = sadd.s32 %s811, 1
    %p815 = scmp.eq.s32.totalorder %s79, 1
    %p816 = scmp.ne.s32.totalorder %s811, %s813
    %p817 = scmp.eq.s32.totalorder %s79, 0
    %p818 = por %p816, %p817
    %p819 = scmp.ne.s32.totalorder %s811, %s813
    %p820 = scmp.eq.s32.totalorder %s84, 1
    %p821 = por %p819, %p820
    %p822 = scmp.ne.s32.totalorder %s813, %s814
    %p823 = scmp.eq.s32.totalorder %s84, 0
    %p824 = por %p822, %p823
    %p825 = scmp.ne.s32.totalorder %s813, %s814
    %p826 = scmp.eq.s32.totalorder %s85, 1
    %p827 = por %p825, %p826
    %p829 = scmp.ne.s32.totalorder %s814, %s828
    %p830 = scmp.eq.s32.totalorder %s85, 0
    %p831 = por %p829, %p830
    %s833 = sadd.s32 %s832, 1
    %p836 = scmp.eq.s32.totalorder %s79, 1
    %p837 = scmp.ne.s32.totalorder %s832, %s834
    %p838 = scmp.eq.s32.totalorder %s79, 0
    %p839 = por %p837, %p838
    %p840 = scmp.ne.s32.totalorder %s832, %s834
    %p841 = scmp.eq.s32.totalorder %s84, 1
    %p842 = por %p840, %p841
    %p843 = scmp.ne.s32.totalorder %s834, %s835
    %p844 = scmp.eq.s32.totalorder %s84, 0
    %p845 = por %p843, %p844
    %p846 = scmp.ne.s32.totalorder %s834, %s835
    %p847 = scmp.eq.s32.totalorder %s85, 1
    %p848 = por %p846, %p847
    %p850 = scmp.ne.s32.totalorder %s835, %s849
    %p851 = scmp.eq.s32.totalorder %s85, 0
    %p852 = por %p850, %p851
    %s853 = ssub.s32 %s79, %s86
    %p854 = scmp.eq.s32.totalorder %s853, 0
    %s856 = sadd.s32 %s855, 1
    %s857 = scalar_select %p854, %s855, %s856
    %p860 = pneg %p854
    %p861 = scmp.eq.s32.totalorder %s79, 1
    %p862 = por %p860, %p861
    %p863 = scmp.ne.s32.totalorder %s855, %s858
    %p864 = scmp.eq.s32.totalorder %s79, 0
    %p865 = por %p863, %p864
    %p866 = scmp.ne.s32.totalorder %s855, %s858
    %p867 = scmp.eq.s32.totalorder %s84, 1
    %p868 = por %p866, %p867
    %p869 = scmp.ne.s32.totalorder %s858, %s859
    %p870 = scmp.eq.s32.totalorder %s84, 0
    %p871 = por %p869, %p870
    %p872 = scmp.ne.s32.totalorder %s858, %s859
    %p873 = scmp.eq.s32.totalorder %s85, 1
    %p874 = por %p872, %p873
    %p876 = scmp.ne.s32.totalorder %s859, %s875
    %p877 = scmp.eq.s32.totalorder %s85, 0
    %p878 = por %p876, %p877
    %p879 = scmp.le.s32.totalorder 1, %s79
    %p880 = scmp.lt.s32.totalorder %s79, 3
    %p881 = pnand %p879, %p880
    %p882 = pneg %p881
    // Predicated region
    $region9: #{fastformer_forward.1} parent=5 // pred_check
      _
    $region10: #{fastformer_forward.1} parent=5 // pred_check_branch
      %884 = sbr.rel (%p881) target = $region12
    $region11: #{fastformer_forward.1} parent=5 // pred_region
      %s885 = ssub.s32 %s79, 1
      // Predicated region
      $region13: #{fastformer_forward.1} parent=11 // pred_check
        %p886 = pneg %p152
      $region14: #{fastformer_forward.1} parent=11 // pred_check_branch
        %888 = sbr.rel (%p886) target = $region16
      $region15: #{fastformer_forward.1} parent=11 // pred_region
        _
      $region16: #{fastformer_forward.1} parent=11 // pred_fallthru
        _
      // Predicated region
      $region17: #{fastformer_forward.1} parent=11 // pred_check
        %p889 = pneg %p173
      $region18: #{fastformer_forward.1} parent=11 // pred_check_branch
        %891 = sbr.rel (%p889) target = $region20
      $region19: #{fastformer_forward.1} parent=11 // pred_region
        _
      $region20: #{fastformer_forward.1} parent=11 // pred_fallthru
        _
      // Predicated region
      $region21: #{fastformer_forward.1} parent=11 // pred_check
        %p892 = pneg %p194
      $region22: #{fastformer_forward.1} parent=11 // pred_check_branch
        %894 = sbr.rel (%p892) target = $region24
      $region23: #{fastformer_forward.1} parent=11 // pred_region
        _
      $region24: #{fastformer_forward.1} parent=11 // pred_fallthru
        _
      // Predicated region
      $region25: #{fastformer_forward.1} parent=11 // pred_check
        %p895 = pneg %p215
      $region26: #{fastformer_forward.1} parent=11 // pred_check_branch
        %897 = sbr.rel (%p895) target = $region28
      $region27: #{fastformer_forward.1} parent=11 // pred_region
        _
      $region28: #{fastformer_forward.1} parent=11 // pred_fallthru
        _
      // Predicated region
      $region29: #{fastformer_forward.1} parent=11 // pred_check
        %p898 = pneg %p236
      $region30: #{fastformer_forward.1} parent=11 // pred_check_branch
        %900 = sbr.rel (%p898) target = $region32
      $region31: #{fastformer_forward.1} parent=11 // pred_region
        _
      $region32: #{fastformer_forward.1} parent=11 // pred_fallthru
        _
      // Predicated region
      $region33: #{fastformer_forward.1} parent=11 // pred_check
        %p901 = pneg %p257
      $region34: #{fastformer_forward.1} parent=11 // pred_check_branch
        %903 = sbr.rel (%p901) target = $region36
      $region35: #{fastformer_forward.1} parent=11 // pred_region
        _
      $region36: #{fastformer_forward.1} parent=11 // pred_fallthru
        _
      // Predicated region
      $region37: #{fastformer_forward.1} parent=11 // pred_check
        %p904 = pneg %p278
      $region38: #{fastformer_forward.1} parent=11 // pred_check_branch
        %906 = sbr.rel (%p904) target = $region40
      $region39: #{fastformer_forward.1} parent=11 // pred_region
        _
      $region40: #{fastformer_forward.1} parent=11 // pred_fallthru
        _
      // Predicated region
      $region41: #{fastformer_forward.1} parent=11 // pred_check
        %p907 = pneg %p299
      $region42: #{fastformer_forward.1} parent=11 // pred_check_branch
        %909 = sbr.rel (%p907) target = $region44
      $region43: #{fastformer_forward.1} parent=11 // pred_region
        _
      $region44: #{fastformer_forward.1} parent=11 // pred_fallthru
        _
      // Predicated region
      $region45: #{fastformer_forward.1} parent=11 // pred_check
        %p910 = pneg %p320
      $region46: #{fastformer_forward.1} parent=11 // pred_check_branch
        %912 = sbr.rel (%p910) target = $region48
      $region47: #{fastformer_forward.1} parent=11 // pred_region
        _
      $region48: #{fastformer_forward.1} parent=11 // pred_fallthru
        _
      // Predicated region
      $region49: #{fastformer_forward.1} parent=11 // pred_check
        %p913 = pneg %p341
      $region50: #{fastformer_forward.1} parent=11 // pred_check_branch
        %915 = sbr.rel (%p913) target = $region52
      $region51: #{fastformer_forward.1} parent=11 // pred_region
        _
      $region52: #{fastformer_forward.1} parent=11 // pred_fallthru
        _
      // Predicated region
      $region53: #{fastformer_forward.1} parent=11 // pred_check
        %p916 = pneg %p362
      $region54: #{fastformer_forward.1} parent=11 // pred_check_branch
        %918 = sbr.rel (%p916) target = $region56
      $region55: #{fastformer_forward.1} parent=11 // pred_region
        _
      $region56: #{fastformer_forward.1} parent=11 // pred_fallthru
        _
      // Predicated region
      $region57: #{fastformer_forward.1} parent=11 // pred_check
        %p919 = pneg %p383
      $region58: #{fastformer_forward.1} parent=11 // pred_check_branch
        %921 = sbr.rel (%p919) target = $region60
      $region59: #{fastformer_forward.1} parent=11 // pred_region
        _
      $region60: #{fastformer_forward.1} parent=11 // pred_fallthru
        _
      // Predicated region
      $region61: #{fastformer_forward.1} parent=11 // pred_check
        %p922 = pneg %p404
      $region62: #{fastformer_forward.1} parent=11 // pred_check_branch
        %924 = sbr.rel (%p922) target = $region64
      $region63: #{fastformer_forward.1} parent=11 // pred_region
        _
      $region64: #{fastformer_forward.1} parent=11 // pred_fallthru
        _
      // Predicated region
      $region65: #{fastformer_forward.1} parent=11 // pred_check
        %p925 = pneg %p425
      $region66: #{fastformer_forward.1} parent=11 // pred_check_branch
        %927 = sbr.rel (%p925) target = $region68
      $region67: #{fastformer_forward.1} parent=11 // pred_region
        _
      $region68: #{fastformer_forward.1} parent=11 // pred_fallthru
        _
      // Predicated region
      $region69: #{fastformer_forward.1} parent=11 // pred_check
        %p928 = pneg %p446
      $region70: #{fastformer_forward.1} parent=11 // pred_check_branch
        %930 = sbr.rel (%p928) target = $region72
      $region71: #{fastformer_forward.1} parent=11 // pred_region
        _
      $region72: #{fastformer_forward.1} parent=11 // pred_fallthru
        _
      // Predicated region
      $region73: #{fastformer_forward.1} parent=11 // pred_check
        %p931 = pneg %p467
      $region74: #{fastformer_forward.1} parent=11 // pred_check_branch
        %933 = sbr.rel (%p931) target = $region76
      $region75: #{fastformer_forward.1} parent=11 // pred_region
        _
      $region76: #{fastformer_forward.1} parent=11 // pred_fallthru
        _
      // Predicated region
      $region77: #{fastformer_forward.1} parent=11 // pred_check
        %p934 = pneg %p488
      $region78: #{fastformer_forward.1} parent=11 // pred_check_branch
        %936 = sbr.rel (%p934) target = $region80
      $region79: #{fastformer_forward.1} parent=11 // pred_region
        _
      $region80: #{fastformer_forward.1} parent=11 // pred_fallthru
        _
      // Predicated region
      $region81: #{fastformer_forward.1} parent=11 // pred_check
        %p937 = pneg %p509
      $region82: #{fastformer_forward.1} parent=11 // pred_check_branch
        %939 = sbr.rel (%p937) target = $region84
      $region83: #{fastformer_forward.1} parent=11 // pred_region
        _
      $region84: #{fastformer_forward.1} parent=11 // pred_fallthru
        _
      // Predicated region
      $region85: #{fastformer_forward.1} parent=11 // pred_check
        %p940 = pneg %p530
      $region86: #{fastformer_forward.1} parent=11 // pred_check_branch
        %942 = sbr.rel (%p940) target = $region88
      $region87: #{fastformer_forward.1} parent=11 // pred_region
        _
      $region88: #{fastformer_forward.1} parent=11 // pred_fallthru
        _
      // Predicated region
      $region89: #{fastformer_forward.1} parent=11 // pred_check
        %p943 = pneg %p551
      $region90: #{fastformer_forward.1} parent=11 // pred_check_branch
        %945 = sbr.rel (%p943) target = $region92
      $region91: #{fastformer_forward.1} parent=11 // pred_region
        _
      $region92: #{fastformer_forward.1} parent=11 // pred_fallthru
        _
      // Predicated region
      $region93: #{fastformer_forward.1} parent=11 // pred_check
        %p946 = pneg %p572
      $region94: #{fastformer_forward.1} parent=11 // pred_check_branch
        %948 = sbr.rel (%p946) target = $region96
      $region95: #{fastformer_forward.1} parent=11 // pred_region
        _
      $region96: #{fastformer_forward.1} parent=11 // pred_fallthru
        _
      // Predicated region
      $region97: #{fastformer_forward.1} parent=11 // pred_check
        %p949 = pneg %p593
      $region98: #{fastformer_forward.1} parent=11 // pred_check_branch
        %951 = sbr.rel (%p949) target = $region100
      $region99: #{fastformer_forward.1} parent=11 // pred_region
        _
      $region100: #{fastformer_forward.1} parent=11 // pred_fallthru
        _
      // Predicated region
      $region101: #{fastformer_forward.1} parent=11 // pred_check
        %p952 = pneg %p614
      $region102: #{fastformer_forward.1} parent=11 // pred_check_branch
        %954 = sbr.rel (%p952) target = $region104
      $region103: #{fastformer_forward.1} parent=11 // pred_region
        _
      $region104: #{fastformer_forward.1} parent=11 // pred_fallthru
        _
      // Predicated region
      $region105: #{fastformer_forward.1} parent=11 // pred_check
        %p955 = pneg %p635
      $region106: #{fastformer_forward.1} parent=11 // pred_check_branch
        %957 = sbr.rel (%p955) target = $region108
      $region107: #{fastformer_forward.1} parent=11 // pred_region
        _
      $region108: #{fastformer_forward.1} parent=11 // pred_fallthru
        _
      // Predicated region
      $region109: #{fastformer_forward.1} parent=11 // pred_check
        %p958 = pneg %p656
      $region110: #{fastformer_forward.1} parent=11 // pred_check_branch
        %960 = sbr.rel (%p958) target = $region112
      $region111: #{fastformer_forward.1} parent=11 // pred_region
        _
      $region112: #{fastformer_forward.1} parent=11 // pred_fallthru
        _
      // Predicated region
      $region113: #{fastformer_forward.1} parent=11 // pred_check
        %p961 = pneg %p677
      $region114: #{fastformer_forward.1} parent=11 // pred_check_branch
        %963 = sbr.rel (%p961) target = $region116
      $region115: #{fastformer_forward.1} parent=11 // pred_region
        _
      $region116: #{fastformer_forward.1} parent=11 // pred_fallthru
        _
      // Predicated region
      $region117: #{fastformer_forward.1} parent=11 // pred_check
        %p964 = pneg %p698
      $region118: #{fastformer_forward.1} parent=11 // pred_check_branch
        %966 = sbr.rel (%p964) target = $region120
      $region119: #{fastformer_forward.1} parent=11 // pred_region
        _
      $region120: #{fastformer_forward.1} parent=11 // pred_fallthru
        _
      // Predicated region
      $region121: #{fastformer_forward.1} parent=11 // pred_check
        %p967 = pneg %p719
      $region122: #{fastformer_forward.1} parent=11 // pred_check_branch
        %969 = sbr.rel (%p967) target = $region124
      $region123: #{fastformer_forward.1} parent=11 // pred_region
        _
      $region124: #{fastformer_forward.1} parent=11 // pred_fallthru
        _
      // Predicated region
      $region125: #{fastformer_forward.1} parent=11 // pred_check
        %p970 = pneg %p740
      $region126: #{fastformer_forward.1} parent=11 // pred_check_branch
        %972 = sbr.rel (%p970) target = $region128
      $region127: #{fastformer_forward.1} parent=11 // pred_region
        _
      $region128: #{fastformer_forward.1} parent=11 // pred_fallthru
        _
      // Predicated region
      $region129: #{fastformer_forward.1} parent=11 // pred_check
        %p973 = pneg %p761
      $region130: #{fastformer_forward.1} parent=11 // pred_check_branch
        %975 = sbr.rel (%p973) target = $region132
      $region131: #{fastformer_forward.1} parent=11 // pred_region
        _
      $region132: #{fastformer_forward.1} parent=11 // pred_fallthru
        _
      // Predicated region
      $region133: #{fastformer_forward.1} parent=11 // pred_check
        %p976 = pneg %p782
      $region134: #{fastformer_forward.1} parent=11 // pred_check_branch
        %978 = sbr.rel (%p976) target = $region136
      $region135: #{fastformer_forward.1} parent=11 // pred_region
        _
      $region136: #{fastformer_forward.1} parent=11 // pred_fallthru
        _
      // Predicated region
      $region137: #{fastformer_forward.1} parent=11 // pred_check
        %p979 = pneg %p803
      $region138: #{fastformer_forward.1} parent=11 // pred_check_branch
        %981 = sbr.rel (%p979) target = $region140
      $region139: #{fastformer_forward.1} parent=11 // pred_region
        _
      $region140: #{fastformer_forward.1} parent=11 // pred_fallthru
        _
      // Predicated region
      $region141: #{fastformer_forward.1} parent=11 // pred_check
        %p982 = pneg %p824
      $region142: #{fastformer_forward.1} parent=11 // pred_check_branch
        %984 = sbr.rel (%p982) target = $region144
      $region143: #{fastformer_forward.1} parent=11 // pred_region
        _
      $region144: #{fastformer_forward.1} parent=11 // pred_fallthru
        _
      // Predicated region
      $region145: #{fastformer_forward.1} parent=11 // pred_check
        %p985 = pneg %p845
      $region146: #{fastformer_forward.1} parent=11 // pred_check_branch
        %987 = sbr.rel (%p985) target = $region148
      $region147: #{fastformer_forward.1} parent=11 // pred_region
        _
      $region148: #{fastformer_forward.1} parent=11 // pred_fallthru
        _
    $region12: #{fastformer_forward.1} parent=5 // pred_fallthru
      _
    %p988 = scmp.lt.s32.totalorder %s79, 2
    // Predicated region
    $region149: #{fastformer_forward.1} parent=5 // pred_check
      %p989 = pneg %p988
    $region150: #{fastformer_forward.1} parent=5 // pred_check_branch
      %991 = sbr.rel (%p989) target = $region152
    $region151: #{fastformer_forward.1} parent=5 // pred_region
      // Predicated region
      $region153: #{fastformer_forward.1} parent=151 // pred_check
        %p992 = pneg %p99
      $region154: #{fastformer_forward.1} parent=151 // pred_check_branch
        %994 = sbr.rel (%p992) target = $region156
      $region155: #{fastformer_forward.1} parent=151 // pred_region
        %p995 = scmp.lt.s32.totalorder %s79, 1
        %s996 = scalar_select %p995, %s79, 1
        %s997 = smul.addr %s996, 4
        %s998 = smul.addr %s997, 8
        %s999 = scalar_lea.vmem %s1, %s998
      $region156: #{fastformer_forward.1} parent=151 // pred_fallthru
        _
      // Predicated region
      $region157: #{fastformer_forward.1} parent=151 // pred_check
        %p1000 = pneg %p125
      $region158: #{fastformer_forward.1} parent=151 // pred_check_branch
        %1002 = sbr.rel (%p1000) target = $region160
      $region159: #{fastformer_forward.1} parent=151 // pred_region
        %p1003 = scmp.lt.s32.totalorder %s79, 1
        %s1004 = scalar_select %p1003, %s79, 1
        %s1005 = smul.addr %s1004, 4
        %s1006 = smul.addr %s1005, 8
        %s1007 = scalar_lea.vmem %s3, %s1006
      $region160: #{fastformer_forward.1} parent=151 // pred_fallthru
        _
    $region152: #{fastformer_forward.1} parent=5 // pred_fallthru
      _
    %p1008 = scmp.le.s32.totalorder 1, %s79
    %p1009 = scmp.lt.s32.totalorder %s79, 3
    %p1010 = pnand %p1008, %p1009
    %p1011 = pneg %p1010
    // Predicated region
    $region161: #{fastformer_forward.1} parent=5 // pred_check
      _
    $region162: #{fastformer_forward.1} parent=5 // pred_check_branch
      %1013 = sbr.rel (%p1010) target = $region164
    $region163: #{fastformer_forward.1} parent=5 // pred_region
      %s1014 = ssub.s32 %s79, 1
      %p1015 = scmp.lt.s32.totalorder %s84, 1
      %s1016 = scalar_select %p1015, %s84, 1
      %s1017 = smul.addr %s1016, 4
      %s1018 = smul.addr %s1017, 8
      %s1019 = scalar_lea.vmem %s1, %s1018
      %p1020 = pneg %p105
      %p1021 = pneg %p102
      %p1022 = scmp.lt.s32.totalorder %s84, 1
      %s1023 = scalar_select %p1022, %s84, 1
      %s1024 = smul.addr %s1023, 4
      %s1025 = smul.addr %s1024, 8
      %s1026 = scalar_lea.vmem %s3, %s1025
      %p1027 = pneg %p131
      %p1028 = pneg %p128
      %p1029 = pneg %p152
      %p1030 = pneg %p149
      %p1031 = pneg %p173
      %p1032 = pneg %p170
      %p1033 = pneg %p194
      %p1034 = pneg %p191
      %p1035 = pneg %p215
      %p1036 = pneg %p212
      %p1037 = pneg %p236
      %p1038 = pneg %p233
      %p1039 = pneg %p257
      %p1040 = pneg %p254
      %p1041 = pneg %p278
      %p1042 = pneg %p275
      %p1043 = pneg %p299
      %p1044 = pneg %p296
      %p1045 = pneg %p320
      %p1046 = pneg %p317
      %p1047 = pneg %p341
      %p1048 = pneg %p338
      %p1049 = pneg %p362
      %p1050 = pneg %p359
      %p1051 = pneg %p383
      %p1052 = pneg %p380
      %p1053 = pneg %p404
      %p1054 = pneg %p401
      %p1055 = pneg %p425
      %p1056 = pneg %p422
      %p1057 = pneg %p446
      %p1058 = pneg %p443
      %p1059 = pneg %p467
      %p1060 = pneg %p464
      %p1061 = pneg %p488
      %p1062 = pneg %p485
      %p1063 = pneg %p509
      %p1064 = pneg %p506
      %p1065 = pneg %p530
      %p1066 = pneg %p527
      %p1067 = pneg %p551
      %p1068 = pneg %p548
      %p1069 = pneg %p572
      %p1070 = pneg %p569
      %p1071 = pneg %p593
      %p1072 = pneg %p590
      %p1073 = pneg %p614
      %p1074 = pneg %p611
      %p1075 = pneg %p635
      %p1076 = pneg %p632
      %p1077 = pneg %p656
      %p1078 = pneg %p653
      %p1079 = pneg %p677
      %p1080 = pneg %p674
      %p1081 = pneg %p698
      %p1082 = pneg %p695
      %p1083 = pneg %p719
      %p1084 = pneg %p716
      %p1085 = pneg %p740
      %p1086 = pneg %p737
      %p1087 = pneg %p761
      %p1088 = pneg %p758
      %p1089 = pneg %p782
      %p1090 = pneg %p779
      %p1091 = pneg %p803
      %p1092 = pneg %p800
      %p1093 = pneg %p824
      %p1094 = pneg %p821
      %p1095 = pneg %p845
      %p1096 = pneg %p842
      %p1097 = pneg %p871
      %p1098 = pneg %p868
      %p1099 = scmp.lt.s32.totalorder %s84, 1
      %s1100 = scalar_select %p1099, %s84, 1
      %s1101 = smul.addr %s1100, 4
      %s1102 = smul.addr %s1101, 8
      %s1103 = scalar_lea.vmem %s73, %s1102
      %p1104 = scmp.lt.s32.totalorder %s84, 1
      %s1105 = scalar_select %p1104, %s84, 1
      %s1106 = smul.addr %s1105, 4
      %s1107 = smul.addr %s1106, 8
      %s1108 = scalar_lea.vmem %s1, %s1107
      %p1109 = scmp.lt.s32.totalorder %s84, 1
      %s1110 = scalar_select %p1109, %s84, 1
      %s1111 = smul.addr %s1110, 4
      %s1112 = smul.addr %s1111, 8
      %s1113 = scalar_lea.vmem %s3, %s1112
      %p1114 = scmp.lt.s32.totalorder %s84, 1
      %s1115 = scalar_select %p1114, %s84, 1
      %s1116 = smul.addr %s1115, 4
      %s1117 = smul.addr %s1116, 8
      %s1118 = scalar_lea.vmem %s73, %s1117
      %v1119 = vld [vmem:[%s1108] sm:$0xff]
      %v1120 = vld [vmem:[%s1108 + $0x8] sm:$0xff]
      %v1121 = vld [vmem:[%s1108 + $0x10] sm:$0xf]
      %v1122 = vld [vmem:[%s1108 + $0x18] sm:$0xf]
      %v1123 = vld [vmem:[%s61] sm:$0xff]
      %v1124 = vld [vmem:[%s61 + $0x8] sm:$0xf]
      %v1125 = vld [vmem:[%s63] sm:$0xff]
      %v1126 = vld [vmem:[%s63 + $0x8] sm:$0xf]
      %vm1127 = vcmask 1043456
      %v1128 = vsel %vm1127, %v1121, 0.0
      %v1129 = vadd.f32 %v1119, %v1128
      %v1130 = vrot.slane %v1129, 4
      %v1131 = vadd.f32 %v1129, %v1130
      %v1132 = vrot.slane %v1131, 2
      %v1133 = vadd.f32 %v1131, %v1132
      %v1134 = vrot.slane %v1133, 1
      %v1135 = vadd.f32 %v1133, %v1134
      %v1136 = vsel %vm1127, %v1122, 0.0
      %v1137 = vadd.f32 %v1120, %v1136
      %v1138 = vrot.slane %v1137, 4
      %v1139 = vadd.f32 %v1137, %v1138
      %v1140 = vrot.slane %v1139, 2
      %v1141 = vadd.f32 %v1139, %v1140
      %v1142 = vrot.slane %v1141, 1
      %v1143 = vadd.f32 %v1141, %v1142
      %v1144 = vrcp.pop 12.0
      %v1145 = vmul.f32 %v1135, %v1144
      %v1146 = vmul.f32 %v1143, %v1144
      %v1147 = vsub.f32 %v1119, %v1145
      %v1148 = vsub.f32 %v1120, %v1146
      %v1149 = vsub.f32 %v1121, %v1145
      %v1150 = vsub.f32 %v1122, %v1146
      %v1151 = vmul.f32 %v1147, %v1147
      %v1152 = vmul.f32 %v1148, %v1148
      %v1153 = vmul.f32 %v1149, %v1149
      %v1154 = vmul.f32 %v1150, %v1150
      %v1155 = vsel %vm1127, %v1153, 0.0
      %v1156 = vadd.f32 %v1151, %v1155
      %v1157 = vrot.slane %v1156, 4
      %v1158 = vadd.f32 %v1156, %v1157
      %v1159 = vrot.slane %v1158, 2
      %v1160 = vadd.f32 %v1158, %v1159
      %v1161 = vrot.slane %v1160, 1
      %v1162 = vadd.f32 %v1160, %v1161
      %v1163 = vsel %vm1127, %v1154, 0.0
      %v1164 = vadd.f32 %v1152, %v1163
      %v1165 = vrot.slane %v1164, 4
      %v1166 = vadd.f32 %v1164, %v1165
      %v1167 = vrot.slane %v1166, 2
      %v1168 = vadd.f32 %v1166, %v1167
      %v1169 = vrot.slane %v1168, 1
      %v1170 = vadd.f32 %v1168, %v1169
      %v1171 = vmul.f32 %v1162, %v1144
      %v1172 = vmul.f32 %v1170, %v1144
      %v1173 = vadd.f32 %v1171, 1e-05
      %v1174 = vadd.f32 %v1172, 1e-05
      %v1175 = vrsqrt.pop %v1173
      %v1176 = vrsqrt.pop %v1174
      %v1177 = vmul.f32 %v1147, %v1175
      %v1178 = vmul.f32 %v1148, %v1176
      %v1179 = vmul.f32 %v1149, %v1175
      %v1180 = vmul.f32 %v1150, %v1176
      %1182 = vset.pattern.permute.xlu0 0
      %1183 = vperm.xlu0 %1182, %v1123
      %v1184 = vpop.permute.xlu0 %1183
      %1187 = vset.pattern.permute.xlu0 0
      %1188 = vperm.xlu0 %1187, %v1124
      %v1189 = vpop.permute.xlu0 %1188
      %v1191 = vmul.f32 %v1177, %v1184
      %v1192 = vmul.f32 %v1178, %v1184
      %v1193 = vmul.f32 %v1179, %v1189
      %v1194 = vmul.f32 %v1180, %v1189
      %1196 = vset.pattern.permute.xlu0 0
      %1197 = vperm.xlu0 %1196, %v1125
      %v1198 = vpop.permute.xlu0 %1197
      %1201 = vset.pattern.permute.xlu0 0
      %1202 = vperm.xlu0 %1201, %v1126
      %v1203 = vpop.permute.xlu0 %1202
      %v1205 = vadd.f32 %v1191, %v1198
      %v1206 = vadd.f32 %v1192, %v1198
      %v1207 = vadd.f32 %v1193, %v1203
      %v1208 = vadd.f32 %v1194, %v1203
      %v1209 = vld [vmem:[%s1113] sm:$0xff]
      %v1210 = vld [vmem:[%s1113 + $0x8] sm:$0xff]
      %v1211 = vld [vmem:[%s1113 + $0x10] sm:$0xf]
      %v1212 = vld [vmem:[%s1113 + $0x18] sm:$0xf]
      %v1213 = vld [vmem:[%s23] sm:$0xff]
      %v1214 = vld [vmem:[%s23 + $0x8] sm:$0xff]
      %v1215 = vld [vmem:[%s23 + $0x10] sm:$0xff]
      %v1216 = vld [vmem:[%s23 + $0x18] sm:$0xff]
      %v1217 = vld [vmem:[%s23 + $0x20] sm:$0xff]
      %v1218 = vld [vmem:[%s23 + $0x28] sm:$0xff]
      %v1219 = vld [vmem:[%s23 + $0x30] sm:$0xff]
      %v1220 = vld [vmem:[%s23 + $0x38] sm:$0xff]
      %v1221 = vld [vmem:[%s23 + $0x40] sm:$0xff]
      %v1222 = vld [vmem:[%s23 + $0x48] sm:$0xff]
      %v1223 = vld [vmem:[%s23 + $0x50] sm:$0xff]
      %v1224 = vld [vmem:[%s23 + $0x58] sm:$0xff]
      %v1225 = vld [vmem:[%s23 + $0x60] sm:$0xff]
      %v1226 = vld [vmem:[%s23 + $0x68] sm:$0xff]
      %v1227 = vld [vmem:[%s23 + $0x70] sm:$0xff]
      %v1228 = vld [vmem:[%s23 + $0x78] sm:$0xff]
      %v1229 = vld [vmem:[%s23 + $0x80] sm:$0xff]
      %v1230 = vld [vmem:[%s23 + $0x88] sm:$0xff]
      %v1231 = vld [vmem:[%s23 + $0x90] sm:$0xff]
      %v1232 = vld [vmem:[%s23 + $0x98] sm:$0xff]
      %v1233 = vld [vmem:[%s23 + $0xa0] sm:$0xff]
      %v1234 = vld [vmem:[%s23 + $0xa8] sm:$0xff]
      %v1235 = vld [vmem:[%s23 + $0xb0] sm:$0xff]
      %v1236 = vld [vmem:[%s23 + $0xb8] sm:$0xff]
      %v1237 = vld [vmem:[%s23 + $0xc0] sm:$0xff]
      %v1238 = vld [vmem:[%s23 + $0xc8] sm:$0xff]
      %v1239 = vld [vmem:[%s23 + $0xd0] sm:$0xff]
      %v1240 = vld [vmem:[%s23 + $0xd8] sm:$0xff]
      %v1241 = vld [vmem:[%s23 + $0xe0] sm:$0xff]
      %v1242 = vld [vmem:[%s23 + $0xe8] sm:$0xff]
      %v1243 = vld [vmem:[%s23 + $0xf0] sm:$0xff]
      %v1244 = vld [vmem:[%s23 + $0xf8] sm:$0xff]
      %v1245 = vld [vmem:[%s23 + $0x100] sm:$0xff]
      %v1246 = vld [vmem:[%s23 + $0x108] sm:$0xff]
      %v1247 = vld [vmem:[%s23 + $0x110] sm:$0xff]
      %v1248 = vld [vmem:[%s23 + $0x118] sm:$0xff]
      %v1249 = vld [vmem:[%s23 + $0x120] sm:$0xff]
      %v1250 = vld [vmem:[%s23 + $0x128] sm:$0xff]
      %v1251 = vld [vmem:[%s23 + $0x130] sm:$0xff]
      %v1252 = vld [vmem:[%s23 + $0x138] sm:$0xff]
      %v1253 = vld [vmem:[%s23 + $0x140] sm:$0xff]
      %v1254 = vld [vmem:[%s23 + $0x148] sm:$0xff]
      %v1255 = vld [vmem:[%s23 + $0x150] sm:$0xff]
      %v1256 = vld [vmem:[%s23 + $0x158] sm:$0xff]
      %v1257 = vld [vmem:[%s23 + $0x160] sm:$0xff]
      %v1258 = vld [vmem:[%s23 + $0x168] sm:$0xff]
      %v1259 = vld [vmem:[%s23 + $0x170] sm:$0xff]
      %v1260 = vld [vmem:[%s23 + $0x178] sm:$0xff]
      %v1261 = vld [vmem:[%s23 + $0x180] sm:$0xff]
      %v1262 = vld [vmem:[%s23 + $0x188] sm:$0xff]
      %v1263 = vld [vmem:[%s23 + $0x190] sm:$0xff]
      %v1264 = vld [vmem:[%s23 + $0x198] sm:$0xff]
      %v1265 = vld [vmem:[%s23 + $0x1a0] sm:$0xff]
      %v1266 = vld [vmem:[%s23 + $0x1a8] sm:$0xff]
      %v1267 = vld [vmem:[%s23 + $0x1b0] sm:$0xff]
      %v1268 = vld [vmem:[%s23 + $0x1b8] sm:$0xff]
      %v1269 = vld [vmem:[%s23 + $0x1c0] sm:$0xff]
      %v1270 = vld [vmem:[%s23 + $0x1c8] sm:$0xff]
      %v1271 = vld [vmem:[%s23 + $0x1d0] sm:$0xff]
      %v1272 = vld [vmem:[%s23 + $0x1d8] sm:$0xff]
      %v1273 = vld [vmem:[%s23 + $0x1e0] sm:$0xff]
      %v1274 = vld [vmem:[%s23 + $0x1e8] sm:$0xff]
      %v1275 = vld [vmem:[%s23 + $0x1f0] sm:$0xff]
      %v1276 = vld [vmem:[%s23 + $0x1f8] sm:$0xff]
      %v1277 = vld [vmem:[%s5] sm:$0xf]
      %vm1278 = vcmask 97280
      %v1280 = vsel %vm1278, %v1277, 0
      %v1283 = vsel %vm1127, %v1211, 0
      %v1286 = vsel %vm1127, %v1212, 0
      %1288 = vmatprep.subr.mxu0 %v1210
      %1289 = vmatpush1.msra.mxu0 %v1209
      %1290 = vmatprep.subr.mxu0 %v1286
      %1291 = vmatpush1.msra.mxu0 %v1283
      %1292 = vmatprep.subr.mxu0 0.0
      %1293 = vmatpush1.msra.mxu0 0.0
      %1294 = vmatprep.subr.mxu0 0.0
      %1295 = vmatpush1.msra.mxu0 0.0
      %1296 = vmatprep.subr.mxu0 0.0
      %1297 = vmatpush1.msra.mxu0 0.0
      %1298 = vmatprep.subr.mxu0 0.0
      %1299 = vmatpush1.msra.mxu0 0.0
      %1300 = vmatprep.subr.mxu0 0.0
      %1301 = vmatpush1.msra.mxu0 0.0
      %1302 = vmatprep.subr.mxu0 0.0
      %1303 = vmatpush1.msra.mxu0 0.0
      %1304 = vmatprep.subr.mxu0 0.0
      %1305 = vmatpush1.msra.mxu0 0.0
      %1306 = vmatprep.subr.mxu0 0.0
      %1307 = vmatpush1.msra.mxu0 0.0
      %1308 = vmatprep.subr.mxu0 0.0
      %1309 = vmatpush1.msra.mxu0 0.0
      %1310 = vmatprep.subr.mxu0 0.0
      %1311 = vmatpush1.msra.mxu0 0.0
      %1312 = vmatprep.subr.mxu0 0.0
      %1313 = vmatpush1.msra.mxu0 0.0
      %1314 = vmatprep.subr.mxu0 0.0
      %1315 = vmatpush1.msra.mxu0 0.0
      %1316 = vmatprep.subr.mxu0 0.0
      %1317 = vmatpush1.msra.mxu0 0.0
      %1318 = vmatprep.subr.mxu0 0.0
      %1319 = vmatpush1.msra.mxu0 0.0
      %1320 = vmatprep.subr.mxu0 0.0
      %1321 = vmatpush1.msra.mxu0 0.0
      %1322 = vmatprep.subr.mxu0 0.0
      %1323 = vmatpush1.msra.mxu0 0.0
      %1324 = vmatprep.subr.mxu0 0.0
      %1325 = vmatpush1.msra.mxu0 0.0
      %1326 = vmatprep.subr.mxu0 0.0
      %1327 = vmatpush1.msra.mxu0 0.0
      %1328 = vmatprep.subr.mxu0 0.0
      %1329 = vmatpush1.msra.mxu0 0.0
      %1330 = vmatprep.subr.mxu0 0.0
      %1331 = vmatpush1.msra.mxu0 0.0
      %1332 = vmatprep.subr.mxu0 0.0
      %1333 = vmatpush1.msra.mxu0 0.0
      %1334 = vmatprep.subr.mxu0 0.0
      %1335 = vmatpush1.msra.mxu0 0.0
      %1336 = vmatprep.subr.mxu0 0.0
      %1337 = vmatpush1.msra.mxu0 0.0
      %1338 = vmatprep.subr.mxu0 0.0
      %1339 = vmatpush1.msra.mxu0 0.0
      %1340 = vmatprep.subr.mxu0 0.0
      %1341 = vmatpush1.msra.mxu0 0.0
      %1342 = vmatprep.subr.mxu0 0.0
      %1343 = vmatpush1.msra.mxu0 0.0
      %1344 = vmatprep.subr.mxu0 0.0
      %1345 = vmatpush1.msra.mxu0 0.0
      %1346 = vmatprep.subr.mxu0 0.0
      %1347 = vmatpush1.msra.mxu0 0.0
      %1348 = vmatprep.subr.mxu0 0.0
      %1349 = vmatpush1.msra.mxu0 0.0
      %1350 = vmatprep.subr.mxu0 0.0
      %1351 = vmatpush1.msra.mxu0 0.0
      %1352 = vmatprep.mubr.f32.mxu0 0.0
      %1353 = vmatmul.mubr.f32.gmra.mrb[0].mxu0 %v1280
      %v1354 = vpop.f32.mrb[0].mxu0
      %v1355 = vadd.f32 0.0, %v1354
      %v1356 = vpop.f32.mrb[0].mxu0
      %v1357 = vadd.f32 0.0, %v1356
      %1358 = vdwg.mxu0
      %v1359 = vsel %vm1127, %v1355, 0.0
      %v1360 = vrot.slane %v1359, 4
      %v1361 = vadd.f32 %v1359, %v1360
      %v1362 = vrot.slane %v1361, 2
      %v1363 = vadd.f32 %v1361, %v1362
      %v1364 = vrot.slane %v1363, 1
      %v1365 = vadd.f32 %v1363, %v1364
      %v1366 = vsel %vm1127, %v1357, 0.0
      %v1367 = vrot.slane %v1366, 4
      %v1368 = vadd.f32 %v1366, %v1367
      %v1369 = vrot.slane %v1368, 2
      %v1370 = vadd.f32 %v1368, %v1369
      %v1371 = vrot.slane %v1370, 1
      %v1372 = vadd.f32 %v1370, %v1371
      %v1373 = vld [vmem:[%s11] sm:$0xff]
      %v1374 = vld [vmem:[%s11 + $0x8] sm:$0xf]
      %v1375 = vld [vmem:[%s13] sm:$0xff]
      %v1376 = vld [vmem:[%s13 + $0x8] sm:$0xf]
      %1378 = vset.pattern.permute.xlu0 0
      %1379 = vperm.xlu0 %1378, %v1375
      %v1380 = vpop.permute.xlu0 %1379
      %1383 = vset.pattern.permute.xlu0 0
      %1384 = vperm.xlu0 %1383, %v1376
      %v1385 = vpop.permute.xlu0 %1384
      %v1388 = vsel %vm1278, %v1373, 0
      %v1391 = vsel %vm1278, %v1374, 0
      %1393 = vmatprep.subr.mxu0 %v1210
      %1394 = vmatpush1.msra.mxu0 %v1209
      %1395 = vmatprep.subr.mxu0 %v1286
      %1396 = vmatpush1.msra.mxu0 %v1283
      %1397 = vmatprep.subr.mxu0 0.0
      %1398 = vmatpush1.msra.mxu0 0.0
      %1399 = vmatprep.subr.mxu0 0.0
      %1400 = vmatpush1.msra.mxu0 0.0
      %1401 = vmatprep.subr.mxu0 0.0
      %1402 = vmatpush1.msra.mxu0 0.0
      %1403 = vmatprep.subr.mxu0 0.0
      %1404 = vmatpush1.msra.mxu0 0.0
      %1405 = vmatprep.subr.mxu0 0.0
      %1406 = vmatpush1.msra.mxu0 0.0
      %1407 = vmatprep.subr.mxu0 0.0
      %1408 = vmatpush1.msra.mxu0 0.0
      %1409 = vmatprep.subr.mxu0 0.0
      %1410 = vmatpush1.msra.mxu0 0.0
      %1411 = vmatprep.subr.mxu0 0.0
      %1412 = vmatpush1.msra.mxu0 0.0
      %1413 = vmatprep.subr.mxu0 0.0
      %1414 = vmatpush1.msra.mxu0 0.0
      %1415 = vmatprep.subr.mxu0 0.0
      %1416 = vmatpush1.msra.mxu0 0.0
      %1417 = vmatprep.subr.mxu0 0.0
      %1418 = vmatpush1.msra.mxu0 0.0
      %1419 = vmatprep.subr.mxu0 0.0
      %1420 = vmatpush1.msra.mxu0 0.0
      %1421 = vmatprep.subr.mxu0 0.0
      %1422 = vmatpush1.msra.mxu0 0.0
      %1423 = vmatprep.subr.mxu0 0.0
      %1424 = vmatpush1.msra.mxu0 0.0
      %1425 = vmatprep.subr.mxu0 0.0
      %1426 = vmatpush1.msra.mxu0 0.0
      %1427 = vmatprep.subr.mxu0 0.0
      %1428 = vmatpush1.msra.mxu0 0.0
      %1429 = vmatprep.subr.mxu0 0.0
      %1430 = vmatpush1.msra.mxu0 0.0
      %1431 = vmatprep.subr.mxu0 0.0
      %1432 = vmatpush1.msra.mxu0 0.0
      %1433 = vmatprep.subr.mxu0 0.0
      %1434 = vmatpush1.msra.mxu0 0.0
      %1435 = vmatprep.subr.mxu0 0.0
      %1436 = vmatpush1.msra.mxu0 0.0
      %1437 = vmatprep.subr.mxu0 0.0
      %1438 = vmatpush1.msra.mxu0 0.0
      %1439 = vmatprep.subr.mxu0 0.0
      %1440 = vmatpush1.msra.mxu0 0.0
      %1441 = vmatprep.subr.mxu0 0.0
      %1442 = vmatpush1.msra.mxu0 0.0
      %1443 = vmatprep.subr.mxu0 0.0
      %1444 = vmatpush1.msra.mxu0 0.0
      %1445 = vmatprep.subr.mxu0 0.0
      %1446 = vmatpush1.msra.mxu0 0.0
      %1447 = vmatprep.subr.mxu0 0.0
      %1448 = vmatpush1.msra.mxu0 0.0
      %1449 = vmatprep.subr.mxu0 0.0
      %1450 = vmatpush1.msra.mxu0 0.0
      %1451 = vmatprep.subr.mxu0 0.0
      %1452 = vmatpush1.msra.mxu0 0.0
      %1453 = vmatprep.subr.mxu0 0.0
      %1454 = vmatpush1.msra.mxu0 0.0
      %1455 = vmatprep.subr.mxu0 0.0
      %1456 = vmatpush1.msra.mxu0 0.0
      %1457 = vmatprep.mubr.f32.mxu0 0.0
      %1458 = vmatmul.mubr.f32.gmra.mrb[0].mxu0 %v1388
      %v1459 = vpop.f32.mrb[0].mxu0
      %v1460 = vadd.f32 %v1380, %v1459
      %v1461 = vpop.f32.mrb[0].mxu0
      %v1462 = vadd.f32 %v1380, %v1461
      %1463 = vmatprep.mubr.f32.mxu0 0.0
      %1464 = vmatmul.mubr.f32.gmra.mrb[0].mxu0 %v1391
      %v1465 = vpop.f32.mrb[0].mxu0
      %v1466 = vadd.f32 %v1385, %v1465
      %v1467 = vpop.f32.mrb[0].mxu0
      %v1468 = vadd.f32 %v1385, %v1467
      %1469 = vdwg.mxu0
      %v1470 = vld [vmem:[%s15] sm:$0xff]
      %v1471 = vld [vmem:[%s15 + $0x8] sm:$0xf]
      %v1472 = vld [vmem:[%s17] sm:$0xff]
      %v1473 = vld [vmem:[%s17 + $0x8] sm:$0xf]
      %v1474 = vsel %vm1127, %v1466, 0.0
      %v1475 = vadd.f32 %v1460, %v1474
      %v1476 = vrot.slane %v1475, 4
      %v1477 = vadd.f32 %v1475, %v1476
      %v1478 = vrot.slane %v1477, 2
      %v1479 = vadd.f32 %v1477, %v1478
      %v1480 = vrot.slane %v1479, 1
      %v1481 = vadd.f32 %v1479, %v1480
      %v1482 = vsel %vm1127, %v1468, 0.0
      %v1483 = vadd.f32 %v1462, %v1482
      %v1484 = vrot.slane %v1483, 4
      %v1485 = vadd.f32 %v1483, %v1484
      %v1486 = vrot.slane %v1485, 2
      %v1487 = vadd.f32 %v1485, %v1486
      %v1488 = vrot.slane %v1487, 1
      %v1489 = vadd.f32 %v1487, %v1488
      %v1490 = vmul.f32 %v1481, %v1144
      %v1491 = vmul.f32 %v1489, %v1144
      %v1492 = vsub.f32 %v1460, %v1490
      %v1493 = vsub.f32 %v1462, %v1491
      %v1494 = vsub.f32 %v1466, %v1490
      %v1495 = vsub.f32 %v1468, %v1491
      %v1496 = vmul.f32 %v1492, %v1492
      %v1497 = vmul.f32 %v1493, %v1493
      %v1498 = vmul.f32 %v1494, %v1494
      %v1499 = vmul.f32 %v1495, %v1495
      %v1500 = vsel %vm1127, %v1498, 0.0
      %v1501 = vadd.f32 %v1496, %v1500
      %v1502 = vrot.slane %v1501, 4
      %v1503 = vadd.f32 %v1501, %v1502
      %v1504 = vrot.slane %v1503, 2
      %v1505 = vadd.f32 %v1503, %v1504
      %v1506 = vrot.slane %v1505, 1
      %v1507 = vadd.f32 %v1505, %v1506
      %v1508 = vsel %vm1127, %v1499, 0.0
      %v1509 = vadd.f32 %v1497, %v1508
      %v1510 = vrot.slane %v1509, 4
      %v1511 = vadd.f32 %v1509, %v1510
      %v1512 = vrot.slane %v1511, 2
      %v1513 = vadd.f32 %v1511, %v1512
      %v1514 = vrot.slane %v1513, 1
      %v1515 = vadd.f32 %v1513, %v1514
      %v1516 = vmul.f32 %v1507, %v1144
      %v1517 = vmul.f32 %v1515, %v1144
      %v1518 = vadd.f32 %v1516, 1e-05
      %v1519 = vadd.f32 %v1517, 1e-05
      %v1520 = vrsqrt.pop %v1518
      %v1521 = vrsqrt.pop %v1519
      %v1522 = vmul.f32 %v1492, %v1520
      %v1523 = vmul.f32 %v1493, %v1521
      %v1524 = vmul.f32 %v1494, %v1520
      %v1525 = vmul.f32 %v1495, %v1521
      %1527 = vset.pattern.permute.xlu0 0
      %1528 = vperm.xlu0 %1527, %v1470
      %v1529 = vpop.permute.xlu0 %1528
      %1532 = vset.pattern.permute.xlu0 0
      %1533 = vperm.xlu0 %1532, %v1471
      %v1534 = vpop.permute.xlu0 %1533
      %v1536 = vmul.f32 %v1522, %v1529
      %v1537 = vmul.f32 %v1523, %v1529
      %v1538 = vmul.f32 %v1524, %v1534
      %v1539 = vmul.f32 %v1525, %v1534
      %1541 = vset.pattern.permute.xlu0 0
      %1542 = vperm.xlu0 %1541, %v1472
      %v1543 = vpop.permute.xlu0 %1542
      %1546 = vset.pattern.permute.xlu0 0
      %1547 = vperm.xlu0 %1546, %v1473
      %v1548 = vpop.permute.xlu0 %1547
      %v1550 = vadd.f32 %v1536, %v1543
      %v1551 = vadd.f32 %v1537, %v1543
      %v1552 = vadd.f32 %v1538, %v1548
      %v1553 = vadd.f32 %v1539, %v1548
      %v1554 = vmul.f32 %v1550, 0.5
      %v1555 = vmul.f32 %v1551, 0.5
      %v1556 = vmul.f32 %v1552, 0.5
      %v1557 = vmul.f32 %v1553, 0.5
      %v1558 = vmul.f32 %v1550, 0.70710677
      %v1559 = vmul.f32 %v1551, 0.70710677
      %v1560 = vmul.f32 %v1552, 0.70710677
      %v1561 = vmul.f32 %v1553, 0.70710677
      %vm1562 = vcmp.ge.f32.partialorder %v1558, 0.0
      %vm1563 = vcmp.ge.f32.partialorder %v1559, 0.0
      %vm1564 = vcmp.ge.f32.partialorder %v1560, 0.0
      %vm1565 = vcmp.ge.f32.partialorder %v1561, 0.0
      %v1566 = vsel %vm1562, 1.0, -1.0
      %v1567 = vsel %vm1563, 1.0, -1.0
      %v1568 = vsel %vm1564, 1.0, -1.0
      %v1569 = vsel %vm1565, 1.0, -1.0
      %v1570 = vand.u32 2147483647, %v1558
      %v1571 = vand.u32 2147483647, %v1559
      %v1572 = vand.u32 2147483647, %v1560
      %v1573 = vand.u32 2147483647, %v1561
      %v1574 = vmul.f32 %v1570, 0.3275911
      %v1575 = vmul.f32 %v1571, 0.3275911
      %v1576 = vmul.f32 %v1572, 0.3275911
      %v1577 = vmul.f32 %v1573, 0.3275911
      %v1578 = vadd.f32 %v1574, 1.0
      %v1579 = vadd.f32 %v1575, 1.0
      %v1580 = vadd.f32 %v1576, 1.0
      %v1581 = vadd.f32 %v1577, 1.0
      %v1582 = vrcp.pop %v1578
      %v1583 = vmul.f32 1.0, %v1582
      %v1584 = vrcp.pop %v1579
      %v1585 = vmul.f32 1.0, %v1584
      %v1586 = vrcp.pop %v1580
      %v1587 = vmul.f32 1.0, %v1586
      %v1588 = vrcp.pop %v1581
      %v1589 = vmul.f32 1.0, %v1588
      %v1590 = vmul.f32 %v1583, 1.0614054
      %v1591 = vmul.f32 %v1585, 1.0614054
      %v1592 = vmul.f32 %v1587, 1.0614054
      %v1593 = vmul.f32 %v1589, 1.0614054
      %v1594 = vadd.f32 %v1590, -1.4531521
      %v1595 = vadd.f32 %v1591, -1.4531521
      %v1596 = vadd.f32 %v1592, -1.4531521
      %v1597 = vadd.f32 %v1593, -1.4531521
      %v1598 = vmul.f32 %v1583, %v1594
      %v1599 = vmul.f32 %v1585, %v1595
      %v1600 = vmul.f32 %v1587, %v1596
      %v1601 = vmul.f32 %v1589, %v1597
      %v1602 = vadd.f32 %v1598, 1.4214138
      %v1603 = vadd.f32 %v1599, 1.4214138
      %v1604 = vadd.f32 %v1600, 1.4214138
      %v1605 = vadd.f32 %v1601, 1.4214138
      %v1606 = vmul.f32 %v1583, %v1602
      %v1607 = vmul.f32 %v1585, %v1603
      %v1608 = vmul.f32 %v1587, %v1604
      %v1609 = vmul.f32 %v1589, %v1605
      %v1610 = vadd.f32 %v1606, -0.28449672
      %v1611 = vadd.f32 %v1607, -0.28449672
      %v1612 = vadd.f32 %v1608, -0.28449672
      %v1613 = vadd.f32 %v1609, -0.28449672
      %v1614 = vmul.f32 %v1583, %v1610
      %v1615 = vmul.f32 %v1585, %v1611
      %v1616 = vmul.f32 %v1587, %v1612
      %v1617 = vmul.f32 %v1589, %v1613
      %v1618 = vadd.f32 %v1614, 0.2548296
      %v1619 = vadd.f32 %v1615, 0.2548296
      %v1620 = vadd.f32 %v1616, 0.2548296
      %v1621 = vadd.f32 %v1617, 0.2548296
      %v1622 = vmul.f32 %v1583, %v1618
      %v1623 = vmul.f32 %v1585, %v1619
      %v1624 = vmul.f32 %v1587, %v1620
      %v1625 = vmul.f32 %v1589, %v1621
      %v1626 = vsub.f32 0.0, %v1570
      %v1627 = vsub.f32 0.0, %v1571
      %v1628 = vsub.f32 0.0, %v1572
      %v1629 = vsub.f32 0.0, %v1573
      %v1630 = vmul.f32 %v1626, %v1570
      %v1631 = vmul.f32 %v1627, %v1571
      %v1632 = vmul.f32 %v1628, %v1572
      %v1633 = vmul.f32 %v1629, %v1573
      %v1634 = vmul.f32 %v1630, 1.442695
      %v1635 = vpow.pop %v1634
      %v1636 = vmul.f32 %v1631, 1.442695
      %v1637 = vpow.pop %v1636
      %v1638 = vmul.f32 %v1632, 1.442695
      %v1639 = vpow.pop %v1638
      %v1640 = vmul.f32 %v1633, 1.442695
      %v1641 = vpow.pop %v1640
      %v1642 = vmul.f32 %v1622, %v1635
      %v1643 = vmul.f32 %v1623, %v1637
      %v1644 = vmul.f32 %v1624, %v1639
      %v1645 = vmul.f32 %v1625, %v1641
      %v1646 = vsub.f32 1.0, %v1642
      %v1647 = vsub.f32 1.0, %v1643
      %v1648 = vsub.f32 1.0, %v1644
      %v1649 = vsub.f32 1.0, %v1645
      %v1650 = vmul.f32 %v1566, %v1646
      %v1651 = vmul.f32 %v1567, %v1647
      %v1652 = vmul.f32 %v1568, %v1648
      %v1653 = vmul.f32 %v1569, %v1649
      %v1654 = vadd.f32 %v1650, 1.0
      %v1655 = vadd.f32 %v1651, 1.0
      %v1656 = vadd.f32 %v1652, 1.0
      %v1657 = vadd.f32 %v1653, 1.0
      %v1658 = vmul.f32 %v1554, %v1654
      %v1659 = vmul.f32 %v1555, %v1655
      %v1660 = vmul.f32 %v1556, %v1656
      %v1661 = vmul.f32 %v1557, %v1657
      %v1662 = vld [vmem:[%s7] sm:$0xf]
      %v1664 = vsel %vm1278, %v1662, 0
      %v1667 = vsel %vm1127, %v1660, 0
      %v1670 = vsel %vm1127, %v1661, 0
      %1672 = vmatprep.subr.mxu0 %v1659
      %1673 = vmatpush1.msra.mxu0 %v1658
      %1674 = vmatprep.subr.mxu0 %v1670
      %1675 = vmatpush1.msra.mxu0 %v1667
      %1676 = vmatprep.subr.mxu0 0.0
      %1677 = vmatpush1.msra.mxu0 0.0
      %1678 = vmatprep.subr.mxu0 0.0
      %1679 = vmatpush1.msra.mxu0 0.0
      %1680 = vmatprep.subr.mxu0 0.0
      %1681 = vmatpush1.msra.mxu0 0.0
      %1682 = vmatprep.subr.mxu0 0.0
      %1683 = vmatpush1.msra.mxu0 0.0
      %1684 = vmatprep.subr.mxu0 0.0
      %1685 = vmatpush1.msra.mxu0 0.0
      %1686 = vmatprep.subr.mxu0 0.0
      %1687 = vmatpush1.msra.mxu0 0.0
      %1688 = vmatprep.subr.mxu0 0.0
      %1689 = vmatpush1.msra.mxu0 0.0
      %1690 = vmatprep.subr.mxu0 0.0
      %1691 = vmatpush1.msra.mxu0 0.0
      %1692 = vmatprep.subr.mxu0 0.0
      %1693 = vmatpush1.msra.mxu0 0.0
      %1694 = vmatprep.subr.mxu0 0.0
      %1695 = vmatpush1.msra.mxu0 0.0
      %1696 = vmatprep.subr.mxu0 0.0
      %1697 = vmatpush1.msra.mxu0 0.0
      %1698 = vmatprep.subr.mxu0 0.0
      %1699 = vmatpush1.msra.mxu0 0.0
      %1700 = vmatprep.subr.mxu0 0.0
      %1701 = vmatpush1.msra.mxu0 0.0
      %1702 = vmatprep.subr.mxu0 0.0
      %1703 = vmatpush1.msra.mxu0 0.0
      %1704 = vmatprep.subr.mxu0 0.0
      %1705 = vmatpush1.msra.mxu0 0.0
      %1706 = vmatprep.subr.mxu0 0.0
      %1707 = vmatpush1.msra.mxu0 0.0
      %1708 = vmatprep.subr.mxu0 0.0
      %1709 = vmatpush1.msra.mxu0 0.0
      %1710 = vmatprep.subr.mxu0 0.0
      %1711 = vmatpush1.msra.mxu0 0.0
      %1712 = vmatprep.subr.mxu0 0.0
      %1713 = vmatpush1.msra.mxu0 0.0
      %1714 = vmatprep.subr.mxu0 0.0
      %1715 = vmatpush1.msra.mxu0 0.0
      %1716 = vmatprep.subr.mxu0 0.0
      %1717 = vmatpush1.msra.mxu0 0.0
      %1718 = vmatprep.subr.mxu0 0.0
      %1719 = vmatpush1.msra.mxu0 0.0
      %1720 = vmatprep.subr.mxu0 0.0
      %1721 = vmatpush1.msra.mxu0 0.0
      %1722 = vmatprep.subr.mxu0 0.0
      %1723 = vmatpush1.msra.mxu0 0.0
      %1724 = vmatprep.subr.mxu0 0.0
      %1725 = vmatpush1.msra.mxu0 0.0
      %1726 = vmatprep.subr.mxu0 0.0
      %1727 = vmatpush1.msra.mxu0 0.0
      %1728 = vmatprep.subr.mxu0 0.0
      %1729 = vmatpush1.msra.mxu0 0.0
      %1730 = vmatprep.subr.mxu0 0.0
      %1731 = vmatpush1.msra.mxu0 0.0
      %1732 = vmatprep.subr.mxu0 0.0
      %1733 = vmatpush1.msra.mxu0 0.0
      %1734 = vmatprep.subr.mxu0 0.0
      %1735 = vmatpush1.msra.mxu0 0.0
      %1736 = vmatprep.mubr.f32.mxu0 0.0
      %1737 = vmatmul.mubr.f32.gmra.mrb[0].mxu0 %v1664
      %v1738 = vpop.f32.mrb[0].mxu0
      %v1739 = vadd.f32 0.0, %v1738
      %v1740 = vpop.f32.mrb[0].mxu0
      %v1741 = vadd.f32 0.0, %v1740
      %1742 = vdwg.mxu0
      %v1743 = vld [vmem:[%s9] sm:$0xff]
      %v1744 = vld [vmem:[%s9 + $0x8] sm:$0xf]
      %v1746 = vsel %vm1278, %v1743, 0
      %v1749 = vsel %vm1278, %v1744, 0
      %1751 = vmatprep.subr.mxu0 %v1659
      %1752 = vmatpush1.msra.mxu0 %v1658
      %1753 = vmatprep.subr.mxu0 %v1670
      %1754 = vmatpush1.msra.mxu0 %v1667
      %1755 = vmatprep.subr.mxu0 0.0
      %1756 = vmatpush1.msra.mxu0 0.0
      %1757 = vmatprep.subr.mxu0 0.0
      %1758 = vmatpush1.msra.mxu0 0.0
      %1759 = vmatprep.subr.mxu0 0.0
      %1760 = vmatpush1.msra.mxu0 0.0
      %1761 = vmatprep.subr.mxu0 0.0
      %1762 = vmatpush1.msra.mxu0 0.0
      %1763 = vmatprep.subr.mxu0 0.0
      %1764 = vmatpush1.msra.mxu0 0.0
      %1765 = vmatprep.subr.mxu0 0.0
      %1766 = vmatpush1.msra.mxu0 0.0
      %1767 = vmatprep.subr.mxu0 0.0
      %1768 = vmatpush1.msra.mxu0 0.0
      %1769 = vmatprep.subr.mxu0 0.0
      %1770 = vmatpush1.msra.mxu0 0.0
      %1771 = vmatprep.subr.mxu0 0.0
      %1772 = vmatpush1.msra.mxu0 0.0
      %1773 = vmatprep.subr.mxu0 0.0
      %1774 = vmatpush1.msra.mxu0 0.0
      %1775 = vmatprep.subr.mxu0 0.0
      %1776 = vmatpush1.msra.mxu0 0.0
      %1777 = vmatprep.subr.mxu0 0.0
      %1778 = vmatpush1.msra.mxu0 0.0
      %1779 = vmatprep.subr.mxu0 0.0
      %1780 = vmatpush1.msra.mxu0 0.0
      %1781 = vmatprep.subr.mxu0 0.0
      %1782 = vmatpush1.msra.mxu0 0.0
      %1783 = vmatprep.subr.mxu0 0.0
      %1784 = vmatpush1.msra.mxu0 0.0
      %1785 = vmatprep.subr.mxu0 0.0
      %1786 = vmatpush1.msra.mxu0 0.0
      %1787 = vmatprep.subr.mxu0 0.0
      %1788 = vmatpush1.msra.mxu0 0.0
      %1789 = vmatprep.subr.mxu0 0.0
      %1790 = vmatpush1.msra.mxu0 0.0
      %1791 = vmatprep.subr.mxu0 0.0
      %1792 = vmatpush1.msra.mxu0 0.0
      %1793 = vmatprep.subr.mxu0 0.0
      %1794 = vmatpush1.msra.mxu0 0.0
      %1795 = vmatprep.subr.mxu0 0.0
      %1796 = vmatpush1.msra.mxu0 0.0
      %1797 = vmatprep.subr.mxu0 0.0
      %1798 = vmatpush1.msra.mxu0 0.0
      %1799 = vmatprep.subr.mxu0 0.0
      %1800 = vmatpush1.msra.mxu0 0.0
      %1801 = vmatprep.subr.mxu0 0.0
      %1802 = vmatpush1.msra.mxu0 0.0
      %1803 = vmatprep.subr.mxu0 0.0
      %1804 = vmatpush1.msra.mxu0 0.0
      %1805 = vmatprep.subr.mxu0 0.0
      %1806 = vmatpush1.msra.mxu0 0.0
      %1807 = vmatprep.subr.mxu0 0.0
      %1808 = vmatpush1.msra.mxu0 0.0
      %1809 = vmatprep.subr.mxu0 0.0
      %1810 = vmatpush1.msra.mxu0 0.0
      %1811 = vmatprep.subr.mxu0 0.0
      %1812 = vmatpush1.msra.mxu0 0.0
      %1813 = vmatprep.subr.mxu0 0.0
      %1814 = vmatpush1.msra.mxu0 0.0
      %1815 = vmatprep.mubr.f32.mxu0 0.0
      %1816 = vmatmul.mubr.f32.gmra.mrb[0].mxu0 %v1746
      %v1817 = vpop.f32.mrb[0].mxu0
      %v1818 = vadd.f32 0.0, %v1817
      %v1819 = vpop.f32.mrb[0].mxu0
      %v1820 = vadd.f32 0.0, %v1819
      %1821 = vmatprep.mubr.f32.mxu0 0.0
      %1822 = vmatmul.mubr.f32.gmra.mrb[0].mxu0 %v1749
      %v1823 = vpop.f32.mrb[0].mxu0
      %v1824 = vadd.f32 0.0, %v1823
      %v1825 = vpop.f32.mrb[0].mxu0
      %v1826 = vadd.f32 0.0, %v1825
      %1827 = vdwg.mxu0
      %v1828 = vmul.f32 %v1365, %v1739
      %v1829 = vmul.f32 %v1372, %v1741
      %1830 = vmatprep.subr.mxu0 %v1214
      %1831 = vmatpush1.xpose.msra.mxu0 %v1213
      %1832 = vmatprep.subr.mxu0 %v1216
      %1833 = vmatpush1.xpose.msra.mxu0 %v1215
      %1834 = vmatprep.subr.mxu0 %v1218
      %1835 = vmatpush1.xpose.msra.mxu0 %v1217
      %1836 = vmatprep.subr.mxu0 %v1220
      %1837 = vmatpush1.xpose.msra.mxu0 %v1219
      %1838 = vmatprep.subr.mxu0 %v1222
      %1839 = vmatpush1.xpose.msra.mxu0 %v1221
      %1840 = vmatprep.subr.mxu0 %v1224
      %1841 = vmatpush1.xpose.msra.mxu0 %v1223
      %1842 = vmatprep.subr.mxu0 %v1226
      %1843 = vmatpush1.xpose.msra.mxu0 %v1225
      %1844 = vmatprep.subr.mxu0 %v1228
      %1845 = vmatpush1.xpose.msra.mxu0 %v1227
      %1846 = vmatprep.subr.mxu0 %v1230
      %1847 = vmatpush1.xpose.msra.mxu0 %v1229
      %1848 = vmatprep.subr.mxu0 %v1232
      %1849 = vmatpush1.xpose.msra.mxu0 %v1231
      %1850 = vmatprep.subr.mxu0 %v1234
      %1851 = vmatpush1.xpose.msra.mxu0 %v1233
      %1852 = vmatprep.subr.mxu0 %v1236
      %1853 = vmatpush1.xpose.msra.mxu0 %v1235
      %1854 = vmatprep.subr.mxu0 %v1238
      %1855 = vmatpush1.xpose.msra.mxu0 %v1237
      %1856 = vmatprep.subr.mxu0 %v1240
      %1857 = vmatpush1.xpose.msra.mxu0 %v1239
      %1858 = vmatprep.subr.mxu0 %v1242
      %1859 = vmatpush1.xpose.msra.mxu0 %v1241
      %1860 = vmatprep.subr.mxu0 %v1244
      %1861 = vmatpush1.xpose.msra.mxu0 %v1243
      %1862 = vmatprep.subr.mxu0 %v1246
      %1863 = vmatpush1.xpose.msra.mxu0 %v1245
      %1864 = vmatprep.subr.mxu0 %v1248
      %1865 = vmatpush1.xpose.msra.mxu0 %v1247
      %1866 = vmatprep.subr.mxu0 %v1250
      %1867 = vmatpush1.xpose.msra.mxu0 %v1249
      %1868 = vmatprep.subr.mxu0 %v1252
      %1869 = vmatpush1.xpose.msra.mxu0 %v1251
      %1870 = vmatprep.subr.mxu0 %v1254
      %1871 = vmatpush1.xpose.msra.mxu0 %v1253
      %1872 = vmatprep.subr.mxu0 %v1256
      %1873 = vmatpush1.xpose.msra.mxu0 %v1255
      %1874 = vmatprep.subr.mxu0 %v1258
      %1875 = vmatpush1.xpose.msra.mxu0 %v1257
      %1876 = vmatprep.subr.mxu0 %v1260
      %1877 = vmatpush1.xpose.msra.mxu0 %v1259
      %1878 = vmatprep.subr.mxu0 %v1262
      %1879 = vmatpush1.xpose.msra.mxu0 %v1261
      %1880 = vmatprep.subr.mxu0 %v1264
      %1881 = vmatpush1.xpose.msra.mxu0 %v1263
      %1882 = vmatprep.subr.mxu0 %v1266
      %1883 = vmatpush1.xpose.msra.mxu0 %v1265
      %1884 = vmatprep.subr.mxu0 %v1268
      %1885 = vmatpush1.xpose.msra.mxu0 %v1267
      %1886 = vmatprep.subr.mxu0 %v1270
      %1887 = vmatpush1.xpose.msra.mxu0 %v1269
      %1888 = vmatprep.subr.mxu0 %v1272
      %1889 = vmatpush1.xpose.msra.mxu0 %v1271
      %1890 = vmatprep.subr.mxu0 %v1274
      %1891 = vmatpush1.xpose.msra.mxu0 %v1273
      %1892 = vmatprep.subr.mxu0 %v1276
      %1893 = vmatpush1.xpose.msra.mxu0 %v1275
      %1894 = vmatprep.mubr.f32.mxu0 %v1829
      %1895 = vmatmul.mubr.f32.gmra.mrb[0].mxu0 %v1828
      %v1896 = vpop.f32.mrb[0].mxu0
      %v1897 = vadd.f32 0.0, %v1896
      %v1898 = vpop.f32.mrb[0].mxu0
      %v1899 = vadd.f32 0.0, %v1898
      %1900 = vdwg.mxu0
      %v1901 = vmul.f32 %v1897, 0.57735026
      %v1902 = vmul.f32 %v1899, 0.57735026
      %v1903 = vsel %vm1127, %v1901, -inf
      %v1904 = vsel %vm1127, %v1902, -inf
      %v1905 = vmax.f32 %v1903, %v1904
      %1906 = vmax.xlane.f32.xlu0 %v1905
      %v1907 = vpop.xlane.xlu0 %1906
      %v1908 = vsub.f32 %v1901, %v1907
      %v1909 = vsub.f32 %v1902, %v1907
      %v1910 = vmul.f32 %v1908, 1.442695
      %v1911 = vpow.pop %v1910
      %v1912 = vmul.f32 %v1909, 1.442695
      %v1913 = vpow.pop %v1912
      %v1914 = vsel %vm1127, %v1911, 0.0
      %v1915 = vsel %vm1127, %v1913, 0.0
      %v1916 = vadd.f32 %v1914, %v1915
      %1917 = vadd.xlane.f32.xlu0 %v1916
      %v1918 = vpop.xlane.xlu0 %1917
      %v1919 = vrcp.pop %v1918
      %v1920 = vmul.f32 %v1911, %v1919
      %v1921 = vmul.f32 %v1913, %v1919
      %v1922 = vsel %vm1127, %v1920, 0.0
      %v1923 = vrot.slane %v1922, 4
      %v1924 = vadd.f32 %v1922, %v1923
      %v1925 = vrot.slane %v1924, 2
      %v1926 = vadd.f32 %v1924, %v1925
      %v1927 = vrot.slane %v1926, 1
      %v1928 = vadd.f32 %v1926, %v1927
      %v1929 = vsel %vm1127, %v1921, 0.0
      %v1930 = vrot.slane %v1929, 4
      %v1931 = vadd.f32 %v1929, %v1930
      %v1932 = vrot.slane %v1931, 2
      %v1933 = vadd.f32 %v1931, %v1932
      %v1934 = vrot.slane %v1933, 1
      %v1935 = vadd.f32 %v1933, %v1934
      %1936 = vmatprep.subr.mxu0 %v1820
      %1937 = vmatpush1.xpose.msra.mxu0 %v1818
      %1938 = vmatprep.subr.mxu0 %v1826
      %1939 = vmatpush1.xpose.msra.mxu0 %v1824
      %1940 = vmatprep.subr.mxu0 0.0
      %1941 = vmatpush1.xpose.msra.mxu0 0.0
      %1942 = vmatprep.subr.mxu0 0.0
      %1943 = vmatpush1.xpose.msra.mxu0 0.0
      %1944 = vmatprep.subr.mxu0 0.0
      %1945 = vmatpush1.xpose.msra.mxu0 0.0
      %1946 = vmatprep.subr.mxu0 0.0
      %1947 = vmatpush1.xpose.msra.mxu0 0.0
      %1948 = vmatprep.subr.mxu0 0.0
      %1949 = vmatpush1.xpose.msra.mxu0 0.0
      %1950 = vmatprep.subr.mxu0 0.0
      %1951 = vmatpush1.xpose.msra.mxu0 0.0
      %1952 = vmatprep.subr.mxu0 0.0
      %1953 = vmatpush1.xpose.msra.mxu0 0.0
      %1954 = vmatprep.subr.mxu0 0.0
      %1955 = vmatpush1.xpose.msra.mxu0 0.0
      %1956 = vmatprep.subr.mxu0 0.0
      %1957 = vmatpush1.xpose.msra.mxu0 0.0
      %1958 = vmatprep.subr.mxu0 0.0
      %1959 = vmatpush1.xpose.msra.mxu0 0.0
      %1960 = vmatprep.subr.mxu0 0.0
      %1961 = vmatpush1.xpose.msra.mxu0 0.0
      %1962 = vmatprep.subr.mxu0 0.0
      %1963 = vmatpush1.xpose.msra.mxu0 0.0
      %1964 = vmatprep.subr.mxu0 0.0
      %1965 = vmatpush1.xpose.msra.mxu0 0.0
      %1966 = vmatprep.subr.mxu0 0.0
      %1967 = vmatpush1.xpose.msra.mxu0 0.0
      %1968 = vmatprep.subr.mxu0 0.0
      %1969 = vmatpush1.xpose.msra.mxu0 0.0
      %1970 = vmatprep.subr.mxu0 0.0
      %1971 = vmatpush1.xpose.msra.mxu0 0.0
      %1972 = vmatprep.subr.mxu0 0.0
      %1973 = vmatpush1.xpose.msra.mxu0 0.0
      %1974 = vmatprep.subr.mxu0 0.0
      %1975 = vmatpush1.xpose.msra.mxu0 0.0
      %1976 = vmatprep.subr.mxu0 0.0
      %1977 = vmatpush1.xpose.msra.mxu0 0.0
      %1978 = vmatprep.subr.mxu0 0.0
      %1979 = vmatpush1.xpose.msra.mxu0 0.0
      %1980 = vmatprep.subr.mxu0 0.0
      %1981 = vmatpush1.xpose.msra.mxu0 0.0
      %1982 = vmatprep.subr.mxu0 0.0
      %1983 = vmatpush1.xpose.msra.mxu0 0.0
      %1984 = vmatprep.subr.mxu0 0.0
      %1985 = vmatpush1.xpose.msra.mxu0 0.0
      %1986 = vmatprep.subr.mxu0 0.0
      %1987 = vmatpush1.xpose.msra.mxu0 0.0
      %1988 = vmatprep.subr.mxu0 0.0
      %1989 = vmatpush1.xpose.msra.mxu0 0.0
      %1990 = vmatprep.subr.mxu0 0.0
      %1991 = vmatpush1.xpose.msra.mxu0 0.0
      %1992 = vmatprep.subr.mxu0 0.0
      %1993 = vmatpush1.xpose.msra.mxu0 0.0
      %1994 = vmatprep.subr.mxu0 0.0
      %1995 = vmatpush1.xpose.msra.mxu0 0.0
      %1996 = vmatprep.subr.mxu0 0.0
      %1997 = vmatpush1.xpose.msra.mxu0 0.0
      %1998 = vmatprep.subr.mxu0 0.0
      %1999 = vmatpush1.xpose.msra.mxu0 0.0
      %2000 = vmatprep.mubr.f32.mxu0 %v1935
      %2001 = vmatmul.mubr.f32.gmra.mrb[0].mxu0 %v1928
      %v2002 = vpop.f32.mrb[0].mxu0
      %v2003 = vadd.f32 0.0, %v2002
      %v2004 = vpop.f32.mrb[0].mxu0
      %2005 = vdwg.mxu0
      %v2006 = vld [vmem:[%s19] sm:$0xff]
      %v2007 = vld [vmem:[%s19 + $0x8] sm:$0xf]
      %v2008 = vld [vmem:[%s21] sm:$0x1]
      %v2010 = vsel %vm1278, %v2003, 0
      %v2013 = vsel %vm1278, %v2006, 0
      %v2016 = vsel %vm1278, %v2007, 0
      %2018 = vmatprep.subr.mxu0 0.0
      %2019 = vmatpush1.xpose.msra.mxu0 %v2013
      %2020 = vmatprep.subr.mxu0 0.0
      %2021 = vmatpush1.xpose.msra.mxu0 %v2016
      %2022 = vmatprep.subr.mxu0 0.0
      %2023 = vmatpush1.xpose.msra.mxu0 0.0
      %2024 = vmatprep.subr.mxu0 0.0
      %2025 = vmatpush1.xpose.msra.mxu0 0.0
      %2026 = vmatprep.subr.mxu0 0.0
      %2027 = vmatpush1.xpose.msra.mxu0 0.0
      %2028 = vmatprep.subr.mxu0 0.0
      %2029 = vmatpush1.xpose.msra.mxu0 0.0
      %2030 = vmatprep.subr.mxu0 0.0
      %2031 = vmatpush1.xpose.msra.mxu0 0.0
      %2032 = vmatprep.subr.mxu0 0.0
      %2033 = vmatpush1.xpose.msra.mxu0 0.0
      %2034 = vmatprep.subr.mxu0 0.0
      %2035 = vmatpush1.xpose.msra.mxu0 0.0
      %2036 = vmatprep.subr.mxu0 0.0
      %2037 = vmatpush1.xpose.msra.mxu0 0.0
      %2038 = vmatprep.subr.mxu0 0.0
      %2039 = vmatpush1.xpose.msra.mxu0 0.0
      %2040 = vmatprep.subr.mxu0 0.0
      %2041 = vmatpush1.xpose.msra.mxu0 0.0
      %2042 = vmatprep.subr.mxu0 0.0
      %2043 = vmatpush1.xpose.msra.mxu0 0.0
      %2044 = vmatprep.subr.mxu0 0.0
      %2045 = vmatpush1.xpose.msra.mxu0 0.0
      %2046 = vmatprep.subr.mxu0 0.0
      %2047 = vmatpush1.xpose.msra.mxu0 0.0
      %2048 = vmatprep.subr.mxu0 0.0
      %2049 = vmatpush1.xpose.msra.mxu0 0.0
      %2050 = vmatprep.subr.mxu0 0.0
      %2051 = vmatpush1.xpose.msra.mxu0 0.0
      %2052 = vmatprep.subr.mxu0 0.0
      %2053 = vmatpush1.xpose.msra.mxu0 0.0
      %2054 = vmatprep.subr.mxu0 0.0
      %2055 = vmatpush1.xpose.msra.mxu0 0.0
      %2056 = vmatprep.subr.mxu0 0.0
      %2057 = vmatpush1.xpose.msra.mxu0 0.0
      %2058 = vmatprep.subr.mxu0 0.0
      %2059 = vmatpush1.xpose.msra.mxu0 0.0
      %2060 = vmatprep.subr.mxu0 0.0
      %2061 = vmatpush1.xpose.msra.mxu0 0.0
      %2062 = vmatprep.subr.mxu0 0.0
      %2063 = vmatpush1.xpose.msra.mxu0 0.0
      %2064 = vmatprep.subr.mxu0 0.0
      %2065 = vmatpush1.xpose.msra.mxu0 0.0
      %2066 = vmatprep.subr.mxu0 0.0
      %2067 = vmatpush1.xpose.msra.mxu0 0.0
      %2068 = vmatprep.subr.mxu0 0.0
      %2069 = vmatpush1.xpose.msra.mxu0 0.0
      %2070 = vmatprep.subr.mxu0 0.0
      %2071 = vmatpush1.xpose.msra.mxu0 0.0
      %2072 = vmatprep.subr.mxu0 0.0
      %2073 = vmatpush1.xpose.msra.mxu0 0.0
      %2074 = vmatprep.subr.mxu0 0.0
      %2075 = vmatpush1.xpose.msra.mxu0 0.0
      %2076 = vmatprep.subr.mxu0 0.0
      %2077 = vmatpush1.xpose.msra.mxu0 0.0
      %2078 = vmatprep.subr.mxu0 0.0
      %2079 = vmatpush1.xpose.msra.mxu0 0.0
      %2080 = vmatprep.subr.mxu0 0.0
      %2081 = vmatpush1.xpose.msra.mxu0 0.0
      %2082 = vmatprep.mubr.f32.mxu0 0.0
      %2083 = vmatmul.mubr.f32.gmra.mrb[0].mxu0 %v2010
      %v2084 = vpop.f32.mrb[0].mxu0
      %v2085 = vadd.f32 %v2008, %v2084
      %v2086 = vpop.f32.mrb[0].mxu0
      %2087 = vdwg.mxu0
      %v2088 = vld [vmem:[%s29] sm:$0xff]
      %v2089 = vld [vmem:[%s29 + $0x8] sm:$0xff]
      %v2090 = vld [vmem:[%s29 + $0x10] sm:$0xf]
      %v2091 = vld [vmem:[%s29 + $0x18] sm:$0xf]
      %v2093 = vsel %vm1278, %v2085, 0
      %v2096 = vsel %vm1127, %v2090, 0
      %v2099 = vsel %vm1127, %v2091, 0
      %2101 = vmatprep.subr.mxu0 %v2089
      %2102 = vmatpush1.msra.mxu0 %v2088
      %2103 = vmatprep.subr.mxu0 %v2099
      %2104 = vmatpush1.msra.mxu0 %v2096
      %2105 = vmatprep.subr.mxu0 0.0
      %2106 = vmatpush1.msra.mxu0 0.0
      %2107 = vmatprep.subr.mxu0 0.0
      %2108 = vmatpush1.msra.mxu0 0.0
      %2109 = vmatprep.subr.mxu0 0.0
      %2110 = vmatpush1.msra.mxu0 0.0
      %2111 = vmatprep.subr.mxu0 0.0
      %2112 = vmatpush1.msra.mxu0 0.0
      %2113 = vmatprep.subr.mxu0 0.0
      %2114 = vmatpush1.msra.mxu0 0.0
      %2115 = vmatprep.subr.mxu0 0.0
      %2116 = vmatpush1.msra.mxu0 0.0
      %2117 = vmatprep.subr.mxu0 0.0
      %2118 = vmatpush1.msra.mxu0 0.0
      %2119 = vmatprep.subr.mxu0 0.0
      %2120 = vmatpush1.msra.mxu0 0.0
      %2121 = vmatprep.subr.mxu0 0.0
      %2122 = vmatpush1.msra.mxu0 0.0
      %2123 = vmatprep.subr.mxu0 0.0
      %2124 = vmatpush1.msra.mxu0 0.0
      %2125 = vmatprep.subr.mxu0 0.0
      %2126 = vmatpush1.msra.mxu0 0.0
      %2127 = vmatprep.subr.mxu0 0.0
      %2128 = vmatpush1.msra.mxu0 0.0
      %2129 = vmatprep.subr.mxu0 0.0
      %2130 = vmatpush1.msra.mxu0 0.0
      %2131 = vmatprep.subr.mxu0 0.0
      %2132 = vmatpush1.msra.mxu0 0.0
      %2133 = vmatprep.subr.mxu0 0.0
      %2134 = vmatpush1.msra.mxu0 0.0
      %2135 = vmatprep.subr.mxu0 0.0
      %2136 = vmatpush1.msra.mxu0 0.0
      %2137 = vmatprep.subr.mxu0 0.0
      %2138 = vmatpush1.msra.mxu0 0.0
      %2139 = vmatprep.subr.mxu0 0.0
      %2140 = vmatpush1.msra.mxu0 0.0
      %2141 = vmatprep.subr.mxu0 0.0
      %2142 = vmatpush1.msra.mxu0 0.0
      %2143 = vmatprep.subr.mxu0 0.0
      %2144 = vmatpush1.msra.mxu0 0.0
      %2145 = vmatprep.subr.mxu0 0.0
      %2146 = vmatpush1.msra.mxu0 0.0
      %2147 = vmatprep.subr.mxu0 0.0
      %2148 = vmatpush1.msra.mxu0 0.0
      %2149 = vmatprep.subr.mxu0 0.0
      %2150 = vmatpush1.msra.mxu0 0.0
      %2151 = vmatprep.subr.mxu0 0.0
      %2152 = vmatpush1.msra.mxu0 0.0
      %2153 = vmatprep.subr.mxu0 0.0
      %2154 = vmatpush1.msra.mxu0 0.0
      %2155 = vmatprep.subr.mxu0 0.0
      %2156 = vmatpush1.msra.mxu0 0.0
      %2157 = vmatprep.subr.mxu0 0.0
      %2158 = vmatpush1.msra.mxu0 0.0
      %2159 = vmatprep.subr.mxu0 0.0
      %2160 = vmatpush1.msra.mxu0 0.0
      %2161 = vmatprep.subr.mxu0 0.0
      %2162 = vmatpush1.msra.mxu0 0.0
      %2163 = vmatprep.subr.mxu0 0.0
      %2164 = vmatpush1.msra.mxu0 0.0
      %2165 = vmatprep.mubr.f32.mxu0 0.0
      %2166 = vmatmul.mubr.f32.gmra.mrb[0].mxu0 %v2093
      %v2167 = vpop.f32.mrb[0].mxu0
      %v2168 = vadd.f32 0.0, %v2167
      %v2169 = vpop.f32.mrb[0].mxu0
      %v2170 = vadd.f32 0.0, %v2169
      %2171 = vdwg.mxu0
      %v2172 = vld [vmem:[%s31] sm:$0xff]
      %v2173 = vld [vmem:[%s31 + $0x8] sm:$0xff]
      %v2174 = vld [vmem:[%s31 + $0x10] sm:$0xf]
      %v2175 = vld [vmem:[%s31 + $0x18] sm:$0xf]
      %v2176 = vlaneseq
      %v2177 = vshrl.u32 %v2176, 7
      %v2178 = vsub.s32 0, %v2177
      %v2179 = vrot.slane %v2168, %v2178
      %v2180 = vlaneseq
      %v2181 = vshrl.u32 %v2180, 7
      %v2182 = vsub.s32 0, %v2181
      %v2183 = vrot.slane %v2170, %v2182
      %v2184 = vmul.f32 %v2172, %v2179
      %v2185 = vmul.f32 %v2173, %v2183
      %v2186 = vmul.f32 %v2174, %v2179
      %v2187 = vmul.f32 %v2175, %v2183
      %v2188 = vld [vmem:[%s33] sm:$0xff]
      %v2189 = vld [vmem:[%s33 + $0x8] sm:$0xff]
      %v2190 = vld [vmem:[%s33 + $0x10] sm:$0xff]
      %v2191 = vld [vmem:[%s33 + $0x18] sm:$0xff]
      %v2192 = vld [vmem:[%s33 + $0x20] sm:$0xff]
      %v2193 = vld [vmem:[%s33 + $0x28] sm:$0xff]
      %v2194 = vld [vmem:[%s33 + $0x30] sm:$0xff]
      %v2195 = vld [vmem:[%s33 + $0x38] sm:$0xff]
      %v2196 = vld [vmem:[%s33 + $0x40] sm:$0xff]
      %v2197 = vld [vmem:[%s33 + $0x48] sm:$0xff]
      %v2198 = vld [vmem:[%s33 + $0x50] sm:$0xff]
      %v2199 = vld [vmem:[%s33 + $0x58] sm:$0xff]
      %v2200 = vld [vmem:[%s33 + $0x60] sm:$0xff]
      %v2201 = vld [vmem:[%s33 + $0x68] sm:$0xff]
      %v2202 = vld [vmem:[%s33 + $0x70] sm:$0xff]
      %v2203 = vld [vmem:[%s33 + $0x78] sm:$0xff]
      %v2204 = vld [vmem:[%s33 + $0x80] sm:$0xff]
      %v2205 = vld [vmem:[%s33 + $0x88] sm:$0xff]
      %vm2206 = vcmask 130048
      %v2208 = vsel %vm2206, %v2185, 0
      %v2211 = vsel %vm2206, %v2187, 0
      %2213 = vmatprep.subr.mxu0 0.0
      %2214 = vmatpush1.msra.mxu0 %v2188
      %2215 = vmatprep.subr.mxu0 0.0
      %2216 = vmatpush1.msra.mxu0 %v2189
      %2217 = vmatprep.subr.mxu0 0.0
      %2218 = vmatpush1.msra.mxu0 %v2190
      %2219 = vmatprep.subr.mxu0 0.0
      %2220 = vmatpush1.msra.mxu0 %v2191
      %2221 = vmatprep.subr.mxu0 0.0
      %2222 = vmatpush1.msra.mxu0 %v2192
      %2223 = vmatprep.subr.mxu0 0.0
      %2224 = vmatpush1.msra.mxu0 %v2193
      %2225 = vmatprep.subr.mxu0 0.0
      %2226 = vmatpush1.msra.mxu0 %v2194
      %2227 = vmatprep.subr.mxu0 0.0
      %2228 = vmatpush1.msra.mxu0 %v2195
      %2229 = vmatprep.subr.mxu0 0.0
      %2230 = vmatpush1.msra.mxu0 %v2196
      %2231 = vmatprep.subr.mxu0 0.0
      %2232 = vmatpush1.msra.mxu0 %v2197
      %2233 = vmatprep.subr.mxu0 0.0
      %2234 = vmatpush1.msra.mxu0 %v2198
      %2235 = vmatprep.subr.mxu0 0.0
      %2236 = vmatpush1.msra.mxu0 %v2199
      %2237 = vmatprep.subr.mxu0 0.0
      %2238 = vmatpush1.msra.mxu0 %v2200
      %2239 = vmatprep.subr.mxu0 0.0
      %2240 = vmatpush1.msra.mxu0 %v2201
      %2241 = vmatprep.subr.mxu0 0.0
      %2242 = vmatpush1.msra.mxu0 %v2202
      %2243 = vmatprep.subr.mxu0 0.0
      %2244 = vmatpush1.msra.mxu0 %v2203
      %2245 = vmatprep.subr.mxu0 0.0
      %2246 = vmatpush1.msra.mxu0 %v2204
      %2247 = vmatprep.subr.mxu0 0.0
      %2248 = vmatpush1.msra.mxu0 %v2205
      %2249 = vmatprep.subr.mxu0 0.0
      %2250 = vmatpush1.msra.mxu0 0.0
      %2251 = vmatprep.subr.mxu0 0.0
      %2252 = vmatpush1.msra.mxu0 0.0
      %2253 = vmatprep.subr.mxu0 0.0
      %2254 = vmatpush1.msra.mxu0 0.0
      %2255 = vmatprep.subr.mxu0 0.0
      %2256 = vmatpush1.msra.mxu0 0.0
      %2257 = vmatprep.subr.mxu0 0.0
      %2258 = vmatpush1.msra.mxu0 0.0
      %2259 = vmatprep.subr.mxu0 0.0
      %2260 = vmatpush1.msra.mxu0 0.0
      %2261 = vmatprep.subr.mxu0 0.0
      %2262 = vmatpush1.msra.mxu0 0.0
      %2263 = vmatprep.subr.mxu0 0.0
      %2264 = vmatpush1.msra.mxu0 0.0
      %2265 = vmatprep.subr.mxu0 0.0
      %2266 = vmatpush1.msra.mxu0 0.0
      %2267 = vmatprep.subr.mxu0 0.0
      %2268 = vmatpush1.msra.mxu0 0.0
      %2269 = vmatprep.subr.mxu0 0.0
      %2270 = vmatpush1.msra.mxu0 0.0
      %2271 = vmatprep.subr.mxu0 0.0
      %2272 = vmatpush1.msra.mxu0 0.0
      %2273 = vmatprep.subr.mxu0 0.0
      %2274 = vmatpush1.msra.mxu0 0.0
      %2275 = vmatprep.subr.mxu0 0.0
      %2276 = vmatpush1.msra.mxu0 0.0
      %2277 = vmatprep.mubr.f32.mxu0 %v2208
      %2278 = vmatmul.mubr.f32.gmra.mrb[0].mxu0 %v2184
      %v2279 = vpop.f32.mrb[0].mxu0
      %v2280 = vadd.f32 0.0, %v2279
      %v2281 = vpop.f32.mrb[0].mxu0
      %2282 = vmatprep.mubr.f32.mxu0 %v2211
      %2283 = vmatmul.mubr.f32.gmra.mrb[0].mxu0 %v2186
      %v2284 = vpop.f32.mrb[0].mxu0
      %v2285 = vadd.f32 0.0, %v2284
      %v2286 = vpop.f32.mrb[0].mxu0
      %2287 = vdwg.mxu0
      %v2288 = vld [vmem:[%s25] sm:$0xff]
      %v2289 = vld [vmem:[%s25 + $0x8] sm:$0xff]
      %v2290 = vld [vmem:[%s25 + $0x10] sm:$0xff]
      %v2291 = vld [vmem:[%s25 + $0x18] sm:$0xff]
      %v2292 = vld [vmem:[%s25 + $0x20] sm:$0xff]
      %v2293 = vld [vmem:[%s25 + $0x28] sm:$0xff]
      %v2294 = vld [vmem:[%s25 + $0x30] sm:$0xff]
      %v2295 = vld [vmem:[%s25 + $0x38] sm:$0xff]
      %s2296 = scalar_lea.vmem %s5, 4
      %v2297 = vld [vmem:[%s2296] sm:$0xf]
      %v2299 = vsel %vm1278, %v2297, 0
      %v2302 = vsel %vm1127, %v2285, 0
      %2304 = vmatprep.subr.mxu0 0.0
      %2305 = vmatpush1.msra.mxu0 %v2280
      %2306 = vmatprep.subr.mxu0 0.0
      %2307 = vmatpush1.msra.mxu0 %v2302
      %2308 = vmatprep.subr.mxu0 0.0
      %2309 = vmatpush1.msra.mxu0 0.0
      %2310 = vmatprep.subr.mxu0 0.0
      %2311 = vmatpush1.msra.mxu0 0.0
      %2312 = vmatprep.subr.mxu0 0.0
      %2313 = vmatpush1.msra.mxu0 0.0
      %2314 = vmatprep.subr.mxu0 0.0
      %2315 = vmatpush1.msra.mxu0 0.0
      %2316 = vmatprep.subr.mxu0 0.0
      %2317 = vmatpush1.msra.mxu0 0.0
      %2318 = vmatprep.subr.mxu0 0.0
      %2319 = vmatpush1.msra.mxu0 0.0
      %2320 = vmatprep.subr.mxu0 0.0
      %2321 = vmatpush1.msra.mxu0 0.0
      %2322 = vmatprep.subr.mxu0 0.0
      %2323 = vmatpush1.msra.mxu0 0.0
      %2324 = vmatprep.subr.mxu0 0.0
      %2325 = vmatpush1.msra.mxu0 0.0
      %2326 = vmatprep.subr.mxu0 0.0
      %2327 = vmatpush1.msra.mxu0 0.0
      %2328 = vmatprep.subr.mxu0 0.0
      %2329 = vmatpush1.msra.mxu0 0.0
      %2330 = vmatprep.subr.mxu0 0.0
      %2331 = vmatpush1.msra.mxu0 0.0
      %2332 = vmatprep.subr.mxu0 0.0
      %2333 = vmatpush1.msra.mxu0 0.0
      %2334 = vmatprep.subr.mxu0 0.0
      %2335 = vmatpush1.msra.mxu0 0.0
      %2336 = vmatprep.subr.mxu0 0.0
      %2337 = vmatpush1.msra.mxu0 0.0
      %2338 = vmatprep.subr.mxu0 0.0
      %2339 = vmatpush1.msra.mxu0 0.0
      %2340 = vmatprep.subr.mxu0 0.0
      %2341 = vmatpush1.msra.mxu0 0.0
      %2342 = vmatprep.subr.mxu0 0.0
      %2343 = vmatpush1.msra.mxu0 0.0
      %2344 = vmatprep.subr.mxu0 0.0
      %2345 = vmatpush1.msra.mxu0 0.0
      %2346 = vmatprep.subr.mxu0 0.0
      %2347 = vmatpush1.msra.mxu0 0.0
      %2348 = vmatprep.subr.mxu0 0.0
      %2349 = vmatpush1.msra.mxu0 0.0
      %2350 = vmatprep.subr.mxu0 0.0
      %2351 = vmatpush1.msra.mxu0 0.0
      %2352 = vmatprep.subr.mxu0 0.0
      %2353 = vmatpush1.msra.mxu0 0.0
      %2354 = vmatprep.subr.mxu0 0.0
      %2355 = vmatpush1.msra.mxu0 0.0
      %2356 = vmatprep.subr.mxu0 0.0
      %2357 = vmatpush1.msra.mxu0 0.0
      %2358 = vmatprep.subr.mxu0 0.0
      %2359 = vmatpush1.msra.mxu0 0.0
      %2360 = vmatprep.subr.mxu0 0.0
      %2361 = vmatpush1.msra.mxu0 0.0
      %2362 = vmatprep.subr.mxu0 0.0
      %2363 = vmatpush1.msra.mxu0 0.0
      %2364 = vmatprep.subr.mxu0 0.0
      %2365 = vmatpush1.msra.mxu0 0.0
      %2366 = vmatprep.subr.mxu0 0.0
      %2367 = vmatpush1.msra.mxu0 0.0
      %2368 = vmatprep.mubr.f32.mxu0 0.0
      %2369 = vmatmul.mubr.f32.gmra.mrb[0].mxu0 %v2299
      %v2370 = vpop.f32.mrb[0].mxu0
      %v2371 = vadd.f32 0.0, %v2370
      %v2372 = vpop.f32.mrb[0].mxu0
      %2373 = vdwg.mxu0
      %vm2374 = vcmask 519168
      %v2375 = vsel %vm2374, %v2371, 0.0
      %v2376 = vrot.slane %v2375, 4
      %v2377 = vadd.f32 %v2375, %v2376
      %v2378 = vrot.slane %v2377, 2
      %v2379 = vadd.f32 %v2377, %v2378
      %v2380 = vrot.slane %v2379, 1
      %v2381 = vadd.f32 %v2379, %v2380
      %s2382 = scalar_lea.vmem %s11, 16
      %v2383 = vld [vmem:[%s2382] sm:$0xff]
      %v2384 = vld [vmem:[%s2382 + $0x8] sm:$0xf]
      %s2385 = scalar_lea.vmem %s13, 16
      %v2386 = vld [vmem:[%s2385] sm:$0xff]
      %v2387 = vld [vmem:[%s2385 + $0x8] sm:$0xf]
      %2389 = vset.pattern.permute.xlu0 0
      %2390 = vperm.xlu0 %2389, %v2386
      %v2391 = vpop.permute.xlu0 %2390
      %2394 = vset.pattern.permute.xlu0 0
      %2395 = vperm.xlu0 %2394, %v2387
      %v2396 = vpop.permute.xlu0 %2395
      %v2399 = vsel %vm1278, %v2383, 0
      %v2402 = vsel %vm1278, %v2384, 0
      %2404 = vmatprep.subr.mxu0 0.0
      %2405 = vmatpush1.msra.mxu0 %v2280
      %2406 = vmatprep.subr.mxu0 0.0
      %2407 = vmatpush1.msra.mxu0 %v2302
      %2408 = vmatprep.subr.mxu0 0.0
      %2409 = vmatpush1.msra.mxu0 0.0
      %2410 = vmatprep.subr.mxu0 0.0
      %2411 = vmatpush1.msra.mxu0 0.0
      %2412 = vmatprep.subr.mxu0 0.0
      %2413 = vmatpush1.msra.mxu0 0.0
      %2414 = vmatprep.subr.mxu0 0.0
      %2415 = vmatpush1.msra.mxu0 0.0
      %2416 = vmatprep.subr.mxu0 0.0
      %2417 = vmatpush1.msra.mxu0 0.0
      %2418 = vmatprep.subr.mxu0 0.0
      %2419 = vmatpush1.msra.mxu0 0.0
      %2420 = vmatprep.subr.mxu0 0.0
      %2421 = vmatpush1.msra.mxu0 0.0
      %2422 = vmatprep.subr.mxu0 0.0
      %2423 = vmatpush1.msra.mxu0 0.0
      %2424 = vmatprep.subr.mxu0 0.0
      %2425 = vmatpush1.msra.mxu0 0.0
      %2426 = vmatprep.subr.mxu0 0.0
      %2427 = vmatpush1.msra.mxu0 0.0
      %2428 = vmatprep.subr.mxu0 0.0
      %2429 = vmatpush1.msra.mxu0 0.0
      %2430 = vmatprep.subr.mxu0 0.0
      %2431 = vmatpush1.msra.mxu0 0.0
      %2432 = vmatprep.subr.mxu0 0.0
      %2433 = vmatpush1.msra.mxu0 0.0
      %2434 = vmatprep.subr.mxu0 0.0
      %2435 = vmatpush1.msra.mxu0 0.0
      %2436 = vmatprep.subr.mxu0 0.0
      %2437 = vmatpush1.msra.mxu0 0.0
      %2438 = vmatprep.subr.mxu0 0.0
      %2439 = vmatpush1.msra.mxu0 0.0
      %2440 = vmatprep.subr.mxu0 0.0
      %2441 = vmatpush1.msra.mxu0 0.0
      %2442 = vmatprep.subr.mxu0 0.0
      %2443 = vmatpush1.msra.mxu0 0.0
      %2444 = vmatprep.subr.mxu0 0.0
      %2445 = vmatpush1.msra.mxu0 0.0
      %2446 = vmatprep.subr.mxu0 0.0
      %2447 = vmatpush1.msra.mxu0 0.0
      %2448 = vmatprep.subr.mxu0 0.0
      %2449 = vmatpush1.msra.mxu0 0.0
      %2450 = vmatprep.subr.mxu0 0.0
      %2451 = vmatpush1.msra.mxu0 0.0
      %2452 = vmatprep.subr.mxu0 0.0
      %2453 = vmatpush1.msra.mxu0 0.0
      %2454 = vmatprep.subr.mxu0 0.0
      %2455 = vmatpush1.msra.mxu0 0.0
      %2456 = vmatprep.subr.mxu0 0.0
      %2457 = vmatpush1.msra.mxu0 0.0
      %2458 = vmatprep.subr.mxu0 0.0
      %2459 = vmatpush1.msra.mxu0 0.0
      %2460 = vmatprep.subr.mxu0 0.0
      %2461 = vmatpush1.msra.mxu0 0.0
      %2462 = vmatprep.subr.mxu0 0.0
      %2463 = vmatpush1.msra.mxu0 0.0
      %2464 = vmatprep.subr.mxu0 0.0
      %2465 = vmatpush1.msra.mxu0 0.0
      %2466 = vmatprep.subr.mxu0 0.0
      %2467 = vmatpush1.msra.mxu0 0.0
      %2468 = vmatprep.mubr.f32.mxu0 0.0
      %2469 = vmatmul.mubr.f32.gmra.mrb[0].mxu0 %v2399
      %v2470 = vpop.f32.mrb[0].mxu0
      %v2471 = vadd.f32 %v2391, %v2470
      %v2472 = vpop.f32.mrb[0].mxu0
      %2473 = vmatprep.mubr.f32.mxu0 0.0
      %2474 = vmatmul.mubr.f32.gmra.mrb[0].mxu0 %v2402
      %v2475 = vpop.f32.mrb[0].mxu0
      %v2476 = vadd.f32 %v2396, %v2475
      %v2477 = vpop.f32.mrb[0].mxu0
      %2478 = vdwg.mxu0
      %s2479 = scalar_lea.vmem %s15, 16
      %v2480 = vld [vmem:[%s2479] sm:$0xff]
      %v2481 = vld [vmem:[%s2479 + $0x8] sm:$0xf]
      %s2482 = scalar_lea.vmem %s17, 16
      %v2483 = vld [vmem:[%s2482] sm:$0xff]
      %v2484 = vld [vmem:[%s2482 + $0x8] sm:$0xf]
      %vm2485 = vcmask 523264
      %v2486 = vsel %vm2485, %v2471, 0.0
      %v2487 = vsel %vm2374, %v2476, 0.0
      %v2488 = vadd.f32 %v2486, %v2487
      %v2489 = vrot.slane %v2488, 4
      %v2490 = vadd.f32 %v2488, %v2489
      %v2491 = vrot.slane %v2490, 2
      %v2492 = vadd.f32 %v2490, %v2491
      %v2493 = vrot.slane %v2492, 1
      %v2494 = vadd.f32 %v2492, %v2493
      %v2495 = vmul.f32 %v2494, %v1144
      %v2496 = vsub.f32 %v2471, %v2495
      %v2497 = vsub.f32 %v2476, %v2495
      %v2498 = vmul.f32 %v2496, %v2496
      %v2499 = vmul.f32 %v2497, %v2497
      %v2500 = vsel %vm2485, %v2498, 0.0
      %v2501 = vsel %vm2374, %v2499, 0.0
      %v2502 = vadd.f32 %v2500, %v2501
      %v2503 = vrot.slane %v2502, 4
      %v2504 = vadd.f32 %v2502, %v2503
      %v2505 = vrot.slane %v2504, 2
      %v2506 = vadd.f32 %v2504, %v2505
      %v2507 = vrot.slane %v2506, 1
      %v2508 = vadd.f32 %v2506, %v2507
      %v2509 = vmul.f32 %v2508, %v1144
      %v2510 = vadd.f32 %v2509, 1e-05
      %v2511 = vrsqrt.pop %v2510
      %v2512 = vmul.f32 %v2496, %v2511
      %v2513 = vmul.f32 %v2497, %v2511
      %2515 = vset.pattern.permute.xlu0 0
      %2516 = vperm.xlu0 %2515, %v2480
      %v2517 = vpop.permute.xlu0 %2516
      %2520 = vset.pattern.permute.xlu0 0
      %2521 = vperm.xlu0 %2520, %v2481
      %v2522 = vpop.permute.xlu0 %2521
      %v2524 = vmul.f32 %v2512, %v2517
      %v2525 = vmul.f32 %v2513, %v2522
      %2527 = vset.pattern.permute.xlu0 0
      %2528 = vperm.xlu0 %2527, %v2483
      %v2529 = vpop.permute.xlu0 %2528
      %2532 = vset.pattern.permute.xlu0 0
      %2533 = vperm.xlu0 %2532, %v2484
      %v2534 = vpop.permute.xlu0 %2533
      %v2536 = vadd.f32 %v2524, %v2529
      %v2537 = vadd.f32 %v2525, %v2534
      %v2538 = vmul.f32 %v2536, 0.5
      %v2539 = vmul.f32 %v2537, 0.5
      %v2540 = vmul.f32 %v2536, 0.70710677
      %v2541 = vmul.f32 %v2537, 0.70710677
      %vm2542 = vcmp.ge.f32.partialorder %v2540, 0.0
      %vm2543 = vcmp.ge.f32.partialorder %v2541, 0.0
      %v2544 = vsel %vm2542, 1.0, -1.0
      %v2545 = vsel %vm2543, 1.0, -1.0
      %v2546 = vand.u32 2147483647, %v2540
      %v2547 = vand.u32 2147483647, %v2541
      %v2548 = vmul.f32 %v2546, 0.3275911
      %v2549 = vmul.f32 %v2547, 0.3275911
      %v2550 = vadd.f32 %v2548, 1.0
      %v2551 = vadd.f32 %v2549, 1.0
      %v2552 = vrcp.pop %v2550
      %v2553 = vmul.f32 1.0, %v2552
      %v2554 = vrcp.pop %v2551
      %v2555 = vmul.f32 1.0, %v2554
      %v2556 = vmul.f32 %v2553, 1.0614054
      %v2557 = vmul.f32 %v2555, 1.0614054
      %v2558 = vadd.f32 %v2556, -1.4531521
      %v2559 = vadd.f32 %v2557, -1.4531521
      %v2560 = vmul.f32 %v2553, %v2558
      %v2561 = vmul.f32 %v2555, %v2559
      %v2562 = vadd.f32 %v2560, 1.4214138
      %v2563 = vadd.f32 %v2561, 1.4214138
      %v2564 = vmul.f32 %v2553, %v2562
      %v2565 = vmul.f32 %v2555, %v2563
      %v2566 = vadd.f32 %v2564, -0.28449672
      %v2567 = vadd.f32 %v2565, -0.28449672
      %v2568 = vmul.f32 %v2553, %v2566
      %v2569 = vmul.f32 %v2555, %v2567
      %v2570 = vadd.f32 %v2568, 0.2548296
      %v2571 = vadd.f32 %v2569, 0.2548296
      %v2572 = vmul.f32 %v2553, %v2570
      %v2573 = vmul.f32 %v2555, %v2571
      %v2574 = vsub.f32 0.0, %v2546
      %v2575 = vsub.f32 0.0, %v2547
      %v2576 = vmul.f32 %v2574, %v2546
      %v2577 = vmul.f32 %v2575, %v2547
      %v2578 = vmul.f32 %v2576, 1.442695
      %v2579 = vpow.pop %v2578
      %v2580 = vmul.f32 %v2577, 1.442695
      %v2581 = vpow.pop %v2580
      %v2582 = vmul.f32 %v2572, %v2579
      %v2583 = vmul.f32 %v2573, %v2581
      %v2584 = vsub.f32 1.0, %v2582
      %v2585 = vsub.f32 1.0, %v2583
      %v2586 = vmul.f32 %v2544, %v2584
      %v2587 = vmul.f32 %v2545, %v2585
      %v2588 = vadd.f32 %v2586, 1.0
      %v2589 = vadd.f32 %v2587, 1.0
      %v2590 = vmul.f32 %v2538, %v2588
      %v2591 = vmul.f32 %v2539, %v2589
      %s2592 = scalar_lea.vmem %s7, 4
      %v2593 = vld [vmem:[%s2592] sm:$0xf]
      %v2595 = vsel %vm1278, %v2593, 0
      %v2598 = vsel %vm1127, %v2591, 0
      %2600 = vmatprep.subr.mxu0 0.0
      %2601 = vmatpush1.msra.mxu0 %v2590
      %2602 = vmatprep.subr.mxu0 0.0
      %2603 = vmatpush1.msra.mxu0 %v2598
      %2604 = vmatprep.subr.mxu0 0.0
      %2605 = vmatpush1.msra.mxu0 0.0
      %2606 = vmatprep.subr.mxu0 0.0
      %2607 = vmatpush1.msra.mxu0 0.0
      %2608 = vmatprep.subr.mxu0 0.0
      %2609 = vmatpush1.msra.mxu0 0.0
      %2610 = vmatprep.subr.mxu0 0.0
      %2611 = vmatpush1.msra.mxu0 0.0
      %2612 = vmatprep.subr.mxu0 0.0
      %2613 = vmatpush1.msra.mxu0 0.0
      %2614 = vmatprep.subr.mxu0 0.0
      %2615 = vmatpush1.msra.mxu0 0.0
      %2616 = vmatprep.subr.mxu0 0.0
      %2617 = vmatpush1.msra.mxu0 0.0
      %2618 = vmatprep.subr.mxu0 0.0
      %2619 = vmatpush1.msra.mxu0 0.0
      %2620 = vmatprep.subr.mxu0 0.0
      %2621 = vmatpush1.msra.mxu0 0.0
      %2622 = vmatprep.subr.mxu0 0.0
      %2623 = vmatpush1.msra.mxu0 0.0
      %2624 = vmatprep.subr.mxu0 0.0
      %2625 = vmatpush1.msra.mxu0 0.0
      %2626 = vmatprep.subr.mxu0 0.0
      %2627 = vmatpush1.msra.mxu0 0.0
      %2628 = vmatprep.subr.mxu0 0.0
      %2629 = vmatpush1.msra.mxu0 0.0
      %2630 = vmatprep.subr.mxu0 0.0
      %2631 = vmatpush1.msra.mxu0 0.0
      %2632 = vmatprep.subr.mxu0 0.0
      %2633 = vmatpush1.msra.mxu0 0.0
      %2634 = vmatprep.subr.mxu0 0.0
      %2635 = vmatpush1.msra.mxu0 0.0
      %2636 = vmatprep.subr.mxu0 0.0
      %2637 = vmatpush1.msra.mxu0 0.0
      %2638 = vmatprep.subr.mxu0 0.0
      %2639 = vmatpush1.msra.mxu0 0.0
      %2640 = vmatprep.subr.mxu0 0.0
      %2641 = vmatpush1.msra.mxu0 0.0
      %2642 = vmatprep.subr.mxu0 0.0
      %2643 = vmatpush1.msra.mxu0 0.0
      %2644 = vmatprep.subr.mxu0 0.0
      %2645 = vmatpush1.msra.mxu0 0.0
      %2646 = vmatprep.subr.mxu0 0.0
      %2647 = vmatpush1.msra.mxu0 0.0
      %2648 = vmatprep.subr.mxu0 0.0
      %2649 = vmatpush1.msra.mxu0 0.0
      %2650 = vmatprep.subr.mxu0 0.0
      %2651 = vmatpush1.msra.mxu0 0.0
      %2652 = vmatprep.subr.mxu0 0.0
      %2653 = vmatpush1.msra.mxu0 0.0
      %2654 = vmatprep.subr.mxu0 0.0
      %2655 = vmatpush1.msra.mxu0 0.0
      %2656 = vmatprep.subr.mxu0 0.0
      %2657 = vmatpush1.msra.mxu0 0.0
      %2658 = vmatprep.subr.mxu0 0.0
      %2659 = vmatpush1.msra.mxu0 0.0
      %2660 = vmatprep.subr.mxu0 0.0
      %2661 = vmatpush1.msra.mxu0 0.0
      %2662 = vmatprep.subr.mxu0 0.0
      %2663 = vmatpush1.msra.mxu0 0.0
      %2664 = vmatprep.mubr.f32.mxu0 0.0
      %2665 = vmatmul.mubr.f32.gmra.mrb[0].mxu0 %v2595
      %v2666 = vpop.f32.mrb[0].mxu0
      %v2667 = vadd.f32 0.0, %v2666
      %v2668 = vpop.f32.mrb[0].mxu0
      %2669 = vdwg.mxu0
      %s2670 = scalar_lea.vmem %s9, 16
      %v2671 = vld [vmem:[%s2670] sm:$0xff]
      %v2672 = vld [vmem:[%s2670 + $0x8] sm:$0xf]
      %v2674 = vsel %vm1278, %v2671, 0
      %v2677 = vsel %vm1278, %v2672, 0
      %2679 = vmatprep.subr.mxu0 0.0
      %2680 = vmatpush1.msra.mxu0 %v2590
      %2681 = vmatprep.subr.mxu0 0.0
      %2682 = vmatpush1.msra.mxu0 %v2598
      %2683 = vmatprep.subr.mxu0 0.0
      %2684 = vmatpush1.msra.mxu0 0.0
      %2685 = vmatprep.subr.mxu0 0.0
      %2686 = vmatpush1.msra.mxu0 0.0
      %2687 = vmatprep.subr.mxu0 0.0
      %2688 = vmatpush1.msra.mxu0 0.0
      %2689 = vmatprep.subr.mxu0 0.0
      %2690 = vmatpush1.msra.mxu0 0.0
      %2691 = vmatprep.subr.mxu0 0.0
      %2692 = vmatpush1.msra.mxu0 0.0
      %2693 = vmatprep.subr.mxu0 0.0
      %2694 = vmatpush1.msra.mxu0 0.0
      %2695 = vmatprep.subr.mxu0 0.0
      %2696 = vmatpush1.msra.mxu0 0.0
      %2697 = vmatprep.subr.mxu0 0.0
      %2698 = vmatpush1.msra.mxu0 0.0
      %2699 = vmatprep.subr.mxu0 0.0
      %2700 = vmatpush1.msra.mxu0 0.0
      %2701 = vmatprep.subr.mxu0 0.0
      %2702 = vmatpush1.msra.mxu0 0.0
      %2703 = vmatprep.subr.mxu0 0.0
      %2704 = vmatpush1.msra.mxu0 0.0
      %2705 = vmatprep.subr.mxu0 0.0
      %2706 = vmatpush1.msra.mxu0 0.0
      %2707 = vmatprep.subr.mxu0 0.0
      %2708 = vmatpush1.msra.mxu0 0.0
      %2709 = vmatprep.subr.mxu0 0.0
      %2710 = vmatpush1.msra.mxu0 0.0
      %2711 = vmatprep.subr.mxu0 0.0
      %2712 = vmatpush1.msra.mxu0 0.0
      %2713 = vmatprep.subr.mxu0 0.0
      %2714 = vmatpush1.msra.mxu0 0.0
      %2715 = vmatprep.subr.mxu0 0.0
      %2716 = vmatpush1.msra.mxu0 0.0
      %2717 = vmatprep.subr.mxu0 0.0
      %2718 = vmatpush1.msra.mxu0 0.0
      %2719 = vmatprep.subr.mxu0 0.0
      %2720 = vmatpush1.msra.mxu0 0.0
      %2721 = vmatprep.subr.mxu0 0.0
      %2722 = vmatpush1.msra.mxu0 0.0
      %2723 = vmatprep.subr.mxu0 0.0
      %2724 = vmatpush1.msra.mxu0 0.0
      %2725 = vmatprep.subr.mxu0 0.0
      %2726 = vmatpush1.msra.mxu0 0.0
      %2727 = vmatprep.subr.mxu0 0.0
      %2728 = vmatpush1.msra.mxu0 0.0
      %2729 = vmatprep.subr.mxu0 0.0
      %2730 = vmatpush1.msra.mxu0 0.0
      %2731 = vmatprep.subr.mxu0 0.0
      %2732 = vmatpush1.msra.mxu0 0.0
      %2733 = vmatprep.subr.mxu0 0.0
      %2734 = vmatpush1.msra.mxu0 0.0
      %2735 = vmatprep.subr.mxu0 0.0
      %2736 = vmatpush1.msra.mxu0 0.0
      %2737 = vmatprep.subr.mxu0 0.0
      %2738 = vmatpush1.msra.mxu0 0.0
      %2739 = vmatprep.subr.mxu0 0.0
      %2740 = vmatpush1.msra.mxu0 0.0
      %2741 = vmatprep.subr.mxu0 0.0
      %2742 = vmatpush1.msra.mxu0 0.0
      %2743 = vmatprep.mubr.f32.mxu0 0.0
      %2744 = vmatmul.mubr.f32.gmra.mrb[0].mxu0 %v2674
      %v2745 = vpop.f32.mrb[0].mxu0
      %v2746 = vadd.f32 0.0, %v2745
      %v2747 = vpop.f32.mrb[0].mxu0
      %2748 = vmatprep.mubr.f32.mxu0 0.0
      %2749 = vmatmul.mubr.f32.gmra.mrb[0].mxu0 %v2677
      %v2750 = vpop.f32.mrb[0].mxu0
      %v2751 = vadd.f32 0.0, %v2750
      %v2752 = vpop.f32.mrb[0].mxu0
      %2753 = vdwg.mxu0
      %v2754 = vmul.f32 %v2381, %v2667
      %v2756 = vsel %vm2485, %v2754, 0
      %v2759 = vsel %vm2485, %v2288, 0
      %v2762 = vsel %vm2485, %v2289, 0
      %v2765 = vsel %vm2485, %v2290, 0
      %v2768 = vsel %vm2485, %v2291, 0
      %v2771 = vsel %vm2485, %v2292, 0
      %v2774 = vsel %vm2485, %v2293, 0
      %v2777 = vsel %vm2485, %v2294, 0
      %v2780 = vsel %vm2485, %v2295, 0
      %2782 = vmatprep.subr.mxu0 0.0
      %2783 = vmatpush1.xpose.msra.mxu0 %v2759
      %2784 = vmatprep.subr.mxu0 0.0
      %2785 = vmatpush1.xpose.msra.mxu0 %v2762
      %2786 = vmatprep.subr.mxu0 0.0
      %2787 = vmatpush1.xpose.msra.mxu0 %v2765
      %2788 = vmatprep.subr.mxu0 0.0
      %2789 = vmatpush1.xpose.msra.mxu0 %v2768
      %2790 = vmatprep.subr.mxu0 0.0
      %2791 = vmatpush1.xpose.msra.mxu0 %v2771
      %2792 = vmatprep.subr.mxu0 0.0
      %2793 = vmatpush1.xpose.msra.mxu0 %v2774
      %2794 = vmatprep.subr.mxu0 0.0
      %2795 = vmatpush1.xpose.msra.mxu0 %v2777
      %2796 = vmatprep.subr.mxu0 0.0
      %2797 = vmatpush1.xpose.msra.mxu0 %v2780
      %2798 = vmatprep.subr.mxu0 0.0
      %2799 = vmatpush1.xpose.msra.mxu0 0.0
      %2800 = vmatprep.subr.mxu0 0.0
      %2801 = vmatpush1.xpose.msra.mxu0 0.0
      %2802 = vmatprep.subr.mxu0 0.0
      %2803 = vmatpush1.xpose.msra.mxu0 0.0
      %2804 = vmatprep.subr.mxu0 0.0
      %2805 = vmatpush1.xpose.msra.mxu0 0.0
      %2806 = vmatprep.subr.mxu0 0.0
      %2807 = vmatpush1.xpose.msra.mxu0 0.0
      %2808 = vmatprep.subr.mxu0 0.0
      %2809 = vmatpush1.xpose.msra.mxu0 0.0
      %2810 = vmatprep.subr.mxu0 0.0
      %2811 = vmatpush1.xpose.msra.mxu0 0.0
      %2812 = vmatprep.subr.mxu0 0.0
      %2813 = vmatpush1.xpose.msra.mxu0 0.0
      %2814 = vmatprep.subr.mxu0 0.0
      %2815 = vmatpush1.xpose.msra.mxu0 0.0
      %2816 = vmatprep.subr.mxu0 0.0
      %2817 = vmatpush1.xpose.msra.mxu0 0.0
      %2818 = vmatprep.subr.mxu0 0.0
      %2819 = vmatpush1.xpose.msra.mxu0 0.0
      %2820 = vmatprep.subr.mxu0 0.0
      %2821 = vmatpush1.xpose.msra.mxu0 0.0
      %2822 = vmatprep.subr.mxu0 0.0
      %2823 = vmatpush1.xpose.msra.mxu0 0.0
      %2824 = vmatprep.subr.mxu0 0.0
      %2825 = vmatpush1.xpose.msra.mxu0 0.0
      %2826 = vmatprep.subr.mxu0 0.0
      %2827 = vmatpush1.xpose.msra.mxu0 0.0
      %2828 = vmatprep.subr.mxu0 0.0
      %2829 = vmatpush1.xpose.msra.mxu0 0.0
      %2830 = vmatprep.subr.mxu0 0.0
      %2831 = vmatpush1.xpose.msra.mxu0 0.0
      %2832 = vmatprep.subr.mxu0 0.0
      %2833 = vmatpush1.xpose.msra.mxu0 0.0
      %2834 = vmatprep.subr.mxu0 0.0
      %2835 = vmatpush1.xpose.msra.mxu0 0.0
      %2836 = vmatprep.subr.mxu0 0.0
      %2837 = vmatpush1.xpose.msra.mxu0 0.0
      %2838 = vmatprep.subr.mxu0 0.0
      %2839 = vmatpush1.xpose.msra.mxu0 0.0
      %2840 = vmatprep.subr.mxu0 0.0
      %2841 = vmatpush1.xpose.msra.mxu0 0.0
      %2842 = vmatprep.subr.mxu0 0.0
      %2843 = vmatpush1.xpose.msra.mxu0 0.0
      %2844 = vmatprep.subr.mxu0 0.0
      %2845 = vmatpush1.xpose.msra.mxu0 0.0
      %2846 = vmatprep.mubr.f32.mxu0 0.0
      %2847 = vmatmul.mubr.f32.gmra.mrb[0].mxu0 %v2756
      %v2848 = vpop.f32.mrb[0].mxu0
      %v2849 = vadd.f32 0.0, %v2848
      %v2850 = vpop.f32.mrb[0].mxu0
      %2851 = vdwg.mxu0
      %v2852 = vmul.f32 %v2849, 0.57735026
      %v2853 = vsel %vm2374, %v2852, -inf
      %2854 = vmax.xlane.f32.xlu0 %v2853
      %v2855 = vpop.xlane.xlu0 %2854
      %v2856 = vsub.f32 %v2852, %v2855
      %v2857 = vmul.f32 %v2856, 1.442695
      %v2858 = vpow.pop %v2857
      %v2859 = vsel %vm2374, %v2858, 0.0
      %2860 = vadd.xlane.f32.xlu0 %v2859
      %v2861 = vpop.xlane.xlu0 %2860
      %v2862 = vrcp.pop %v2861
      %v2863 = vmul.f32 %v2858, %v2862
      %v2864 = vsel %vm2374, %v2863, 0.0
      %v2865 = vrot.slane %v2864, 4
      %v2866 = vadd.f32 %v2864, %v2865
      %v2867 = vrot.slane %v2866, 2
      %v2868 = vadd.f32 %v2866, %v2867
      %v2869 = vrot.slane %v2868, 1
      %v2870 = vadd.f32 %v2868, %v2869
      %v2872 = vsel %vm2485, %v2870, 0
      %v2875 = vsel %vm2485, %v2746, 0
      %v2878 = vsel %vm2485, %v2751, 0
      %2880 = vmatprep.subr.mxu0 0.0
      %2881 = vmatpush1.xpose.msra.mxu0 %v2875
      %2882 = vmatprep.subr.mxu0 0.0
      %2883 = vmatpush1.xpose.msra.mxu0 %v2878
      %2884 = vmatprep.subr.mxu0 0.0
      %2885 = vmatpush1.xpose.msra.mxu0 0.0
      %2886 = vmatprep.subr.mxu0 0.0
      %2887 = vmatpush1.xpose.msra.mxu0 0.0
      %2888 = vmatprep.subr.mxu0 0.0
      %2889 = vmatpush1.xpose.msra.mxu0 0.0
      %2890 = vmatprep.subr.mxu0 0.0
      %2891 = vmatpush1.xpose.msra.mxu0 0.0
      %2892 = vmatprep.subr.mxu0 0.0
      %2893 = vmatpush1.xpose.msra.mxu0 0.0
      %2894 = vmatprep.subr.mxu0 0.0
      %2895 = vmatpush1.xpose.msra.mxu0 0.0
      %2896 = vmatprep.subr.mxu0 0.0
      %2897 = vmatpush1.xpose.msra.mxu0 0.0
      %2898 = vmatprep.subr.mxu0 0.0
      %2899 = vmatpush1.xpose.msra.mxu0 0.0
      %2900 = vmatprep.subr.mxu0 0.0
      %2901 = vmatpush1.xpose.msra.mxu0 0.0
      %2902 = vmatprep.subr.mxu0 0.0
      %2903 = vmatpush1.xpose.msra.mxu0 0.0
      %2904 = vmatprep.subr.mxu0 0.0
      %2905 = vmatpush1.xpose.msra.mxu0 0.0
      %2906 = vmatprep.subr.mxu0 0.0
      %2907 = vmatpush1.xpose.msra.mxu0 0.0
      %2908 = vmatprep.subr.mxu0 0.0
      %2909 = vmatpush1.xpose.msra.mxu0 0.0
      %2910 = vmatprep.subr.mxu0 0.0
      %2911 = vmatpush1.xpose.msra.mxu0 0.0
      %2912 = vmatprep.subr.mxu0 0.0
      %2913 = vmatpush1.xpose.msra.mxu0 0.0
      %2914 = vmatprep.subr.mxu0 0.0
      %2915 = vmatpush1.xpose.msra.mxu0 0.0
      %2916 = vmatprep.subr.mxu0 0.0
      %2917 = vmatpush1.xpose.msra.mxu0 0.0
      %2918 = vmatprep.subr.mxu0 0.0
      %2919 = vmatpush1.xpose.msra.mxu0 0.0
      %2920 = vmatprep.subr.mxu0 0.0
      %2921 = vmatpush1.xpose.msra.mxu0 0.0
      %2922 = vmatprep.subr.mxu0 0.0
      %2923 = vmatpush1.xpose.msra.mxu0 0.0
      %2924 = vmatprep.subr.mxu0 0.0
      %2925 = vmatpush1.xpose.msra.mxu0 0.0
      %2926 = vmatprep.subr.mxu0 0.0
      %2927 = vmatpush1.xpose.msra.mxu0 0.0
      %2928 = vmatprep.subr.mxu0 0.0
      %2929 = vmatpush1.xpose.msra.mxu0 0.0
      %2930 = vmatprep.subr.mxu0 0.0
      %2931 = vmatpush1.xpose.msra.mxu0 0.0
      %2932 = vmatprep.subr.mxu0 0.0
      %2933 = vmatpush1.xpose.msra.mxu0 0.0
      %2934 = vmatprep.subr.mxu0 0.0
      %2935 = vmatpush1.xpose.msra.mxu0 0.0
      %2936 = vmatprep.subr.mxu0 0.0
      %2937 = vmatpush1.xpose.msra.mxu0 0.0
      %2938 = vmatprep.subr.mxu0 0.0
      %2939 = vmatpush1.xpose.msra.mxu0 0.0
      %2940 = vmatprep.subr.mxu0 0.0
      %2941 = vmatpush1.xpose.msra.mxu0 0.0
      %2942 = vmatprep.subr.mxu0 0.0
      %2943 = vmatpush1.xpose.msra.mxu0 0.0
      %2944 = vmatprep.mubr.f32.mxu0 0.0
      %2945 = vmatmul.mubr.f32.gmra.mrb[0].mxu0 %v2872
      %v2946 = vpop.f32.mrb[0].mxu0
      %v2947 = vadd.f32 0.0, %v2946
      %v2948 = vpop.f32.mrb[0].mxu0
      %2949 = vdwg.mxu0
      %s2950 = scalar_lea.vmem %s19, 16
      %v2951 = vld [vmem:[%s2950] sm:$0xff]
      %v2952 = vld [vmem:[%s2950 + $0x8] sm:$0xf]
      %s2953 = scalar_lea.vmem %s21, 1
      %v2954 = vld [vmem:[%s2953] sm:$0x1]
      %v2956 = vsel %vm1278, %v2947, 0
      %v2959 = vsel %vm1278, %v2951, 0
      %v2962 = vsel %vm1278, %v2952, 0
      %2964 = vmatprep.subr.mxu0 0.0
      %2965 = vmatpush1.xpose.msra.mxu0 %v2959
      %2966 = vmatprep.subr.mxu0 0.0
      %2967 = vmatpush1.xpose.msra.mxu0 %v2962
      %2968 = vmatprep.subr.mxu0 0.0
      %2969 = vmatpush1.xpose.msra.mxu0 0.0
      %2970 = vmatprep.subr.mxu0 0.0
      %2971 = vmatpush1.xpose.msra.mxu0 0.0
      %2972 = vmatprep.subr.mxu0 0.0
      %2973 = vmatpush1.xpose.msra.mxu0 0.0
      %2974 = vmatprep.subr.mxu0 0.0
      %2975 = vmatpush1.xpose.msra.mxu0 0.0
      %2976 = vmatprep.subr.mxu0 0.0
      %2977 = vmatpush1.xpose.msra.mxu0 0.0
      %2978 = vmatprep.subr.mxu0 0.0
      %2979 = vmatpush1.xpose.msra.mxu0 0.0
      %2980 = vmatprep.subr.mxu0 0.0
      %2981 = vmatpush1.xpose.msra.mxu0 0.0
      %2982 = vmatprep.subr.mxu0 0.0
      %2983 = vmatpush1.xpose.msra.mxu0 0.0
      %2984 = vmatprep.subr.mxu0 0.0
      %2985 = vmatpush1.xpose.msra.mxu0 0.0
      %2986 = vmatprep.subr.mxu0 0.0
      %2987 = vmatpush1.xpose.msra.mxu0 0.0
      %2988 = vmatprep.subr.mxu0 0.0
      %2989 = vmatpush1.xpose.msra.mxu0 0.0
      %2990 = vmatprep.subr.mxu0 0.0
      %2991 = vmatpush1.xpose.msra.mxu0 0.0
      %2992 = vmatprep.subr.mxu0 0.0
      %2993 = vmatpush1.xpose.msra.mxu0 0.0
      %2994 = vmatprep.subr.mxu0 0.0
      %2995 = vmatpush1.xpose.msra.mxu0 0.0
      %2996 = vmatprep.subr.mxu0 0.0
      %2997 = vmatpush1.xpose.msra.mxu0 0.0
      %2998 = vmatprep.subr.mxu0 0.0
      %2999 = vmatpush1.xpose.msra.mxu0 0.0
      %3000 = vmatprep.subr.mxu0 0.0
      %3001 = vmatpush1.xpose.msra.mxu0 0.0
      %3002 = vmatprep.subr.mxu0 0.0
      %3003 = vmatpush1.xpose.msra.mxu0 0.0
      %3004 = vmatprep.subr.mxu0 0.0
      %3005 = vmatpush1.xpose.msra.mxu0 0.0
      %3006 = vmatprep.subr.mxu0 0.0
      %3007 = vmatpush1.xpose.msra.mxu0 0.0
      %3008 = vmatprep.subr.mxu0 0.0
      %3009 = vmatpush1.xpose.msra.mxu0 0.0
      %3010 = vmatprep.subr.mxu0 0.0
      %3011 = vmatpush1.xpose.msra.mxu0 0.0
      %3012 = vmatprep.subr.mxu0 0.0
      %3013 = vmatpush1.xpose.msra.mxu0 0.0
      %3014 = vmatprep.subr.mxu0 0.0
      %3015 = vmatpush1.xpose.msra.mxu0 0.0
      %3016 = vmatprep.subr.mxu0 0.0
      %3017 = vmatpush1.xpose.msra.mxu0 0.0
      %3018 = vmatprep.subr.mxu0 0.0
      %3019 = vmatpush1.xpose.msra.mxu0 0.0
      %3020 = vmatprep.subr.mxu0 0.0
      %3021 = vmatpush1.xpose.msra.mxu0 0.0
      %3022 = vmatprep.subr.mxu0 0.0
      %3023 = vmatpush1.xpose.msra.mxu0 0.0
      %3024 = vmatprep.subr.mxu0 0.0
      %3025 = vmatpush1.xpose.msra.mxu0 0.0
      %3026 = vmatprep.subr.mxu0 0.0
      %3027 = vmatpush1.xpose.msra.mxu0 0.0
      %3028 = vmatprep.mubr.f32.mxu0 0.0
      %3029 = vmatmul.mubr.f32.gmra.mrb[0].mxu0 %v2956
      %v3030 = vpop.f32.mrb[0].mxu0
      %v3031 = vadd.f32 %v2954, %v3030
      %v3032 = vpop.f32.mrb[0].mxu0
      %3033 = vdwg.mxu0
      %v3035 = vsel %vm1278, %v3031, 0
      %3037 = vmatprep.subr.mxu0 %v2089
      %3038 = vmatpush1.msra.mxu0 %v2088
      %3039 = vmatprep.subr.mxu0 %v2099
      %3040 = vmatpush1.msra.mxu0 %v2096
      %3041 = vmatprep.subr.mxu0 0.0
      %3042 = vmatpush1.msra.mxu0 0.0
      %3043 = vmatprep.subr.mxu0 0.0
      %3044 = vmatpush1.msra.mxu0 0.0
      %3045 = vmatprep.subr.mxu0 0.0
      %3046 = vmatpush1.msra.mxu0 0.0
      %3047 = vmatprep.subr.mxu0 0.0
      %3048 = vmatpush1.msra.mxu0 0.0
      %3049 = vmatprep.subr.mxu0 0.0
      %3050 = vmatpush1.msra.mxu0 0.0
      %3051 = vmatprep.subr.mxu0 0.0
      %3052 = vmatpush1.msra.mxu0 0.0
      %3053 = vmatprep.subr.mxu0 0.0
      %3054 = vmatpush1.msra.mxu0 0.0
      %3055 = vmatprep.subr.mxu0 0.0
      %3056 = vmatpush1.msra.mxu0 0.0
      %3057 = vmatprep.subr.mxu0 0.0
      %3058 = vmatpush1.msra.mxu0 0.0
      %3059 = vmatprep.subr.mxu0 0.0
      %3060 = vmatpush1.msra.mxu0 0.0
      %3061 = vmatprep.subr.mxu0 0.0
      %3062 = vmatpush1.msra.mxu0 0.0
      %3063 = vmatprep.subr.mxu0 0.0
      %3064 = vmatpush1.msra.mxu0 0.0
      %3065 = vmatprep.subr.mxu0 0.0
      %3066 = vmatpush1.msra.mxu0 0.0
      %3067 = vmatprep.subr.mxu0 0.0
      %3068 = vmatpush1.msra.mxu0 0.0
      %3069 = vmatprep.subr.mxu0 0.0
      %3070 = vmatpush1.msra.mxu0 0.0
      %3071 = vmatprep.subr.mxu0 0.0
      %3072 = vmatpush1.msra.mxu0 0.0
      %3073 = vmatprep.subr.mxu0 0.0
      %3074 = vmatpush1.msra.mxu0 0.0
      %3075 = vmatprep.subr.mxu0 0.0
      %3076 = vmatpush1.msra.mxu0 0.0
      %3077 = vmatprep.subr.mxu0 0.0
      %3078 = vmatpush1.msra.mxu0 0.0
      %3079 = vmatprep.subr.mxu0 0.0
      %3080 = vmatpush1.msra.mxu0 0.0
      %3081 = vmatprep.subr.mxu0 0.0
      %3082 = vmatpush1.msra.mxu0 0.0
      %3083 = vmatprep.subr.mxu0 0.0
      %3084 = vmatpush1.msra.mxu0 0.0
      %3085 = vmatprep.subr.mxu0 0.0
      %3086 = vmatpush1.msra.mxu0 0.0
      %3087 = vmatprep.subr.mxu0 0.0
      %3088 = vmatpush1.msra.mxu0 0.0
      %3089 = vmatprep.subr.mxu0 0.0
      %3090 = vmatpush1.msra.mxu0 0.0
      %3091 = vmatprep.subr.mxu0 0.0
      %3092 = vmatpush1.msra.mxu0 0.0
      %3093 = vmatprep.subr.mxu0 0.0
      %3094 = vmatpush1.msra.mxu0 0.0
      %3095 = vmatprep.subr.mxu0 0.0
      %3096 = vmatpush1.msra.mxu0 0.0
      %3097 = vmatprep.subr.mxu0 0.0
      %3098 = vmatpush1.msra.mxu0 0.0
      %3099 = vmatprep.subr.mxu0 0.0
      %3100 = vmatpush1.msra.mxu0 0.0
      %3101 = vmatprep.mubr.f32.mxu0 0.0
      %3102 = vmatmul.mubr.f32.gmra.mrb[0].mxu0 %v3035
      %v3103 = vpop.f32.mrb[0].mxu0
      %v3104 = vadd.f32 0.0, %v3103
      %v3105 = vpop.f32.mrb[0].mxu0
      %v3106 = vadd.f32 0.0, %v3105
      %3107 = vdwg.mxu0
      %v3108 = vlaneseq
      %v3109 = vshrl.u32 %v3108, 7
      %v3110 = vsub.s32 0, %v3109
      %v3111 = vrot.slane %v3104, %v3110
      %v3112 = vlaneseq
      %v3113 = vshrl.u32 %v3112, 7
      %v3114 = vsub.s32 0, %v3113
      %v3115 = vrot.slane %v3106, %v3114
      %v3116 = vmul.f32 %v2172, %v3111
      %v3117 = vmul.f32 %v2173, %v3115
      %v3118 = vmul.f32 %v2174, %v3111
      %v3119 = vmul.f32 %v2175, %v3115
      %v3120 = vld [vmem:[%s35] sm:$0xff]
      %v3121 = vld [vmem:[%s35 + $0x8] sm:$0xff]
      %v3122 = vld [vmem:[%s35 + $0x10] sm:$0xff]
      %v3123 = vld [vmem:[%s35 + $0x18] sm:$0xff]
      %v3124 = vld [vmem:[%s35 + $0x20] sm:$0xff]
      %v3125 = vld [vmem:[%s35 + $0x28] sm:$0xff]
      %v3126 = vld [vmem:[%s35 + $0x30] sm:$0xff]
      %v3127 = vld [vmem:[%s35 + $0x38] sm:$0xff]
      %v3128 = vld [vmem:[%s35 + $0x40] sm:$0xff]
      %v3129 = vld [vmem:[%s35 + $0x48] sm:$0xff]
      %v3130 = vld [vmem:[%s35 + $0x50] sm:$0xff]
      %v3131 = vld [vmem:[%s35 + $0x58] sm:$0xff]
      %v3132 = vld [vmem:[%s35 + $0x60] sm:$0xff]
      %v3133 = vld [vmem:[%s35 + $0x68] sm:$0xff]
      %v3134 = vld [vmem:[%s35 + $0x70] sm:$0xff]
      %v3135 = vld [vmem:[%s35 + $0x78] sm:$0xff]
      %v3136 = vld [vmem:[%s35 + $0x80] sm:$0xff]
      %v3137 = vld [vmem:[%s35 + $0x88] sm:$0xff]
      %v3139 = vsel %vm2206, %v3117, 0
      %v3142 = vsel %vm2206, %v3119, 0
      %3144 = vmatprep.subr.mxu0 0.0
      %3145 = vmatpush1.msra.mxu0 %v3120
      %3146 = vmatprep.subr.mxu0 0.0
      %3147 = vmatpush1.msra.mxu0 %v3121
      %3148 = vmatprep.subr.mxu0 0.0
      %3149 = vmatpush1.msra.mxu0 %v3122
      %3150 = vmatprep.subr.mxu0 0.0
      %3151 = vmatpush1.msra.mxu0 %v3123
      %3152 = vmatprep.subr.mxu0 0.0
      %3153 = vmatpush1.msra.mxu0 %v3124
      %3154 = vmatprep.subr.mxu0 0.0
      %3155 = vmatpush1.msra.mxu0 %v3125
      %3156 = vmatprep.subr.mxu0 0.0
      %3157 = vmatpush1.msra.mxu0 %v3126
      %3158 = vmatprep.subr.mxu0 0.0
      %3159 = vmatpush1.msra.mxu0 %v3127
      %3160 = vmatprep.subr.mxu0 0.0
      %3161 = vmatpush1.msra.mxu0 %v3128
      %3162 = vmatprep.subr.mxu0 0.0
      %3163 = vmatpush1.msra.mxu0 %v3129
      %3164 = vmatprep.subr.mxu0 0.0
      %3165 = vmatpush1.msra.mxu0 %v3130
      %3166 = vmatprep.subr.mxu0 0.0
      %3167 = vmatpush1.msra.mxu0 %v3131
      %3168 = vmatprep.subr.mxu0 0.0
      %3169 = vmatpush1.msra.mxu0 %v3132
      %3170 = vmatprep.subr.mxu0 0.0
      %3171 = vmatpush1.msra.mxu0 %v3133
      %3172 = vmatprep.subr.mxu0 0.0
      %3173 = vmatpush1.msra.mxu0 %v3134
      %3174 = vmatprep.subr.mxu0 0.0
      %3175 = vmatpush1.msra.mxu0 %v3135
      %3176 = vmatprep.subr.mxu0 0.0
      %3177 = vmatpush1.msra.mxu0 %v3136
      %3178 = vmatprep.subr.mxu0 0.0
      %3179 = vmatpush1.msra.mxu0 %v3137
      %3180 = vmatprep.subr.mxu0 0.0
      %3181 = vmatpush1.msra.mxu0 0.0
      %3182 = vmatprep.subr.mxu0 0.0
      %3183 = vmatpush1.msra.mxu0 0.0
      %3184 = vmatprep.subr.mxu0 0.0
      %3185 = vmatpush1.msra.mxu0 0.0
      %3186 = vmatprep.subr.mxu0 0.0
      %3187 = vmatpush1.msra.mxu0 0.0
      %3188 = vmatprep.subr.mxu0 0.0
      %3189 = vmatpush1.msra.mxu0 0.0
      %3190 = vmatprep.subr.mxu0 0.0
      %3191 = vmatpush1.msra.mxu0 0.0
      %3192 = vmatprep.subr.mxu0 0.0
      %3193 = vmatpush1.msra.mxu0 0.0
      %3194 = vmatprep.subr.mxu0 0.0
      %3195 = vmatpush1.msra.mxu0 0.0
      %3196 = vmatprep.subr.mxu0 0.0
      %3197 = vmatpush1.msra.mxu0 0.0
      %3198 = vmatprep.subr.mxu0 0.0
      %3199 = vmatpush1.msra.mxu0 0.0
      %3200 = vmatprep.subr.mxu0 0.0
      %3201 = vmatpush1.msra.mxu0 0.0
      %3202 = vmatprep.subr.mxu0 0.0
      %3203 = vmatpush1.msra.mxu0 0.0
      %3204 = vmatprep.subr.mxu0 0.0
      %3205 = vmatpush1.msra.mxu0 0.0
      %3206 = vmatprep.subr.mxu0 0.0
      %3207 = vmatpush1.msra.mxu0 0.0
      %3208 = vmatprep.mubr.f32.mxu0 %v3139
      %3209 = vmatmul.mubr.f32.gmra.mrb[0].mxu0 %v3116
      %v3210 = vpop.f32.mrb[0].mxu0
      %v3211 = vadd.f32 0.0, %v3210
      %v3212 = vpop.f32.mrb[0].mxu0
      %3213 = vmatprep.mubr.f32.mxu0 %v3142
      %3214 = vmatmul.mubr.f32.gmra.mrb[0].mxu0 %v3118
      %v3215 = vpop.f32.mrb[0].mxu0
      %v3216 = vadd.f32 0.0, %v3215
      %v3217 = vpop.f32.mrb[0].mxu0
      %3218 = vdwg.mxu0
      %v3219 = vld [vmem:[%s27] sm:$0xff]
      %v3220 = vld [vmem:[%s27 + $0x8] sm:$0xff]
      %s3221 = scalar_lea.vmem %s5, 8
      %v3222 = vld [vmem:[%s3221] sm:$0xf]
      %v3224 = vsel %vm1278, %v3222, 0
      %v3227 = vsel %vm1127, %v3216, 0
      %3229 = vmatprep.subr.mxu0 0.0
      %3230 = vmatpush1.msra.mxu0 %v3211
      %3231 = vmatprep.subr.mxu0 0.0
      %3232 = vmatpush1.msra.mxu0 %v3227
      %3233 = vmatprep.subr.mxu0 0.0
      %3234 = vmatpush1.msra.mxu0 0.0
      %3235 = vmatprep.subr.mxu0 0.0
      %3236 = vmatpush1.msra.mxu0 0.0
      %3237 = vmatprep.subr.mxu0 0.0
      %3238 = vmatpush1.msra.mxu0 0.0
      %3239 = vmatprep.subr.mxu0 0.0
      %3240 = vmatpush1.msra.mxu0 0.0
      %3241 = vmatprep.subr.mxu0 0.0
      %3242 = vmatpush1.msra.mxu0 0.0
      %3243 = vmatprep.subr.mxu0 0.0
      %3244 = vmatpush1.msra.mxu0 0.0
      %3245 = vmatprep.subr.mxu0 0.0
      %3246 = vmatpush1.msra.mxu0 0.0
      %3247 = vmatprep.subr.mxu0 0.0
      %3248 = vmatpush1.msra.mxu0 0.0
      %3249 = vmatprep.subr.mxu0 0.0
      %3250 = vmatpush1.msra.mxu0 0.0
      %3251 = vmatprep.subr.mxu0 0.0
      %3252 = vmatpush1.msra.mxu0 0.0
      %3253 = vmatprep.subr.mxu0 0.0
      %3254 = vmatpush1.msra.mxu0 0.0
      %3255 = vmatprep.subr.mxu0 0.0
      %3256 = vmatpush1.msra.mxu0 0.0
      %3257 = vmatprep.subr.mxu0 0.0
      %3258 = vmatpush1.msra.mxu0 0.0
      %3259 = vmatprep.subr.mxu0 0.0
      %3260 = vmatpush1.msra.mxu0 0.0
      %3261 = vmatprep.subr.mxu0 0.0
      %3262 = vmatpush1.msra.mxu0 0.0
      %3263 = vmatprep.subr.mxu0 0.0
      %3264 = vmatpush1.msra.mxu0 0.0
      %3265 = vmatprep.subr.mxu0 0.0
      %3266 = vmatpush1.msra.mxu0 0.0
      %3267 = vmatprep.subr.mxu0 0.0
      %3268 = vmatpush1.msra.mxu0 0.0
      %3269 = vmatprep.subr.mxu0 0.0
      %3270 = vmatpush1.msra.mxu0 0.0
      %3271 = vmatprep.subr.mxu0 0.0
      %3272 = vmatpush1.msra.mxu0 0.0
      %3273 = vmatprep.subr.mxu0 0.0
      %3274 = vmatpush1.msra.mxu0 0.0
      %3275 = vmatprep.subr.mxu0 0.0
      %3276 = vmatpush1.msra.mxu0 0.0
      %3277 = vmatprep.subr.mxu0 0.0
      %3278 = vmatpush1.msra.mxu0 0.0
      %3279 = vmatprep.subr.mxu0 0.0
      %3280 = vmatpush1.msra.mxu0 0.0
      %3281 = vmatprep.subr.mxu0 0.0
      %3282 = vmatpush1.msra.mxu0 0.0
      %3283 = vmatprep.subr.mxu0 0.0
      %3284 = vmatpush1.msra.mxu0 0.0
      %3285 = vmatprep.subr.mxu0 0.0
      %3286 = vmatpush1.msra.mxu0 0.0
      %3287 = vmatprep.subr.mxu0 0.0
      %3288 = vmatpush1.msra.mxu0 0.0
      %3289 = vmatprep.subr.mxu0 0.0
      %3290 = vmatpush1.msra.mxu0 0.0
      %3291 = vmatprep.subr.mxu0 0.0
      %3292 = vmatpush1.msra.mxu0 0.0
      %3293 = vmatprep.mubr.f32.mxu0 0.0
      %3294 = vmatmul.mubr.f32.gmra.mrb[0].mxu0 %v3224
      %v3295 = vpop.f32.mrb[0].mxu0
      %v3296 = vadd.f32 0.0, %v3295
      %v3297 = vpop.f32.mrb[0].mxu0
      %3298 = vdwg.mxu0
      %vm3299 = vcmask 125952
      %v3300 = vsel %vm3299, %v3296, 0.0
      %v3301 = vrot.slane %v3300, 4
      %v3302 = vadd.f32 %v3300, %v3301
      %v3303 = vrot.slane %v3302, 2
      %v3304 = vadd.f32 %v3302, %v3303
      %v3305 = vrot.slane %v3304, 1
      %v3306 = vadd.f32 %v3304, %v3305
      %s3307 = scalar_lea.vmem %s11, 32
      %v3308 = vld [vmem:[%s3307] sm:$0xff]
      %v3309 = vld [vmem:[%s3307 + $0x8] sm:$0xf]
      %s3310 = scalar_lea.vmem %s13, 32
      %v3311 = vld [vmem:[%s3310] sm:$0xff]
      %v3312 = vld [vmem:[%s3310 + $0x8] sm:$0xf]
      %3314 = vset.pattern.permute.xlu0 0
      %3315 = vperm.xlu0 %3314, %v3311
      %v3316 = vpop.permute.xlu0 %3315
      %3319 = vset.pattern.permute.xlu0 0
      %3320 = vperm.xlu0 %3319, %v3312
      %v3321 = vpop.permute.xlu0 %3320
      %v3324 = vsel %vm1278, %v3308, 0
      %v3327 = vsel %vm1278, %v3309, 0
      %3329 = vmatprep.subr.mxu0 0.0
      %3330 = vmatpush1.msra.mxu0 %v3211
      %3331 = vmatprep.subr.mxu0 0.0
      %3332 = vmatpush1.msra.mxu0 %v3227
      %3333 = vmatprep.subr.mxu0 0.0
      %3334 = vmatpush1.msra.mxu0 0.0
      %3335 = vmatprep.subr.mxu0 0.0
      %3336 = vmatpush1.msra.mxu0 0.0
      %3337 = vmatprep.subr.mxu0 0.0
      %3338 = vmatpush1.msra.mxu0 0.0
      %3339 = vmatprep.subr.mxu0 0.0
      %3340 = vmatpush1.msra.mxu0 0.0
      %3341 = vmatprep.subr.mxu0 0.0
      %3342 = vmatpush1.msra.mxu0 0.0
      %3343 = vmatprep.subr.mxu0 0.0
      %3344 = vmatpush1.msra.mxu0 0.0
      %3345 = vmatprep.subr.mxu0 0.0
      %3346 = vmatpush1.msra.mxu0 0.0
      %3347 = vmatprep.subr.mxu0 0.0
      %3348 = vmatpush1.msra.mxu0 0.0
      %3349 = vmatprep.subr.mxu0 0.0
      %3350 = vmatpush1.msra.mxu0 0.0
      %3351 = vmatprep.subr.mxu0 0.0
      %3352 = vmatpush1.msra.mxu0 0.0
      %3353 = vmatprep.subr.mxu0 0.0
      %3354 = vmatpush1.msra.mxu0 0.0
      %3355 = vmatprep.subr.mxu0 0.0
      %3356 = vmatpush1.msra.mxu0 0.0
      %3357 = vmatprep.subr.mxu0 0.0
      %3358 = vmatpush1.msra.mxu0 0.0
      %3359 = vmatprep.subr.mxu0 0.0
      %3360 = vmatpush1.msra.mxu0 0.0
      %3361 = vmatprep.subr.mxu0 0.0
      %3362 = vmatpush1.msra.mxu0 0.0
      %3363 = vmatprep.subr.mxu0 0.0
      %3364 = vmatpush1.msra.mxu0 0.0
      %3365 = vmatprep.subr.mxu0 0.0
      %3366 = vmatpush1.msra.mxu0 0.0
      %3367 = vmatprep.subr.mxu0 0.0
      %3368 = vmatpush1.msra.mxu0 0.0
      %3369 = vmatprep.subr.mxu0 0.0
      %3370 = vmatpush1.msra.mxu0 0.0
      %3371 = vmatprep.subr.mxu0 0.0
      %3372 = vmatpush1.msra.mxu0 0.0
      %3373 = vmatprep.subr.mxu0 0.0
      %3374 = vmatpush1.msra.mxu0 0.0
      %3375 = vmatprep.subr.mxu0 0.0
      %3376 = vmatpush1.msra.mxu0 0.0
      %3377 = vmatprep.subr.mxu0 0.0
      %3378 = vmatpush1.msra.mxu0 0.0
      %3379 = vmatprep.subr.mxu0 0.0
      %3380 = vmatpush1.msra.mxu0 0.0
      %3381 = vmatprep.subr.mxu0 0.0
      %3382 = vmatpush1.msra.mxu0 0.0
      %3383 = vmatprep.subr.mxu0 0.0
      %3384 = vmatpush1.msra.mxu0 0.0
      %3385 = vmatprep.subr.mxu0 0.0
      %3386 = vmatpush1.msra.mxu0 0.0
      %3387 = vmatprep.subr.mxu0 0.0
      %3388 = vmatpush1.msra.mxu0 0.0
      %3389 = vmatprep.subr.mxu0 0.0
      %3390 = vmatpush1.msra.mxu0 0.0
      %3391 = vmatprep.subr.mxu0 0.0
      %3392 = vmatpush1.msra.mxu0 0.0
      %3393 = vmatprep.mubr.f32.mxu0 0.0
      %3394 = vmatmul.mubr.f32.gmra.mrb[0].mxu0 %v3324
      %v3395 = vpop.f32.mrb[0].mxu0
      %v3396 = vadd.f32 %v3316, %v3395
      %v3397 = vpop.f32.mrb[0].mxu0
      %3398 = vmatprep.mubr.f32.mxu0 0.0
      %3399 = vmatmul.mubr.f32.gmra.mrb[0].mxu0 %v3327
      %v3400 = vpop.f32.mrb[0].mxu0
      %v3401 = vadd.f32 %v3321, %v3400
      %v3402 = vpop.f32.mrb[0].mxu0
      %3403 = vdwg.mxu0
      %s3404 = scalar_lea.vmem %s15, 32
      %v3405 = vld [vmem:[%s3404] sm:$0xff]
      %v3406 = vld [vmem:[%s3404 + $0x8] sm:$0xf]
      %s3407 = scalar_lea.vmem %s17, 32
      %v3408 = vld [vmem:[%s3407] sm:$0xff]
      %v3409 = vld [vmem:[%s3407 + $0x8] sm:$0xf]
      %v3410 = vsel %vm2206, %v3396, 0.0
      %v3411 = vsel %vm3299, %v3401, 0.0
      %v3412 = vadd.f32 %v3410, %v3411
      %v3413 = vrot.slane %v3412, 4
      %v3414 = vadd.f32 %v3412, %v3413
      %v3415 = vrot.slane %v3414, 2
      %v3416 = vadd.f32 %v3414, %v3415
      %v3417 = vrot.slane %v3416, 1
      %v3418 = vadd.f32 %v3416, %v3417
      %v3419 = vmul.f32 %v3418, %v1144
      %v3420 = vsub.f32 %v3396, %v3419
      %v3421 = vsub.f32 %v3401, %v3419
      %v3422 = vmul.f32 %v3420, %v3420
      %v3423 = vmul.f32 %v3421, %v3421
      %v3424 = vsel %vm2206, %v3422, 0.0
      %v3425 = vsel %vm3299, %v3423, 0.0
      %v3426 = vadd.f32 %v3424, %v3425
      %v3427 = vrot.slane %v3426, 4
      %v3428 = vadd.f32 %v3426, %v3427
      %v3429 = vrot.slane %v3428, 2
      %v3430 = vadd.f32 %v3428, %v3429
      %v3431 = vrot.slane %v3430, 1
      %v3432 = vadd.f32 %v3430, %v3431
      %v3433 = vmul.f32 %v3432, %v1144
      %v3434 = vadd.f32 %v3433, 1e-05
      %v3435 = vrsqrt.pop %v3434
      %v3436 = vmul.f32 %v3420, %v3435
      %v3437 = vmul.f32 %v3421, %v3435
      %3439 = vset.pattern.permute.xlu0 0
      %3440 = vperm.xlu0 %3439, %v3405
      %v3441 = vpop.permute.xlu0 %3440
      %3444 = vset.pattern.permute.xlu0 0
      %3445 = vperm.xlu0 %3444, %v3406
      %v3446 = vpop.permute.xlu0 %3445
      %v3448 = vmul.f32 %v3436, %v3441
      %v3449 = vmul.f32 %v3437, %v3446
      %3451 = vset.pattern.permute.xlu0 0
      %3452 = vperm.xlu0 %3451, %v3408
      %v3453 = vpop.permute.xlu0 %3452
      %3456 = vset.pattern.permute.xlu0 0
      %3457 = vperm.xlu0 %3456, %v3409
      %v3458 = vpop.permute.xlu0 %3457
      %v3460 = vadd.f32 %v3448, %v3453
      %v3461 = vadd.f32 %v3449, %v3458
      %v3462 = vmul.f32 %v3460, 0.5
      %v3463 = vmul.f32 %v3461, 0.5
      %v3464 = vmul.f32 %v3460, 0.70710677
      %v3465 = vmul.f32 %v3461, 0.70710677
      %vm3466 = vcmp.ge.f32.partialorder %v3464, 0.0
      %vm3467 = vcmp.ge.f32.partialorder %v3465, 0.0
      %v3468 = vsel %vm3466, 1.0, -1.0
      %v3469 = vsel %vm3467, 1.0, -1.0
      %v3470 = vand.u32 2147483647, %v3464
      %v3471 = vand.u32 2147483647, %v3465
      %v3472 = vmul.f32 %v3470, 0.3275911
      %v3473 = vmul.f32 %v3471, 0.3275911
      %v3474 = vadd.f32 %v3472, 1.0
      %v3475 = vadd.f32 %v3473, 1.0
      %v3476 = vrcp.pop %v3474
      %v3477 = vmul.f32 1.0, %v3476
      %v3478 = vrcp.pop %v3475
      %v3479 = vmul.f32 1.0, %v3478
      %v3480 = vmul.f32 %v3477, 1.0614054
      %v3481 = vmul.f32 %v3479, 1.0614054
      %v3482 = vadd.f32 %v3480, -1.4531521
      %v3483 = vadd.f32 %v3481, -1.4531521
      %v3484 = vmul.f32 %v3477, %v3482
      %v3485 = vmul.f32 %v3479, %v3483
      %v3486 = vadd.f32 %v3484, 1.4214138
      %v3487 = vadd.f32 %v3485, 1.4214138
      %v3488 = vmul.f32 %v3477, %v3486
      %v3489 = vmul.f32 %v3479, %v3487
      %v3490 = vadd.f32 %v3488, -0.28449672
      %v3491 = vadd.f32 %v3489, -0.28449672
      %v3492 = vmul.f32 %v3477, %v3490
      %v3493 = vmul.f32 %v3479, %v3491
      %v3494 = vadd.f32 %v3492, 0.2548296
      %v3495 = vadd.f32 %v3493, 0.2548296
      %v3496 = vmul.f32 %v3477, %v3494
      %v3497 = vmul.f32 %v3479, %v3495
      %v3498 = vsub.f32 0.0, %v3470
      %v3499 = vsub.f32 0.0, %v3471
      %v3500 = vmul.f32 %v3498, %v3470
      %v3501 = vmul.f32 %v3499, %v3471
      %v3502 = vmul.f32 %v3500, 1.442695
      %v3503 = vpow.pop %v3502
      %v3504 = vmul.f32 %v3501, 1.442695
      %v3505 = vpow.pop %v3504
      %v3506 = vmul.f32 %v3496, %v3503
      %v3507 = vmul.f32 %v3497, %v3505
      %v3508 = vsub.f32 1.0, %v3506
      %v3509 = vsub.f32 1.0, %v3507
      %v3510 = vmul.f32 %v3468, %v3508
      %v3511 = vmul.f32 %v3469, %v3509
      %v3512 = vadd.f32 %v3510, 1.0
      %v3513 = vadd.f32 %v3511, 1.0
      %v3514 = vmul.f32 %v3462, %v3512
      %v3515 = vmul.f32 %v3463, %v3513
      %s3516 = scalar_lea.vmem %s7, 8
      %v3517 = vld [vmem:[%s3516] sm:$0xf]
      %v3519 = vsel %vm1278, %v3517, 0
      %v3522 = vsel %vm1127, %v3515, 0
      %3524 = vmatprep.subr.mxu0 0.0
      %3525 = vmatpush1.msra.mxu0 %v3514
      %3526 = vmatprep.subr.mxu0 0.0
      %3527 = vmatpush1.msra.mxu0 %v3522
      %3528 = vmatprep.subr.mxu0 0.0
      %3529 = vmatpush1.msra.mxu0 0.0
      %3530 = vmatprep.subr.mxu0 0.0
      %3531 = vmatpush1.msra.mxu0 0.0
      %3532 = vmatprep.subr.mxu0 0.0
      %3533 = vmatpush1.msra.mxu0 0.0
      %3534 = vmatprep.subr.mxu0 0.0
      %3535 = vmatpush1.msra.mxu0 0.0
      %3536 = vmatprep.subr.mxu0 0.0
      %3537 = vmatpush1.msra.mxu0 0.0
      %3538 = vmatprep.subr.mxu0 0.0
      %3539 = vmatpush1.msra.mxu0 0.0
      %3540 = vmatprep.subr.mxu0 0.0
      %3541 = vmatpush1.msra.mxu0 0.0
      %3542 = vmatprep.subr.mxu0 0.0
      %3543 = vmatpush1.msra.mxu0 0.0
      %3544 = vmatprep.subr.mxu0 0.0
      %3545 = vmatpush1.msra.mxu0 0.0
      %3546 = vmatprep.subr.mxu0 0.0
      %3547 = vmatpush1.msra.mxu0 0.0
      %3548 = vmatprep.subr.mxu0 0.0
      %3549 = vmatpush1.msra.mxu0 0.0
      %3550 = vmatprep.subr.mxu0 0.0
      %3551 = vmatpush1.msra.mxu0 0.0
      %3552 = vmatprep.subr.mxu0 0.0
      %3553 = vmatpush1.msra.mxu0 0.0
      %3554 = vmatprep.subr.mxu0 0.0
      %3555 = vmatpush1.msra.mxu0 0.0
      %3556 = vmatprep.subr.mxu0 0.0
      %3557 = vmatpush1.msra.mxu0 0.0
      %3558 = vmatprep.subr.mxu0 0.0
      %3559 = vmatpush1.msra.mxu0 0.0
      %3560 = vmatprep.subr.mxu0 0.0
      %3561 = vmatpush1.msra.mxu0 0.0
      %3562 = vmatprep.subr.mxu0 0.0
      %3563 = vmatpush1.msra.mxu0 0.0
      %3564 = vmatprep.subr.mxu0 0.0
      %3565 = vmatpush1.msra.mxu0 0.0
      %3566 = vmatprep.subr.mxu0 0.0
      %3567 = vmatpush1.msra.mxu0 0.0
      %3568 = vmatprep.subr.mxu0 0.0
      %3569 = vmatpush1.msra.mxu0 0.0
      %3570 = vmatprep.subr.mxu0 0.0
      %3571 = vmatpush1.msra.mxu0 0.0
      %3572 = vmatprep.subr.mxu0 0.0
      %3573 = vmatpush1.msra.mxu0 0.0
      %3574 = vmatprep.subr.mxu0 0.0
      %3575 = vmatpush1.msra.mxu0 0.0
      %3576 = vmatprep.subr.mxu0 0.0
      %3577 = vmatpush1.msra.mxu0 0.0
      %3578 = vmatprep.subr.mxu0 0.0
      %3579 = vmatpush1.msra.mxu0 0.0
      %3580 = vmatprep.subr.mxu0 0.0
      %3581 = vmatpush1.msra.mxu0 0.0
      %3582 = vmatprep.subr.mxu0 0.0
      %3583 = vmatpush1.msra.mxu0 0.0
      %3584 = vmatprep.subr.mxu0 0.0
      %3585 = vmatpush1.msra.mxu0 0.0
      %3586 = vmatprep.subr.mxu0 0.0
      %3587 = vmatpush1.msra.mxu0 0.0
      %3588 = vmatprep.mubr.f32.mxu0 0.0
      %3589 = vmatmul.mubr.f32.gmra.mrb[0].mxu0 %v3519
      %v3590 = vpop.f32.mrb[0].mxu0
      %v3591 = vadd.f32 0.0, %v3590
      %v3592 = vpop.f32.mrb[0].mxu0
      %3593 = vdwg.mxu0
      %s3594 = scalar_lea.vmem %s9, 32
      %v3595 = vld [vmem:[%s3594] sm:$0xff]
      %v3596 = vld [vmem:[%s3594 + $0x8] sm:$0xf]
      %v3598 = vsel %vm1278, %v3595, 0
      %v3601 = vsel %vm1278, %v3596, 0
      %3603 = vmatprep.subr.mxu0 0.0
      %3604 = vmatpush1.msra.mxu0 %v3514
      %3605 = vmatprep.subr.mxu0 0.0
      %3606 = vmatpush1.msra.mxu0 %v3522
      %3607 = vmatprep.subr.mxu0 0.0
      %3608 = vmatpush1.msra.mxu0 0.0
      %3609 = vmatprep.subr.mxu0 0.0
      %3610 = vmatpush1.msra.mxu0 0.0
      %3611 = vmatprep.subr.mxu0 0.0
      %3612 = vmatpush1.msra.mxu0 0.0
      %3613 = vmatprep.subr.mxu0 0.0
      %3614 = vmatpush1.msra.mxu0 0.0
      %3615 = vmatprep.subr.mxu0 0.0
      %3616 = vmatpush1.msra.mxu0 0.0
      %3617 = vmatprep.subr.mxu0 0.0
      %3618 = vmatpush1.msra.mxu0 0.0
      %3619 = vmatprep.subr.mxu0 0.0
      %3620 = vmatpush1.msra.mxu0 0.0
      %3621 = vmatprep.subr.mxu0 0.0
      %3622 = vmatpush1.msra.mxu0 0.0
      %3623 = vmatprep.subr.mxu0 0.0
      %3624 = vmatpush1.msra.mxu0 0.0
      %3625 = vmatprep.subr.mxu0 0.0
      %3626 = vmatpush1.msra.mxu0 0.0
      %3627 = vmatprep.subr.mxu0 0.0
      %3628 = vmatpush1.msra.mxu0 0.0
      %3629 = vmatprep.subr.mxu0 0.0
      %3630 = vmatpush1.msra.mxu0 0.0
      %3631 = vmatprep.subr.mxu0 0.0
      %3632 = vmatpush1.msra.mxu0 0.0
      %3633 = vmatprep.subr.mxu0 0.0
      %3634 = vmatpush1.msra.mxu0 0.0
      %3635 = vmatprep.subr.mxu0 0.0
      %3636 = vmatpush1.msra.mxu0 0.0
      %3637 = vmatprep.subr.mxu0 0.0
      %3638 = vmatpush1.msra.mxu0 0.0
      %3639 = vmatprep.subr.mxu0 0.0
      %3640 = vmatpush1.msra.mxu0 0.0
      %3641 = vmatprep.subr.mxu0 0.0
      %3642 = vmatpush1.msra.mxu0 0.0
      %3643 = vmatprep.subr.mxu0 0.0
      %3644 = vmatpush1.msra.mxu0 0.0
      %3645 = vmatprep.subr.mxu0 0.0
      %3646 = vmatpush1.msra.mxu0 0.0
      %3647 = vmatprep.subr.mxu0 0.0
      %3648 = vmatpush1.msra.mxu0 0.0
      %3649 = vmatprep.subr.mxu0 0.0
      %3650 = vmatpush1.msra.mxu0 0.0
      %3651 = vmatprep.subr.mxu0 0.0
      %3652 = vmatpush1.msra.mxu0 0.0
      %3653 = vmatprep.subr.mxu0 0.0
      %3654 = vmatpush1.msra.mxu0 0.0
      %3655 = vmatprep.subr.mxu0 0.0
      %3656 = vmatpush1.msra.mxu0 0.0
      %3657 = vmatprep.subr.mxu0 0.0
      %3658 = vmatpush1.msra.mxu0 0.0
      %3659 = vmatprep.subr.mxu0 0.0
      %3660 = vmatpush1.msra.mxu0 0.0
      %3661 = vmatprep.subr.mxu0 0.0
      %3662 = vmatpush1.msra.mxu0 0.0
      %3663 = vmatprep.subr.mxu0 0.0
      %3664 = vmatpush1.msra.mxu0 0.0
      %3665 = vmatprep.subr.mxu0 0.0
      %3666 = vmatpush1.msra.mxu0 0.0
      %3667 = vmatprep.mubr.f32.mxu0 0.0
      %3668 = vmatmul.mubr.f32.gmra.mrb[0].mxu0 %v3598
      %v3669 = vpop.f32.mrb[0].mxu0
      %v3670 = vadd.f32 0.0, %v3669
      %v3671 = vpop.f32.mrb[0].mxu0
      %3672 = vmatprep.mubr.f32.mxu0 0.0
      %3673 = vmatmul.mubr.f32.gmra.mrb[0].mxu0 %v3601
      %v3674 = vpop.f32.mrb[0].mxu0
      %v3675 = vadd.f32 0.0, %v3674
      %v3676 = vpop.f32.mrb[0].mxu0
      %3677 = vdwg.mxu0
      %v3678 = vmul.f32 %v3306, %v3591
      %v3680 = vsel %vm2206, %v3678, 0
      %v3683 = vsel %vm2206, %v3219, 0
      %v3686 = vsel %vm2206, %v3220, 0
      %3688 = vmatprep.subr.mxu0 0.0
      %3689 = vmatpush1.xpose.msra.mxu0 %v3683
      %3690 = vmatprep.subr.mxu0 0.0
      %3691 = vmatpush1.xpose.msra.mxu0 %v3686
      %3692 = vmatprep.subr.mxu0 0.0
      %3693 = vmatpush1.xpose.msra.mxu0 0.0
      %3694 = vmatprep.subr.mxu0 0.0
      %3695 = vmatpush1.xpose.msra.mxu0 0.0
      %3696 = vmatprep.subr.mxu0 0.0
      %3697 = vmatpush1.xpose.msra.mxu0 0.0
      %3698 = vmatprep.subr.mxu0 0.0
      %3699 = vmatpush1.xpose.msra.mxu0 0.0
      %3700 = vmatprep.subr.mxu0 0.0
      %3701 = vmatpush1.xpose.msra.mxu0 0.0
      %3702 = vmatprep.subr.mxu0 0.0
      %3703 = vmatpush1.xpose.msra.mxu0 0.0
      %3704 = vmatprep.subr.mxu0 0.0
      %3705 = vmatpush1.xpose.msra.mxu0 0.0
      %3706 = vmatprep.subr.mxu0 0.0
      %3707 = vmatpush1.xpose.msra.mxu0 0.0
      %3708 = vmatprep.subr.mxu0 0.0
      %3709 = vmatpush1.xpose.msra.mxu0 0.0
      %3710 = vmatprep.subr.mxu0 0.0
      %3711 = vmatpush1.xpose.msra.mxu0 0.0
      %3712 = vmatprep.subr.mxu0 0.0
      %3713 = vmatpush1.xpose.msra.mxu0 0.0
      %3714 = vmatprep.subr.mxu0 0.0
      %3715 = vmatpush1.xpose.msra.mxu0 0.0
      %3716 = vmatprep.subr.mxu0 0.0
      %3717 = vmatpush1.xpose.msra.mxu0 0.0
      %3718 = vmatprep.subr.mxu0 0.0
      %3719 = vmatpush1.xpose.msra.mxu0 0.0
      %3720 = vmatprep.subr.mxu0 0.0
      %3721 = vmatpush1.xpose.msra.mxu0 0.0
      %3722 = vmatprep.subr.mxu0 0.0
      %3723 = vmatpush1.xpose.msra.mxu0 0.0
      %3724 = vmatprep.subr.mxu0 0.0
      %3725 = vmatpush1.xpose.msra.mxu0 0.0
      %3726 = vmatprep.subr.mxu0 0.0
      %3727 = vmatpush1.xpose.msra.mxu0 0.0
      %3728 = vmatprep.subr.mxu0 0.0
      %3729 = vmatpush1.xpose.msra.mxu0 0.0
      %3730 = vmatprep.subr.mxu0 0.0
      %3731 = vmatpush1.xpose.msra.mxu0 0.0
      %3732 = vmatprep.subr.mxu0 0.0
      %3733 = vmatpush1.xpose.msra.mxu0 0.0
      %3734 = vmatprep.subr.mxu0 0.0
      %3735 = vmatpush1.xpose.msra.mxu0 0.0
      %3736 = vmatprep.subr.mxu0 0.0
      %3737 = vmatpush1.xpose.msra.mxu0 0.0
      %3738 = vmatprep.subr.mxu0 0.0
      %3739 = vmatpush1.xpose.msra.mxu0 0.0
      %3740 = vmatprep.subr.mxu0 0.0
      %3741 = vmatpush1.xpose.msra.mxu0 0.0
      %3742 = vmatprep.subr.mxu0 0.0
      %3743 = vmatpush1.xpose.msra.mxu0 0.0
      %3744 = vmatprep.subr.mxu0 0.0
      %3745 = vmatpush1.xpose.msra.mxu0 0.0
      %3746 = vmatprep.subr.mxu0 0.0
      %3747 = vmatpush1.xpose.msra.mxu0 0.0
      %3748 = vmatprep.subr.mxu0 0.0
      %3749 = vmatpush1.xpose.msra.mxu0 0.0
      %3750 = vmatprep.subr.mxu0 0.0
      %3751 = vmatpush1.xpose.msra.mxu0 0.0
      %3752 = vmatprep.mubr.f32.mxu0 0.0
      %3753 = vmatmul.mubr.f32.gmra.mrb[0].mxu0 %v3680
      %v3754 = vpop.f32.mrb[0].mxu0
      %v3755 = vadd.f32 0.0, %v3754
      %v3756 = vpop.f32.mrb[0].mxu0
      %3757 = vdwg.mxu0
      %v3758 = vmul.f32 %v3755, 0.57735026
      %v3759 = vsel %vm3299, %v3758, -inf
      %3760 = vmax.xlane.f32.xlu0 %v3759
      %v3761 = vpop.xlane.xlu0 %3760
      %v3762 = vsub.f32 %v3758, %v3761
      %v3763 = vmul.f32 %v3762, 1.442695
      %v3764 = vpow.pop %v3763
      %v3765 = vsel %vm3299, %v3764, 0.0
      %3766 = vadd.xlane.f32.xlu0 %v3765
      %v3767 = vpop.xlane.xlu0 %3766
      %v3768 = vrcp.pop %v3767
      %v3769 = vmul.f32 %v3764, %v3768
      %v3770 = vsel %vm3299, %v3769, 0.0
      %v3771 = vrot.slane %v3770, 4
      %v3772 = vadd.f32 %v3770, %v3771
      %v3773 = vrot.slane %v3772, 2
      %v3774 = vadd.f32 %v3772, %v3773
      %v3775 = vrot.slane %v3774, 1
      %v3776 = vadd.f32 %v3774, %v3775
      %v3778 = vsel %vm2206, %v3776, 0
      %v3781 = vsel %vm2206, %v3670, 0
      %v3784 = vsel %vm2206, %v3675, 0
      %3786 = vmatprep.subr.mxu0 0.0
      %3787 = vmatpush1.xpose.msra.mxu0 %v3781
      %3788 = vmatprep.subr.mxu0 0.0
      %3789 = vmatpush1.xpose.msra.mxu0 %v3784
      %3790 = vmatprep.subr.mxu0 0.0
      %3791 = vmatpush1.xpose.msra.mxu0 0.0
      %3792 = vmatprep.subr.mxu0 0.0
      %3793 = vmatpush1.xpose.msra.mxu0 0.0
      %3794 = vmatprep.subr.mxu0 0.0
      %3795 = vmatpush1.xpose.msra.mxu0 0.0
      %3796 = vmatprep.subr.mxu0 0.0
      %3797 = vmatpush1.xpose.msra.mxu0 0.0
      %3798 = vmatprep.subr.mxu0 0.0
      %3799 = vmatpush1.xpose.msra.mxu0 0.0
      %3800 = vmatprep.subr.mxu0 0.0
      %3801 = vmatpush1.xpose.msra.mxu0 0.0
      %3802 = vmatprep.subr.mxu0 0.0
      %3803 = vmatpush1.xpose.msra.mxu0 0.0
      %3804 = vmatprep.subr.mxu0 0.0
      %3805 = vmatpush1.xpose.msra.mxu0 0.0
      %3806 = vmatprep.subr.mxu0 0.0
      %3807 = vmatpush1.xpose.msra.mxu0 0.0
      %3808 = vmatprep.subr.mxu0 0.0
      %3809 = vmatpush1.xpose.msra.mxu0 0.0
      %3810 = vmatprep.subr.mxu0 0.0
      %3811 = vmatpush1.xpose.msra.mxu0 0.0
      %3812 = vmatprep.subr.mxu0 0.0
      %3813 = vmatpush1.xpose.msra.mxu0 0.0
      %3814 = vmatprep.subr.mxu0 0.0
      %3815 = vmatpush1.xpose.msra.mxu0 0.0
      %3816 = vmatprep.subr.mxu0 0.0
      %3817 = vmatpush1.xpose.msra.mxu0 0.0
      %3818 = vmatprep.subr.mxu0 0.0
      %3819 = vmatpush1.xpose.msra.mxu0 0.0
      %3820 = vmatprep.subr.mxu0 0.0
      %3821 = vmatpush1.xpose.msra.mxu0 0.0
      %3822 = vmatprep.subr.mxu0 0.0
      %3823 = vmatpush1.xpose.msra.mxu0 0.0
      %3824 = vmatprep.subr.mxu0 0.0
      %3825 = vmatpush1.xpose.msra.mxu0 0.0
      %3826 = vmatprep.subr.mxu0 0.0
      %3827 = vmatpush1.xpose.msra.mxu0 0.0
      %3828 = vmatprep.subr.mxu0 0.0
      %3829 = vmatpush1.xpose.msra.mxu0 0.0
      %3830 = vmatprep.subr.mxu0 0.0
      %3831 = vmatpush1.xpose.msra.mxu0 0.0
      %3832 = vmatprep.subr.mxu0 0.0
      %3833 = vmatpush1.xpose.msra.mxu0 0.0
      %3834 = vmatprep.subr.mxu0 0.0
      %3835 = vmatpush1.xpose.msra.mxu0 0.0
      %3836 = vmatprep.subr.mxu0 0.0
      %3837 = vmatpush1.xpose.msra.mxu0 0.0
      %3838 = vmatprep.subr.mxu0 0.0
      %3839 = vmatpush1.xpose.msra.mxu0 0.0
      %3840 = vmatprep.subr.mxu0 0.0
      %3841 = vmatpush1.xpose.msra.mxu0 0.0
      %3842 = vmatprep.subr.mxu0 0.0
      %3843 = vmatpush1.xpose.msra.mxu0 0.0
      %3844 = vmatprep.subr.mxu0 0.0
      %3845 = vmatpush1.xpose.msra.mxu0 0.0
      %3846 = vmatprep.subr.mxu0 0.0
      %3847 = vmatpush1.xpose.msra.mxu0 0.0
      %3848 = vmatprep.subr.mxu0 0.0
      %3849 = vmatpush1.xpose.msra.mxu0 0.0
      %3850 = vmatprep.mubr.f32.mxu0 0.0
      %3851 = vmatmul.mubr.f32.gmra.mrb[0].mxu0 %v3778
      %v3852 = vpop.f32.mrb[0].mxu0
      %v3853 = vadd.f32 0.0, %v3852
      %v3854 = vpop.f32.mrb[0].mxu0
      %3855 = vdwg.mxu0
      %s3856 = scalar_lea.vmem %s19, 32
      %v3857 = vld [vmem:[%s3856] sm:$0xff]
      %v3858 = vld [vmem:[%s3856 + $0x8] sm:$0xf]
      %s3859 = scalar_lea.vmem %s21, 2
      %v3860 = vld [vmem:[%s3859] sm:$0x1]
      %v3862 = vsel %vm1278, %v3853, 0
      %v3865 = vsel %vm1278, %v3857, 0
      %v3868 = vsel %vm1278, %v3858, 0
      %3870 = vmatprep.subr.mxu0 0.0
      %3871 = vmatpush1.xpose.msra.mxu0 %v3865
      %3872 = vmatprep.subr.mxu0 0.0
      %3873 = vmatpush1.xpose.msra.mxu0 %v3868
      %3874 = vmatprep.subr.mxu0 0.0
      %3875 = vmatpush1.xpose.msra.mxu0 0.0
      %3876 = vmatprep.subr.mxu0 0.0
      %3877 = vmatpush1.xpose.msra.mxu0 0.0
      %3878 = vmatprep.subr.mxu0 0.0
      %3879 = vmatpush1.xpose.msra.mxu0 0.0
      %3880 = vmatprep.subr.mxu0 0.0
      %3881 = vmatpush1.xpose.msra.mxu0 0.0
      %3882 = vmatprep.subr.mxu0 0.0
      %3883 = vmatpush1.xpose.msra.mxu0 0.0
      %3884 = vmatprep.subr.mxu0 0.0
      %3885 = vmatpush1.xpose.msra.mxu0 0.0
      %3886 = vmatprep.subr.mxu0 0.0
      %3887 = vmatpush1.xpose.msra.mxu0 0.0
      %3888 = vmatprep.subr.mxu0 0.0
      %3889 = vmatpush1.xpose.msra.mxu0 0.0
      %3890 = vmatprep.subr.mxu0 0.0
      %3891 = vmatpush1.xpose.msra.mxu0 0.0
      %3892 = vmatprep.subr.mxu0 0.0
      %3893 = vmatpush1.xpose.msra.mxu0 0.0
      %3894 = vmatprep.subr.mxu0 0.0
      %3895 = vmatpush1.xpose.msra.mxu0 0.0
      %3896 = vmatprep.subr.mxu0 0.0
      %3897 = vmatpush1.xpose.msra.mxu0 0.0
      %3898 = vmatprep.subr.mxu0 0.0
      %3899 = vmatpush1.xpose.msra.mxu0 0.0
      %3900 = vmatprep.subr.mxu0 0.0
      %3901 = vmatpush1.xpose.msra.mxu0 0.0
      %3902 = vmatprep.subr.mxu0 0.0
      %3903 = vmatpush1.xpose.msra.mxu0 0.0
      %3904 = vmatprep.subr.mxu0 0.0
      %3905 = vmatpush1.xpose.msra.mxu0 0.0
      %3906 = vmatprep.subr.mxu0 0.0
      %3907 = vmatpush1.xpose.msra.mxu0 0.0
      %3908 = vmatprep.subr.mxu0 0.0
      %3909 = vmatpush1.xpose.msra.mxu0 0.0
      %3910 = vmatprep.subr.mxu0 0.0
      %3911 = vmatpush1.xpose.msra.mxu0 0.0
      %3912 = vmatprep.subr.mxu0 0.0
      %3913 = vmatpush1.xpose.msra.mxu0 0.0
      %3914 = vmatprep.subr.mxu0 0.0
      %3915 = vmatpush1.xpose.msra.mxu0 0.0
      %3916 = vmatprep.subr.mxu0 0.0
      %3917 = vmatpush1.xpose.msra.mxu0 0.0
      %3918 = vmatprep.subr.mxu0 0.0
      %3919 = vmatpush1.xpose.msra.mxu0 0.0
      %3920 = vmatprep.subr.mxu0 0.0
      %3921 = vmatpush1.xpose.msra.mxu0 0.0
      %3922 = vmatprep.subr.mxu0 0.0
      %3923 = vmatpush1.xpose.msra.mxu0 0.0
      %3924 = vmatprep.subr.mxu0 0.0
      %3925 = vmatpush1.xpose.msra.mxu0 0.0
      %3926 = vmatprep.subr.mxu0 0.0
      %3927 = vmatpush1.xpose.msra.mxu0 0.0
      %3928 = vmatprep.subr.mxu0 0.0
      %3929 = vmatpush1.xpose.msra.mxu0 0.0
      %3930 = vmatprep.subr.mxu0 0.0
      %3931 = vmatpush1.xpose.msra.mxu0 0.0
      %3932 = vmatprep.subr.mxu0 0.0
      %3933 = vmatpush1.xpose.msra.mxu0 0.0
      %3934 = vmatprep.mubr.f32.mxu0 0.0
      %3935 = vmatmul.mubr.f32.gmra.mrb[0].mxu0 %v3862
      %v3936 = vpop.f32.mrb[0].mxu0
      %v3937 = vadd.f32 %v3860, %v3936
      %v3938 = vpop.f32.mrb[0].mxu0
      %3939 = vdwg.mxu0
      %v3941 = vsel %vm1278, %v3937, 0
      %3943 = vmatprep.subr.mxu0 %v2089
      %3944 = vmatpush1.msra.mxu0 %v2088
      %3945 = vmatprep.subr.mxu0 %v2099
      %3946 = vmatpush1.msra.mxu0 %v2096
      %3947 = vmatprep.subr.mxu0 0.0
      %3948 = vmatpush1.msra.mxu0 0.0
      %3949 = vmatprep.subr.mxu0 0.0
      %3950 = vmatpush1.msra.mxu0 0.0
      %3951 = vmatprep.subr.mxu0 0.0
      %3952 = vmatpush1.msra.mxu0 0.0
      %3953 = vmatprep.subr.mxu0 0.0
      %3954 = vmatpush1.msra.mxu0 0.0
      %3955 = vmatprep.subr.mxu0 0.0
      %3956 = vmatpush1.msra.mxu0 0.0
      %3957 = vmatprep.subr.mxu0 0.0
      %3958 = vmatpush1.msra.mxu0 0.0
      %3959 = vmatprep.subr.mxu0 0.0
      %3960 = vmatpush1.msra.mxu0 0.0
      %3961 = vmatprep.subr.mxu0 0.0
      %3962 = vmatpush1.msra.mxu0 0.0
      %3963 = vmatprep.subr.mxu0 0.0
      %3964 = vmatpush1.msra.mxu0 0.0
      %3965 = vmatprep.subr.mxu0 0.0
      %3966 = vmatpush1.msra.mxu0 0.0
      %3967 = vmatprep.subr.mxu0 0.0
      %3968 = vmatpush1.msra.mxu0 0.0
      %3969 = vmatprep.subr.mxu0 0.0
      %3970 = vmatpush1.msra.mxu0 0.0
      %3971 = vmatprep.subr.mxu0 0.0
      %3972 = vmatpush1.msra.mxu0 0.0
      %3973 = vmatprep.subr.mxu0 0.0
      %3974 = vmatpush1.msra.mxu0 0.0
      %3975 = vmatprep.subr.mxu0 0.0
      %3976 = vmatpush1.msra.mxu0 0.0
      %3977 = vmatprep.subr.mxu0 0.0
      %3978 = vmatpush1.msra.mxu0 0.0
      %3979 = vmatprep.subr.mxu0 0.0
      %3980 = vmatpush1.msra.mxu0 0.0
      %3981 = vmatprep.subr.mxu0 0.0
      %3982 = vmatpush1.msra.mxu0 0.0
      %3983 = vmatprep.subr.mxu0 0.0
      %3984 = vmatpush1.msra.mxu0 0.0
      %3985 = vmatprep.subr.mxu0 0.0
      %3986 = vmatpush1.msra.mxu0 0.0
      %3987 = vmatprep.subr.mxu0 0.0
      %3988 = vmatpush1.msra.mxu0 0.0
      %3989 = vmatprep.subr.mxu0 0.0
      %3990 = vmatpush1.msra.mxu0 0.0
      %3991 = vmatprep.subr.mxu0 0.0
      %3992 = vmatpush1.msra.mxu0 0.0
      %3993 = vmatprep.subr.mxu0 0.0
      %3994 = vmatpush1.msra.mxu0 0.0
      %3995 = vmatprep.subr.mxu0 0.0
      %3996 = vmatpush1.msra.mxu0 0.0
      %3997 = vmatprep.subr.mxu0 0.0
      %3998 = vmatpush1.msra.mxu0 0.0
      %3999 = vmatprep.subr.mxu0 0.0
      %4000 = vmatpush1.msra.mxu0 0.0
      %4001 = vmatprep.subr.mxu0 0.0
      %4002 = vmatpush1.msra.mxu0 0.0
      %4003 = vmatprep.subr.mxu0 0.0
      %4004 = vmatpush1.msra.mxu0 0.0
      %4005 = vmatprep.subr.mxu0 0.0
      %4006 = vmatpush1.msra.mxu0 0.0
      %4007 = vmatprep.mubr.f32.mxu0 0.0
      %4008 = vmatmul.mubr.f32.gmra.mrb[0].mxu0 %v3941
      %v4009 = vpop.f32.mrb[0].mxu0
      %v4010 = vadd.f32 0.0, %v4009
      %v4011 = vpop.f32.mrb[0].mxu0
      %v4012 = vadd.f32 0.0, %v4011
      %4013 = vdwg.mxu0
      %v4014 = vlaneseq
      %v4015 = vshrl.u32 %v4014, 7
      %v4016 = vsub.s32 0, %v4015
      %v4017 = vrot.slane %v4010, %v4016
      %v4018 = vlaneseq
      %v4019 = vshrl.u32 %v4018, 7
      %v4020 = vsub.s32 0, %v4019
      %v4021 = vrot.slane %v4012, %v4020
      %v4022 = vmul.f32 %v2172, %v4017
      %v4023 = vmul.f32 %v2173, %v4021
      %v4024 = vmul.f32 %v2174, %v4017
      %v4025 = vmul.f32 %v2175, %v4021
      %v4026 = vld [vmem:[%s37] sm:$0xff]
      %v4027 = vld [vmem:[%s37 + $0x8] sm:$0xff]
      %v4028 = vld [vmem:[%s37 + $0x10] sm:$0xff]
      %v4029 = vld [vmem:[%s37 + $0x18] sm:$0xff]
      %v4030 = vld [vmem:[%s37 + $0x20] sm:$0xff]
      %v4031 = vld [vmem:[%s37 + $0x28] sm:$0xff]
      %v4032 = vld [vmem:[%s37 + $0x30] sm:$0xff]
      %v4033 = vld [vmem:[%s37 + $0x38] sm:$0xff]
      %v4034 = vld [vmem:[%s37 + $0x40] sm:$0xff]
      %v4035 = vld [vmem:[%s37 + $0x48] sm:$0xff]
      %v4036 = vld [vmem:[%s37 + $0x50] sm:$0xff]
      %v4037 = vld [vmem:[%s37 + $0x58] sm:$0xff]
      %v4038 = vld [vmem:[%s37 + $0x60] sm:$0xff]
      %v4039 = vld [vmem:[%s37 + $0x68] sm:$0xff]
      %v4040 = vld [vmem:[%s37 + $0x70] sm:$0xff]
      %v4041 = vld [vmem:[%s37 + $0x78] sm:$0xff]
      %v4042 = vld [vmem:[%s37 + $0x80] sm:$0xff]
      %v4043 = vld [vmem:[%s37 + $0x88] sm:$0xff]
      %v4044 = vld [vmem:[%s37 + $0x90] sm:$0xff]
      %v4045 = vld [vmem:[%s37 + $0x98] sm:$0xff]
      %v4046 = vld [vmem:[%s37 + $0xa0] sm:$0xff]
      %v4047 = vld [vmem:[%s37 + $0xa8] sm:$0xff]
      %v4048 = vld [vmem:[%s37 + $0xb0] sm:$0xff]
      %v4049 = vld [vmem:[%s37 + $0xb8] sm:$0xff]
      %v4050 = vld [vmem:[%s37 + $0xc0] sm:$0xff]
      %v4051 = vld [vmem:[%s37 + $0xc8] sm:$0xff]
      %v4052 = vld [vmem:[%s37 + $0xd0] sm:$0xff]
      %v4053 = vld [vmem:[%s37 + $0xd8] sm:$0xff]
      %v4054 = vld [vmem:[%s37 + $0xe0] sm:$0xff]
      %v4055 = vld [vmem:[%s37 + $0xe8] sm:$0xff]
      %v4056 = vld [vmem:[%s37 + $0xf0] sm:$0xff]
      %v4057 = vld [vmem:[%s37 + $0xf8] sm:$0xff]
      %v4058 = vld [vmem:[%s37 + $0x100] sm:$0xff]
      %v4059 = vld [vmem:[%s37 + $0x108] sm:$0xff]
      %v4060 = vld [vmem:[%s37 + $0x110] sm:$0xff]
      %v4061 = vld [vmem:[%s37 + $0x118] sm:$0xff]
      %4062 = vmatprep.subr.mxu0 %v4027
      %4063 = vmatpush1.msra.mxu0 %v4026
      %4064 = vmatprep.subr.mxu0 %v4029
      %4065 = vmatpush1.msra.mxu0 %v4028
      %4066 = vmatprep.subr.mxu0 %v4031
      %4067 = vmatpush1.msra.mxu0 %v4030
      %4068 = vmatprep.subr.mxu0 %v4033
      %4069 = vmatpush1.msra.mxu0 %v4032
      %4070 = vmatprep.subr.mxu0 %v4035
      %4071 = vmatpush1.msra.mxu0 %v4034
      %4072 = vmatprep.subr.mxu0 %v4037
      %4073 = vmatpush1.msra.mxu0 %v4036
      %4074 = vmatprep.subr.mxu0 %v4039
      %4075 = vmatpush1.msra.mxu0 %v4038
      %4076 = vmatprep.subr.mxu0 %v4041
      %4077 = vmatpush1.msra.mxu0 %v4040
      %4078 = vmatprep.subr.mxu0 %v4043
      %4079 = vmatpush1.msra.mxu0 %v4042
      %4080 = vmatprep.subr.mxu0 %v4045
      %4081 = vmatpush1.msra.mxu0 %v4044
      %4082 = vmatprep.subr.mxu0 %v4047
      %4083 = vmatpush1.msra.mxu0 %v4046
      %4084 = vmatprep.subr.mxu0 %v4049
      %4085 = vmatpush1.msra.mxu0 %v4048
      %4086 = vmatprep.subr.mxu0 %v4051
      %4087 = vmatpush1.msra.mxu0 %v4050
      %4088 = vmatprep.subr.mxu0 %v4053
      %4089 = vmatpush1.msra.mxu0 %v4052
      %4090 = vmatprep.subr.mxu0 %v4055
      %4091 = vmatpush1.msra.mxu0 %v4054
      %4092 = vmatprep.subr.mxu0 %v4057
      %4093 = vmatpush1.msra.mxu0 %v4056
      %4094 = vmatprep.subr.mxu0 %v4059
      %4095 = vmatpush1.msra.mxu0 %v4058
      %4096 = vmatprep.subr.mxu0 %v4061
      %4097 = vmatpush1.msra.mxu0 %v4060
      %4098 = vmatprep.subr.mxu0 0.0
      %4099 = vmatpush1.msra.mxu0 0.0
      %4100 = vmatprep.subr.mxu0 0.0
      %4101 = vmatpush1.msra.mxu0 0.0
      %4102 = vmatprep.subr.mxu0 0.0
      %4103 = vmatpush1.msra.mxu0 0.0
      %4104 = vmatprep.subr.mxu0 0.0
      %4105 = vmatpush1.msra.mxu0 0.0
      %4106 = vmatprep.subr.mxu0 0.0
      %4107 = vmatpush1.msra.mxu0 0.0
      %4108 = vmatprep.subr.mxu0 0.0
      %4109 = vmatpush1.msra.mxu0 0.0
      %4110 = vmatprep.subr.mxu0 0.0
      %4111 = vmatpush1.msra.mxu0 0.0
      %4112 = vmatprep.subr.mxu0 0.0
      %4113 = vmatpush1.msra.mxu0 0.0
      %4114 = vmatprep.subr.mxu0 0.0
      %4115 = vmatpush1.msra.mxu0 0.0
      %4116 = vmatprep.subr.mxu0 0.0
      %4117 = vmatpush1.msra.mxu0 0.0
      %4118 = vmatprep.subr.mxu0 0.0
      %4119 = vmatpush1.msra.mxu0 0.0
      %4120 = vmatprep.subr.mxu0 0.0
      %4121 = vmatpush1.msra.mxu0 0.0
      %4122 = vmatprep.subr.mxu0 0.0
      %4123 = vmatpush1.msra.mxu0 0.0
      %4124 = vmatprep.subr.mxu0 0.0
      %4125 = vmatpush1.msra.mxu0 0.0
      %4126 = vmatprep.mubr.f32.mxu0 %v2208
      %4127 = vmatmul.mubr.f32.gmra.mrb[0].mxu0 %v2184
      %v4128 = vpop.f32.mrb[0].mxu0
      %v4129 = vadd.f32 0.0, %v4128
      %v4130 = vpop.f32.mrb[0].mxu0
      %v4131 = vadd.f32 0.0, %v4130
      %4132 = vmatprep.mubr.f32.mxu0 %v2211
      %4133 = vmatmul.mubr.f32.gmra.mrb[0].mxu0 %v2186
      %v4134 = vpop.f32.mrb[0].mxu0
      %v4135 = vadd.f32 0.0, %v4134
      %v4136 = vpop.f32.mrb[0].mxu0
      %v4137 = vadd.f32 0.0, %v4136
      %4138 = vdwg.mxu0
      %s4139 = scalar_lea.vmem %s37, 288
      %v4140 = vld [vmem:[%s4139] sm:$0xff]
      %v4141 = vld [vmem:[%s4139 + $0x8] sm:$0xff]
      %v4142 = vld [vmem:[%s4139 + $0x10] sm:$0xff]
      %v4143 = vld [vmem:[%s4139 + $0x18] sm:$0xff]
      %v4144 = vld [vmem:[%s4139 + $0x20] sm:$0xff]
      %v4145 = vld [vmem:[%s4139 + $0x28] sm:$0xff]
      %v4146 = vld [vmem:[%s4139 + $0x30] sm:$0xff]
      %v4147 = vld [vmem:[%s4139 + $0x38] sm:$0xff]
      %v4148 = vld [vmem:[%s4139 + $0x40] sm:$0xff]
      %v4149 = vld [vmem:[%s4139 + $0x48] sm:$0xff]
      %v4150 = vld [vmem:[%s4139 + $0x50] sm:$0xff]
      %v4151 = vld [vmem:[%s4139 + $0x58] sm:$0xff]
      %v4152 = vld [vmem:[%s4139 + $0x60] sm:$0xff]
      %v4153 = vld [vmem:[%s4139 + $0x68] sm:$0xff]
      %v4154 = vld [vmem:[%s4139 + $0x70] sm:$0xff]
      %v4155 = vld [vmem:[%s4139 + $0x78] sm:$0xff]
      %v4156 = vld [vmem:[%s4139 + $0x80] sm:$0xff]
      %v4157 = vld [vmem:[%s4139 + $0x88] sm:$0xff]
      %v4158 = vld [vmem:[%s4139 + $0x90] sm:$0xff]
      %v4159 = vld [vmem:[%s4139 + $0x98] sm:$0xff]
      %v4160 = vld [vmem:[%s4139 + $0xa0] sm:$0xff]
      %v4161 = vld [vmem:[%s4139 + $0xa8] sm:$0xff]
      %v4162 = vld [vmem:[%s4139 + $0xb0] sm:$0xff]
      %v4163 = vld [vmem:[%s4139 + $0xb8] sm:$0xff]
      %v4164 = vld [vmem:[%s4139 + $0xc0] sm:$0xff]
      %v4165 = vld [vmem:[%s4139 + $0xc8] sm:$0xff]
      %v4166 = vld [vmem:[%s4139 + $0xd0] sm:$0xff]
      %v4167 = vld [vmem:[%s4139 + $0xd8] sm:$0xff]
      %v4168 = vld [vmem:[%s4139 + $0xe0] sm:$0xff]
      %v4169 = vld [vmem:[%s4139 + $0xe8] sm:$0xff]
      %v4170 = vld [vmem:[%s4139 + $0xf0] sm:$0xff]
      %v4171 = vld [vmem:[%s4139 + $0xf8] sm:$0xff]
      %v4172 = vld [vmem:[%s4139 + $0x100] sm:$0xff]
      %v4173 = vld [vmem:[%s4139 + $0x108] sm:$0xff]
      %v4174 = vld [vmem:[%s4139 + $0x110] sm:$0xff]
      %v4175 = vld [vmem:[%s4139 + $0x118] sm:$0xff]
      %4176 = vmatprep.subr.mxu0 %v4141
      %4177 = vmatpush1.msra.mxu0 %v4140
      %4178 = vmatprep.subr.mxu0 %v4143
      %4179 = vmatpush1.msra.mxu0 %v4142
      %4180 = vmatprep.subr.mxu0 %v4145
      %4181 = vmatpush1.msra.mxu0 %v4144
      %4182 = vmatprep.subr.mxu0 %v4147
      %4183 = vmatpush1.msra.mxu0 %v4146
      %4184 = vmatprep.subr.mxu0 %v4149
      %4185 = vmatpush1.msra.mxu0 %v4148
      %4186 = vmatprep.subr.mxu0 %v4151
      %4187 = vmatpush1.msra.mxu0 %v4150
      %4188 = vmatprep.subr.mxu0 %v4153
      %4189 = vmatpush1.msra.mxu0 %v4152
      %4190 = vmatprep.subr.mxu0 %v4155
      %4191 = vmatpush1.msra.mxu0 %v4154
      %4192 = vmatprep.subr.mxu0 %v4157
      %4193 = vmatpush1.msra.mxu0 %v4156
      %4194 = vmatprep.subr.mxu0 %v4159
      %4195 = vmatpush1.msra.mxu0 %v4158
      %4196 = vmatprep.subr.mxu0 %v4161
      %4197 = vmatpush1.msra.mxu0 %v4160
      %4198 = vmatprep.subr.mxu0 %v4163
      %4199 = vmatpush1.msra.mxu0 %v4162
      %4200 = vmatprep.subr.mxu0 %v4165
      %4201 = vmatpush1.msra.mxu0 %v4164
      %4202 = vmatprep.subr.mxu0 %v4167
      %4203 = vmatpush1.msra.mxu0 %v4166
      %4204 = vmatprep.subr.mxu0 %v4169
      %4205 = vmatpush1.msra.mxu0 %v4168
      %4206 = vmatprep.subr.mxu0 %v4171
      %4207 = vmatpush1.msra.mxu0 %v4170
      %4208 = vmatprep.subr.mxu0 %v4173
      %4209 = vmatpush1.msra.mxu0 %v4172
      %4210 = vmatprep.subr.mxu0 %v4175
      %4211 = vmatpush1.msra.mxu0 %v4174
      %4212 = vmatprep.subr.mxu0 0.0
      %4213 = vmatpush1.msra.mxu0 0.0
      %4214 = vmatprep.subr.mxu0 0.0
      %4215 = vmatpush1.msra.mxu0 0.0
      %4216 = vmatprep.subr.mxu0 0.0
      %4217 = vmatpush1.msra.mxu0 0.0
      %4218 = vmatprep.subr.mxu0 0.0
      %4219 = vmatpush1.msra.mxu0 0.0
      %4220 = vmatprep.subr.mxu0 0.0
      %4221 = vmatpush1.msra.mxu0 0.0
      %4222 = vmatprep.subr.mxu0 0.0
      %4223 = vmatpush1.msra.mxu0 0.0
      %4224 = vmatprep.subr.mxu0 0.0
      %4225 = vmatpush1.msra.mxu0 0.0
      %4226 = vmatprep.subr.mxu0 0.0
      %4227 = vmatpush1.msra.mxu0 0.0
      %4228 = vmatprep.subr.mxu0 0.0
      %4229 = vmatpush1.msra.mxu0 0.0
      %4230 = vmatprep.subr.mxu0 0.0
      %4231 = vmatpush1.msra.mxu0 0.0
      %4232 = vmatprep.subr.mxu0 0.0
      %4233 = vmatpush1.msra.mxu0 0.0
      %4234 = vmatprep.subr.mxu0 0.0
      %4235 = vmatpush1.msra.mxu0 0.0
      %4236 = vmatprep.subr.mxu0 0.0
      %4237 = vmatpush1.msra.mxu0 0.0
      %4238 = vmatprep.subr.mxu0 0.0
      %4239 = vmatpush1.msra.mxu0 0.0
      %4240 = vmatprep.mubr.f32.mxu0 %v3139
      %4241 = vmatmul.mubr.f32.gmra.mrb[0].mxu0 %v3116
      %v4242 = vpop.f32.mrb[0].mxu0
      %v4243 = vadd.f32 0.0, %v4242
      %v4244 = vpop.f32.mrb[0].mxu0
      %v4245 = vadd.f32 0.0, %v4244
      %4246 = vmatprep.mubr.f32.mxu0 %v3142
      %4247 = vmatmul.mubr.f32.gmra.mrb[0].mxu0 %v3118
      %v4248 = vpop.f32.mrb[0].mxu0
      %v4249 = vadd.f32 0.0, %v4248
      %v4250 = vpop.f32.mrb[0].mxu0
      %v4251 = vadd.f32 0.0, %v4250
      %4252 = vdwg.mxu0
      %s4253 = scalar_lea.vmem %s37, 576
      %v4254 = vld [vmem:[%s4253] sm:$0xff]
      %v4255 = vld [vmem:[%s4253 + $0x8] sm:$0xff]
      %v4256 = vld [vmem:[%s4253 + $0x10] sm:$0xff]
      %v4257 = vld [vmem:[%s4253 + $0x18] sm:$0xff]
      %v4258 = vld [vmem:[%s4253 + $0x20] sm:$0xff]
      %v4259 = vld [vmem:[%s4253 + $0x28] sm:$0xff]
      %v4260 = vld [vmem:[%s4253 + $0x30] sm:$0xff]
      %v4261 = vld [vmem:[%s4253 + $0x38] sm:$0xff]
      %v4262 = vld [vmem:[%s4253 + $0x40] sm:$0xff]
      %v4263 = vld [vmem:[%s4253 + $0x48] sm:$0xff]
      %v4264 = vld [vmem:[%s4253 + $0x50] sm:$0xff]
      %v4265 = vld [vmem:[%s4253 + $0x58] sm:$0xff]
      %v4266 = vld [vmem:[%s4253 + $0x60] sm:$0xff]
      %v4267 = vld [vmem:[%s4253 + $0x68] sm:$0xff]
      %v4268 = vld [vmem:[%s4253 + $0x70] sm:$0xff]
      %v4269 = vld [vmem:[%s4253 + $0x78] sm:$0xff]
      %v4270 = vld [vmem:[%s4253 + $0x80] sm:$0xff]
      %v4271 = vld [vmem:[%s4253 + $0x88] sm:$0xff]
      %v4272 = vld [vmem:[%s4253 + $0x90] sm:$0xff]
      %v4273 = vld [vmem:[%s4253 + $0x98] sm:$0xff]
      %v4274 = vld [vmem:[%s4253 + $0xa0] sm:$0xff]
      %v4275 = vld [vmem:[%s4253 + $0xa8] sm:$0xff]
      %v4276 = vld [vmem:[%s4253 + $0xb0] sm:$0xff]
      %v4277 = vld [vmem:[%s4253 + $0xb8] sm:$0xff]
      %v4278 = vld [vmem:[%s4253 + $0xc0] sm:$0xff]
      %v4279 = vld [vmem:[%s4253 + $0xc8] sm:$0xff]
      %v4280 = vld [vmem:[%s4253 + $0xd0] sm:$0xff]
      %v4281 = vld [vmem:[%s4253 + $0xd8] sm:$0xff]
      %v4282 = vld [vmem:[%s4253 + $0xe0] sm:$0xff]
      %v4283 = vld [vmem:[%s4253 + $0xe8] sm:$0xff]
      %v4284 = vld [vmem:[%s4253 + $0xf0] sm:$0xff]
      %v4285 = vld [vmem:[%s4253 + $0xf8] sm:$0xff]
      %v4286 = vld [vmem:[%s4253 + $0x100] sm:$0xff]
      %v4287 = vld [vmem:[%s4253 + $0x108] sm:$0xff]
      %v4288 = vld [vmem:[%s4253 + $0x110] sm:$0xff]
      %v4289 = vld [vmem:[%s4253 + $0x118] sm:$0xff]
      %v4291 = vsel %vm2206, %v4023, 0
      %v4294 = vsel %vm2206, %v4025, 0
      %4296 = vmatprep.subr.mxu0 %v4255
      %4297 = vmatpush1.msra.mxu0 %v4254
      %4298 = vmatprep.subr.mxu0 %v4257
      %4299 = vmatpush1.msra.mxu0 %v4256
      %4300 = vmatprep.subr.mxu0 %v4259
      %4301 = vmatpush1.msra.mxu0 %v4258
      %4302 = vmatprep.subr.mxu0 %v4261
      %4303 = vmatpush1.msra.mxu0 %v4260
      %4304 = vmatprep.subr.mxu0 %v4263
      %4305 = vmatpush1.msra.mxu0 %v4262
      %4306 = vmatprep.subr.mxu0 %v4265
      %4307 = vmatpush1.msra.mxu0 %v4264
      %4308 = vmatprep.subr.mxu0 %v4267
      %4309 = vmatpush1.msra.mxu0 %v4266
      %4310 = vmatprep.subr.mxu0 %v4269
      %4311 = vmatpush1.msra.mxu0 %v4268
      %4312 = vmatprep.subr.mxu0 %v4271
      %4313 = vmatpush1.msra.mxu0 %v4270
      %4314 = vmatprep.subr.mxu0 %v4273
      %4315 = vmatpush1.msra.mxu0 %v4272
      %4316 = vmatprep.subr.mxu0 %v4275
      %4317 = vmatpush1.msra.mxu0 %v4274
      %4318 = vmatprep.subr.mxu0 %v4277
      %4319 = vmatpush1.msra.mxu0 %v4276
      %4320 = vmatprep.subr.mxu0 %v4279
      %4321 = vmatpush1.msra.mxu0 %v4278
      %4322 = vmatprep.subr.mxu0 %v4281
      %4323 = vmatpush1.msra.mxu0 %v4280
      %4324 = vmatprep.subr.mxu0 %v4283
      %4325 = vmatpush1.msra.mxu0 %v4282
      %4326 = vmatprep.subr.mxu0 %v4285
      %4327 = vmatpush1.msra.mxu0 %v4284
      %4328 = vmatprep.subr.mxu0 %v4287
      %4329 = vmatpush1.msra.mxu0 %v4286
      %4330 = vmatprep.subr.mxu0 %v4289
      %4331 = vmatpush1.msra.mxu0 %v4288
      %4332 = vmatprep.subr.mxu0 0.0
      %4333 = vmatpush1.msra.mxu0 0.0
      %4334 = vmatprep.subr.mxu0 0.0
      %4335 = vmatpush1.msra.mxu0 0.0
      %4336 = vmatprep.subr.mxu0 0.0
      %4337 = vmatpush1.msra.mxu0 0.0
      %4338 = vmatprep.subr.mxu0 0.0
      %4339 = vmatpush1.msra.mxu0 0.0
      %4340 = vmatprep.subr.mxu0 0.0
      %4341 = vmatpush1.msra.mxu0 0.0
      %4342 = vmatprep.subr.mxu0 0.0
      %4343 = vmatpush1.msra.mxu0 0.0
      %4344 = vmatprep.subr.mxu0 0.0
      %4345 = vmatpush1.msra.mxu0 0.0
      %4346 = vmatprep.subr.mxu0 0.0
      %4347 = vmatpush1.msra.mxu0 0.0
      %4348 = vmatprep.subr.mxu0 0.0
      %4349 = vmatpush1.msra.mxu0 0.0
      %4350 = vmatprep.subr.mxu0 0.0
      %4351 = vmatpush1.msra.mxu0 0.0
      %4352 = vmatprep.subr.mxu0 0.0
      %4353 = vmatpush1.msra.mxu0 0.0
      %4354 = vmatprep.subr.mxu0 0.0
      %4355 = vmatpush1.msra.mxu0 0.0
      %4356 = vmatprep.subr.mxu0 0.0
      %4357 = vmatpush1.msra.mxu0 0.0
      %4358 = vmatprep.subr.mxu0 0.0
      %4359 = vmatpush1.msra.mxu0 0.0
      %4360 = vmatprep.mubr.f32.mxu0 %v4291
      %4361 = vmatmul.mubr.f32.gmra.mrb[0].mxu0 %v4022
      %v4362 = vpop.f32.mrb[0].mxu0
      %v4363 = vadd.f32 0.0, %v4362
      %v4364 = vpop.f32.mrb[0].mxu0
      %v4365 = vadd.f32 0.0, %v4364
      %4366 = vmatprep.mubr.f32.mxu0 %v4294
      %4367 = vmatmul.mubr.f32.gmra.mrb[0].mxu0 %v4024
      %v4368 = vpop.f32.mrb[0].mxu0
      %v4369 = vadd.f32 0.0, %v4368
      %v4370 = vpop.f32.mrb[0].mxu0
      %v4371 = vadd.f32 0.0, %v4370
      %4372 = vdwg.mxu0
      %v4373 = vadd.f32 %v4243, %v4363
      %v4374 = vadd.f32 %v4245, %v4365
      %v4375 = vadd.f32 %v4249, %v4369
      %v4376 = vadd.f32 %v4251, %v4371
      %4377 = vmatprep.subr.mxu0 %v4374
      %4378 = vmatpush1.xpose.msra.mxu0 %v4373
      %4379 = vmatprep.subr.mxu0 %v4376
      %4380 = vmatpush1.xpose.msra.mxu0 %v4375
      %4381 = vmatprep.subr.mxu0 0.0
      %4382 = vmatpush1.xpose.msra.mxu0 0.0
      %4383 = vmatprep.subr.mxu0 0.0
      %4384 = vmatpush1.xpose.msra.mxu0 0.0
      %4385 = vmatprep.subr.mxu0 0.0
      %4386 = vmatpush1.xpose.msra.mxu0 0.0
      %4387 = vmatprep.subr.mxu0 0.0
      %4388 = vmatpush1.xpose.msra.mxu0 0.0
      %4389 = vmatprep.subr.mxu0 0.0
      %4390 = vmatpush1.xpose.msra.mxu0 0.0
      %4391 = vmatprep.subr.mxu0 0.0
      %4392 = vmatpush1.xpose.msra.mxu0 0.0
      %4393 = vmatprep.subr.mxu0 0.0
      %4394 = vmatpush1.xpose.msra.mxu0 0.0
      %4395 = vmatprep.subr.mxu0 0.0
      %4396 = vmatpush1.xpose.msra.mxu0 0.0
      %4397 = vmatprep.subr.mxu0 0.0
      %4398 = vmatpush1.xpose.msra.mxu0 0.0
      %4399 = vmatprep.subr.mxu0 0.0
      %4400 = vmatpush1.xpose.msra.mxu0 0.0
      %4401 = vmatprep.subr.mxu0 0.0
      %4402 = vmatpush1.xpose.msra.mxu0 0.0
      %4403 = vmatprep.subr.mxu0 0.0
      %4404 = vmatpush1.xpose.msra.mxu0 0.0
      %4405 = vmatprep.subr.mxu0 0.0
      %4406 = vmatpush1.xpose.msra.mxu0 0.0
      %4407 = vmatprep.subr.mxu0 0.0
      %4408 = vmatpush1.xpose.msra.mxu0 0.0
      %4409 = vmatprep.subr.mxu0 0.0
      %4410 = vmatpush1.xpose.msra.mxu0 0.0
      %4411 = vmatprep.subr.mxu0 0.0
      %4412 = vmatpush1.xpose.msra.mxu0 0.0
      %4413 = vmatprep.subr.mxu0 0.0
      %4414 = vmatpush1.xpose.msra.mxu0 0.0
      %4415 = vmatprep.subr.mxu0 0.0
      %4416 = vmatpush1.xpose.msra.mxu0 0.0
      %4417 = vmatprep.subr.mxu0 0.0
      %4418 = vmatpush1.xpose.msra.mxu0 0.0
      %4419 = vmatprep.subr.mxu0 0.0
      %4420 = vmatpush1.xpose.msra.mxu0 0.0
      %4421 = vmatprep.subr.mxu0 0.0
      %4422 = vmatpush1.xpose.msra.mxu0 0.0
      %4423 = vmatprep.subr.mxu0 0.0
      %4424 = vmatpush1.xpose.msra.mxu0 0.0
      %4425 = vmatprep.subr.mxu0 0.0
      %4426 = vmatpush1.xpose.msra.mxu0 0.0
      %4427 = vmatprep.subr.mxu0 0.0
      %4428 = vmatpush1.xpose.msra.mxu0 0.0
      %4429 = vmatprep.subr.mxu0 0.0
      %4430 = vmatpush1.xpose.msra.mxu0 0.0
      %4431 = vmatprep.subr.mxu0 0.0
      %4432 = vmatpush1.xpose.msra.mxu0 0.0
      %4433 = vmatprep.subr.mxu0 0.0
      %4434 = vmatpush1.xpose.msra.mxu0 0.0
      %4435 = vmatprep.subr.mxu0 0.0
      %4436 = vmatpush1.xpose.msra.mxu0 0.0
      %4437 = vmatprep.subr.mxu0 0.0
      %4438 = vmatpush1.xpose.msra.mxu0 0.0
      %4439 = vmatprep.subr.mxu0 0.0
      %4440 = vmatpush1.xpose.msra.mxu0 0.0
      %4441 = vmatprep.mubr.f32.mxu0 1.0
      %4442 = vmatmul.mubr.f32.gmra.mrb[0].mxu0 1.0
      %v4443 = vpop.f32.mrb[0].mxu0
      %v4444 = vadd.f32 0.0, %v4443
      %v4445 = vpop.f32.mrb[0].mxu0
      %4446 = vdwg.mxu0
      %v4447 = vmul.f32 %v4444, 0.00390625
      %v4448 = vld [vmem:[%s53] sm:$0x3f]
      %v4449 = vld [vmem:[%s55] sm:$0x1]
      %v4451 = vsel %vm1278, %v4447, 0
      %v4454 = vsel %vm1278, %v4448, 0
      %4456 = vmatprep.subr.mxu0 0.0
      %4457 = vmatpush1.xpose.msra.mxu0 %v4454
      %4458 = vmatprep.subr.mxu0 0.0
      %4459 = vmatpush1.xpose.msra.mxu0 0.0
      %4460 = vmatprep.subr.mxu0 0.0
      %4461 = vmatpush1.xpose.msra.mxu0 0.0
      %4462 = vmatprep.subr.mxu0 0.0
      %4463 = vmatpush1.xpose.msra.mxu0 0.0
      %4464 = vmatprep.subr.mxu0 0.0
      %4465 = vmatpush1.xpose.msra.mxu0 0.0
      %4466 = vmatprep.subr.mxu0 0.0
      %4467 = vmatpush1.xpose.msra.mxu0 0.0
      %4468 = vmatprep.subr.mxu0 0.0
      %4469 = vmatpush1.xpose.msra.mxu0 0.0
      %4470 = vmatprep.subr.mxu0 0.0
      %4471 = vmatpush1.xpose.msra.mxu0 0.0
      %4472 = vmatprep.subr.mxu0 0.0
      %4473 = vmatpush1.xpose.msra.mxu0 0.0
      %4474 = vmatprep.subr.mxu0 0.0
      %4475 = vmatpush1.xpose.msra.mxu0 0.0
      %4476 = vmatprep.subr.mxu0 0.0
      %4477 = vmatpush1.xpose.msra.mxu0 0.0
      %4478 = vmatprep.subr.mxu0 0.0
      %4479 = vmatpush1.xpose.msra.mxu0 0.0
      %4480 = vmatprep.subr.mxu0 0.0
      %4481 = vmatpush1.xpose.msra.mxu0 0.0
      %4482 = vmatprep.subr.mxu0 0.0
      %4483 = vmatpush1.xpose.msra.mxu0 0.0
      %4484 = vmatprep.subr.mxu0 0.0
      %4485 = vmatpush1.xpose.msra.mxu0 0.0
      %4486 = vmatprep.subr.mxu0 0.0
      %4487 = vmatpush1.xpose.msra.mxu0 0.0
      %4488 = vmatprep.subr.mxu0 0.0
      %4489 = vmatpush1.xpose.msra.mxu0 0.0
      %4490 = vmatprep.subr.mxu0 0.0
      %4491 = vmatpush1.xpose.msra.mxu0 0.0
      %4492 = vmatprep.subr.mxu0 0.0
      %4493 = vmatpush1.xpose.msra.mxu0 0.0
      %4494 = vmatprep.subr.mxu0 0.0
      %4495 = vmatpush1.xpose.msra.mxu0 0.0
      %4496 = vmatprep.subr.mxu0 0.0
      %4497 = vmatpush1.xpose.msra.mxu0 0.0
      %4498 = vmatprep.subr.mxu0 0.0
      %4499 = vmatpush1.xpose.msra.mxu0 0.0
      %4500 = vmatprep.subr.mxu0 0.0
      %4501 = vmatpush1.xpose.msra.mxu0 0.0
      %4502 = vmatprep.subr.mxu0 0.0
      %4503 = vmatpush1.xpose.msra.mxu0 0.0
      %4504 = vmatprep.subr.mxu0 0.0
      %4505 = vmatpush1.xpose.msra.mxu0 0.0
      %4506 = vmatprep.subr.mxu0 0.0
      %4507 = vmatpush1.xpose.msra.mxu0 0.0
      %4508 = vmatprep.subr.mxu0 0.0
      %4509 = vmatpush1.xpose.msra.mxu0 0.0
      %4510 = vmatprep.subr.mxu0 0.0
      %4511 = vmatpush1.xpose.msra.mxu0 0.0
      %4512 = vmatprep.subr.mxu0 0.0
      %4513 = vmatpush1.xpose.msra.mxu0 0.0
      %4514 = vmatprep.subr.mxu0 0.0
      %4515 = vmatpush1.xpose.msra.mxu0 0.0
      %4516 = vmatprep.subr.mxu0 0.0
      %4517 = vmatpush1.xpose.msra.mxu0 0.0
      %4518 = vmatprep.subr.mxu0 0.0
      %4519 = vmatpush1.xpose.msra.mxu0 0.0
      %4520 = vmatprep.mubr.f32.mxu0 0.0
      %4521 = vmatmul.mubr.f32.gmra.mrb[0].mxu0 %v4451
      %v4522 = vpop.f32.mrb[0].mxu0
      %v4523 = vadd.f32 %v4449, %v4522
      %v4524 = vpop.f32.mrb[0].mxu0
      %4525 = vdwg.mxu0
      %v4526 = vmax.f32 %v4523, 0.0
      %v4527 = vld [vmem:[%s57] sm:$0xff]
      %v4528 = vld [vmem:[%s57 + $0x8] sm:$0xf]
      %v4529 = vld [vmem:[%s59] sm:$0x1]
      %vm4530 = vcmask 48128
      %v4532 = vsel %vm4530, %v4526, 0
      %v4535 = vsel %vm4530, %v4527, 0
      %v4538 = vsel %vm4530, %v4528, 0
      %4540 = vmatprep.subr.mxu0 0.0
      %4541 = vmatpush1.xpose.msra.mxu0 %v4535
      %4542 = vmatprep.subr.mxu0 0.0
      %4543 = vmatpush1.xpose.msra.mxu0 %v4538
      %4544 = vmatprep.subr.mxu0 0.0
      %4545 = vmatpush1.xpose.msra.mxu0 0.0
      %4546 = vmatprep.subr.mxu0 0.0
      %4547 = vmatpush1.xpose.msra.mxu0 0.0
      %4548 = vmatprep.subr.mxu0 0.0
      %4549 = vmatpush1.xpose.msra.mxu0 0.0
      %4550 = vmatprep.subr.mxu0 0.0
      %4551 = vmatpush1.xpose.msra.mxu0 0.0
      %4552 = vmatprep.subr.mxu0 0.0
      %4553 = vmatpush1.xpose.msra.mxu0 0.0
      %4554 = vmatprep.subr.mxu0 0.0
      %4555 = vmatpush1.xpose.msra.mxu0 0.0
      %4556 = vmatprep.subr.mxu0 0.0
      %4557 = vmatpush1.xpose.msra.mxu0 0.0
      %4558 = vmatprep.subr.mxu0 0.0
      %4559 = vmatpush1.xpose.msra.mxu0 0.0
      %4560 = vmatprep.subr.mxu0 0.0
      %4561 = vmatpush1.xpose.msra.mxu0 0.0
      %4562 = vmatprep.subr.mxu0 0.0
      %4563 = vmatpush1.xpose.msra.mxu0 0.0
      %4564 = vmatprep.subr.mxu0 0.0
      %4565 = vmatpush1.xpose.msra.mxu0 0.0
      %4566 = vmatprep.subr.mxu0 0.0
      %4567 = vmatpush1.xpose.msra.mxu0 0.0
      %4568 = vmatprep.subr.mxu0 0.0
      %4569 = vmatpush1.xpose.msra.mxu0 0.0
      %4570 = vmatprep.subr.mxu0 0.0
      %4571 = vmatpush1.xpose.msra.mxu0 0.0
      %4572 = vmatprep.subr.mxu0 0.0
      %4573 = vmatpush1.xpose.msra.mxu0 0.0
      %4574 = vmatprep.subr.mxu0 0.0
      %4575 = vmatpush1.xpose.msra.mxu0 0.0
      %4576 = vmatprep.subr.mxu0 0.0
      %4577 = vmatpush1.xpose.msra.mxu0 0.0
      %4578 = vmatprep.subr.mxu0 0.0
      %4579 = vmatpush1.xpose.msra.mxu0 0.0
      %4580 = vmatprep.subr.mxu0 0.0
      %4581 = vmatpush1.xpose.msra.mxu0 0.0
      %4582 = vmatprep.subr.mxu0 0.0
      %4583 = vmatpush1.xpose.msra.mxu0 0.0
      %4584 = vmatprep.subr.mxu0 0.0
      %4585 = vmatpush1.xpose.msra.mxu0 0.0
      %4586 = vmatprep.subr.mxu0 0.0
      %4587 = vmatpush1.xpose.msra.mxu0 0.0
      %4588 = vmatprep.subr.mxu0 0.0
      %4589 = vmatpush1.xpose.msra.mxu0 0.0
      %4590 = vmatprep.subr.mxu0 0.0
      %4591 = vmatpush1.xpose.msra.mxu0 0.0
      %4592 = vmatprep.subr.mxu0 0.0
      %4593 = vmatpush1.xpose.msra.mxu0 0.0
      %4594 = vmatprep.subr.mxu0 0.0
      %4595 = vmatpush1.xpose.msra.mxu0 0.0
      %4596 = vmatprep.subr.mxu0 0.0
      %4597 = vmatpush1.xpose.msra.mxu0 0.0
      %4598 = vmatprep.subr.mxu0 0.0
      %4599 = vmatpush1.xpose.msra.mxu0 0.0
      %4600 = vmatprep.subr.mxu0 0.0
      %4601 = vmatpush1.xpose.msra.mxu0 0.0
      %4602 = vmatprep.subr.mxu0 0.0
      %4603 = vmatpush1.xpose.msra.mxu0 0.0
      %4604 = vmatprep.mubr.f32.mxu0 0.0
      %4605 = vmatmul.mubr.f32.gmra.mrb[0].mxu0 %v4532
      %v4606 = vpop.f32.mrb[0].mxu0
      %v4607 = vadd.f32 %v4529, %v4606
      %v4608 = vpop.f32.mrb[0].mxu0
      %4609 = vdwg.mxu0
      %v4610 = vsub.f32 0.0, %v4607
      %v4611 = vmul.f32 %v4610, 1.442695
      %v4612 = vpow.pop %v4611
      %v4613 = vadd.f32 %v4612, 1.0
      %v4614 = vrcp.pop %v4613
      %v4615 = vmul.f32 1.0, %v4614
      %v4617 = vsel %vm1278, %v4615, 0
      %v4620 = vsel %vm1127, %v2174, 0
      %v4623 = vsel %vm1127, %v2175, 0
      %4625 = vmatprep.subr.mxu0 %v2173
      %4626 = vmatpush1.msra.mxu0 %v2172
      %4627 = vmatprep.subr.mxu0 %v4623
      %4628 = vmatpush1.msra.mxu0 %v4620
      %4629 = vmatprep.subr.mxu0 0.0
      %4630 = vmatpush1.msra.mxu0 0.0
      %4631 = vmatprep.subr.mxu0 0.0
      %4632 = vmatpush1.msra.mxu0 0.0
      %4633 = vmatprep.subr.mxu0 0.0
      %4634 = vmatpush1.msra.mxu0 0.0
      %4635 = vmatprep.subr.mxu0 0.0
      %4636 = vmatpush1.msra.mxu0 0.0
      %4637 = vmatprep.subr.mxu0 0.0
      %4638 = vmatpush1.msra.mxu0 0.0
      %4639 = vmatprep.subr.mxu0 0.0
      %4640 = vmatpush1.msra.mxu0 0.0
      %4641 = vmatprep.subr.mxu0 0.0
      %4642 = vmatpush1.msra.mxu0 0.0
      %4643 = vmatprep.subr.mxu0 0.0
      %4644 = vmatpush1.msra.mxu0 0.0
      %4645 = vmatprep.subr.mxu0 0.0
      %4646 = vmatpush1.msra.mxu0 0.0
      %4647 = vmatprep.subr.mxu0 0.0
      %4648 = vmatpush1.msra.mxu0 0.0
      %4649 = vmatprep.subr.mxu0 0.0
      %4650 = vmatpush1.msra.mxu0 0.0
      %4651 = vmatprep.subr.mxu0 0.0
      %4652 = vmatpush1.msra.mxu0 0.0
      %4653 = vmatprep.subr.mxu0 0.0
      %4654 = vmatpush1.msra.mxu0 0.0
      %4655 = vmatprep.subr.mxu0 0.0
      %4656 = vmatpush1.msra.mxu0 0.0
      %4657 = vmatprep.subr.mxu0 0.0
      %4658 = vmatpush1.msra.mxu0 0.0
      %4659 = vmatprep.subr.mxu0 0.0
      %4660 = vmatpush1.msra.mxu0 0.0
      %4661 = vmatprep.subr.mxu0 0.0
      %4662 = vmatpush1.msra.mxu0 0.0
      %4663 = vmatprep.subr.mxu0 0.0
      %4664 = vmatpush1.msra.mxu0 0.0
      %4665 = vmatprep.subr.mxu0 0.0
      %4666 = vmatpush1.msra.mxu0 0.0
      %4667 = vmatprep.subr.mxu0 0.0
      %4668 = vmatpush1.msra.mxu0 0.0
      %4669 = vmatprep.subr.mxu0 0.0
      %4670 = vmatpush1.msra.mxu0 0.0
      %4671 = vmatprep.subr.mxu0 0.0
      %4672 = vmatpush1.msra.mxu0 0.0
      %4673 = vmatprep.subr.mxu0 0.0
      %4674 = vmatpush1.msra.mxu0 0.0
      %4675 = vmatprep.subr.mxu0 0.0
      %4676 = vmatpush1.msra.mxu0 0.0
      %4677 = vmatprep.subr.mxu0 0.0
      %4678 = vmatpush1.msra.mxu0 0.0
      %4679 = vmatprep.subr.mxu0 0.0
      %4680 = vmatpush1.msra.mxu0 0.0
      %4681 = vmatprep.subr.mxu0 0.0
      %4682 = vmatpush1.msra.mxu0 0.0
      %4683 = vmatprep.subr.mxu0 0.0
      %4684 = vmatpush1.msra.mxu0 0.0
      %4685 = vmatprep.subr.mxu0 0.0
      %4686 = vmatpush1.msra.mxu0 0.0
      %4687 = vmatprep.subr.mxu0 0.0
      %4688 = vmatpush1.msra.mxu0 0.0
      %4689 = vmatprep.mubr.f32.mxu0 0.0
      %4690 = vmatmul.mubr.f32.gmra.mrb[0].mxu0 %v4617
      %v4691 = vpop.f32.mrb[0].mxu0
      %v4692 = vadd.f32 0.0, %v4691
      %v4693 = vpop.f32.mrb[0].mxu0
      %v4694 = vadd.f32 0.0, %v4693
      %4695 = vdwg.mxu0
      %v4696 = vlaneseq
      %v4697 = vshrl.u32 %v4696, 7
      %v4698 = vsub.s32 0, %v4697
      %v4699 = vrot.slane %v4692, %v4698
      %v4700 = vlaneseq
      %v4701 = vshrl.u32 %v4700, 7
      %v4702 = vsub.s32 0, %v4701
      %v4703 = vrot.slane %v4694, %v4702
      %v4704 = vmul.f32 %v3116, %v4699
      %v4705 = vmul.f32 %v3117, %v4703
      %v4706 = vmul.f32 %v3118, %v4699
      %v4707 = vmul.f32 %v3119, %v4703
      %v4708 = vsub.f32 1.0, %v4692
      %v4709 = vsub.f32 1.0, %v4694
      %v4710 = vlaneseq
      %v4711 = vshrl.u32 %v4710, 7
      %v4712 = vsub.s32 0, %v4711
      %v4713 = vrot.slane %v4708, %v4712
      %v4714 = vlaneseq
      %v4715 = vshrl.u32 %v4714, 7
      %v4716 = vsub.s32 0, %v4715
      %v4717 = vrot.slane %v4709, %v4716
      %v4718 = vmul.f32 %v4022, %v4713
      %v4719 = vmul.f32 %v4023, %v4717
      %v4720 = vmul.f32 %v4024, %v4713
      %v4721 = vmul.f32 %v4025, %v4717
      %v4723 = vsel %vm2206, %v4719, 0
      %v4726 = vsel %vm2206, %v4721, 0
      %4728 = vmatprep.subr.mxu0 %v4255
      %4729 = vmatpush1.msra.mxu0 %v4254
      %4730 = vmatprep.subr.mxu0 %v4257
      %4731 = vmatpush1.msra.mxu0 %v4256
      %4732 = vmatprep.subr.mxu0 %v4259
      %4733 = vmatpush1.msra.mxu0 %v4258
      %4734 = vmatprep.subr.mxu0 %v4261
      %4735 = vmatpush1.msra.mxu0 %v4260
      %4736 = vmatprep.subr.mxu0 %v4263
      %4737 = vmatpush1.msra.mxu0 %v4262
      %4738 = vmatprep.subr.mxu0 %v4265
      %4739 = vmatpush1.msra.mxu0 %v4264
      %4740 = vmatprep.subr.mxu0 %v4267
      %4741 = vmatpush1.msra.mxu0 %v4266
      %4742 = vmatprep.subr.mxu0 %v4269
      %4743 = vmatpush1.msra.mxu0 %v4268
      %4744 = vmatprep.subr.mxu0 %v4271
      %4745 = vmatpush1.msra.mxu0 %v4270
      %4746 = vmatprep.subr.mxu0 %v4273
      %4747 = vmatpush1.msra.mxu0 %v4272
      %4748 = vmatprep.subr.mxu0 %v4275
      %4749 = vmatpush1.msra.mxu0 %v4274
      %4750 = vmatprep.subr.mxu0 %v4277
      %4751 = vmatpush1.msra.mxu0 %v4276
      %4752 = vmatprep.subr.mxu0 %v4279
      %4753 = vmatpush1.msra.mxu0 %v4278
      %4754 = vmatprep.subr.mxu0 %v4281
      %4755 = vmatpush1.msra.mxu0 %v4280
      %4756 = vmatprep.subr.mxu0 %v4283
      %4757 = vmatpush1.msra.mxu0 %v4282
      %4758 = vmatprep.subr.mxu0 %v4285
      %4759 = vmatpush1.msra.mxu0 %v4284
      %4760 = vmatprep.subr.mxu0 %v4287
      %4761 = vmatpush1.msra.mxu0 %v4286
      %4762 = vmatprep.subr.mxu0 %v4289
      %4763 = vmatpush1.msra.mxu0 %v4288
      %4764 = vmatprep.subr.mxu0 0.0
      %4765 = vmatpush1.msra.mxu0 0.0
      %4766 = vmatprep.subr.mxu0 0.0
      %4767 = vmatpush1.msra.mxu0 0.0
      %4768 = vmatprep.subr.mxu0 0.0
      %4769 = vmatpush1.msra.mxu0 0.0
      %4770 = vmatprep.subr.mxu0 0.0
      %4771 = vmatpush1.msra.mxu0 0.0
      %4772 = vmatprep.subr.mxu0 0.0
      %4773 = vmatpush1.msra.mxu0 0.0
      %4774 = vmatprep.subr.mxu0 0.0
      %4775 = vmatpush1.msra.mxu0 0.0
      %4776 = vmatprep.subr.mxu0 0.0
      %4777 = vmatpush1.msra.mxu0 0.0
      %4778 = vmatprep.subr.mxu0 0.0
      %4779 = vmatpush1.msra.mxu0 0.0
      %4780 = vmatprep.subr.mxu0 0.0
      %4781 = vmatpush1.msra.mxu0 0.0
      %4782 = vmatprep.subr.mxu0 0.0
      %4783 = vmatpush1.msra.mxu0 0.0
      %4784 = vmatprep.subr.mxu0 0.0
      %4785 = vmatpush1.msra.mxu0 0.0
      %4786 = vmatprep.subr.mxu0 0.0
      %4787 = vmatpush1.msra.mxu0 0.0
      %4788 = vmatprep.subr.mxu0 0.0
      %4789 = vmatpush1.msra.mxu0 0.0
      %4790 = vmatprep.subr.mxu0 0.0
      %4791 = vmatpush1.msra.mxu0 0.0
      %4792 = vmatprep.mubr.f32.mxu0 %v4723
      %4793 = vmatmul.mubr.f32.gmra.mrb[0].mxu0 %v4718
      %v4794 = vpop.f32.mrb[0].mxu0
      %v4795 = vadd.f32 0.0, %v4794
      %v4796 = vpop.f32.mrb[0].mxu0
      %v4797 = vadd.f32 0.0, %v4796
      %4798 = vmatprep.mubr.f32.mxu0 %v4726
      %4799 = vmatmul.mubr.f32.gmra.mrb[0].mxu0 %v4720
      %v4800 = vpop.f32.mrb[0].mxu0
      %v4801 = vadd.f32 0.0, %v4800
      %v4802 = vpop.f32.mrb[0].mxu0
      %v4803 = vadd.f32 0.0, %v4802
      %4804 = vdwg.mxu0
      %v4806 = vsel %vm2206, %v4705, 0
      %v4809 = vsel %vm2206, %v4707, 0
      %4811 = vmatprep.subr.mxu0 %v4141
      %4812 = vmatpush1.msra.mxu0 %v4140
      %4813 = vmatprep.subr.mxu0 %v4143
      %4814 = vmatpush1.msra.mxu0 %v4142
      %4815 = vmatprep.subr.mxu0 %v4145
      %4816 = vmatpush1.msra.mxu0 %v4144
      %4817 = vmatprep.subr.mxu0 %v4147
      %4818 = vmatpush1.msra.mxu0 %v4146
      %4819 = vmatprep.subr.mxu0 %v4149
      %4820 = vmatpush1.msra.mxu0 %v4148
      %4821 = vmatprep.subr.mxu0 %v4151
      %4822 = vmatpush1.msra.mxu0 %v4150
      %4823 = vmatprep.subr.mxu0 %v4153
      %4824 = vmatpush1.msra.mxu0 %v4152
      %4825 = vmatprep.subr.mxu0 %v4155
      %4826 = vmatpush1.msra.mxu0 %v4154
      %4827 = vmatprep.subr.mxu0 %v4157
      %4828 = vmatpush1.msra.mxu0 %v4156
      %4829 = vmatprep.subr.mxu0 %v4159
      %4830 = vmatpush1.msra.mxu0 %v4158
      %4831 = vmatprep.subr.mxu0 %v4161
      %4832 = vmatpush1.msra.mxu0 %v4160
      %4833 = vmatprep.subr.mxu0 %v4163
      %4834 = vmatpush1.msra.mxu0 %v4162
      %4835 = vmatprep.subr.mxu0 %v4165
      %4836 = vmatpush1.msra.mxu0 %v4164
      %4837 = vmatprep.subr.mxu0 %v4167
      %4838 = vmatpush1.msra.mxu0 %v4166
      %4839 = vmatprep.subr.mxu0 %v4169
      %4840 = vmatpush1.msra.mxu0 %v4168
      %4841 = vmatprep.subr.mxu0 %v4171
      %4842 = vmatpush1.msra.mxu0 %v4170
      %4843 = vmatprep.subr.mxu0 %v4173
      %4844 = vmatpush1.msra.mxu0 %v4172
      %4845 = vmatprep.subr.mxu0 %v4175
      %4846 = vmatpush1.msra.mxu0 %v4174
      %4847 = vmatprep.subr.mxu0 0.0
      %4848 = vmatpush1.msra.mxu0 0.0
      %4849 = vmatprep.subr.mxu0 0.0
      %4850 = vmatpush1.msra.mxu0 0.0
      %4851 = vmatprep.subr.mxu0 0.0
      %4852 = vmatpush1.msra.mxu0 0.0
      %4853 = vmatprep.subr.mxu0 0.0
      %4854 = vmatpush1.msra.mxu0 0.0
      %4855 = vmatprep.subr.mxu0 0.0
      %4856 = vmatpush1.msra.mxu0 0.0
      %4857 = vmatprep.subr.mxu0 0.0
      %4858 = vmatpush1.msra.mxu0 0.0
      %4859 = vmatprep.subr.mxu0 0.0
      %4860 = vmatpush1.msra.mxu0 0.0
      %4861 = vmatprep.subr.mxu0 0.0
      %4862 = vmatpush1.msra.mxu0 0.0
      %4863 = vmatprep.subr.mxu0 0.0
      %4864 = vmatpush1.msra.mxu0 0.0
      %4865 = vmatprep.subr.mxu0 0.0
      %4866 = vmatpush1.msra.mxu0 0.0
      %4867 = vmatprep.subr.mxu0 0.0
      %4868 = vmatpush1.msra.mxu0 0.0
      %4869 = vmatprep.subr.mxu0 0.0
      %4870 = vmatpush1.msra.mxu0 0.0
      %4871 = vmatprep.subr.mxu0 0.0
      %4872 = vmatpush1.msra.mxu0 0.0
      %4873 = vmatprep.subr.mxu0 0.0
      %4874 = vmatpush1.msra.mxu0 0.0
      %4875 = vmatprep.mubr.f32.mxu0 %v4806
      %4876 = vmatmul.mubr.f32.gmra.mrb[0].mxu0 %v4704
      %v4877 = vpop.f32.mrb[0].mxu0
      %v4878 = vadd.f32 %v4795, %v4877
      %v4879 = vpop.f32.mrb[0].mxu0
      %v4880 = vadd.f32 %v4797, %v4879
      %4881 = vmatprep.mubr.f32.mxu0 %v4809
      %4882 = vmatmul.mubr.f32.gmra.mrb[0].mxu0 %v4706
      %v4883 = vpop.f32.mrb[0].mxu0
      %v4884 = vadd.f32 %v4801, %v4883
      %v4885 = vpop.f32.mrb[0].mxu0
      %v4886 = vadd.f32 %v4803, %v4885
      %4887 = vdwg.mxu0
      %v4888 = vld [vmem:[%s41] sm:$0xf]
      %v4889 = vld [vmem:[%s43] sm:$0xf]
      %4891 = vset.pattern.permute.xlu0 0
      %4892 = vperm.xlu0 %4891, %v4889
      %v4893 = vpop.permute.xlu0 %4892
      %v4896 = vsel %vm1278, %v4888, 0
      %v4899 = vsel %vm1127, %v4135, 0
      %v4902 = vsel %vm1127, %v4137, 0
      %4904 = vmatprep.subr.mxu0 %v4131
      %4905 = vmatpush1.msra.mxu0 %v4129
      %4906 = vmatprep.subr.mxu0 %v4902
      %4907 = vmatpush1.msra.mxu0 %v4899
      %4908 = vmatprep.subr.mxu0 0.0
      %4909 = vmatpush1.msra.mxu0 0.0
      %4910 = vmatprep.subr.mxu0 0.0
      %4911 = vmatpush1.msra.mxu0 0.0
      %4912 = vmatprep.subr.mxu0 0.0
      %4913 = vmatpush1.msra.mxu0 0.0
      %4914 = vmatprep.subr.mxu0 0.0
      %4915 = vmatpush1.msra.mxu0 0.0
      %4916 = vmatprep.subr.mxu0 0.0
      %4917 = vmatpush1.msra.mxu0 0.0
      %4918 = vmatprep.subr.mxu0 0.0
      %4919 = vmatpush1.msra.mxu0 0.0
      %4920 = vmatprep.subr.mxu0 0.0
      %4921 = vmatpush1.msra.mxu0 0.0
      %4922 = vmatprep.subr.mxu0 0.0
      %4923 = vmatpush1.msra.mxu0 0.0
      %4924 = vmatprep.subr.mxu0 0.0
      %4925 = vmatpush1.msra.mxu0 0.0
      %4926 = vmatprep.subr.mxu0 0.0
      %4927 = vmatpush1.msra.mxu0 0.0
      %4928 = vmatprep.subr.mxu0 0.0
      %4929 = vmatpush1.msra.mxu0 0.0
      %4930 = vmatprep.subr.mxu0 0.0
      %4931 = vmatpush1.msra.mxu0 0.0
      %4932 = vmatprep.subr.mxu0 0.0
      %4933 = vmatpush1.msra.mxu0 0.0
      %4934 = vmatprep.subr.mxu0 0.0
      %4935 = vmatpush1.msra.mxu0 0.0
      %4936 = vmatprep.subr.mxu0 0.0
      %4937 = vmatpush1.msra.mxu0 0.0
      %4938 = vmatprep.subr.mxu0 0.0
      %4939 = vmatpush1.msra.mxu0 0.0
      %4940 = vmatprep.subr.mxu0 0.0
      %4941 = vmatpush1.msra.mxu0 0.0
      %4942 = vmatprep.subr.mxu0 0.0
      %4943 = vmatpush1.msra.mxu0 0.0
      %4944 = vmatprep.subr.mxu0 0.0
      %4945 = vmatpush1.msra.mxu0 0.0
      %4946 = vmatprep.subr.mxu0 0.0
      %4947 = vmatpush1.msra.mxu0 0.0
      %4948 = vmatprep.subr.mxu0 0.0
      %4949 = vmatpush1.msra.mxu0 0.0
      %4950 = vmatprep.subr.mxu0 0.0
      %4951 = vmatpush1.msra.mxu0 0.0
      %4952 = vmatprep.subr.mxu0 0.0
      %4953 = vmatpush1.msra.mxu0 0.0
      %4954 = vmatprep.subr.mxu0 0.0
      %4955 = vmatpush1.msra.mxu0 0.0
      %4956 = vmatprep.subr.mxu0 0.0
      %4957 = vmatpush1.msra.mxu0 0.0
      %4958 = vmatprep.subr.mxu0 0.0
      %4959 = vmatpush1.msra.mxu0 0.0
      %4960 = vmatprep.subr.mxu0 0.0
      %4961 = vmatpush1.msra.mxu0 0.0
      %4962 = vmatprep.subr.mxu0 0.0
      %4963 = vmatpush1.msra.mxu0 0.0
      %4964 = vmatprep.subr.mxu0 0.0
      %4965 = vmatpush1.msra.mxu0 0.0
      %4966 = vmatprep.subr.mxu0 0.0
      %4967 = vmatpush1.msra.mxu0 0.0
      %4968 = vmatprep.mubr.f32.mxu0 0.0
      %4969 = vmatmul.mubr.f32.gmra.mrb[0].mxu0 %v4896
      %v4970 = vpop.f32.mrb[0].mxu0
      %v4971 = vadd.f32 %v4893, %v4970
      %v4972 = vpop.f32.mrb[0].mxu0
      %v4973 = vadd.f32 %v4893, %v4972
      %4974 = vdwg.mxu0
      %v4976 = vsel %vm1127, %v4249, 0
      %v4979 = vsel %vm1127, %v4251, 0
      %4981 = vmatprep.subr.mxu0 %v4245
      %4982 = vmatpush1.msra.mxu0 %v4243
      %4983 = vmatprep.subr.mxu0 %v4979
      %4984 = vmatpush1.msra.mxu0 %v4976
      %4985 = vmatprep.subr.mxu0 0.0
      %4986 = vmatpush1.msra.mxu0 0.0
      %4987 = vmatprep.subr.mxu0 0.0
      %4988 = vmatpush1.msra.mxu0 0.0
      %4989 = vmatprep.subr.mxu0 0.0
      %4990 = vmatpush1.msra.mxu0 0.0
      %4991 = vmatprep.subr.mxu0 0.0
      %4992 = vmatpush1.msra.mxu0 0.0
      %4993 = vmatprep.subr.mxu0 0.0
      %4994 = vmatpush1.msra.mxu0 0.0
      %4995 = vmatprep.subr.mxu0 0.0
      %4996 = vmatpush1.msra.mxu0 0.0
      %4997 = vmatprep.subr.mxu0 0.0
      %4998 = vmatpush1.msra.mxu0 0.0
      %4999 = vmatprep.subr.mxu0 0.0
      %5000 = vmatpush1.msra.mxu0 0.0
      %5001 = vmatprep.subr.mxu0 0.0
      %5002 = vmatpush1.msra.mxu0 0.0
      %5003 = vmatprep.subr.mxu0 0.0
      %5004 = vmatpush1.msra.mxu0 0.0
      %5005 = vmatprep.subr.mxu0 0.0
      %5006 = vmatpush1.msra.mxu0 0.0
      %5007 = vmatprep.subr.mxu0 0.0
      %5008 = vmatpush1.msra.mxu0 0.0
      %5009 = vmatprep.subr.mxu0 0.0
      %5010 = vmatpush1.msra.mxu0 0.0
      %5011 = vmatprep.subr.mxu0 0.0
      %5012 = vmatpush1.msra.mxu0 0.0
      %5013 = vmatprep.subr.mxu0 0.0
      %5014 = vmatpush1.msra.mxu0 0.0
      %5015 = vmatprep.subr.mxu0 0.0
      %5016 = vmatpush1.msra.mxu0 0.0
      %5017 = vmatprep.subr.mxu0 0.0
      %5018 = vmatpush1.msra.mxu0 0.0
      %5019 = vmatprep.subr.mxu0 0.0
      %5020 = vmatpush1.msra.mxu0 0.0
      %5021 = vmatprep.subr.mxu0 0.0
      %5022 = vmatpush1.msra.mxu0 0.0
      %5023 = vmatprep.subr.mxu0 0.0
      %5024 = vmatpush1.msra.mxu0 0.0
      %5025 = vmatprep.subr.mxu0 0.0
      %5026 = vmatpush1.msra.mxu0 0.0
      %5027 = vmatprep.subr.mxu0 0.0
      %5028 = vmatpush1.msra.mxu0 0.0
      %5029 = vmatprep.subr.mxu0 0.0
      %5030 = vmatpush1.msra.mxu0 0.0
      %5031 = vmatprep.subr.mxu0 0.0
      %5032 = vmatpush1.msra.mxu0 0.0
      %5033 = vmatprep.subr.mxu0 0.0
      %5034 = vmatpush1.msra.mxu0 0.0
      %5035 = vmatprep.subr.mxu0 0.0
      %5036 = vmatpush1.msra.mxu0 0.0
      %5037 = vmatprep.subr.mxu0 0.0
      %5038 = vmatpush1.msra.mxu0 0.0
      %5039 = vmatprep.subr.mxu0 0.0
      %5040 = vmatpush1.msra.mxu0 0.0
      %5041 = vmatprep.subr.mxu0 0.0
      %5042 = vmatpush1.msra.mxu0 0.0
      %5043 = vmatprep.subr.mxu0 0.0
      %5044 = vmatpush1.msra.mxu0 0.0
      %5045 = vmatprep.mubr.f32.mxu0 0.0
      %5046 = vmatmul.mubr.f32.gmra.mrb[0].mxu0 %v4896
      %v5047 = vpop.f32.mrb[0].mxu0
      %v5048 = vadd.f32 %v4893, %v5047
      %v5049 = vpop.f32.mrb[0].mxu0
      %v5050 = vadd.f32 %v4893, %v5049
      %5051 = vdwg.mxu0
      %v5053 = vsel %vm1127, %v4369, 0
      %v5056 = vsel %vm1127, %v4371, 0
      %5058 = vmatprep.subr.mxu0 %v4365
      %5059 = vmatpush1.msra.mxu0 %v4363
      %5060 = vmatprep.subr.mxu0 %v5056
      %5061 = vmatpush1.msra.mxu0 %v5053
      %5062 = vmatprep.subr.mxu0 0.0
      %5063 = vmatpush1.msra.mxu0 0.0
      %5064 = vmatprep.subr.mxu0 0.0
      %5065 = vmatpush1.msra.mxu0 0.0
      %5066 = vmatprep.subr.mxu0 0.0
      %5067 = vmatpush1.msra.mxu0 0.0
      %5068 = vmatprep.subr.mxu0 0.0
      %5069 = vmatpush1.msra.mxu0 0.0
      %5070 = vmatprep.subr.mxu0 0.0
      %5071 = vmatpush1.msra.mxu0 0.0
      %5072 = vmatprep.subr.mxu0 0.0
      %5073 = vmatpush1.msra.mxu0 0.0
      %5074 = vmatprep.subr.mxu0 0.0
      %5075 = vmatpush1.msra.mxu0 0.0
      %5076 = vmatprep.subr.mxu0 0.0
      %5077 = vmatpush1.msra.mxu0 0.0
      %5078 = vmatprep.subr.mxu0 0.0
      %5079 = vmatpush1.msra.mxu0 0.0
      %5080 = vmatprep.subr.mxu0 0.0
      %5081 = vmatpush1.msra.mxu0 0.0
      %5082 = vmatprep.subr.mxu0 0.0
      %5083 = vmatpush1.msra.mxu0 0.0
      %5084 = vmatprep.subr.mxu0 0.0
      %5085 = vmatpush1.msra.mxu0 0.0
      %5086 = vmatprep.subr.mxu0 0.0
      %5087 = vmatpush1.msra.mxu0 0.0
      %5088 = vmatprep.subr.mxu0 0.0
      %5089 = vmatpush1.msra.mxu0 0.0
      %5090 = vmatprep.subr.mxu0 0.0
      %5091 = vmatpush1.msra.mxu0 0.0
      %5092 = vmatprep.subr.mxu0 0.0
      %5093 = vmatpush1.msra.mxu0 0.0
      %5094 = vmatprep.subr.mxu0 0.0
      %5095 = vmatpush1.msra.mxu0 0.0
      %5096 = vmatprep.subr.mxu0 0.0
      %5097 = vmatpush1.msra.mxu0 0.0
      %5098 = vmatprep.subr.mxu0 0.0
      %5099 = vmatpush1.msra.mxu0 0.0
      %5100 = vmatprep.subr.mxu0 0.0
      %5101 = vmatpush1.msra.mxu0 0.0
      %5102 = vmatprep.subr.mxu0 0.0
      %5103 = vmatpush1.msra.mxu0 0.0
      %5104 = vmatprep.subr.mxu0 0.0
      %5105 = vmatpush1.msra.mxu0 0.0
      %5106 = vmatprep.subr.mxu0 0.0
      %5107 = vmatpush1.msra.mxu0 0.0
      %5108 = vmatprep.subr.mxu0 0.0
      %5109 = vmatpush1.msra.mxu0 0.0
      %5110 = vmatprep.subr.mxu0 0.0
      %5111 = vmatpush1.msra.mxu0 0.0
      %5112 = vmatprep.subr.mxu0 0.0
      %5113 = vmatpush1.msra.mxu0 0.0
      %5114 = vmatprep.subr.mxu0 0.0
      %5115 = vmatpush1.msra.mxu0 0.0
      %5116 = vmatprep.subr.mxu0 0.0
      %5117 = vmatpush1.msra.mxu0 0.0
      %5118 = vmatprep.subr.mxu0 0.0
      %5119 = vmatpush1.msra.mxu0 0.0
      %5120 = vmatprep.subr.mxu0 0.0
      %5121 = vmatpush1.msra.mxu0 0.0
      %5122 = vmatprep.mubr.f32.mxu0 0.0
      %5123 = vmatmul.mubr.f32.gmra.mrb[0].mxu0 %v4896
      %v5124 = vpop.f32.mrb[0].mxu0
      %v5125 = vadd.f32 %v4893, %v5124
      %v5126 = vpop.f32.mrb[0].mxu0
      %v5127 = vadd.f32 %v4893, %v5126
      %5128 = vdwg.mxu0
      %v5129 = vadd.f32 %v4971, %v5048
      %v5130 = vadd.f32 %v4973, %v5050
      %v5131 = vadd.f32 %v5129, %v5125
      %v5132 = vadd.f32 %v5130, %v5127
      %v5133 = vsel %vm1127, %v5131, 0.0
      %v5134 = vrot.slane %v5133, 4
      %v5135 = vadd.f32 %v5133, %v5134
      %v5136 = vrot.slane %v5135, 2
      %v5137 = vadd.f32 %v5135, %v5136
      %v5138 = vrot.slane %v5137, 1
      %v5139 = vadd.f32 %v5137, %v5138
      %v5140 = vsel %vm1127, %v5132, 0.0
      %v5141 = vrot.slane %v5140, 4
      %v5142 = vadd.f32 %v5140, %v5141
      %v5143 = vrot.slane %v5142, 2
      %v5144 = vadd.f32 %v5142, %v5143
      %v5145 = vrot.slane %v5144, 1
      %v5146 = vadd.f32 %v5144, %v5145
      %v5147 = vmul.f32 %v5139, 0.083333336
      %v5148 = vmul.f32 %v5146, 0.083333336
      %v5149 = vmax.f32 %v4971, %v5048
      %v5150 = vmax.f32 %v4973, %v5050
      %v5151 = vmax.f32 %v5149, %v5125
      %v5152 = vmax.f32 %v5150, %v5127
      %v5153 = vsel %vm1127, %v5151, -inf
      %v5154 = vrot.slane %v5153, 4
      %v5155 = vmax.f32 %v5153, %v5154
      %v5156 = vrot.slane %v5155, 2
      %v5157 = vmax.f32 %v5155, %v5156
      %v5158 = vrot.slane %v5157, 1
      %v5159 = vmax.f32 %v5157, %v5158
      %v5160 = vsel %vm1127, %v5152, -inf
      %v5161 = vrot.slane %v5160, 4
      %v5162 = vmax.f32 %v5160, %v5161
      %v5163 = vrot.slane %v5162, 2
      %v5164 = vmax.f32 %v5162, %v5163
      %v5165 = vrot.slane %v5164, 1
      %v5166 = vmax.f32 %v5164, %v5165
      %vm5167 = vcmask 1041408
      %vm5168 = vcmask 1043458
      %vm5169 = vmor %vm5168, %vm5167
      %vm5170 = vcmask 832516
      %vm5171 = vmor %vm5170, %vm5169
      %5172 = vst.msk [vmem:[#allocation2] sm:$0x3f] %vm5171, 0.0
      %v5175 = vcombine.low %v5147, %v5148
      %v5177 = vunpack.c.l.s4 1966171168
      %v5178 = vunpack.c.0.s8 %v5177
      %v5179 = vlaneseq
      %v5180 = vshrl.u32 %v5179, 7
      %v5181 = vsub.s32 %v5178, %v5180
      %v5182 = vrot.slane %v5175, %v5181
      %v5184 = vunpack.c.l.s4 1966171168
      %v5185 = vunpack.c.0.s8 %v5184
      %v5186 = vlaneseq
      %v5187 = vshrl.u32 %v5186, 7
      %v5188 = vsub.s32 %v5185, %v5187
      %v5189 = vrot.slane %v5182, %v5188
      %5190 = vrot.lane.b32.xlu0 %v5189, 51
      %v5191 = vpop.permute.xlu0 %5190
      %v5192 = vrot.slane %v5191, 7
      %vm5193 = vcmask 416768
      %v5194 = vsel %vm5193, %v5192, %v5191
      %v5196 = vlaneseq
      %vm5197 = vcmp.ge.s32.totalorder %v5196, 51
      %vm5198 = vcmp.lt.s32.totalorder %v5196, 307
      %vm5199 = vmand %vm5197, %vm5198
      %5200 = vst.msk [vmem:[#allocation2] ss:$2 sm:$0x7] %vm5199, %v5194
      %v5203 = vcombine.low %v5159, %v5166
      %v5205 = vunpack.c.l.s4 1966171168
      %v5206 = vunpack.c.0.s8 %v5205
      %v5207 = vlaneseq
      %v5208 = vshrl.u32 %v5207, 7
      %v5209 = vsub.s32 %v5206, %v5208
      %v5210 = vrot.slane %v5203, %v5209
      %v5212 = vunpack.c.l.s4 1966171168
      %v5213 = vunpack.c.0.s8 %v5212
      %v5214 = vlaneseq
      %v5215 = vshrl.u32 %v5214, 7
      %v5216 = vsub.s32 %v5213, %v5215
      %v5217 = vrot.slane %v5210, %v5216
      %5218 = vrot.lane.b32.xlu0 %v5217, 51
      %v5219 = vpop.permute.xlu0 %5218
      %v5220 = vrot.slane %v5219, 7
      %v5221 = vsel %vm5193, %v5220, %v5219
      %s5223 = scalar_lea.vmem [#allocation2], 1
      %5224 = vst.msk [vmem:[%s5223] ss:$2 sm:$0x7] %vm5199, %v5221
      %v5225 = vld [vmem:[#allocation2] sm:$0xf]
      %v5226 = vld [vmem:[%s39] ss:$8 sm:$0x3]
      %v5228 = vlaneseq
      %v5229 = vshrl.u32 %v5228, 7
      %v5230 = vsub.s32 0, %v5229
      %v5231 = vrot.slane %v5226, %v5230
      %v5232 = vlaneseq
      %v5233 = vshrl.u32 %v5232, 7
      %v5234 = vsub.s32 1, %v5233
      %v5235 = vrot.slane %v5226, %v5234
      %v5236 = vcombine.low %v5231, %v5235
      %v5238 = vunpack.c.l.s4 1983009808
      %v5239 = vunpack.c.0.s8 %v5238
      %v5240 = vlaneseq
      %v5241 = vshrl.u32 %v5240, 7
      %v5242 = vsub.s32 %v5239, %v5241
      %v5243 = vrot.slane %v5236, %v5242
      %v5245 = vmul.f32 %v5225, %v5243
      %v5248 = vunpack.c.l.s4 1983009808
      %v5249 = vunpack.c.0.s8 %v5248
      %v5250 = vlaneseq
      %v5251 = vshrl.u32 %v5250, 7
      %v5252 = vsub.s32 %v5249, %v5251
      %v5253 = vrot.slane %v5245, %v5252
      %v5254 = vcombine.high %v5253, %v5253
      %5257 = vst [vmem:[#allocation3] sm:$0x3] %v5253
      %5258 = vst [vmem:[#allocation3 + $0x8] sm:$0x3] %v5254
      %v5259 = vld [vmem:[#allocation2] sm:$0x3f]
      %s5260 = scalar_lea.vmem %s39, 1
      %v5261 = vld [vmem:[%s5260] ss:$8 sm:$0x3]
      %v5263 = vlaneseq
      %v5264 = vshrl.u32 %v5263, 7
      %v5265 = vsub.s32 0, %v5264
      %v5266 = vrot.slane %v5261, %v5265
      %v5267 = vlaneseq
      %v5268 = vshrl.u32 %v5267, 7
      %v5269 = vsub.s32 1, %v5268
      %v5270 = vrot.slane %v5261, %v5269
      %v5271 = vcombine.low %v5266, %v5270
      %v5273 = vunpack.c.l.s4 1983009808
      %v5274 = vunpack.c.0.s8 %v5273
      %v5275 = vlaneseq
      %v5276 = vshrl.u32 %v5275, 7
      %v5277 = vsub.s32 %v5274, %v5276
      %v5278 = vrot.slane %v5271, %v5277
      %5279 = vrot.lane.b32.xlu0 %v5278, 1
      %v5280 = vpop.permute.xlu0 %5279
      %v5281 = vrot.slane %v5280, 6
      %vm5282 = vcmask 7168
      %v5283 = vsel %vm5282, %v5281, %v5280
      %v5285 = vmul.f32 %v5259, %v5283
      %v5287 = vcombine.low %v5285, %v5285
      %v5289 = vunpack.c.l.s4 1983009808
      %v5290 = vunpack.c.0.s8 %v5289
      %v5291 = vlaneseq
      %v5292 = vshrl.u32 %v5291, 7
      %v5293 = vsub.s32 %v5290, %v5292
      %v5294 = vrot.slane %v5287, %v5293
      %v5296 = vunpack.c.l.s4 1983009808
      %v5297 = vunpack.c.0.s8 %v5296
      %v5298 = vlaneseq
      %v5299 = vshrl.u32 %v5298, 7
      %v5300 = vsub.s32 %v5297, %v5299
      %v5301 = vrot.slane %v5285, %v5300
      %v5302 = vcombine.high %v5294, %v5294
      %5303 = vrot.lane.b32.xlu0 %v5294, 127
      %v5304 = vpop.permute.xlu0 %5303
      %5305 = vrot.lane.b32.xlu0 %v5302, 127
      %v5306 = vpop.permute.xlu0 %5305
      %5307 = vrot.lane.b32.xlu0 %v5301, 127
      %v5308 = vpop.permute.xlu0 %5307
      %vm5309 = vcmask 1039360
      %v5310 = vsel %vm5309, %v5304, %v5306
      %v5311 = vsel %vm5309, %v5306, %v5308
      %5314 = vst [vmem:[#allocation3] sm:$0xc] %v5310
      %5315 = vst [vmem:[#allocation3 + $0x8] sm:$0xc] %v5311
      %v5316 = vld [vmem:[#allocation2] sm:$0x3f]
      %s5317 = scalar_lea.vmem %s39, 2
      %v5318 = vld [vmem:[%s5317] ss:$8 sm:$0x3]
      %v5320 = vlaneseq
      %v5321 = vshrl.u32 %v5320, 7
      %v5322 = vsub.s32 0, %v5321
      %v5323 = vrot.slane %v5318, %v5322
      %v5324 = vlaneseq
      %v5325 = vshrl.u32 %v5324, 7
      %v5326 = vsub.s32 1, %v5325
      %v5327 = vrot.slane %v5318, %v5326
      %v5328 = vcombine.low %v5323, %v5327
      %v5330 = vunpack.c.l.s4 1983009808
      %v5331 = vunpack.c.0.s8 %v5330
      %v5332 = vlaneseq
      %v5333 = vshrl.u32 %v5332, 7
      %v5334 = vsub.s32 %v5331, %v5333
      %v5335 = vrot.slane %v5328, %v5334
      %5336 = vrot.lane.b32.xlu0 %v5335, 2
      %v5337 = vpop.permute.xlu0 %5336
      %v5338 = vrot.slane %v5337, 6
      %vm5339 = vcmask 15360
      %v5340 = vsel %vm5339, %v5338, %v5337
      %v5342 = vmul.f32 %v5316, %v5340
      %v5344 = vcombine.high %v5342, %v5342
      %v5346 = vunpack.c.l.s4 1983009808
      %v5347 = vunpack.c.0.s8 %v5346
      %v5348 = vlaneseq
      %v5349 = vshrl.u32 %v5348, 7
      %v5350 = vsub.s32 %v5347, %v5349
      %v5351 = vrot.slane %v5342, %v5350
      %v5353 = vunpack.c.l.s4 1983009808
      %v5354 = vunpack.c.0.s8 %v5353
      %v5355 = vlaneseq
      %v5356 = vshrl.u32 %v5355, 7
      %v5357 = vsub.s32 %v5354, %v5356
      %v5358 = vrot.slane %v5344, %v5357
      %v5359 = vcombine.low %v5351, %v5351
      %v5360 = vcombine.low %v5358, %v5358
      %5361 = vrot.lane.b32.xlu0 %v5359, 126
      %v5362 = vpop.permute.xlu0 %5361
      %5363 = vrot.lane.b32.xlu0 %v5351, 126
      %v5364 = vpop.permute.xlu0 %5363
      %5365 = vrot.lane.b32.xlu0 %v5360, 126
      %v5366 = vpop.permute.xlu0 %5365
      %vm5367 = vcmask 1031168
      %v5368 = vsel %vm5367, %v5362, %v5364
      %v5369 = vsel %vm5367, %v5364, %v5366
      %5372 = vst [vmem:[#allocation3] sm:$0x30] %v5368
      %5373 = vst [vmem:[#allocation3 + $0x8] sm:$0x30] %v5369
      %v5374 = vld [vmem:[#allocation2] sm:$0x3f]
      %s5375 = scalar_lea.vmem %s39, 3
      %v5376 = vld [vmem:[%s5375] ss:$8 sm:$0x3]
      %v5378 = vlaneseq
      %v5379 = vshrl.u32 %v5378, 7
      %v5380 = vsub.s32 0, %v5379
      %v5381 = vrot.slane %v5376, %v5380
      %v5382 = vlaneseq
      %v5383 = vshrl.u32 %v5382, 7
      %v5384 = vsub.s32 1, %v5383
      %v5385 = vrot.slane %v5376, %v5384
      %v5386 = vcombine.low %v5381, %v5385
      %v5388 = vunpack.c.l.s4 1983009808
      %v5389 = vunpack.c.0.s8 %v5388
      %v5390 = vlaneseq
      %v5391 = vshrl.u32 %v5390, 7
      %v5392 = vsub.s32 %v5389, %v5391
      %v5393 = vrot.slane %v5386, %v5392
      %5394 = vrot.lane.b32.xlu0 %v5393, 3
      %v5395 = vpop.permute.xlu0 %5394
      %v5396 = vrot.slane %v5395, 6
      %vm5397 = vcmask 23552
      %v5398 = vsel %vm5397, %v5396, %v5395
      %v5400 = vmul.f32 %v5374, %v5398
      %v5402 = vcombine.low %v5400, %v5400
      %v5404 = vunpack.c.l.s4 1983009808
      %v5405 = vunpack.c.0.s8 %v5404
      %v5406 = vlaneseq
      %v5407 = vshrl.u32 %v5406, 7
      %v5408 = vsub.s32 %v5405, %v5407
      %v5409 = vrot.slane %v5402, %v5408
      %v5411 = vunpack.c.l.s4 1983009808
      %v5412 = vunpack.c.0.s8 %v5411
      %v5413 = vlaneseq
      %v5414 = vshrl.u32 %v5413, 7
      %v5415 = vsub.s32 %v5412, %v5414
      %v5416 = vrot.slane %v5400, %v5415
      %v5417 = vcombine.low %v5409, %v5409
      %v5418 = vcombine.low %v5416, %v5416
      %5419 = vrot.lane.b32.xlu0 %v5417, 125
      %v5420 = vpop.permute.xlu0 %5419
      %5421 = vrot.lane.b32.xlu0 %v5409, 125
      %v5422 = vpop.permute.xlu0 %5421
      %5423 = vrot.lane.b32.xlu0 %v5418, 125
      %v5424 = vpop.permute.xlu0 %5423
      %vm5425 = vcmask 1022976
      %v5426 = vsel %vm5425, %v5420, %v5422
      %v5427 = vsel %vm5425, %v5422, %v5424
      %5430 = vst [vmem:[#allocation3] sm:$0xc0] %v5426
      %5431 = vst [vmem:[#allocation3 + $0x8] sm:$0xc0] %v5427
      %v5432 = vld [vmem:[#allocation2] sm:$0x3f]
      %s5433 = scalar_lea.vmem %s39, 4
      %v5434 = vld [vmem:[%s5433] ss:$8 sm:$0x3]
      %v5436 = vlaneseq
      %v5437 = vshrl.u32 %v5436, 7
      %v5438 = vsub.s32 0, %v5437
      %v5439 = vrot.slane %v5434, %v5438
      %v5440 = vlaneseq
      %v5441 = vshrl.u32 %v5440, 7
      %v5442 = vsub.s32 1, %v5441
      %v5443 = vrot.slane %v5434, %v5442
      %v5444 = vcombine.low %v5439, %v5443
      %v5446 = vunpack.c.l.s4 1983009808
      %v5447 = vunpack.c.0.s8 %v5446
      %v5448 = vlaneseq
      %v5449 = vshrl.u32 %v5448, 7
      %v5450 = vsub.s32 %v5447, %v5449
      %v5451 = vrot.slane %v5444, %v5450
      %5452 = vrot.lane.b32.xlu0 %v5451, 4
      %v5453 = vpop.permute.xlu0 %5452
      %v5454 = vrot.slane %v5453, 6
      %vm5455 = vcmask 31744
      %v5456 = vsel %vm5455, %v5454, %v5453
      %v5458 = vmul.f32 %v5432, %v5456
      %v5460 = vcombine.high %v5458, %v5458
      %v5462 = vunpack.c.l.s4 1983009808
      %v5463 = vunpack.c.0.s8 %v5462
      %v5464 = vlaneseq
      %v5465 = vshrl.u32 %v5464, 7
      %v5466 = vsub.s32 %v5463, %v5465
      %v5467 = vrot.slane %v5458, %v5466
      %v5469 = vunpack.c.l.s4 1983009808
      %v5470 = vunpack.c.0.s8 %v5469
      %v5471 = vlaneseq
      %v5472 = vshrl.u32 %v5471, 7
      %v5473 = vsub.s32 %v5470, %v5472
      %v5474 = vrot.slane %v5460, %v5473
      %v5475 = vcombine.high %v5467, %v5467
      %5476 = vrot.lane.b32.xlu0 %v5467, 124
      %v5477 = vpop.permute.xlu0 %5476
      %5478 = vrot.lane.b32.xlu0 %v5475, 124
      %v5479 = vpop.permute.xlu0 %5478
      %5480 = vrot.lane.b32.xlu0 %v5474, 124
      %v5481 = vpop.permute.xlu0 %5480
      %vm5482 = vcmask 1014784
      %v5483 = vsel %vm5482, %v5477, %v5479
      %v5484 = vsel %vm5482, %v5479, %v5481
      %5487 = vst [vmem:[#allocation3 + $0x10] sm:$0x3] %v5483
      %5488 = vst [vmem:[#allocation3 + $0x18] sm:$0x3] %v5484
      %v5489 = vld [vmem:[#allocation2] sm:$0x3f]
      %s5490 = scalar_lea.vmem %s39, 5
      %v5491 = vld [vmem:[%s5490] ss:$8 sm:$0x3]
      %v5493 = vlaneseq
      %v5494 = vshrl.u32 %v5493, 7
      %v5495 = vsub.s32 0, %v5494
      %v5496 = vrot.slane %v5491, %v5495
      %v5497 = vlaneseq
      %v5498 = vshrl.u32 %v5497, 7
      %v5499 = vsub.s32 1, %v5498
      %v5500 = vrot.slane %v5491, %v5499
      %v5501 = vcombine.low %v5496, %v5500
      %v5503 = vunpack.c.l.s4 1983009808
      %v5504 = vunpack.c.0.s8 %v5503
      %v5505 = vlaneseq
      %v5506 = vshrl.u32 %v5505, 7
      %v5507 = vsub.s32 %v5504, %v5506
      %v5508 = vrot.slane %v5501, %v5507
      %5509 = vrot.lane.b32.xlu0 %v5508, 5
      %v5510 = vpop.permute.xlu0 %5509
      %v5511 = vrot.slane %v5510, 6
      %vm5512 = vcmask 39936
      %v5513 = vsel %vm5512, %v5511, %v5510
      %v5515 = vmul.f32 %v5489, %v5513
      %v5517 = vcombine.low %v5515, %v5515
      %v5519 = vunpack.c.l.s4 1983009808
      %v5520 = vunpack.c.0.s8 %v5519
      %v5521 = vlaneseq
      %v5522 = vshrl.u32 %v5521, 7
      %v5523 = vsub.s32 %v5520, %v5522
      %v5524 = vrot.slane %v5517, %v5523
      %v5526 = vunpack.c.l.s4 1983009808
      %v5527 = vunpack.c.0.s8 %v5526
      %v5528 = vlaneseq
      %v5529 = vshrl.u32 %v5528, 7
      %v5530 = vsub.s32 %v5527, %v5529
      %v5531 = vrot.slane %v5515, %v5530
      %v5532 = vcombine.high %v5524, %v5524
      %5533 = vrot.lane.b32.xlu0 %v5524, 123
      %v5534 = vpop.permute.xlu0 %5533
      %5535 = vrot.lane.b32.xlu0 %v5532, 123
      %v5536 = vpop.permute.xlu0 %5535
      %5537 = vrot.lane.b32.xlu0 %v5531, 123
      %v5538 = vpop.permute.xlu0 %5537
      %vm5539 = vcmask 1006592
      %v5540 = vsel %vm5539, %v5534, %v5536
      %v5541 = vsel %vm5539, %v5536, %v5538
      %5544 = vst [vmem:[#allocation3 + $0x10] sm:$0xc] %v5540
      %5545 = vst [vmem:[#allocation3 + $0x18] sm:$0xc] %v5541
      %v5546 = vld [vmem:[#allocation2] sm:$0x3f]
      %s5547 = scalar_lea.vmem %s39, 6
      %v5548 = vld [vmem:[%s5547] ss:$8 sm:$0x3]
      %v5550 = vlaneseq
      %v5551 = vshrl.u32 %v5550, 7
      %v5552 = vsub.s32 0, %v5551
      %v5553 = vrot.slane %v5548, %v5552
      %v5554 = vlaneseq
      %v5555 = vshrl.u32 %v5554, 7
      %v5556 = vsub.s32 1, %v5555
      %v5557 = vrot.slane %v5548, %v5556
      %v5558 = vcombine.low %v5553, %v5557
      %v5560 = vunpack.c.l.s4 1983009808
      %v5561 = vunpack.c.0.s8 %v5560
      %v5562 = vlaneseq
      %v5563 = vshrl.u32 %v5562, 7
      %v5564 = vsub.s32 %v5561, %v5563
      %v5565 = vrot.slane %v5558, %v5564
      %5566 = vrot.lane.b32.xlu0 %v5565, 6
      %v5567 = vpop.permute.xlu0 %5566
      %v5568 = vrot.slane %v5567, 6
      %v5569 = vsel %vm4530, %v5568, %v5567
      %v5571 = vmul.f32 %v5546, %v5569
      %v5573 = vcombine.high %v5571, %v5571
      %v5575 = vunpack.c.l.s4 1983009808
      %v5576 = vunpack.c.0.s8 %v5575
      %v5577 = vlaneseq
      %v5578 = vshrl.u32 %v5577, 7
      %v5579 = vsub.s32 %v5576, %v5578
      %v5580 = vrot.slane %v5571, %v5579
      %v5582 = vunpack.c.l.s4 1983009808
      %v5583 = vunpack.c.0.s8 %v5582
      %v5584 = vlaneseq
      %v5585 = vshrl.u32 %v5584, 7
      %v5586 = vsub.s32 %v5583, %v5585
      %v5587 = vrot.slane %v5573, %v5586
      %v5588 = vcombine.low %v5580, %v5580
      %v5589 = vcombine.low %v5587, %v5587
      %5590 = vrot.lane.b32.xlu0 %v5588, 122
      %v5591 = vpop.permute.xlu0 %5590
      %5592 = vrot.lane.b32.xlu0 %v5580, 122
      %v5593 = vpop.permute.xlu0 %5592
      %5594 = vrot.lane.b32.xlu0 %v5589, 122
      %v5595 = vpop.permute.xlu0 %5594
      %vm5596 = vcmask 998400
      %v5597 = vsel %vm5596, %v5591, %v5593
      %v5598 = vsel %vm5596, %v5593, %v5595
      %5601 = vst [vmem:[#allocation3 + $0x10] sm:$0x30] %v5597
      %5602 = vst [vmem:[#allocation3 + $0x18] sm:$0x30] %v5598
      %v5603 = vld [vmem:[#allocation2] sm:$0x3f]
      %s5604 = scalar_lea.vmem %s39, 7
      %v5605 = vld [vmem:[%s5604] ss:$8 sm:$0x3]
      %v5607 = vlaneseq
      %v5608 = vshrl.u32 %v5607, 7
      %v5609 = vsub.s32 0, %v5608
      %v5610 = vrot.slane %v5605, %v5609
      %v5611 = vlaneseq
      %v5612 = vshrl.u32 %v5611, 7
      %v5613 = vsub.s32 1, %v5612
      %v5614 = vrot.slane %v5605, %v5613
      %v5615 = vcombine.low %v5610, %v5614
      %v5617 = vunpack.c.l.s4 1983009808
      %v5618 = vunpack.c.0.s8 %v5617
      %v5619 = vlaneseq
      %v5620 = vshrl.u32 %v5619, 7
      %v5621 = vsub.s32 %v5618, %v5620
      %v5622 = vrot.slane %v5615, %v5621
      %5623 = vrot.lane.b32.xlu0 %v5622, 16
      %v5624 = vpop.permute.xlu0 %5623
      %v5625 = vrot.slane %v5624, 6
      %v5626 = vsel %vm2206, %v5625, %v5624
      %v5628 = vmul.f32 %v5603, %v5626
      %v5630 = vcombine.low %v5628, %v5628
      %v5632 = vunpack.c.l.s4 1983009808
      %v5633 = vunpack.c.0.s8 %v5632
      %v5634 = vlaneseq
      %v5635 = vshrl.u32 %v5634, 7
      %v5636 = vsub.s32 %v5633, %v5635
      %v5637 = vrot.slane %v5630, %v5636
      %v5639 = vunpack.c.l.s4 1983009808
      %v5640 = vunpack.c.0.s8 %v5639
      %v5641 = vlaneseq
      %v5642 = vshrl.u32 %v5641, 7
      %v5643 = vsub.s32 %v5640, %v5642
      %v5644 = vrot.slane %v5628, %v5643
      %v5645 = vcombine.low %v5637, %v5637
      %v5646 = vcombine.low %v5644, %v5644
      %5647 = vrot.lane.b32.xlu0 %v5645, 112
      %v5648 = vpop.permute.xlu0 %5647
      %5649 = vrot.lane.b32.xlu0 %v5637, 112
      %v5650 = vpop.permute.xlu0 %5649
      %5651 = vrot.lane.b32.xlu0 %v5646, 112
      %v5652 = vpop.permute.xlu0 %5651
      %vm5653 = vcmask 916480
      %v5654 = vsel %vm5653, %v5648, %v5650
      %v5655 = vsel %vm5653, %v5650, %v5652
      %5658 = vst [vmem:[#allocation3 + $0x10] sm:$0xc0] %v5654
      %5659 = vst [vmem:[#allocation3 + $0x18] sm:$0xc0] %v5655
      %v5660 = vld [vmem:[#allocation2] sm:$0x3f]
      %s5661 = scalar_lea.vmem %s39, 16
      %v5662 = vld [vmem:[%s5661] ss:$8 sm:$0x3]
      %v5664 = vlaneseq
      %v5665 = vshrl.u32 %v5664, 7
      %v5666 = vsub.s32 0, %v5665
      %v5667 = vrot.slane %v5662, %v5666
      %v5668 = vlaneseq
      %v5669 = vshrl.u32 %v5668, 7
      %v5670 = vsub.s32 1, %v5669
      %v5671 = vrot.slane %v5662, %v5670
      %v5672 = vcombine.low %v5667, %v5671
      %v5674 = vunpack.c.l.s4 1983009808
      %v5675 = vunpack.c.0.s8 %v5674
      %v5676 = vlaneseq
      %v5677 = vshrl.u32 %v5676, 7
      %v5678 = vsub.s32 %v5675, %v5677
      %v5679 = vrot.slane %v5672, %v5678
      %5680 = vrot.lane.b32.xlu0 %v5679, 17
      %v5681 = vpop.permute.xlu0 %5680
      %v5682 = vrot.slane %v5681, 6
      %vm5683 = vcmask 138240
      %v5684 = vsel %vm5683, %v5682, %v5681
      %v5686 = vmul.f32 %v5660, %v5684
      %v5688 = vcombine.high %v5686, %v5686
      %v5690 = vunpack.c.l.s4 1983009808
      %v5691 = vunpack.c.0.s8 %v5690
      %v5692 = vlaneseq
      %v5693 = vshrl.u32 %v5692, 7
      %v5694 = vsub.s32 %v5691, %v5693
      %v5695 = vrot.slane %v5686, %v5694
      %v5697 = vunpack.c.l.s4 1983009808
      %v5698 = vunpack.c.0.s8 %v5697
      %v5699 = vlaneseq
      %v5700 = vshrl.u32 %v5699, 7
      %v5701 = vsub.s32 %v5698, %v5700
      %v5702 = vrot.slane %v5688, %v5701
      %v5703 = vcombine.high %v5695, %v5695
      %5704 = vrot.lane.b32.xlu0 %v5695, 111
      %v5705 = vpop.permute.xlu0 %5704
      %5706 = vrot.lane.b32.xlu0 %v5703, 111
      %v5707 = vpop.permute.xlu0 %5706
      %5708 = vrot.lane.b32.xlu0 %v5702, 111
      %v5709 = vpop.permute.xlu0 %5708
      %vm5710 = vcmask 908288
      %v5711 = vsel %vm5710, %v5705, %v5707
      %v5712 = vsel %vm5710, %v5707, %v5709
      %5715 = vst [vmem:[#allocation3 + $0x20] sm:$0x3] %v5711
      %5716 = vst [vmem:[#allocation3 + $0x28] sm:$0x3] %v5712
      %v5717 = vld [vmem:[#allocation2] sm:$0x3f]
      %s5718 = scalar_lea.vmem %s39, 17
      %v5719 = vld [vmem:[%s5718] ss:$8 sm:$0x3]
      %v5721 = vlaneseq
      %v5722 = vshrl.u32 %v5721, 7
      %v5723 = vsub.s32 0, %v5722
      %v5724 = vrot.slane %v5719, %v5723
      %v5725 = vlaneseq
      %v5726 = vshrl.u32 %v5725, 7
      %v5727 = vsub.s32 1, %v5726
      %v5728 = vrot.slane %v5719, %v5727
      %v5729 = vcombine.low %v5724, %v5728
      %v5731 = vunpack.c.l.s4 1983009808
      %v5732 = vunpack.c.0.s8 %v5731
      %v5733 = vlaneseq
      %v5734 = vshrl.u32 %v5733, 7
      %v5735 = vsub.s32 %v5732, %v5734
      %v5736 = vrot.slane %v5729, %v5735
      %5737 = vrot.lane.b32.xlu0 %v5736, 18
      %v5738 = vpop.permute.xlu0 %5737
      %v5739 = vrot.slane %v5738, 6
      %vm5740 = vcmask 146432
      %v5741 = vsel %vm5740, %v5739, %v5738
      %v5743 = vmul.f32 %v5717, %v5741
      %v5745 = vcombine.low %v5743, %v5743
      %v5747 = vunpack.c.l.s4 1983009808
      %v5748 = vunpack.c.0.s8 %v5747
      %v5749 = vlaneseq
      %v5750 = vshrl.u32 %v5749, 7
      %v5751 = vsub.s32 %v5748, %v5750
      %v5752 = vrot.slane %v5745, %v5751
      %v5754 = vunpack.c.l.s4 1983009808
      %v5755 = vunpack.c.0.s8 %v5754
      %v5756 = vlaneseq
      %v5757 = vshrl.u32 %v5756, 7
      %v5758 = vsub.s32 %v5755, %v5757
      %v5759 = vrot.slane %v5743, %v5758
      %v5760 = vcombine.high %v5752, %v5752
      %5761 = vrot.lane.b32.xlu0 %v5752, 110
      %v5762 = vpop.permute.xlu0 %5761
      %5763 = vrot.lane.b32.xlu0 %v5760, 110
      %v5764 = vpop.permute.xlu0 %5763
      %5765 = vrot.lane.b32.xlu0 %v5759, 110
      %v5766 = vpop.permute.xlu0 %5765
      %vm5767 = vcmask 900096
      %v5768 = vsel %vm5767, %v5762, %v5764
      %v5769 = vsel %vm5767, %v5764, %v5766
      %5772 = vst [vmem:[#allocation3 + $0x20] sm:$0xc] %v5768
      %5773 = vst [vmem:[#allocation3 + $0x28] sm:$0xc] %v5769
      %v5774 = vld [vmem:[#allocation2] sm:$0x3f]
      %s5775 = scalar_lea.vmem %s39, 18
      %v5776 = vld [vmem:[%s5775] ss:$8 sm:$0x3]
      %v5778 = vlaneseq
      %v5779 = vshrl.u32 %v5778, 7
      %v5780 = vsub.s32 0, %v5779
      %v5781 = vrot.slane %v5776, %v5780
      %v5782 = vlaneseq
      %v5783 = vshrl.u32 %v5782, 7
      %v5784 = vsub.s32 1, %v5783
      %v5785 = vrot.slane %v5776, %v5784
      %v5786 = vcombine.low %v5781, %v5785
      %v5788 = vunpack.c.l.s4 1983009808
      %v5789 = vunpack.c.0.s8 %v5788
      %v5790 = vlaneseq
      %v5791 = vshrl.u32 %v5790, 7
      %v5792 = vsub.s32 %v5789, %v5791
      %v5793 = vrot.slane %v5786, %v5792
      %5794 = vrot.lane.b32.xlu0 %v5793, 19
      %v5795 = vpop.permute.xlu0 %5794
      %v5796 = vrot.slane %v5795, 6
      %vm5797 = vcmask 154624
      %v5798 = vsel %vm5797, %v5796, %v5795
      %v5800 = vmul.f32 %v5774, %v5798
      %v5802 = vcombine.high %v5800, %v5800
      %v5804 = vunpack.c.l.s4 1983009808
      %v5805 = vunpack.c.0.s8 %v5804
      %v5806 = vlaneseq
      %v5807 = vshrl.u32 %v5806, 7
      %v5808 = vsub.s32 %v5805, %v5807
      %v5809 = vrot.slane %v5800, %v5808
      %v5811 = vunpack.c.l.s4 1983009808
      %v5812 = vunpack.c.0.s8 %v5811
      %v5813 = vlaneseq
      %v5814 = vshrl.u32 %v5813, 7
      %v5815 = vsub.s32 %v5812, %v5814
      %v5816 = vrot.slane %v5802, %v5815
      %v5817 = vcombine.low %v5809, %v5809
      %v5818 = vcombine.low %v5816, %v5816
      %5819 = vrot.lane.b32.xlu0 %v5817, 109
      %v5820 = vpop.permute.xlu0 %5819
      %5821 = vrot.lane.b32.xlu0 %v5809, 109
      %v5822 = vpop.permute.xlu0 %5821
      %5823 = vrot.lane.b32.xlu0 %v5818, 109
      %v5824 = vpop.permute.xlu0 %5823
      %vm5825 = vcmask 891904
      %v5826 = vsel %vm5825, %v5820, %v5822
      %v5827 = vsel %vm5825, %v5822, %v5824
      %5830 = vst [vmem:[#allocation3 + $0x20] sm:$0x30] %v5826
      %5831 = vst [vmem:[#allocation3 + $0x28] sm:$0x30] %v5827
      %v5832 = vld [vmem:[#allocation2] sm:$0x3f]
      %s5833 = scalar_lea.vmem %s39, 19
      %v5834 = vld [vmem:[%s5833] ss:$8 sm:$0x3]
      %v5836 = vlaneseq
      %v5837 = vshrl.u32 %v5836, 7
      %v5838 = vsub.s32 0, %v5837
      %v5839 = vrot.slane %v5834, %v5838
      %v5840 = vlaneseq
      %v5841 = vshrl.u32 %v5840, 7
      %v5842 = vsub.s32 1, %v5841
      %v5843 = vrot.slane %v5834, %v5842
      %v5844 = vcombine.low %v5839, %v5843
      %v5846 = vunpack.c.l.s4 1983009808
      %v5847 = vunpack.c.0.s8 %v5846
      %v5848 = vlaneseq
      %v5849 = vshrl.u32 %v5848, 7
      %v5850 = vsub.s32 %v5847, %v5849
      %v5851 = vrot.slane %v5844, %v5850
      %5852 = vrot.lane.b32.xlu0 %v5851, 20
      %v5853 = vpop.permute.xlu0 %5852
      %v5854 = vrot.slane %v5853, 6
      %vm5855 = vcmask 162816
      %v5856 = vsel %vm5855, %v5854, %v5853
      %v5858 = vmul.f32 %v5832, %v5856
      %v5860 = vcombine.low %v5858, %v5858
      %v5862 = vunpack.c.l.s4 1983009808
      %v5863 = vunpack.c.0.s8 %v5862
      %v5864 = vlaneseq
      %v5865 = vshrl.u32 %v5864, 7
      %v5866 = vsub.s32 %v5863, %v5865
      %v5867 = vrot.slane %v5860, %v5866
      %v5869 = vunpack.c.l.s4 1983009808
      %v5870 = vunpack.c.0.s8 %v5869
      %v5871 = vlaneseq
      %v5872 = vshrl.u32 %v5871, 7
      %v5873 = vsub.s32 %v5870, %v5872
      %v5874 = vrot.slane %v5858, %v5873
      %v5875 = vcombine.low %v5867, %v5867
      %v5876 = vcombine.low %v5874, %v5874
      %5877 = vrot.lane.b32.xlu0 %v5875, 108
      %v5878 = vpop.permute.xlu0 %5877
      %5879 = vrot.lane.b32.xlu0 %v5867, 108
      %v5880 = vpop.permute.xlu0 %5879
      %5881 = vrot.lane.b32.xlu0 %v5876, 108
      %v5882 = vpop.permute.xlu0 %5881
      %vm5883 = vcmask 883712
      %v5884 = vsel %vm5883, %v5878, %v5880
      %v5885 = vsel %vm5883, %v5880, %v5882
      %5888 = vst [vmem:[#allocation3 + $0x20] sm:$0xc0] %v5884
      %5889 = vst [vmem:[#allocation3 + $0x28] sm:$0xc0] %v5885
      %v5890 = vld [vmem:[#allocation2] sm:$0x3f]
      %s5891 = scalar_lea.vmem %s39, 20
      %v5892 = vld [vmem:[%s5891] ss:$8 sm:$0x3]
      %v5894 = vlaneseq
      %v5895 = vshrl.u32 %v5894, 7
      %v5896 = vsub.s32 0, %v5895
      %v5897 = vrot.slane %v5892, %v5896
      %v5898 = vlaneseq
      %v5899 = vshrl.u32 %v5898, 7
      %v5900 = vsub.s32 1, %v5899
      %v5901 = vrot.slane %v5892, %v5900
      %v5902 = vcombine.low %v5897, %v5901
      %v5904 = vunpack.c.l.s4 1983009808
      %v5905 = vunpack.c.0.s8 %v5904
      %v5906 = vlaneseq
      %v5907 = vshrl.u32 %v5906, 7
      %v5908 = vsub.s32 %v5905, %v5907
      %v5909 = vrot.slane %v5902, %v5908
      %5910 = vrot.lane.b32.xlu0 %v5909, 21
      %v5911 = vpop.permute.xlu0 %5910
      %v5912 = vrot.slane %v5911, 6
      %vm5913 = vcmask 171008
      %v5914 = vsel %vm5913, %v5912, %v5911
      %v5916 = vmul.f32 %v5890, %v5914
      %v5918 = vcombine.high %v5916, %v5916
      %v5920 = vunpack.c.l.s4 1983009808
      %v5921 = vunpack.c.0.s8 %v5920
      %v5922 = vlaneseq
      %v5923 = vshrl.u32 %v5922, 7
      %v5924 = vsub.s32 %v5921, %v5923
      %v5925 = vrot.slane %v5916, %v5924
      %v5927 = vunpack.c.l.s4 1983009808
      %v5928 = vunpack.c.0.s8 %v5927
      %v5929 = vlaneseq
      %v5930 = vshrl.u32 %v5929, 7
      %v5931 = vsub.s32 %v5928, %v5930
      %v5932 = vrot.slane %v5918, %v5931
      %v5933 = vcombine.high %v5925, %v5925
      %5934 = vrot.lane.b32.xlu0 %v5925, 107
      %v5935 = vpop.permute.xlu0 %5934
      %5936 = vrot.lane.b32.xlu0 %v5933, 107
      %v5937 = vpop.permute.xlu0 %5936
      %5938 = vrot.lane.b32.xlu0 %v5932, 107
      %v5939 = vpop.permute.xlu0 %5938
      %vm5940 = vcmask 875520
      %v5941 = vsel %vm5940, %v5935, %v5937
      %v5942 = vsel %vm5940, %v5937, %v5939
      %5945 = vst [vmem:[#allocation3 + $0x30] sm:$0x3] %v5941
      %5946 = vst [vmem:[#allocation3 + $0x38] sm:$0x3] %v5942
      %v5947 = vld [vmem:[#allocation2] sm:$0x3f]
      %s5948 = scalar_lea.vmem %s39, 21
      %v5949 = vld [vmem:[%s5948] ss:$8 sm:$0x3]
      %v5951 = vlaneseq
      %v5952 = vshrl.u32 %v5951, 7
      %v5953 = vsub.s32 0, %v5952
      %v5954 = vrot.slane %v5949, %v5953
      %v5955 = vlaneseq
      %v5956 = vshrl.u32 %v5955, 7
      %v5957 = vsub.s32 1, %v5956
      %v5958 = vrot.slane %v5949, %v5957
      %v5959 = vcombine.low %v5954, %v5958
      %v5961 = vunpack.c.l.s4 1983009808
      %v5962 = vunpack.c.0.s8 %v5961
      %v5963 = vlaneseq
      %v5964 = vshrl.u32 %v5963, 7
      %v5965 = vsub.s32 %v5962, %v5964
      %v5966 = vrot.slane %v5959, %v5965
      %5967 = vrot.lane.b32.xlu0 %v5966, 22
      %v5968 = vpop.permute.xlu0 %5967
      %v5969 = vrot.slane %v5968, 6
      %vm5970 = vcmask 179200
      %v5971 = vsel %vm5970, %v5969, %v5968
      %v5973 = vmul.f32 %v5947, %v5971
      %v5975 = vcombine.low %v5973, %v5973
      %v5977 = vunpack.c.l.s4 1983009808
      %v5978 = vunpack.c.0.s8 %v5977
      %v5979 = vlaneseq
      %v5980 = vshrl.u32 %v5979, 7
      %v5981 = vsub.s32 %v5978, %v5980
      %v5982 = vrot.slane %v5975, %v5981
      %v5984 = vunpack.c.l.s4 1983009808
      %v5985 = vunpack.c.0.s8 %v5984
      %v5986 = vlaneseq
      %v5987 = vshrl.u32 %v5986, 7
      %v5988 = vsub.s32 %v5985, %v5987
      %v5989 = vrot.slane %v5973, %v5988
      %v5990 = vcombine.high %v5982, %v5982
      %5991 = vrot.lane.b32.xlu0 %v5982, 106
      %v5992 = vpop.permute.xlu0 %5991
      %5993 = vrot.lane.b32.xlu0 %v5990, 106
      %v5994 = vpop.permute.xlu0 %5993
      %5995 = vrot.lane.b32.xlu0 %v5989, 106
      %v5996 = vpop.permute.xlu0 %5995
      %vm5997 = vcmask 867328
      %v5998 = vsel %vm5997, %v5992, %v5994
      %v5999 = vsel %vm5997, %v5994, %v5996
      %6002 = vst [vmem:[#allocation3 + $0x30] sm:$0xc] %v5998
      %6003 = vst [vmem:[#allocation3 + $0x38] sm:$0xc] %v5999
      %v6004 = vld [vmem:[#allocation2] sm:$0x3f]
      %s6005 = scalar_lea.vmem %s39, 22
      %v6006 = vld [vmem:[%s6005] ss:$8 sm:$0x3]
      %v6008 = vlaneseq
      %v6009 = vshrl.u32 %v6008, 7
      %v6010 = vsub.s32 0, %v6009
      %v6011 = vrot.slane %v6006, %v6010
      %v6012 = vlaneseq
      %v6013 = vshrl.u32 %v6012, 7
      %v6014 = vsub.s32 1, %v6013
      %v6015 = vrot.slane %v6006, %v6014
      %v6016 = vcombine.low %v6011, %v6015
      %v6018 = vunpack.c.l.s4 1983009808
      %v6019 = vunpack.c.0.s8 %v6018
      %v6020 = vlaneseq
      %v6021 = vshrl.u32 %v6020, 7
      %v6022 = vsub.s32 %v6019, %v6021
      %v6023 = vrot.slane %v6016, %v6022
      %6024 = vrot.lane.b32.xlu0 %v6023, 32
      %v6025 = vpop.permute.xlu0 %6024
      %v6026 = vrot.slane %v6025, 6
      %vm6027 = vcmask 261120
      %v6028 = vsel %vm6027, %v6026, %v6025
      %v6030 = vmul.f32 %v6004, %v6028
      %v6032 = vcombine.high %v6030, %v6030
      %v6034 = vunpack.c.l.s4 1983009808
      %v6035 = vunpack.c.0.s8 %v6034
      %v6036 = vlaneseq
      %v6037 = vshrl.u32 %v6036, 7
      %v6038 = vsub.s32 %v6035, %v6037
      %v6039 = vrot.slane %v6030, %v6038
      %v6041 = vunpack.c.l.s4 1983009808
      %v6042 = vunpack.c.0.s8 %v6041
      %v6043 = vlaneseq
      %v6044 = vshrl.u32 %v6043, 7
      %v6045 = vsub.s32 %v6042, %v6044
      %v6046 = vrot.slane %v6032, %v6045
      %v6047 = vcombine.low %v6039, %v6039
      %v6048 = vcombine.low %v6046, %v6046
      %6049 = vrot.lane.b32.xlu0 %v6047, 96
      %v6050 = vpop.permute.xlu0 %6049
      %6051 = vrot.lane.b32.xlu0 %v6039, 96
      %v6052 = vpop.permute.xlu0 %6051
      %6053 = vrot.lane.b32.xlu0 %v6048, 96
      %v6054 = vpop.permute.xlu0 %6053
      %vm6055 = vcmask 785408
      %v6056 = vsel %vm6055, %v6050, %v6052
      %v6057 = vsel %vm6055, %v6052, %v6054
      %6060 = vst [vmem:[#allocation3 + $0x30] sm:$0x30] %v6056
      %6061 = vst [vmem:[#allocation3 + $0x38] sm:$0x30] %v6057
      %v6062 = vld [vmem:[#allocation2] sm:$0x3f]
      %s6063 = scalar_lea.vmem %s39, 23
      %v6064 = vld [vmem:[%s6063] ss:$8 sm:$0x3]
      %v6066 = vlaneseq
      %v6067 = vshrl.u32 %v6066, 7
      %v6068 = vsub.s32 0, %v6067
      %v6069 = vrot.slane %v6064, %v6068
      %v6070 = vlaneseq
      %v6071 = vshrl.u32 %v6070, 7
      %v6072 = vsub.s32 1, %v6071
      %v6073 = vrot.slane %v6064, %v6072
      %v6074 = vcombine.low %v6069, %v6073
      %v6076 = vunpack.c.l.s4 1983009808
      %v6077 = vunpack.c.0.s8 %v6076
      %v6078 = vlaneseq
      %v6079 = vshrl.u32 %v6078, 7
      %v6080 = vsub.s32 %v6077, %v6079
      %v6081 = vrot.slane %v6074, %v6080
      %6082 = vrot.lane.b32.xlu0 %v6081, 33
      %v6083 = vpop.permute.xlu0 %6082
      %v6084 = vrot.slane %v6083, 6
      %vm6085 = vcmask 269312
      %v6086 = vsel %vm6085, %v6084, %v6083
      %v6088 = vmul.f32 %v6062, %v6086
      %v6090 = vcombine.low %v6088, %v6088
      %v6092 = vunpack.c.l.s4 1983009808
      %v6093 = vunpack.c.0.s8 %v6092
      %v6094 = vlaneseq
      %v6095 = vshrl.u32 %v6094, 7
      %v6096 = vsub.s32 %v6093, %v6095
      %v6097 = vrot.slane %v6090, %v6096
      %v6099 = vunpack.c.l.s4 1983009808
      %v6100 = vunpack.c.0.s8 %v6099
      %v6101 = vlaneseq
      %v6102 = vshrl.u32 %v6101, 7
      %v6103 = vsub.s32 %v6100, %v6102
      %v6104 = vrot.slane %v6088, %v6103
      %v6105 = vcombine.low %v6097, %v6097
      %v6106 = vcombine.low %v6104, %v6104
      %6107 = vrot.lane.b32.xlu0 %v6105, 95
      %v6108 = vpop.permute.xlu0 %6107
      %6109 = vrot.lane.b32.xlu0 %v6097, 95
      %v6110 = vpop.permute.xlu0 %6109
      %6111 = vrot.lane.b32.xlu0 %v6106, 95
      %v6112 = vpop.permute.xlu0 %6111
      %vm6113 = vcmask 777216
      %v6114 = vsel %vm6113, %v6108, %v6110
      %v6115 = vsel %vm6113, %v6110, %v6112
      %6118 = vst [vmem:[#allocation3 + $0x30] sm:$0xc0] %v6114
      %6119 = vst [vmem:[#allocation3 + $0x38] sm:$0xc0] %v6115
      %v6120 = vld [vmem:[#allocation2] sm:$0x3f]
      %s6121 = scalar_lea.vmem %s39, 32
      %v6122 = vld [vmem:[%s6121] ss:$8 sm:$0x3]
      %v6124 = vlaneseq
      %v6125 = vshrl.u32 %v6124, 7
      %v6126 = vsub.s32 0, %v6125
      %v6127 = vrot.slane %v6122, %v6126
      %v6128 = vlaneseq
      %v6129 = vshrl.u32 %v6128, 7
      %v6130 = vsub.s32 1, %v6129
      %v6131 = vrot.slane %v6122, %v6130
      %v6132 = vcombine.low %v6127, %v6131
      %v6134 = vunpack.c.l.s4 1983009808
      %v6135 = vunpack.c.0.s8 %v6134
      %v6136 = vlaneseq
      %v6137 = vshrl.u32 %v6136, 7
      %v6138 = vsub.s32 %v6135, %v6137
      %v6139 = vrot.slane %v6132, %v6138
      %6140 = vrot.lane.b32.xlu0 %v6139, 34
      %v6141 = vpop.permute.xlu0 %6140
      %v6142 = vrot.slane %v6141, 6
      %vm6143 = vcmask 277504
      %v6144 = vsel %vm6143, %v6142, %v6141
      %v6146 = vmul.f32 %v6120, %v6144
      %v6148 = vcombine.high %v6146, %v6146
      %v6150 = vunpack.c.l.s4 1983009808
      %v6151 = vunpack.c.0.s8 %v6150
      %v6152 = vlaneseq
      %v6153 = vshrl.u32 %v6152, 7
      %v6154 = vsub.s32 %v6151, %v6153
      %v6155 = vrot.slane %v6146, %v6154
      %v6157 = vunpack.c.l.s4 1983009808
      %v6158 = vunpack.c.0.s8 %v6157
      %v6159 = vlaneseq
      %v6160 = vshrl.u32 %v6159, 7
      %v6161 = vsub.s32 %v6158, %v6160
      %v6162 = vrot.slane %v6148, %v6161
      %v6163 = vcombine.high %v6155, %v6155
      %6164 = vrot.lane.b32.xlu0 %v6155, 94
      %v6165 = vpop.permute.xlu0 %6164
      %6166 = vrot.lane.b32.xlu0 %v6163, 94
      %v6167 = vpop.permute.xlu0 %6166
      %6168 = vrot.lane.b32.xlu0 %v6162, 94
      %v6169 = vpop.permute.xlu0 %6168
      %vm6170 = vcmask 769024
      %v6171 = vsel %vm6170, %v6165, %v6167
      %v6172 = vsel %vm6170, %v6167, %v6169
      %6175 = vst [vmem:[#allocation3 + $0x40] sm:$0x3] %v6171
      %6176 = vst [vmem:[#allocation3 + $0x48] sm:$0x3] %v6172
      %v6177 = vld [vmem:[#allocation2] sm:$0x3f]
      %s6178 = scalar_lea.vmem %s39, 33
      %v6179 = vld [vmem:[%s6178] ss:$8 sm:$0x3]
      %v6181 = vlaneseq
      %v6182 = vshrl.u32 %v6181, 7
      %v6183 = vsub.s32 0, %v6182
      %v6184 = vrot.slane %v6179, %v6183
      %v6185 = vlaneseq
      %v6186 = vshrl.u32 %v6185, 7
      %v6187 = vsub.s32 1, %v6186
      %v6188 = vrot.slane %v6179, %v6187
      %v6189 = vcombine.low %v6184, %v6188
      %v6191 = vunpack.c.l.s4 1983009808
      %v6192 = vunpack.c.0.s8 %v6191
      %v6193 = vlaneseq
      %v6194 = vshrl.u32 %v6193, 7
      %v6195 = vsub.s32 %v6192, %v6194
      %v6196 = vrot.slane %v6189, %v6195
      %6197 = vrot.lane.b32.xlu0 %v6196, 35
      %v6198 = vpop.permute.xlu0 %6197
      %v6199 = vrot.slane %v6198, 6
      %vm6200 = vcmask 285696
      %v6201 = vsel %vm6200, %v6199, %v6198
      %v6203 = vmul.f32 %v6177, %v6201
      %v6205 = vcombine.low %v6203, %v6203
      %v6207 = vunpack.c.l.s4 1983009808
      %v6208 = vunpack.c.0.s8 %v6207
      %v6209 = vlaneseq
      %v6210 = vshrl.u32 %v6209, 7
      %v6211 = vsub.s32 %v6208, %v6210
      %v6212 = vrot.slane %v6205, %v6211
      %v6214 = vunpack.c.l.s4 1983009808
      %v6215 = vunpack.c.0.s8 %v6214
      %v6216 = vlaneseq
      %v6217 = vshrl.u32 %v6216, 7
      %v6218 = vsub.s32 %v6215, %v6217
      %v6219 = vrot.slane %v6203, %v6218
      %v6220 = vcombine.high %v6212, %v6212
      %6221 = vrot.lane.b32.xlu0 %v6212, 93
      %v6222 = vpop.permute.xlu0 %6221
      %6223 = vrot.lane.b32.xlu0 %v6220, 93
      %v6224 = vpop.permute.xlu0 %6223
      %6225 = vrot.lane.b32.xlu0 %v6219, 93
      %v6226 = vpop.permute.xlu0 %6225
      %vm6227 = vcmask 760832
      %v6228 = vsel %vm6227, %v6222, %v6224
      %v6229 = vsel %vm6227, %v6224, %v6226
      %6232 = vst [vmem:[#allocation3 + $0x40] sm:$0xc] %v6228
      %6233 = vst [vmem:[#allocation3 + $0x48] sm:$0xc] %v6229
      %v6234 = vld [vmem:[#allocation2] sm:$0x3f]
      %s6235 = scalar_lea.vmem %s39, 34
      %v6236 = vld [vmem:[%s6235] ss:$8 sm:$0x3]
      %v6238 = vlaneseq
      %v6239 = vshrl.u32 %v6238, 7
      %v6240 = vsub.s32 0, %v6239
      %v6241 = vrot.slane %v6236, %v6240
      %v6242 = vlaneseq
      %v6243 = vshrl.u32 %v6242, 7
      %v6244 = vsub.s32 1, %v6243
      %v6245 = vrot.slane %v6236, %v6244
      %v6246 = vcombine.low %v6241, %v6245
      %v6248 = vunpack.c.l.s4 1983009808
      %v6249 = vunpack.c.0.s8 %v6248
      %v6250 = vlaneseq
      %v6251 = vshrl.u32 %v6250, 7
      %v6252 = vsub.s32 %v6249, %v6251
      %v6253 = vrot.slane %v6246, %v6252
      %6254 = vrot.lane.b32.xlu0 %v6253, 36
      %v6255 = vpop.permute.xlu0 %6254
      %v6256 = vrot.slane %v6255, 6
      %vm6257 = vcmask 293888
      %v6258 = vsel %vm6257, %v6256, %v6255
      %v6260 = vmul.f32 %v6234, %v6258
      %v6262 = vcombine.high %v6260, %v6260
      %v6264 = vunpack.c.l.s4 1983009808
      %v6265 = vunpack.c.0.s8 %v6264
      %v6266 = vlaneseq
      %v6267 = vshrl.u32 %v6266, 7
      %v6268 = vsub.s32 %v6265, %v6267
      %v6269 = vrot.slane %v6260, %v6268
      %v6271 = vunpack.c.l.s4 1983009808
      %v6272 = vunpack.c.0.s8 %v6271
      %v6273 = vlaneseq
      %v6274 = vshrl.u32 %v6273, 7
      %v6275 = vsub.s32 %v6272, %v6274
      %v6276 = vrot.slane %v6262, %v6275
      %v6277 = vcombine.low %v6269, %v6269
      %v6278 = vcombine.low %v6276, %v6276
      %6279 = vrot.lane.b32.xlu0 %v6277, 92
      %v6280 = vpop.permute.xlu0 %6279
      %6281 = vrot.lane.b32.xlu0 %v6269, 92
      %v6282 = vpop.permute.xlu0 %6281
      %6283 = vrot.lane.b32.xlu0 %v6278, 92
      %v6284 = vpop.permute.xlu0 %6283
      %vm6285 = vcmask 752640
      %v6286 = vsel %vm6285, %v6280, %v6282
      %v6287 = vsel %vm6285, %v6282, %v6284
      %6290 = vst [vmem:[#allocation3 + $0x40] sm:$0x30] %v6286
      %6291 = vst [vmem:[#allocation3 + $0x48] sm:$0x30] %v6287
      %v6292 = vld [vmem:[#allocation2] sm:$0x3f]
      %s6293 = scalar_lea.vmem %s39, 35
      %v6294 = vld [vmem:[%s6293] ss:$8 sm:$0x3]
      %v6296 = vlaneseq
      %v6297 = vshrl.u32 %v6296, 7
      %v6298 = vsub.s32 0, %v6297
      %v6299 = vrot.slane %v6294, %v6298
      %v6300 = vlaneseq
      %v6301 = vshrl.u32 %v6300, 7
      %v6302 = vsub.s32 1, %v6301
      %v6303 = vrot.slane %v6294, %v6302
      %v6304 = vcombine.low %v6299, %v6303
      %v6306 = vunpack.c.l.s4 1983009808
      %v6307 = vunpack.c.0.s8 %v6306
      %v6308 = vlaneseq
      %v6309 = vshrl.u32 %v6308, 7
      %v6310 = vsub.s32 %v6307, %v6309
      %v6311 = vrot.slane %v6304, %v6310
      %6312 = vrot.lane.b32.xlu0 %v6311, 37
      %v6313 = vpop.permute.xlu0 %6312
      %v6314 = vrot.slane %v6313, 6
      %vm6315 = vcmask 302080
      %v6316 = vsel %vm6315, %v6314, %v6313
      %v6318 = vmul.f32 %v6292, %v6316
      %v6320 = vcombine.low %v6318, %v6318
      %v6322 = vunpack.c.l.s4 1983009808
      %v6323 = vunpack.c.0.s8 %v6322
      %v6324 = vlaneseq
      %v6325 = vshrl.u32 %v6324, 7
      %v6326 = vsub.s32 %v6323, %v6325
      %v6327 = vrot.slane %v6320, %v6326
      %v6329 = vunpack.c.l.s4 1983009808
      %v6330 = vunpack.c.0.s8 %v6329
      %v6331 = vlaneseq
      %v6332 = vshrl.u32 %v6331, 7
      %v6333 = vsub.s32 %v6330, %v6332
      %v6334 = vrot.slane %v6318, %v6333
      %v6335 = vcombine.low %v6327, %v6327
      %v6336 = vcombine.low %v6334, %v6334
      %6337 = vrot.lane.b32.xlu0 %v6335, 91
      %v6338 = vpop.permute.xlu0 %6337
      %6339 = vrot.lane.b32.xlu0 %v6327, 91
      %v6340 = vpop.permute.xlu0 %6339
      %6341 = vrot.lane.b32.xlu0 %v6336, 91
      %v6342 = vpop.permute.xlu0 %6341
      %vm6343 = vcmask 744448
      %v6344 = vsel %vm6343, %v6338, %v6340
      %v6345 = vsel %vm6343, %v6340, %v6342
      %6348 = vst [vmem:[#allocation3 + $0x40] sm:$0xc0] %v6344
      %6349 = vst [vmem:[#allocation3 + $0x48] sm:$0xc0] %v6345
      %v6350 = vld [vmem:[#allocation2] sm:$0x3f]
      %s6351 = scalar_lea.vmem %s39, 36
      %v6352 = vld [vmem:[%s6351] ss:$8 sm:$0x3]
      %v6354 = vlaneseq
      %v6355 = vshrl.u32 %v6354, 7
      %v6356 = vsub.s32 0, %v6355
      %v6357 = vrot.slane %v6352, %v6356
      %v6358 = vlaneseq
      %v6359 = vshrl.u32 %v6358, 7
      %v6360 = vsub.s32 1, %v6359
      %v6361 = vrot.slane %v6352, %v6360
      %v6362 = vcombine.low %v6357, %v6361
      %v6364 = vunpack.c.l.s4 1983009808
      %v6365 = vunpack.c.0.s8 %v6364
      %v6366 = vlaneseq
      %v6367 = vshrl.u32 %v6366, 7
      %v6368 = vsub.s32 %v6365, %v6367
      %v6369 = vrot.slane %v6362, %v6368
      %6370 = vrot.lane.b32.xlu0 %v6369, 38
      %v6371 = vpop.permute.xlu0 %6370
      %v6372 = vrot.slane %v6371, 6
      %vm6373 = vcmask 310272
      %v6374 = vsel %vm6373, %v6372, %v6371
      %v6376 = vmul.f32 %v6350, %v6374
      %v6378 = vcombine.high %v6376, %v6376
      %v6380 = vunpack.c.l.s4 1983009808
      %v6381 = vunpack.c.0.s8 %v6380
      %v6382 = vlaneseq
      %v6383 = vshrl.u32 %v6382, 7
      %v6384 = vsub.s32 %v6381, %v6383
      %v6385 = vrot.slane %v6376, %v6384
      %v6387 = vunpack.c.l.s4 1983009808
      %v6388 = vunpack.c.0.s8 %v6387
      %v6389 = vlaneseq
      %v6390 = vshrl.u32 %v6389, 7
      %v6391 = vsub.s32 %v6388, %v6390
      %v6392 = vrot.slane %v6378, %v6391
      %v6393 = vcombine.high %v6385, %v6385
      %6394 = vrot.lane.b32.xlu0 %v6385, 90
      %v6395 = vpop.permute.xlu0 %6394
      %6396 = vrot.lane.b32.xlu0 %v6393, 90
      %v6397 = vpop.permute.xlu0 %6396
      %6398 = vrot.lane.b32.xlu0 %v6392, 90
      %v6399 = vpop.permute.xlu0 %6398
      %vm6400 = vcmask 736256
      %v6401 = vsel %vm6400, %v6395, %v6397
      %v6402 = vsel %vm6400, %v6397, %v6399
      %6405 = vst [vmem:[#allocation3 + $0x50] sm:$0x3] %v6401
      %6406 = vst [vmem:[#allocation3 + $0x58] sm:$0x3] %v6402
      %v6407 = vld [vmem:[#allocation2] sm:$0x3f]
      %s6408 = scalar_lea.vmem %s39, 37
      %v6409 = vld [vmem:[%s6408] ss:$8 sm:$0x3]
      %v6411 = vlaneseq
      %v6412 = vshrl.u32 %v6411, 7
      %v6413 = vsub.s32 0, %v6412
      %v6414 = vrot.slane %v6409, %v6413
      %v6415 = vlaneseq
      %v6416 = vshrl.u32 %v6415, 7
      %v6417 = vsub.s32 1, %v6416
      %v6418 = vrot.slane %v6409, %v6417
      %v6419 = vcombine.low %v6414, %v6418
      %v6421 = vunpack.c.l.s4 1983009808
      %v6422 = vunpack.c.0.s8 %v6421
      %v6423 = vlaneseq
      %v6424 = vshrl.u32 %v6423, 7
      %v6425 = vsub.s32 %v6422, %v6424
      %v6426 = vrot.slane %v6419, %v6425
      %6427 = vrot.lane.b32.xlu0 %v6426, 48
      %v6428 = vpop.permute.xlu0 %6427
      %v6429 = vrot.slane %v6428, 6
      %vm6430 = vcmask 392192
      %v6431 = vsel %vm6430, %v6429, %v6428
      %v6433 = vmul.f32 %v6407, %v6431
      %v6435 = vcombine.low %v6433, %v6433
      %v6437 = vunpack.c.l.s4 1983009808
      %v6438 = vunpack.c.0.s8 %v6437
      %v6439 = vlaneseq
      %v6440 = vshrl.u32 %v6439, 7
      %v6441 = vsub.s32 %v6438, %v6440
      %v6442 = vrot.slane %v6435, %v6441
      %v6444 = vunpack.c.l.s4 1983009808
      %v6445 = vunpack.c.0.s8 %v6444
      %v6446 = vlaneseq
      %v6447 = vshrl.u32 %v6446, 7
      %v6448 = vsub.s32 %v6445, %v6447
      %v6449 = vrot.slane %v6433, %v6448
      %v6450 = vcombine.high %v6442, %v6442
      %6451 = vrot.lane.b32.xlu0 %v6442, 80
      %v6452 = vpop.permute.xlu0 %6451
      %6453 = vrot.lane.b32.xlu0 %v6450, 80
      %v6454 = vpop.permute.xlu0 %6453
      %6455 = vrot.lane.b32.xlu0 %v6449, 80
      %v6456 = vpop.permute.xlu0 %6455
      %vm6457 = vcmask 654336
      %v6458 = vsel %vm6457, %v6452, %v6454
      %v6459 = vsel %vm6457, %v6454, %v6456
      %6462 = vst [vmem:[#allocation3 + $0x50] sm:$0xc] %v6458
      %6463 = vst [vmem:[#allocation3 + $0x58] sm:$0xc] %v6459
      %v6464 = vld [vmem:[#allocation2] sm:$0x3f]
      %s6465 = scalar_lea.vmem %s39, 38
      %v6466 = vld [vmem:[%s6465] ss:$8 sm:$0x3]
      %v6468 = vlaneseq
      %v6469 = vshrl.u32 %v6468, 7
      %v6470 = vsub.s32 0, %v6469
      %v6471 = vrot.slane %v6466, %v6470
      %v6472 = vlaneseq
      %v6473 = vshrl.u32 %v6472, 7
      %v6474 = vsub.s32 1, %v6473
      %v6475 = vrot.slane %v6466, %v6474
      %v6476 = vcombine.low %v6471, %v6475
      %v6478 = vunpack.c.l.s4 1983009808
      %v6479 = vunpack.c.0.s8 %v6478
      %v6480 = vlaneseq
      %v6481 = vshrl.u32 %v6480, 7
      %v6482 = vsub.s32 %v6479, %v6481
      %v6483 = vrot.slane %v6476, %v6482
      %6484 = vrot.lane.b32.xlu0 %v6483, 49
      %v6485 = vpop.permute.xlu0 %6484
      %v6486 = vrot.slane %v6485, 6
      %vm6487 = vcmask 400384
      %v6488 = vsel %vm6487, %v6486, %v6485
      %v6490 = vmul.f32 %v6464, %v6488
      %v6492 = vcombine.high %v6490, %v6490
      %v6494 = vunpack.c.l.s4 1983009808
      %v6495 = vunpack.c.0.s8 %v6494
      %v6496 = vlaneseq
      %v6497 = vshrl.u32 %v6496, 7
      %v6498 = vsub.s32 %v6495, %v6497
      %v6499 = vrot.slane %v6490, %v6498
      %v6501 = vunpack.c.l.s4 1983009808
      %v6502 = vunpack.c.0.s8 %v6501
      %v6503 = vlaneseq
      %v6504 = vshrl.u32 %v6503, 7
      %v6505 = vsub.s32 %v6502, %v6504
      %v6506 = vrot.slane %v6492, %v6505
      %v6507 = vcombine.low %v6499, %v6499
      %v6508 = vcombine.low %v6506, %v6506
      %6509 = vrot.lane.b32.xlu0 %v6507, 79
      %v6510 = vpop.permute.xlu0 %6509
      %6511 = vrot.lane.b32.xlu0 %v6499, 79
      %v6512 = vpop.permute.xlu0 %6511
      %6513 = vrot.lane.b32.xlu0 %v6508, 79
      %v6514 = vpop.permute.xlu0 %6513
      %vm6515 = vcmask 646144
      %v6516 = vsel %vm6515, %v6510, %v6512
      %v6517 = vsel %vm6515, %v6512, %v6514
      %6520 = vst [vmem:[#allocation3 + $0x50] sm:$0x30] %v6516
      %6521 = vst [vmem:[#allocation3 + $0x58] sm:$0x30] %v6517
      %v6522 = vld [vmem:[#allocation2] sm:$0x3f]
      %s6523 = scalar_lea.vmem %s39, 39
      %v6524 = vld [vmem:[%s6523] ss:$8 sm:$0x3]
      %v6526 = vlaneseq
      %v6527 = vshrl.u32 %v6526, 7
      %v6528 = vsub.s32 0, %v6527
      %v6529 = vrot.slane %v6524, %v6528
      %v6530 = vlaneseq
      %v6531 = vshrl.u32 %v6530, 7
      %v6532 = vsub.s32 1, %v6531
      %v6533 = vrot.slane %v6524, %v6532
      %v6534 = vcombine.low %v6529, %v6533
      %v6536 = vunpack.c.l.s4 1983009808
      %v6537 = vunpack.c.0.s8 %v6536
      %v6538 = vlaneseq
      %v6539 = vshrl.u32 %v6538, 7
      %v6540 = vsub.s32 %v6537, %v6539
      %v6541 = vrot.slane %v6534, %v6540
      %6542 = vrot.lane.b32.xlu0 %v6541, 50
      %v6543 = vpop.permute.xlu0 %6542
      %v6544 = vrot.slane %v6543, 6
      %vm6545 = vcmask 408576
      %v6546 = vsel %vm6545, %v6544, %v6543
      %v6548 = vmul.f32 %v6522, %v6546
      %v6550 = vcombine.low %v6548, %v6548
      %v6552 = vunpack.c.l.s4 1983009808
      %v6553 = vunpack.c.0.s8 %v6552
      %v6554 = vlaneseq
      %v6555 = vshrl.u32 %v6554, 7
      %v6556 = vsub.s32 %v6553, %v6555
      %v6557 = vrot.slane %v6550, %v6556
      %v6559 = vunpack.c.l.s4 1983009808
      %v6560 = vunpack.c.0.s8 %v6559
      %v6561 = vlaneseq
      %v6562 = vshrl.u32 %v6561, 7
      %v6563 = vsub.s32 %v6560, %v6562
      %v6564 = vrot.slane %v6548, %v6563
      %v6565 = vcombine.low %v6557, %v6557
      %v6566 = vcombine.low %v6564, %v6564
      %6567 = vrot.lane.b32.xlu0 %v6565, 78
      %v6568 = vpop.permute.xlu0 %6567
      %6569 = vrot.lane.b32.xlu0 %v6557, 78
      %v6570 = vpop.permute.xlu0 %6569
      %6571 = vrot.lane.b32.xlu0 %v6566, 78
      %v6572 = vpop.permute.xlu0 %6571
      %vm6573 = vcmask 637952
      %v6574 = vsel %vm6573, %v6568, %v6570
      %v6575 = vsel %vm6573, %v6570, %v6572
      %6578 = vst [vmem:[#allocation3 + $0x50] sm:$0xc0] %v6574
      %6579 = vst [vmem:[#allocation3 + $0x58] sm:$0xc0] %v6575
      %v6580 = vld [vmem:[#allocation2] sm:$0x3f]
      %s6581 = scalar_lea.vmem %s39, 48
      %v6582 = vld [vmem:[%s6581] ss:$8 sm:$0x3]
      %v6584 = vlaneseq
      %v6585 = vshrl.u32 %v6584, 7
      %v6586 = vsub.s32 0, %v6585
      %v6587 = vrot.slane %v6582, %v6586
      %v6588 = vlaneseq
      %v6589 = vshrl.u32 %v6588, 7
      %v6590 = vsub.s32 1, %v6589
      %v6591 = vrot.slane %v6582, %v6590
      %v6592 = vcombine.low %v6587, %v6591
      %v6594 = vunpack.c.l.s4 1983009808
      %v6595 = vunpack.c.0.s8 %v6594
      %v6596 = vlaneseq
      %v6597 = vshrl.u32 %v6596, 7
      %v6598 = vsub.s32 %v6595, %v6597
      %v6599 = vrot.slane %v6592, %v6598
      %6600 = vrot.lane.b32.xlu0 %v6599, 51
      %v6601 = vpop.permute.xlu0 %6600
      %v6602 = vrot.slane %v6601, 6
      %v6603 = vsel %vm5193, %v6602, %v6601
      %v6605 = vmul.f32 %v6580, %v6603
      %v6607 = vcombine.high %v6605, %v6605
      %v6609 = vunpack.c.l.s4 1983009808
      %v6610 = vunpack.c.0.s8 %v6609
      %v6611 = vlaneseq
      %v6612 = vshrl.u32 %v6611, 7
      %v6613 = vsub.s32 %v6610, %v6612
      %v6614 = vrot.slane %v6605, %v6613
      %v6616 = vunpack.c.l.s4 1983009808
      %v6617 = vunpack.c.0.s8 %v6616
      %v6618 = vlaneseq
      %v6619 = vshrl.u32 %v6618, 7
      %v6620 = vsub.s32 %v6617, %v6619
      %v6621 = vrot.slane %v6607, %v6620
      %v6622 = vcombine.high %v6614, %v6614
      %6623 = vrot.lane.b32.xlu0 %v6614, 77
      %v6624 = vpop.permute.xlu0 %6623
      %6625 = vrot.lane.b32.xlu0 %v6622, 77
      %v6626 = vpop.permute.xlu0 %6625
      %6627 = vrot.lane.b32.xlu0 %v6621, 77
      %v6628 = vpop.permute.xlu0 %6627
      %vm6629 = vcmask 629760
      %v6630 = vsel %vm6629, %v6624, %v6626
      %v6631 = vsel %vm6629, %v6626, %v6628
      %6634 = vst [vmem:[#allocation3 + $0x60] sm:$0x3] %v6630
      %6635 = vst [vmem:[#allocation3 + $0x68] sm:$0x3] %v6631
      %v6636 = vld [vmem:[#allocation2] sm:$0x3f]
      %s6637 = scalar_lea.vmem %s39, 49
      %v6638 = vld [vmem:[%s6637] ss:$8 sm:$0x3]
      %v6640 = vlaneseq
      %v6641 = vshrl.u32 %v6640, 7
      %v6642 = vsub.s32 0, %v6641
      %v6643 = vrot.slane %v6638, %v6642
      %v6644 = vlaneseq
      %v6645 = vshrl.u32 %v6644, 7
      %v6646 = vsub.s32 1, %v6645
      %v6647 = vrot.slane %v6638, %v6646
      %v6648 = vcombine.low %v6643, %v6647
      %v6650 = vunpack.c.l.s4 1983009808
      %v6651 = vunpack.c.0.s8 %v6650
      %v6652 = vlaneseq
      %v6653 = vshrl.u32 %v6652, 7
      %v6654 = vsub.s32 %v6651, %v6653
      %v6655 = vrot.slane %v6648, %v6654
      %6656 = vrot.lane.b32.xlu0 %v6655, 52
      %v6657 = vpop.permute.xlu0 %6656
      %v6658 = vrot.slane %v6657, 6
      %vm6659 = vcmask 424960
      %v6660 = vsel %vm6659, %v6658, %v6657
      %v6662 = vmul.f32 %v6636, %v6660
      %v6664 = vcombine.low %v6662, %v6662
      %v6666 = vunpack.c.l.s4 1983009808
      %v6667 = vunpack.c.0.s8 %v6666
      %v6668 = vlaneseq
      %v6669 = vshrl.u32 %v6668, 7
      %v6670 = vsub.s32 %v6667, %v6669
      %v6671 = vrot.slane %v6664, %v6670
      %v6673 = vunpack.c.l.s4 1983009808
      %v6674 = vunpack.c.0.s8 %v6673
      %v6675 = vlaneseq
      %v6676 = vshrl.u32 %v6675, 7
      %v6677 = vsub.s32 %v6674, %v6676
      %v6678 = vrot.slane %v6662, %v6677
      %v6679 = vcombine.high %v6671, %v6671
      %6680 = vrot.lane.b32.xlu0 %v6671, 76
      %v6681 = vpop.permute.xlu0 %6680
      %6682 = vrot.lane.b32.xlu0 %v6679, 76
      %v6683 = vpop.permute.xlu0 %6682
      %6684 = vrot.lane.b32.xlu0 %v6678, 76
      %v6685 = vpop.permute.xlu0 %6684
      %vm6686 = vcmask 621568
      %v6687 = vsel %vm6686, %v6681, %v6683
      %v6688 = vsel %vm6686, %v6683, %v6685
      %6691 = vst [vmem:[#allocation3 + $0x60] sm:$0xc] %v6687
      %6692 = vst [vmem:[#allocation3 + $0x68] sm:$0xc] %v6688
      %v6693 = vld [vmem:[#allocation2] sm:$0x3f]
      %s6694 = scalar_lea.vmem %s39, 50
      %v6695 = vld [vmem:[%s6694] ss:$8 sm:$0x3]
      %v6697 = vlaneseq
      %v6698 = vshrl.u32 %v6697, 7
      %v6699 = vsub.s32 0, %v6698
      %v6700 = vrot.slane %v6695, %v6699
      %v6701 = vlaneseq
      %v6702 = vshrl.u32 %v6701, 7
      %v6703 = vsub.s32 1, %v6702
      %v6704 = vrot.slane %v6695, %v6703
      %v6705 = vcombine.low %v6700, %v6704
      %v6707 = vunpack.c.l.s4 1983009808
      %v6708 = vunpack.c.0.s8 %v6707
      %v6709 = vlaneseq
      %v6710 = vshrl.u32 %v6709, 7
      %v6711 = vsub.s32 %v6708, %v6710
      %v6712 = vrot.slane %v6705, %v6711
      %6713 = vrot.lane.b32.xlu0 %v6712, 53
      %v6714 = vpop.permute.xlu0 %6713
      %v6715 = vrot.slane %v6714, 6
      %vm6716 = vcmask 433152
      %v6717 = vsel %vm6716, %v6715, %v6714
      %v6719 = vmul.f32 %v6693, %v6717
      %v6721 = vcombine.high %v6719, %v6719
      %v6723 = vunpack.c.l.s4 1983009808
      %v6724 = vunpack.c.0.s8 %v6723
      %v6725 = vlaneseq
      %v6726 = vshrl.u32 %v6725, 7
      %v6727 = vsub.s32 %v6724, %v6726
      %v6728 = vrot.slane %v6719, %v6727
      %v6730 = vunpack.c.l.s4 1983009808
      %v6731 = vunpack.c.0.s8 %v6730
      %v6732 = vlaneseq
      %v6733 = vshrl.u32 %v6732, 7
      %v6734 = vsub.s32 %v6731, %v6733
      %v6735 = vrot.slane %v6721, %v6734
      %v6736 = vcombine.low %v6728, %v6728
      %v6737 = vcombine.low %v6735, %v6735
      %6738 = vrot.lane.b32.xlu0 %v6736, 75
      %v6739 = vpop.permute.xlu0 %6738
      %6740 = vrot.lane.b32.xlu0 %v6728, 75
      %v6741 = vpop.permute.xlu0 %6740
      %6742 = vrot.lane.b32.xlu0 %v6737, 75
      %v6743 = vpop.permute.xlu0 %6742
      %vm6744 = vcmask 613376
      %v6745 = vsel %vm6744, %v6739, %v6741
      %v6746 = vsel %vm6744, %v6741, %v6743
      %6749 = vst [vmem:[#allocation3 + $0x60] sm:$0x30] %v6745
      %6750 = vst [vmem:[#allocation3 + $0x68] sm:$0x30] %v6746
      %v6751 = vld [vmem:[#allocation2] sm:$0x3f]
      %s6752 = scalar_lea.vmem %s39, 51
      %v6753 = vld [vmem:[%s6752] ss:$8 sm:$0x3]
      %v6755 = vlaneseq
      %v6756 = vshrl.u32 %v6755, 7
      %v6757 = vsub.s32 0, %v6756
      %v6758 = vrot.slane %v6753, %v6757
      %v6759 = vlaneseq
      %v6760 = vshrl.u32 %v6759, 7
      %v6761 = vsub.s32 1, %v6760
      %v6762 = vrot.slane %v6753, %v6761
      %v6763 = vcombine.low %v6758, %v6762
      %v6765 = vunpack.c.l.s4 1983009808
      %v6766 = vunpack.c.0.s8 %v6765
      %v6767 = vlaneseq
      %v6768 = vshrl.u32 %v6767, 7
      %v6769 = vsub.s32 %v6766, %v6768
      %v6770 = vrot.slane %v6763, %v6769
      %6771 = vrot.lane.b32.xlu0 %v6770, 54
      %v6772 = vpop.permute.xlu0 %6771
      %v6773 = vrot.slane %v6772, 6
      %vm6774 = vcmask 441344
      %v6775 = vsel %vm6774, %v6773, %v6772
      %v6777 = vmul.f32 %v6751, %v6775
      %v6779 = vcombine.low %v6777, %v6777
      %v6781 = vunpack.c.l.s4 1983009808
      %v6782 = vunpack.c.0.s8 %v6781
      %v6783 = vlaneseq
      %v6784 = vshrl.u32 %v6783, 7
      %v6785 = vsub.s32 %v6782, %v6784
      %v6786 = vrot.slane %v6779, %v6785
      %v6788 = vunpack.c.l.s4 1983009808
      %v6789 = vunpack.c.0.s8 %v6788
      %v6790 = vlaneseq
      %v6791 = vshrl.u32 %v6790, 7
      %v6792 = vsub.s32 %v6789, %v6791
      %v6793 = vrot.slane %v6777, %v6792
      %v6794 = vcombine.low %v6786, %v6786
      %v6795 = vcombine.low %v6793, %v6793
      %6796 = vrot.lane.b32.xlu0 %v6794, 74
      %v6797 = vpop.permute.xlu0 %6796
      %6798 = vrot.lane.b32.xlu0 %v6786, 74
      %v6799 = vpop.permute.xlu0 %6798
      %6800 = vrot.lane.b32.xlu0 %v6795, 74
      %v6801 = vpop.permute.xlu0 %6800
      %vm6802 = vcmask 605184
      %v6803 = vsel %vm6802, %v6797, %v6799
      %v6804 = vsel %vm6802, %v6799, %v6801
      %6807 = vst [vmem:[#allocation3 + $0x60] sm:$0xc0] %v6803
      %6808 = vst [vmem:[#allocation3 + $0x68] sm:$0xc0] %v6804
      %v6809 = vld [vmem:[#allocation2] sm:$0x3f]
      %s6810 = scalar_lea.vmem %s39, 52
      %v6811 = vld [vmem:[%s6810] ss:$8 sm:$0x3]
      %v6813 = vlaneseq
      %v6814 = vshrl.u32 %v6813, 7
      %v6815 = vsub.s32 0, %v6814
      %v6816 = vrot.slane %v6811, %v6815
      %v6817 = vlaneseq
      %v6818 = vshrl.u32 %v6817, 7
      %v6819 = vsub.s32 1, %v6818
      %v6820 = vrot.slane %v6811, %v6819
      %v6821 = vcombine.low %v6816, %v6820
      %v6823 = vunpack.c.l.s4 1983009808
      %v6824 = vunpack.c.0.s8 %v6823
      %v6825 = vlaneseq
      %v6826 = vshrl.u32 %v6825, 7
      %v6827 = vsub.s32 %v6824, %v6826
      %v6828 = vrot.slane %v6821, %v6827
      %6829 = vrot.lane.b32.xlu0 %v6828, 64
      %v6830 = vpop.permute.xlu0 %6829
      %v6831 = vrot.slane %v6830, 6
      %v6832 = vsel %vm2485, %v6831, %v6830
      %v6834 = vmul.f32 %v6809, %v6832
      %v6836 = vcombine.high %v6834, %v6834
      %v6838 = vunpack.c.l.s4 1983009808
      %v6839 = vunpack.c.0.s8 %v6838
      %v6840 = vlaneseq
      %v6841 = vshrl.u32 %v6840, 7
      %v6842 = vsub.s32 %v6839, %v6841
      %v6843 = vrot.slane %v6834, %v6842
      %v6845 = vunpack.c.l.s4 1983009808
      %v6846 = vunpack.c.0.s8 %v6845
      %v6847 = vlaneseq
      %v6848 = vshrl.u32 %v6847, 7
      %v6849 = vsub.s32 %v6846, %v6848
      %v6850 = vrot.slane %v6836, %v6849
      %v6851 = vcombine.high %v6843, %v6843
      %6852 = vrot.lane.b32.xlu0 %v6843, 64
      %v6853 = vpop.permute.xlu0 %6852
      %6854 = vrot.lane.b32.xlu0 %v6851, 64
      %v6855 = vpop.permute.xlu0 %6854
      %6856 = vrot.lane.b32.xlu0 %v6850, 64
      %v6857 = vpop.permute.xlu0 %6856
      %v6858 = vsel %vm2485, %v6853, %v6855
      %v6859 = vsel %vm2485, %v6855, %v6857
      %6862 = vst [vmem:[#allocation3 + $0x70] sm:$0x3] %v6858
      %6863 = vst [vmem:[#allocation3 + $0x78] sm:$0x3] %v6859
      %v6864 = vld [vmem:[#allocation2] sm:$0x3f]
      %s6865 = scalar_lea.vmem %s39, 53
      %v6866 = vld [vmem:[%s6865] ss:$8 sm:$0x3]
      %v6868 = vlaneseq
      %v6869 = vshrl.u32 %v6868, 7
      %v6870 = vsub.s32 0, %v6869
      %v6871 = vrot.slane %v6866, %v6870
      %v6872 = vlaneseq
      %v6873 = vshrl.u32 %v6872, 7
      %v6874 = vsub.s32 1, %v6873
      %v6875 = vrot.slane %v6866, %v6874
      %v6876 = vcombine.low %v6871, %v6875
      %v6878 = vunpack.c.l.s4 1983009808
      %v6879 = vunpack.c.0.s8 %v6878
      %v6880 = vlaneseq
      %v6881 = vshrl.u32 %v6880, 7
      %v6882 = vsub.s32 %v6879, %v6881
      %v6883 = vrot.slane %v6876, %v6882
      %6884 = vrot.lane.b32.xlu0 %v6883, 65
      %v6885 = vpop.permute.xlu0 %6884
      %v6886 = vrot.slane %v6885, 6
      %vm6887 = vcmask 531456
      %v6888 = vsel %vm6887, %v6886, %v6885
      %v6890 = vmul.f32 %v6864, %v6888
      %v6892 = vcombine.low %v6890, %v6890
      %v6894 = vunpack.c.l.s4 1983009808
      %v6895 = vunpack.c.0.s8 %v6894
      %v6896 = vlaneseq
      %v6897 = vshrl.u32 %v6896, 7
      %v6898 = vsub.s32 %v6895, %v6897
      %v6899 = vrot.slane %v6892, %v6898
      %v6901 = vunpack.c.l.s4 1983009808
      %v6902 = vunpack.c.0.s8 %v6901
      %v6903 = vlaneseq
      %v6904 = vshrl.u32 %v6903, 7
      %v6905 = vsub.s32 %v6902, %v6904
      %v6906 = vrot.slane %v6890, %v6905
      %v6907 = vcombine.high %v6899, %v6899
      %6908 = vrot.lane.b32.xlu0 %v6899, 63
      %v6909 = vpop.permute.xlu0 %6908
      %6910 = vrot.lane.b32.xlu0 %v6907, 63
      %v6911 = vpop.permute.xlu0 %6910
      %6912 = vrot.lane.b32.xlu0 %v6906, 63
      %v6913 = vpop.permute.xlu0 %6912
      %vm6914 = vcmask 515072
      %v6915 = vsel %vm6914, %v6909, %v6911
      %v6916 = vsel %vm6914, %v6911, %v6913
      %6919 = vst [vmem:[#allocation3 + $0x70] sm:$0xc] %v6915
      %6920 = vst [vmem:[#allocation3 + $0x78] sm:$0xc] %v6916
      %v6921 = vld [vmem:[#allocation2] sm:$0x3f]
      %s6922 = scalar_lea.vmem %s39, 54
      %v6923 = vld [vmem:[%s6922] ss:$8 sm:$0x3]
      %v6925 = vlaneseq
      %v6926 = vshrl.u32 %v6925, 7
      %v6927 = vsub.s32 0, %v6926
      %v6928 = vrot.slane %v6923, %v6927
      %v6929 = vlaneseq
      %v6930 = vshrl.u32 %v6929, 7
      %v6931 = vsub.s32 1, %v6930
      %v6932 = vrot.slane %v6923, %v6931
      %v6933 = vcombine.low %v6928, %v6932
      %v6935 = vunpack.c.l.s4 1983009808
      %v6936 = vunpack.c.0.s8 %v6935
      %v6937 = vlaneseq
      %v6938 = vshrl.u32 %v6937, 7
      %v6939 = vsub.s32 %v6936, %v6938
      %v6940 = vrot.slane %v6933, %v6939
      %6941 = vrot.lane.b32.xlu0 %v6940, 66
      %v6942 = vpop.permute.xlu0 %6941
      %v6943 = vrot.slane %v6942, 6
      %vm6944 = vcmask 539648
      %v6945 = vsel %vm6944, %v6943, %v6942
      %v6947 = vmul.f32 %v6921, %v6945
      %v6949 = vcombine.high %v6947, %v6947
      %v6951 = vunpack.c.l.s4 1983009808
      %v6952 = vunpack.c.0.s8 %v6951
      %v6953 = vlaneseq
      %v6954 = vshrl.u32 %v6953, 7
      %v6955 = vsub.s32 %v6952, %v6954
      %v6956 = vrot.slane %v6947, %v6955
      %v6958 = vunpack.c.l.s4 1983009808
      %v6959 = vunpack.c.0.s8 %v6958
      %v6960 = vlaneseq
      %v6961 = vshrl.u32 %v6960, 7
      %v6962 = vsub.s32 %v6959, %v6961
      %v6963 = vrot.slane %v6949, %v6962
      %v6964 = vcombine.low %v6956, %v6956
      %v6965 = vcombine.low %v6963, %v6963
      %6966 = vrot.lane.b32.xlu0 %v6964, 62
      %v6967 = vpop.permute.xlu0 %6966
      %6968 = vrot.lane.b32.xlu0 %v6956, 62
      %v6969 = vpop.permute.xlu0 %6968
      %6970 = vrot.lane.b32.xlu0 %v6965, 62
      %v6971 = vpop.permute.xlu0 %6970
      %vm6972 = vcmask 506880
      %v6973 = vsel %vm6972, %v6967, %v6969
      %v6974 = vsel %vm6972, %v6969, %v6971
      %6977 = vst [vmem:[#allocation3 + $0x70] sm:$0x30] %v6973
      %6978 = vst [vmem:[#allocation3 + $0x78] sm:$0x30] %v6974
      %v6979 = vld [vmem:[#allocation2] sm:$0x3f]
      %s6980 = scalar_lea.vmem %s39, 55
      %v6981 = vld [vmem:[%s6980] ss:$8 sm:$0x3]
      %v6983 = vlaneseq
      %v6984 = vshrl.u32 %v6983, 7
      %v6985 = vsub.s32 0, %v6984
      %v6986 = vrot.slane %v6981, %v6985
      %v6987 = vlaneseq
      %v6988 = vshrl.u32 %v6987, 7
      %v6989 = vsub.s32 1, %v6988
      %v6990 = vrot.slane %v6981, %v6989
      %v6991 = vcombine.low %v6986, %v6990
      %v6993 = vunpack.c.l.s4 1983009808
      %v6994 = vunpack.c.0.s8 %v6993
      %v6995 = vlaneseq
      %v6996 = vshrl.u32 %v6995, 7
      %v6997 = vsub.s32 %v6994, %v6996
      %v6998 = vrot.slane %v6991, %v6997
      %6999 = vrot.lane.b32.xlu0 %v6998, 67
      %v7000 = vpop.permute.xlu0 %6999
      %v7001 = vrot.slane %v7000, 6
      %vm7002 = vcmask 547840
      %v7003 = vsel %vm7002, %v7001, %v7000
      %v7005 = vmul.f32 %v6979, %v7003
      %v7007 = vcombine.low %v7005, %v7005
      %v7009 = vunpack.c.l.s4 1983009808
      %v7010 = vunpack.c.0.s8 %v7009
      %v7011 = vlaneseq
      %v7012 = vshrl.u32 %v7011, 7
      %v7013 = vsub.s32 %v7010, %v7012
      %v7014 = vrot.slane %v7007, %v7013
      %v7016 = vunpack.c.l.s4 1983009808
      %v7017 = vunpack.c.0.s8 %v7016
      %v7018 = vlaneseq
      %v7019 = vshrl.u32 %v7018, 7
      %v7020 = vsub.s32 %v7017, %v7019
      %v7021 = vrot.slane %v7005, %v7020
      %v7022 = vcombine.low %v7014, %v7014
      %v7023 = vcombine.low %v7021, %v7021
      %7024 = vrot.lane.b32.xlu0 %v7022, 61
      %v7025 = vpop.permute.xlu0 %7024
      %7026 = vrot.lane.b32.xlu0 %v7014, 61
      %v7027 = vpop.permute.xlu0 %7026
      %7028 = vrot.lane.b32.xlu0 %v7023, 61
      %v7029 = vpop.permute.xlu0 %7028
      %vm7030 = vcmask 498688
      %v7031 = vsel %vm7030, %v7025, %v7027
      %v7032 = vsel %vm7030, %v7027, %v7029
      %7035 = vst [vmem:[#allocation3 + $0x70] sm:$0xc0] %v7031
      %7036 = vst [vmem:[#allocation3 + $0x78] sm:$0xc0] %v7032
      %v7037 = vld [vmem:[#allocation2] sm:$0x3f]
      %s7038 = scalar_lea.vmem %s39, 64
      %v7039 = vld [vmem:[%s7038] ss:$8 sm:$0x3]
      %v7041 = vlaneseq
      %v7042 = vshrl.u32 %v7041, 7
      %v7043 = vsub.s32 0, %v7042
      %v7044 = vrot.slane %v7039, %v7043
      %v7045 = vlaneseq
      %v7046 = vshrl.u32 %v7045, 7
      %v7047 = vsub.s32 1, %v7046
      %v7048 = vrot.slane %v7039, %v7047
      %v7049 = vcombine.low %v7044, %v7048
      %v7051 = vunpack.c.l.s4 1983009808
      %v7052 = vunpack.c.0.s8 %v7051
      %v7053 = vlaneseq
      %v7054 = vshrl.u32 %v7053, 7
      %v7055 = vsub.s32 %v7052, %v7054
      %v7056 = vrot.slane %v7049, %v7055
      %7057 = vrot.lane.b32.xlu0 %v7056, 68
      %v7058 = vpop.permute.xlu0 %7057
      %v7059 = vrot.slane %v7058, 6
      %vm7060 = vcmask 556032
      %v7061 = vsel %vm7060, %v7059, %v7058
      %v7063 = vmul.f32 %v7037, %v7061
      %v7065 = vcombine.high %v7063, %v7063
      %v7067 = vunpack.c.l.s4 1983009808
      %v7068 = vunpack.c.0.s8 %v7067
      %v7069 = vlaneseq
      %v7070 = vshrl.u32 %v7069, 7
      %v7071 = vsub.s32 %v7068, %v7070
      %v7072 = vrot.slane %v7063, %v7071
      %v7074 = vunpack.c.l.s4 1983009808
      %v7075 = vunpack.c.0.s8 %v7074
      %v7076 = vlaneseq
      %v7077 = vshrl.u32 %v7076, 7
      %v7078 = vsub.s32 %v7075, %v7077
      %v7079 = vrot.slane %v7065, %v7078
      %v7080 = vcombine.high %v7072, %v7072
      %7081 = vrot.lane.b32.xlu0 %v7072, 60
      %v7082 = vpop.permute.xlu0 %7081
      %7083 = vrot.lane.b32.xlu0 %v7080, 60
      %v7084 = vpop.permute.xlu0 %7083
      %7085 = vrot.lane.b32.xlu0 %v7079, 60
      %v7086 = vpop.permute.xlu0 %7085
      %vm7087 = vcmask 490496
      %v7088 = vsel %vm7087, %v7082, %v7084
      %v7089 = vsel %vm7087, %v7084, %v7086
      %7092 = vst [vmem:[#allocation3 + $0x80] sm:$0x3] %v7088
      %7093 = vst [vmem:[#allocation3 + $0x88] sm:$0x3] %v7089
      %v7094 = vld [vmem:[#allocation2] sm:$0x3f]
      %s7095 = scalar_lea.vmem %s39, 65
      %v7096 = vld [vmem:[%s7095] ss:$8 sm:$0x3]
      %v7098 = vlaneseq
      %v7099 = vshrl.u32 %v7098, 7
      %v7100 = vsub.s32 0, %v7099
      %v7101 = vrot.slane %v7096, %v7100
      %v7102 = vlaneseq
      %v7103 = vshrl.u32 %v7102, 7
      %v7104 = vsub.s32 1, %v7103
      %v7105 = vrot.slane %v7096, %v7104
      %v7106 = vcombine.low %v7101, %v7105
      %v7108 = vunpack.c.l.s4 1983009808
      %v7109 = vunpack.c.0.s8 %v7108
      %v7110 = vlaneseq
      %v7111 = vshrl.u32 %v7110, 7
      %v7112 = vsub.s32 %v7109, %v7111
      %v7113 = vrot.slane %v7106, %v7112
      %7114 = vrot.lane.b32.xlu0 %v7113, 69
      %v7115 = vpop.permute.xlu0 %7114
      %v7116 = vrot.slane %v7115, 6
      %vm7117 = vcmask 564224
      %v7118 = vsel %vm7117, %v7116, %v7115
      %v7120 = vmul.f32 %v7094, %v7118
      %v7122 = vcombine.low %v7120, %v7120
      %v7124 = vunpack.c.l.s4 1983009808
      %v7125 = vunpack.c.0.s8 %v7124
      %v7126 = vlaneseq
      %v7127 = vshrl.u32 %v7126, 7
      %v7128 = vsub.s32 %v7125, %v7127
      %v7129 = vrot.slane %v7122, %v7128
      %v7131 = vunpack.c.l.s4 1983009808
      %v7132 = vunpack.c.0.s8 %v7131
      %v7133 = vlaneseq
      %v7134 = vshrl.u32 %v7133, 7
      %v7135 = vsub.s32 %v7132, %v7134
      %v7136 = vrot.slane %v7120, %v7135
      %v7137 = vcombine.high %v7129, %v7129
      %7138 = vrot.lane.b32.xlu0 %v7129, 59
      %v7139 = vpop.permute.xlu0 %7138
      %7140 = vrot.lane.b32.xlu0 %v7137, 59
      %v7141 = vpop.permute.xlu0 %7140
      %7142 = vrot.lane.b32.xlu0 %v7136, 59
      %v7143 = vpop.permute.xlu0 %7142
      %vm7144 = vcmask 482304
      %v7145 = vsel %vm7144, %v7139, %v7141
      %v7146 = vsel %vm7144, %v7141, %v7143
      %7149 = vst [vmem:[#allocation3 + $0x80] sm:$0xc] %v7145
      %7150 = vst [vmem:[#allocation3 + $0x88] sm:$0xc] %v7146
      %v7151 = vld [vmem:[#allocation2] sm:$0x3f]
      %s7152 = scalar_lea.vmem %s39, 66
      %v7153 = vld [vmem:[%s7152] ss:$8 sm:$0x3]
      %v7155 = vlaneseq
      %v7156 = vshrl.u32 %v7155, 7
      %v7157 = vsub.s32 0, %v7156
      %v7158 = vrot.slane %v7153, %v7157
      %v7159 = vlaneseq
      %v7160 = vshrl.u32 %v7159, 7
      %v7161 = vsub.s32 1, %v7160
      %v7162 = vrot.slane %v7153, %v7161
      %v7163 = vcombine.low %v7158, %v7162
      %v7165 = vunpack.c.l.s4 1983009808
      %v7166 = vunpack.c.0.s8 %v7165
      %v7167 = vlaneseq
      %v7168 = vshrl.u32 %v7167, 7
      %v7169 = vsub.s32 %v7166, %v7168
      %v7170 = vrot.slane %v7163, %v7169
      %7171 = vrot.lane.b32.xlu0 %v7170, 70
      %v7172 = vpop.permute.xlu0 %7171
      %v7173 = vrot.slane %v7172, 6
      %vm7174 = vcmask 572416
      %v7175 = vsel %vm7174, %v7173, %v7172
      %v7177 = vmul.f32 %v7151, %v7175
      %v7179 = vcombine.high %v7177, %v7177
      %v7181 = vunpack.c.l.s4 1983009808
      %v7182 = vunpack.c.0.s8 %v7181
      %v7183 = vlaneseq
      %v7184 = vshrl.u32 %v7183, 7
      %v7185 = vsub.s32 %v7182, %v7184
      %v7186 = vrot.slane %v7177, %v7185
      %v7188 = vunpack.c.l.s4 1983009808
      %v7189 = vunpack.c.0.s8 %v7188
      %v7190 = vlaneseq
      %v7191 = vshrl.u32 %v7190, 7
      %v7192 = vsub.s32 %v7189, %v7191
      %v7193 = vrot.slane %v7179, %v7192
      %v7194 = vcombine.low %v7186, %v7186
      %v7195 = vcombine.low %v7193, %v7193
      %7196 = vrot.lane.b32.xlu0 %v7194, 58
      %v7197 = vpop.permute.xlu0 %7196
      %7198 = vrot.lane.b32.xlu0 %v7186, 58
      %v7199 = vpop.permute.xlu0 %7198
      %7200 = vrot.lane.b32.xlu0 %v7195, 58
      %v7201 = vpop.permute.xlu0 %7200
      %vm7202 = vcmask 474112
      %v7203 = vsel %vm7202, %v7197, %v7199
      %v7204 = vsel %vm7202, %v7199, %v7201
      %7207 = vst [vmem:[#allocation3 + $0x80] sm:$0x30] %v7203
      %7208 = vst [vmem:[#allocation3 + $0x88] sm:$0x30] %v7204
      %v7209 = vld [vmem:[#allocation2] sm:$0x3f]
      %s7210 = scalar_lea.vmem %s39, 67
      %v7211 = vld [vmem:[%s7210] ss:$8 sm:$0x3]
      %v7213 = vlaneseq
      %v7214 = vshrl.u32 %v7213, 7
      %v7215 = vsub.s32 0, %v7214
      %v7216 = vrot.slane %v7211, %v7215
      %v7217 = vlaneseq
      %v7218 = vshrl.u32 %v7217, 7
      %v7219 = vsub.s32 1, %v7218
      %v7220 = vrot.slane %v7211, %v7219
      %v7221 = vcombine.low %v7216, %v7220
      %v7223 = vunpack.c.l.s4 1983009808
      %v7224 = vunpack.c.0.s8 %v7223
      %v7225 = vlaneseq
      %v7226 = vshrl.u32 %v7225, 7
      %v7227 = vsub.s32 %v7224, %v7226
      %v7228 = vrot.slane %v7221, %v7227
      %7229 = vrot.lane.b32.xlu0 %v7228, 80
      %v7230 = vpop.permute.xlu0 %7229
      %v7231 = vrot.slane %v7230, 6
      %v7232 = vsel %vm6457, %v7231, %v7230
      %v7234 = vmul.f32 %v7209, %v7232
      %v7236 = vcombine.low %v7234, %v7234
      %v7238 = vunpack.c.l.s4 1983009808
      %v7239 = vunpack.c.0.s8 %v7238
      %v7240 = vlaneseq
      %v7241 = vshrl.u32 %v7240, 7
      %v7242 = vsub.s32 %v7239, %v7241
      %v7243 = vrot.slane %v7236, %v7242
      %v7245 = vunpack.c.l.s4 1983009808
      %v7246 = vunpack.c.0.s8 %v7245
      %v7247 = vlaneseq
      %v7248 = vshrl.u32 %v7247, 7
      %v7249 = vsub.s32 %v7246, %v7248
      %v7250 = vrot.slane %v7234, %v7249
      %v7251 = vcombine.low %v7243, %v7243
      %v7252 = vcombine.low %v7250, %v7250
      %7253 = vrot.lane.b32.xlu0 %v7251, 48
      %v7254 = vpop.permute.xlu0 %7253
      %7255 = vrot.lane.b32.xlu0 %v7243, 48
      %v7256 = vpop.permute.xlu0 %7255
      %7257 = vrot.lane.b32.xlu0 %v7252, 48
      %v7258 = vpop.permute.xlu0 %7257
      %v7259 = vsel %vm6430, %v7254, %v7256
      %v7260 = vsel %vm6430, %v7256, %v7258
      %7263 = vst [vmem:[#allocation3 + $0x80] sm:$0xc0] %v7259
      %7264 = vst [vmem:[#allocation3 + $0x88] sm:$0xc0] %v7260
      %v7265 = vld [vmem:[#allocation2] sm:$0x3f]
      %s7266 = scalar_lea.vmem %s39, 68
      %v7267 = vld [vmem:[%s7266] ss:$8 sm:$0x3]
      %v7269 = vlaneseq
      %v7270 = vshrl.u32 %v7269, 7
      %v7271 = vsub.s32 0, %v7270
      %v7272 = vrot.slane %v7267, %v7271
      %v7273 = vlaneseq
      %v7274 = vshrl.u32 %v7273, 7
      %v7275 = vsub.s32 1, %v7274
      %v7276 = vrot.slane %v7267, %v7275
      %v7277 = vcombine.low %v7272, %v7276
      %v7279 = vunpack.c.l.s4 1983009808
      %v7280 = vunpack.c.0.s8 %v7279
      %v7281 = vlaneseq
      %v7282 = vshrl.u32 %v7281, 7
      %v7283 = vsub.s32 %v7280, %v7282
      %v7284 = vrot.slane %v7277, %v7283
      %7285 = vrot.lane.b32.xlu0 %v7284, 81
      %v7286 = vpop.permute.xlu0 %7285
      %v7287 = vrot.slane %v7286, 6
      %vm7288 = vcmask 662528
      %v7289 = vsel %vm7288, %v7287, %v7286
      %v7291 = vmul.f32 %v7265, %v7289
      %v7293 = vcombine.high %v7291, %v7291
      %v7295 = vunpack.c.l.s4 1983009808
      %v7296 = vunpack.c.0.s8 %v7295
      %v7297 = vlaneseq
      %v7298 = vshrl.u32 %v7297, 7
      %v7299 = vsub.s32 %v7296, %v7298
      %v7300 = vrot.slane %v7291, %v7299
      %v7302 = vunpack.c.l.s4 1983009808
      %v7303 = vunpack.c.0.s8 %v7302
      %v7304 = vlaneseq
      %v7305 = vshrl.u32 %v7304, 7
      %v7306 = vsub.s32 %v7303, %v7305
      %v7307 = vrot.slane %v7293, %v7306
      %v7308 = vcombine.high %v7300, %v7300
      %7309 = vrot.lane.b32.xlu0 %v7300, 47
      %v7310 = vpop.permute.xlu0 %7309
      %7311 = vrot.lane.b32.xlu0 %v7308, 47
      %v7312 = vpop.permute.xlu0 %7311
      %7313 = vrot.lane.b32.xlu0 %v7307, 47
      %v7314 = vpop.permute.xlu0 %7313
      %vm7315 = vcmask 384000
      %v7316 = vsel %vm7315, %v7310, %v7312
      %v7317 = vsel %vm7315, %v7312, %v7314
      %7320 = vst [vmem:[#allocation3 + $0x90] sm:$0x3] %v7316
      %7321 = vst [vmem:[#allocation3 + $0x98] sm:$0x3] %v7317
      %v7322 = vld [vmem:[#allocation2] sm:$0x3f]
      %s7323 = scalar_lea.vmem %s39, 69
      %v7324 = vld [vmem:[%s7323] ss:$8 sm:$0x3]
      %v7326 = vlaneseq
      %v7327 = vshrl.u32 %v7326, 7
      %v7328 = vsub.s32 0, %v7327
      %v7329 = vrot.slane %v7324, %v7328
      %v7330 = vlaneseq
      %v7331 = vshrl.u32 %v7330, 7
      %v7332 = vsub.s32 1, %v7331
      %v7333 = vrot.slane %v7324, %v7332
      %v7334 = vcombine.low %v7329, %v7333
      %v7336 = vunpack.c.l.s4 1983009808
      %v7337 = vunpack.c.0.s8 %v7336
      %v7338 = vlaneseq
      %v7339 = vshrl.u32 %v7338, 7
      %v7340 = vsub.s32 %v7337, %v7339
      %v7341 = vrot.slane %v7334, %v7340
      %7342 = vrot.lane.b32.xlu0 %v7341, 82
      %v7343 = vpop.permute.xlu0 %7342
      %v7344 = vrot.slane %v7343, 6
      %vm7345 = vcmask 670720
      %v7346 = vsel %vm7345, %v7344, %v7343
      %v7348 = vmul.f32 %v7322, %v7346
      %v7350 = vcombine.low %v7348, %v7348
      %v7352 = vunpack.c.l.s4 1983009808
      %v7353 = vunpack.c.0.s8 %v7352
      %v7354 = vlaneseq
      %v7355 = vshrl.u32 %v7354, 7
      %v7356 = vsub.s32 %v7353, %v7355
      %v7357 = vrot.slane %v7350, %v7356
      %v7359 = vunpack.c.l.s4 1983009808
      %v7360 = vunpack.c.0.s8 %v7359
      %v7361 = vlaneseq
      %v7362 = vshrl.u32 %v7361, 7
      %v7363 = vsub.s32 %v7360, %v7362
      %v7364 = vrot.slane %v7348, %v7363
      %v7365 = vcombine.high %v7357, %v7357
      %7366 = vrot.lane.b32.xlu0 %v7357, 46
      %v7367 = vpop.permute.xlu0 %7366
      %7368 = vrot.lane.b32.xlu0 %v7365, 46
      %v7369 = vpop.permute.xlu0 %7368
      %7370 = vrot.lane.b32.xlu0 %v7364, 46
      %v7371 = vpop.permute.xlu0 %7370
      %vm7372 = vcmask 375808
      %v7373 = vsel %vm7372, %v7367, %v7369
      %v7374 = vsel %vm7372, %v7369, %v7371
      %7377 = vst [vmem:[#allocation3 + $0x90] sm:$0xc] %v7373
      %7378 = vst [vmem:[#allocation3 + $0x98] sm:$0xc] %v7374
      %v7379 = vld [vmem:[#allocation2] sm:$0x3f]
      %s7380 = scalar_lea.vmem %s39, 70
      %v7381 = vld [vmem:[%s7380] ss:$8 sm:$0x3]
      %v7383 = vlaneseq
      %v7384 = vshrl.u32 %v7383, 7
      %v7385 = vsub.s32 0, %v7384
      %v7386 = vrot.slane %v7381, %v7385
      %v7387 = vlaneseq
      %v7388 = vshrl.u32 %v7387, 7
      %v7389 = vsub.s32 1, %v7388
      %v7390 = vrot.slane %v7381, %v7389
      %v7391 = vcombine.low %v7386, %v7390
      %v7393 = vunpack.c.l.s4 1983009808
      %v7394 = vunpack.c.0.s8 %v7393
      %v7395 = vlaneseq
      %v7396 = vshrl.u32 %v7395, 7
      %v7397 = vsub.s32 %v7394, %v7396
      %v7398 = vrot.slane %v7391, %v7397
      %7399 = vrot.lane.b32.xlu0 %v7398, 83
      %v7400 = vpop.permute.xlu0 %7399
      %v7401 = vrot.slane %v7400, 6
      %vm7402 = vcmask 678912
      %v7403 = vsel %vm7402, %v7401, %v7400
      %v7405 = vmul.f32 %v7379, %v7403
      %v7407 = vcombine.high %v7405, %v7405
      %v7409 = vunpack.c.l.s4 1983009808
      %v7410 = vunpack.c.0.s8 %v7409
      %v7411 = vlaneseq
      %v7412 = vshrl.u32 %v7411, 7
      %v7413 = vsub.s32 %v7410, %v7412
      %v7414 = vrot.slane %v7405, %v7413
      %v7416 = vunpack.c.l.s4 1983009808
      %v7417 = vunpack.c.0.s8 %v7416
      %v7418 = vlaneseq
      %v7419 = vshrl.u32 %v7418, 7
      %v7420 = vsub.s32 %v7417, %v7419
      %v7421 = vrot.slane %v7407, %v7420
      %v7422 = vcombine.low %v7414, %v7414
      %v7423 = vcombine.low %v7421, %v7421
      %7424 = vrot.lane.b32.xlu0 %v7422, 45
      %v7425 = vpop.permute.xlu0 %7424
      %7426 = vrot.lane.b32.xlu0 %v7414, 45
      %v7427 = vpop.permute.xlu0 %7426
      %7428 = vrot.lane.b32.xlu0 %v7423, 45
      %v7429 = vpop.permute.xlu0 %7428
      %vm7430 = vcmask 367616
      %v7431 = vsel %vm7430, %v7425, %v7427
      %v7432 = vsel %vm7430, %v7427, %v7429
      %7435 = vst [vmem:[#allocation3 + $0x90] sm:$0x30] %v7431
      %7436 = vst [vmem:[#allocation3 + $0x98] sm:$0x30] %v7432
      %v7437 = vld [vmem:[#allocation2] sm:$0x3f]
      %s7438 = scalar_lea.vmem %s39, 71
      %v7439 = vld [vmem:[%s7438] ss:$8 sm:$0x3]
      %v7441 = vlaneseq
      %v7442 = vshrl.u32 %v7441, 7
      %v7443 = vsub.s32 0, %v7442
      %v7444 = vrot.slane %v7439, %v7443
      %v7445 = vlaneseq
      %v7446 = vshrl.u32 %v7445, 7
      %v7447 = vsub.s32 1, %v7446
      %v7448 = vrot.slane %v7439, %v7447
      %v7449 = vcombine.low %v7444, %v7448
      %v7451 = vunpack.c.l.s4 1983009808
      %v7452 = vunpack.c.0.s8 %v7451
      %v7453 = vlaneseq
      %v7454 = vshrl.u32 %v7453, 7
      %v7455 = vsub.s32 %v7452, %v7454
      %v7456 = vrot.slane %v7449, %v7455
      %7457 = vrot.lane.b32.xlu0 %v7456, 84
      %v7458 = vpop.permute.xlu0 %7457
      %v7459 = vrot.slane %v7458, 6
      %vm7460 = vcmask 687104
      %v7461 = vsel %vm7460, %v7459, %v7458
      %v7463 = vmul.f32 %v7437, %v7461
      %v7465 = vcombine.low %v7463, %v7463
      %v7467 = vunpack.c.l.s4 1983009808
      %v7468 = vunpack.c.0.s8 %v7467
      %v7469 = vlaneseq
      %v7470 = vshrl.u32 %v7469, 7
      %v7471 = vsub.s32 %v7468, %v7470
      %v7472 = vrot.slane %v7465, %v7471
      %v7474 = vunpack.c.l.s4 1983009808
      %v7475 = vunpack.c.0.s8 %v7474
      %v7476 = vlaneseq
      %v7477 = vshrl.u32 %v7476, 7
      %v7478 = vsub.s32 %v7475, %v7477
      %v7479 = vrot.slane %v7463, %v7478
      %v7480 = vcombine.low %v7472, %v7472
      %v7481 = vcombine.low %v7479, %v7479
      %7482 = vrot.lane.b32.xlu0 %v7480, 44
      %v7483 = vpop.permute.xlu0 %7482
      %7484 = vrot.lane.b32.xlu0 %v7472, 44
      %v7485 = vpop.permute.xlu0 %7484
      %7486 = vrot.lane.b32.xlu0 %v7481, 44
      %v7487 = vpop.permute.xlu0 %7486
      %vm7488 = vcmask 359424
      %v7489 = vsel %vm7488, %v7483, %v7485
      %v7490 = vsel %vm7488, %v7485, %v7487
      %7493 = vst [vmem:[#allocation3 + $0x90] sm:$0xc0] %v7489
      %7494 = vst [vmem:[#allocation3 + $0x98] sm:$0xc0] %v7490
      %v7495 = vld [vmem:[#allocation2] sm:$0x3f]
      %s7496 = scalar_lea.vmem %s39, 80
      %v7497 = vld [vmem:[%s7496] ss:$8 sm:$0x3]
      %v7499 = vlaneseq
      %v7500 = vshrl.u32 %v7499, 7
      %v7501 = vsub.s32 0, %v7500
      %v7502 = vrot.slane %v7497, %v7501
      %v7503 = vlaneseq
      %v7504 = vshrl.u32 %v7503, 7
      %v7505 = vsub.s32 1, %v7504
      %v7506 = vrot.slane %v7497, %v7505
      %v7507 = vcombine.low %v7502, %v7506
      %v7509 = vunpack.c.l.s4 1983009808
      %v7510 = vunpack.c.0.s8 %v7509
      %v7511 = vlaneseq
      %v7512 = vshrl.u32 %v7511, 7
      %v7513 = vsub.s32 %v7510, %v7512
      %v7514 = vrot.slane %v7507, %v7513
      %7515 = vrot.lane.b32.xlu0 %v7514, 85
      %v7516 = vpop.permute.xlu0 %7515
      %v7517 = vrot.slane %v7516, 6
      %vm7518 = vcmask 695296
      %v7519 = vsel %vm7518, %v7517, %v7516
      %v7521 = vmul.f32 %v7495, %v7519
      %v7523 = vcombine.high %v7521, %v7521
      %v7525 = vunpack.c.l.s4 1983009808
      %v7526 = vunpack.c.0.s8 %v7525
      %v7527 = vlaneseq
      %v7528 = vshrl.u32 %v7527, 7
      %v7529 = vsub.s32 %v7526, %v7528
      %v7530 = vrot.slane %v7521, %v7529
      %v7532 = vunpack.c.l.s4 1983009808
      %v7533 = vunpack.c.0.s8 %v7532
      %v7534 = vlaneseq
      %v7535 = vshrl.u32 %v7534, 7
      %v7536 = vsub.s32 %v7533, %v7535
      %v7537 = vrot.slane %v7523, %v7536
      %v7538 = vcombine.high %v7530, %v7530
      %7539 = vrot.lane.b32.xlu0 %v7530, 43
      %v7540 = vpop.permute.xlu0 %7539
      %7541 = vrot.lane.b32.xlu0 %v7538, 43
      %v7542 = vpop.permute.xlu0 %7541
      %7543 = vrot.lane.b32.xlu0 %v7537, 43
      %v7544 = vpop.permute.xlu0 %7543
      %vm7545 = vcmask 351232
      %v7546 = vsel %vm7545, %v7540, %v7542
      %v7547 = vsel %vm7545, %v7542, %v7544
      %7550 = vst [vmem:[#allocation3 + $0xa0] sm:$0x3] %v7546
      %7551 = vst [vmem:[#allocation3 + $0xa8] sm:$0x3] %v7547
      %v7552 = vld [vmem:[#allocation2] sm:$0x3f]
      %s7553 = scalar_lea.vmem %s39, 81
      %v7554 = vld [vmem:[%s7553] ss:$8 sm:$0x3]
      %v7556 = vlaneseq
      %v7557 = vshrl.u32 %v7556, 7
      %v7558 = vsub.s32 0, %v7557
      %v7559 = vrot.slane %v7554, %v7558
      %v7560 = vlaneseq
      %v7561 = vshrl.u32 %v7560, 7
      %v7562 = vsub.s32 1, %v7561
      %v7563 = vrot.slane %v7554, %v7562
      %v7564 = vcombine.low %v7559, %v7563
      %v7566 = vunpack.c.l.s4 1983009808
      %v7567 = vunpack.c.0.s8 %v7566
      %v7568 = vlaneseq
      %v7569 = vshrl.u32 %v7568, 7
      %v7570 = vsub.s32 %v7567, %v7569
      %v7571 = vrot.slane %v7564, %v7570
      %7572 = vrot.lane.b32.xlu0 %v7571, 86
      %v7573 = vpop.permute.xlu0 %7572
      %v7574 = vrot.slane %v7573, 6
      %vm7575 = vcmask 703488
      %v7576 = vsel %vm7575, %v7574, %v7573
      %v7578 = vmul.f32 %v7552, %v7576
      %v7580 = vcombine.low %v7578, %v7578
      %v7582 = vunpack.c.l.s4 1983009808
      %v7583 = vunpack.c.0.s8 %v7582
      %v7584 = vlaneseq
      %v7585 = vshrl.u32 %v7584, 7
      %v7586 = vsub.s32 %v7583, %v7585
      %v7587 = vrot.slane %v7580, %v7586
      %v7589 = vunpack.c.l.s4 1983009808
      %v7590 = vunpack.c.0.s8 %v7589
      %v7591 = vlaneseq
      %v7592 = vshrl.u32 %v7591, 7
      %v7593 = vsub.s32 %v7590, %v7592
      %v7594 = vrot.slane %v7578, %v7593
      %v7595 = vcombine.high %v7587, %v7587
      %7596 = vrot.lane.b32.xlu0 %v7587, 42
      %v7597 = vpop.permute.xlu0 %7596
      %7598 = vrot.lane.b32.xlu0 %v7595, 42
      %v7599 = vpop.permute.xlu0 %7598
      %7600 = vrot.lane.b32.xlu0 %v7594, 42
      %v7601 = vpop.permute.xlu0 %7600
      %vm7602 = vcmask 343040
      %v7603 = vsel %vm7602, %v7597, %v7599
      %v7604 = vsel %vm7602, %v7599, %v7601
      %7607 = vst [vmem:[#allocation3 + $0xa0] sm:$0xc] %v7603
      %7608 = vst [vmem:[#allocation3 + $0xa8] sm:$0xc] %v7604
      %v7609 = vld [vmem:[#allocation2] sm:$0x3f]
      %s7610 = scalar_lea.vmem %s39, 82
      %v7611 = vld [vmem:[%s7610] ss:$8 sm:$0x3]
      %v7613 = vlaneseq
      %v7614 = vshrl.u32 %v7613, 7
      %v7615 = vsub.s32 0, %v7614
      %v7616 = vrot.slane %v7611, %v7615
      %v7617 = vlaneseq
      %v7618 = vshrl.u32 %v7617, 7
      %v7619 = vsub.s32 1, %v7618
      %v7620 = vrot.slane %v7611, %v7619
      %v7621 = vcombine.low %v7616, %v7620
      %v7623 = vunpack.c.l.s4 1983009808
      %v7624 = vunpack.c.0.s8 %v7623
      %v7625 = vlaneseq
      %v7626 = vshrl.u32 %v7625, 7
      %v7627 = vsub.s32 %v7624, %v7626
      %v7628 = vrot.slane %v7621, %v7627
      %7629 = vrot.lane.b32.xlu0 %v7628, 96
      %v7630 = vpop.permute.xlu0 %7629
      %v7631 = vrot.slane %v7630, 6
      %v7632 = vsel %vm6055, %v7631, %v7630
      %v7634 = vmul.f32 %v7609, %v7632
      %v7636 = vcombine.high %v7634, %v7634
      %v7638 = vunpack.c.l.s4 1983009808
      %v7639 = vunpack.c.0.s8 %v7638
      %v7640 = vlaneseq
      %v7641 = vshrl.u32 %v7640, 7
      %v7642 = vsub.s32 %v7639, %v7641
      %v7643 = vrot.slane %v7634, %v7642
      %v7645 = vunpack.c.l.s4 1983009808
      %v7646 = vunpack.c.0.s8 %v7645
      %v7647 = vlaneseq
      %v7648 = vshrl.u32 %v7647, 7
      %v7649 = vsub.s32 %v7646, %v7648
      %v7650 = vrot.slane %v7636, %v7649
      %v7651 = vcombine.low %v7643, %v7643
      %v7652 = vcombine.low %v7650, %v7650
      %7653 = vrot.lane.b32.xlu0 %v7651, 32
      %v7654 = vpop.permute.xlu0 %7653
      %7655 = vrot.lane.b32.xlu0 %v7643, 32
      %v7656 = vpop.permute.xlu0 %7655
      %7657 = vrot.lane.b32.xlu0 %v7652, 32
      %v7658 = vpop.permute.xlu0 %7657
      %v7659 = vsel %vm6027, %v7654, %v7656
      %v7660 = vsel %vm6027, %v7656, %v7658
      %7663 = vst [vmem:[#allocation3 + $0xa0] sm:$0x30] %v7659
      %7664 = vst [vmem:[#allocation3 + $0xa8] sm:$0x30] %v7660
      %v7665 = vld [vmem:[#allocation2] sm:$0x3f]
      %s7666 = scalar_lea.vmem %s39, 83
      %v7667 = vld [vmem:[%s7666] ss:$8 sm:$0x3]
      %v7669 = vlaneseq
      %v7670 = vshrl.u32 %v7669, 7
      %v7671 = vsub.s32 0, %v7670
      %v7672 = vrot.slane %v7667, %v7671
      %v7673 = vlaneseq
      %v7674 = vshrl.u32 %v7673, 7
      %v7675 = vsub.s32 1, %v7674
      %v7676 = vrot.slane %v7667, %v7675
      %v7677 = vcombine.low %v7672, %v7676
      %v7679 = vunpack.c.l.s4 1983009808
      %v7680 = vunpack.c.0.s8 %v7679
      %v7681 = vlaneseq
      %v7682 = vshrl.u32 %v7681, 7
      %v7683 = vsub.s32 %v7680, %v7682
      %v7684 = vrot.slane %v7677, %v7683
      %7685 = vrot.lane.b32.xlu0 %v7684, 97
      %v7686 = vpop.permute.xlu0 %7685
      %v7687 = vrot.slane %v7686, 6
      %vm7688 = vcmask 793600
      %v7689 = vsel %vm7688, %v7687, %v7686
      %v7691 = vmul.f32 %v7665, %v7689
      %v7693 = vcombine.low %v7691, %v7691
      %v7695 = vunpack.c.l.s4 1983009808
      %v7696 = vunpack.c.0.s8 %v7695
      %v7697 = vlaneseq
      %v7698 = vshrl.u32 %v7697, 7
      %v7699 = vsub.s32 %v7696, %v7698
      %v7700 = vrot.slane %v7693, %v7699
      %v7702 = vunpack.c.l.s4 1983009808
      %v7703 = vunpack.c.0.s8 %v7702
      %v7704 = vlaneseq
      %v7705 = vshrl.u32 %v7704, 7
      %v7706 = vsub.s32 %v7703, %v7705
      %v7707 = vrot.slane %v7691, %v7706
      %v7708 = vcombine.low %v7700, %v7700
      %v7709 = vcombine.low %v7707, %v7707
      %7710 = vrot.lane.b32.xlu0 %v7708, 31
      %v7711 = vpop.permute.xlu0 %7710
      %7712 = vrot.lane.b32.xlu0 %v7700, 31
      %v7713 = vpop.permute.xlu0 %7712
      %7714 = vrot.lane.b32.xlu0 %v7709, 31
      %v7715 = vpop.permute.xlu0 %7714
      %vm7716 = vcmask 252928
      %v7717 = vsel %vm7716, %v7711, %v7713
      %v7718 = vsel %vm7716, %v7713, %v7715
      %7721 = vst [vmem:[#allocation3 + $0xa0] sm:$0xc0] %v7717
      %7722 = vst [vmem:[#allocation3 + $0xa8] sm:$0xc0] %v7718
      %v7723 = vld [vmem:[#allocation2] sm:$0x3f]
      %s7724 = scalar_lea.vmem %s39, 84
      %v7725 = vld [vmem:[%s7724] ss:$8 sm:$0x3]
      %v7727 = vlaneseq
      %v7728 = vshrl.u32 %v7727, 7
      %v7729 = vsub.s32 0, %v7728
      %v7730 = vrot.slane %v7725, %v7729
      %v7731 = vlaneseq
      %v7732 = vshrl.u32 %v7731, 7
      %v7733 = vsub.s32 1, %v7732
      %v7734 = vrot.slane %v7725, %v7733
      %v7735 = vcombine.low %v7730, %v7734
      %v7737 = vunpack.c.l.s4 1983009808
      %v7738 = vunpack.c.0.s8 %v7737
      %v7739 = vlaneseq
      %v7740 = vshrl.u32 %v7739, 7
      %v7741 = vsub.s32 %v7738, %v7740
      %v7742 = vrot.slane %v7735, %v7741
      %7743 = vrot.lane.b32.xlu0 %v7742, 98
      %v7744 = vpop.permute.xlu0 %7743
      %v7745 = vrot.slane %v7744, 6
      %vm7746 = vcmask 801792
      %v7747 = vsel %vm7746, %v7745, %v7744
      %v7749 = vmul.f32 %v7723, %v7747
      %v7751 = vcombine.high %v7749, %v7749
      %v7753 = vunpack.c.l.s4 1983009808
      %v7754 = vunpack.c.0.s8 %v7753
      %v7755 = vlaneseq
      %v7756 = vshrl.u32 %v7755, 7
      %v7757 = vsub.s32 %v7754, %v7756
      %v7758 = vrot.slane %v7749, %v7757
      %v7760 = vunpack.c.l.s4 1983009808
      %v7761 = vunpack.c.0.s8 %v7760
      %v7762 = vlaneseq
      %v7763 = vshrl.u32 %v7762, 7
      %v7764 = vsub.s32 %v7761, %v7763
      %v7765 = vrot.slane %v7751, %v7764
      %v7766 = vcombine.high %v7758, %v7758
      %7767 = vrot.lane.b32.xlu0 %v7758, 30
      %v7768 = vpop.permute.xlu0 %7767
      %7769 = vrot.lane.b32.xlu0 %v7766, 30
      %v7770 = vpop.permute.xlu0 %7769
      %7771 = vrot.lane.b32.xlu0 %v7765, 30
      %v7772 = vpop.permute.xlu0 %7771
      %vm7773 = vcmask 244736
      %v7774 = vsel %vm7773, %v7768, %v7770
      %v7775 = vsel %vm7773, %v7770, %v7772
      %7778 = vst [vmem:[#allocation3 + $0xb0] sm:$0x3] %v7774
      %7779 = vst [vmem:[#allocation3 + $0xb8] sm:$0x3] %v7775
      %v7780 = vld [vmem:[#allocation2] sm:$0x3f]
      %s7781 = scalar_lea.vmem %s39, 85
      %v7782 = vld [vmem:[%s7781] ss:$8 sm:$0x3]
      %v7784 = vlaneseq
      %v7785 = vshrl.u32 %v7784, 7
      %v7786 = vsub.s32 0, %v7785
      %v7787 = vrot.slane %v7782, %v7786
      %v7788 = vlaneseq
      %v7789 = vshrl.u32 %v7788, 7
      %v7790 = vsub.s32 1, %v7789
      %v7791 = vrot.slane %v7782, %v7790
      %v7792 = vcombine.low %v7787, %v7791
      %v7794 = vunpack.c.l.s4 1983009808
      %v7795 = vunpack.c.0.s8 %v7794
      %v7796 = vlaneseq
      %v7797 = vshrl.u32 %v7796, 7
      %v7798 = vsub.s32 %v7795, %v7797
      %v7799 = vrot.slane %v7792, %v7798
      %7800 = vrot.lane.b32.xlu0 %v7799, 99
      %v7801 = vpop.permute.xlu0 %7800
      %v7802 = vrot.slane %v7801, 6
      %vm7803 = vcmask 809984
      %v7804 = vsel %vm7803, %v7802, %v7801
      %v7806 = vmul.f32 %v7780, %v7804
      %v7808 = vcombine.low %v7806, %v7806
      %v7810 = vunpack.c.l.s4 1983009808
      %v7811 = vunpack.c.0.s8 %v7810
      %v7812 = vlaneseq
      %v7813 = vshrl.u32 %v7812, 7
      %v7814 = vsub.s32 %v7811, %v7813
      %v7815 = vrot.slane %v7808, %v7814
      %v7817 = vunpack.c.l.s4 1983009808
      %v7818 = vunpack.c.0.s8 %v7817
      %v7819 = vlaneseq
      %v7820 = vshrl.u32 %v7819, 7
      %v7821 = vsub.s32 %v7818, %v7820
      %v7822 = vrot.slane %v7806, %v7821
      %v7823 = vcombine.high %v7815, %v7815
      %7824 = vrot.lane.b32.xlu0 %v7815, 29
      %v7825 = vpop.permute.xlu0 %7824
      %7826 = vrot.lane.b32.xlu0 %v7823, 29
      %v7827 = vpop.permute.xlu0 %7826
      %7828 = vrot.lane.b32.xlu0 %v7822, 29
      %v7829 = vpop.permute.xlu0 %7828
      %vm7830 = vcmask 236544
      %v7831 = vsel %vm7830, %v7825, %v7827
      %v7832 = vsel %vm7830, %v7827, %v7829
      %7835 = vst [vmem:[#allocation3 + $0xb0] sm:$0xc] %v7831
      %7836 = vst [vmem:[#allocation3 + $0xb8] sm:$0xc] %v7832
      %v7837 = vld [vmem:[#allocation2] sm:$0x3f]
      %s7838 = scalar_lea.vmem %s39, 86
      %v7839 = vld [vmem:[%s7838] ss:$8 sm:$0x3]
      %v7841 = vlaneseq
      %v7842 = vshrl.u32 %v7841, 7
      %v7843 = vsub.s32 0, %v7842
      %v7844 = vrot.slane %v7839, %v7843
      %v7845 = vlaneseq
      %v7846 = vshrl.u32 %v7845, 7
      %v7847 = vsub.s32 1, %v7846
      %v7848 = vrot.slane %v7839, %v7847
      %v7849 = vcombine.low %v7844, %v7848
      %v7851 = vunpack.c.l.s4 1983009808
      %v7852 = vunpack.c.0.s8 %v7851
      %v7853 = vlaneseq
      %v7854 = vshrl.u32 %v7853, 7
      %v7855 = vsub.s32 %v7852, %v7854
      %v7856 = vrot.slane %v7849, %v7855
      %7857 = vrot.lane.b32.xlu0 %v7856, 100
      %v7858 = vpop.permute.xlu0 %7857
      %v7859 = vrot.slane %v7858, 6
      %vm7860 = vcmask 818176
      %v7861 = vsel %vm7860, %v7859, %v7858
      %v7863 = vmul.f32 %v7837, %v7861
      %v7865 = vcombine.high %v7863, %v7863
      %v7867 = vunpack.c.l.s4 1983009808
      %v7868 = vunpack.c.0.s8 %v7867
      %v7869 = vlaneseq
      %v7870 = vshrl.u32 %v7869, 7
      %v7871 = vsub.s32 %v7868, %v7870
      %v7872 = vrot.slane %v7863, %v7871
      %v7874 = vunpack.c.l.s4 1983009808
      %v7875 = vunpack.c.0.s8 %v7874
      %v7876 = vlaneseq
      %v7877 = vshrl.u32 %v7876, 7
      %v7878 = vsub.s32 %v7875, %v7877
      %v7879 = vrot.slane %v7865, %v7878
      %v7880 = vcombine.low %v7872, %v7872
      %v7881 = vcombine.low %v7879, %v7879
      %7882 = vrot.lane.b32.xlu0 %v7880, 28
      %v7883 = vpop.permute.xlu0 %7882
      %7884 = vrot.lane.b32.xlu0 %v7872, 28
      %v7885 = vpop.permute.xlu0 %7884
      %7886 = vrot.lane.b32.xlu0 %v7881, 28
      %v7887 = vpop.permute.xlu0 %7886
      %vm7888 = vcmask 228352
      %v7889 = vsel %vm7888, %v7883, %v7885
      %v7890 = vsel %vm7888, %v7885, %v7887
      %7893 = vst [vmem:[#allocation3 + $0xb0] sm:$0x30] %v7889
      %7894 = vst [vmem:[#allocation3 + $0xb8] sm:$0x30] %v7890
      %v7895 = vld [vmem:[#allocation2] sm:$0x3f]
      %s7896 = scalar_lea.vmem %s39, 87
      %v7897 = vld [vmem:[%s7896] ss:$8 sm:$0x3]
      %v7899 = vlaneseq
      %v7900 = vshrl.u32 %v7899, 7
      %v7901 = vsub.s32 0, %v7900
      %v7902 = vrot.slane %v7897, %v7901
      %v7903 = vlaneseq
      %v7904 = vshrl.u32 %v7903, 7
      %v7905 = vsub.s32 1, %v7904
      %v7906 = vrot.slane %v7897, %v7905
      %v7907 = vcombine.low %v7902, %v7906
      %v7909 = vunpack.c.l.s4 1983009808
      %v7910 = vunpack.c.0.s8 %v7909
      %v7911 = vlaneseq
      %v7912 = vshrl.u32 %v7911, 7
      %v7913 = vsub.s32 %v7910, %v7912
      %v7914 = vrot.slane %v7907, %v7913
      %7915 = vrot.lane.b32.xlu0 %v7914, 101
      %v7916 = vpop.permute.xlu0 %7915
      %v7917 = vrot.slane %v7916, 6
      %vm7918 = vcmask 826368
      %v7919 = vsel %vm7918, %v7917, %v7916
      %v7921 = vmul.f32 %v7895, %v7919
      %v7923 = vcombine.low %v7921, %v7921
      %v7925 = vunpack.c.l.s4 1983009808
      %v7926 = vunpack.c.0.s8 %v7925
      %v7927 = vlaneseq
      %v7928 = vshrl.u32 %v7927, 7
      %v7929 = vsub.s32 %v7926, %v7928
      %v7930 = vrot.slane %v7923, %v7929
      %v7932 = vunpack.c.l.s4 1983009808
      %v7933 = vunpack.c.0.s8 %v7932
      %v7934 = vlaneseq
      %v7935 = vshrl.u32 %v7934, 7
      %v7936 = vsub.s32 %v7933, %v7935
      %v7937 = vrot.slane %v7921, %v7936
      %v7938 = vcombine.low %v7930, %v7930
      %v7939 = vcombine.low %v7937, %v7937
      %7940 = vrot.lane.b32.xlu0 %v7938, 27
      %v7941 = vpop.permute.xlu0 %7940
      %7942 = vrot.lane.b32.xlu0 %v7930, 27
      %v7943 = vpop.permute.xlu0 %7942
      %7944 = vrot.lane.b32.xlu0 %v7939, 27
      %v7945 = vpop.permute.xlu0 %7944
      %vm7946 = vcmask 220160
      %v7947 = vsel %vm7946, %v7941, %v7943
      %v7948 = vsel %vm7946, %v7943, %v7945
      %7951 = vst [vmem:[#allocation3 + $0xb0] sm:$0xc0] %v7947
      %7952 = vst [vmem:[#allocation3 + $0xb8] sm:$0xc0] %v7948
      %v7953 = vld [vmem:[#allocation2] sm:$0x3f]
      %s7954 = scalar_lea.vmem %s39, 96
      %v7955 = vld [vmem:[%s7954] ss:$8 sm:$0x3]
      %v7957 = vlaneseq
      %v7958 = vshrl.u32 %v7957, 7
      %v7959 = vsub.s32 0, %v7958
      %v7960 = vrot.slane %v7955, %v7959
      %v7961 = vlaneseq
      %v7962 = vshrl.u32 %v7961, 7
      %v7963 = vsub.s32 1, %v7962
      %v7964 = vrot.slane %v7955, %v7963
      %v7965 = vcombine.low %v7960, %v7964
      %v7967 = vunpack.c.l.s4 1983009808
      %v7968 = vunpack.c.0.s8 %v7967
      %v7969 = vlaneseq
      %v7970 = vshrl.u32 %v7969, 7
      %v7971 = vsub.s32 %v7968, %v7970
      %v7972 = vrot.slane %v7965, %v7971
      %7973 = vrot.lane.b32.xlu0 %v7972, 102
      %v7974 = vpop.permute.xlu0 %7973
      %v7975 = vrot.slane %v7974, 6
      %vm7976 = vcmask 834560
      %v7977 = vsel %vm7976, %v7975, %v7974
      %v7979 = vmul.f32 %v7953, %v7977
      %v7981 = vcombine.high %v7979, %v7979
      %v7983 = vunpack.c.l.s4 1983009808
      %v7984 = vunpack.c.0.s8 %v7983
      %v7985 = vlaneseq
      %v7986 = vshrl.u32 %v7985, 7
      %v7987 = vsub.s32 %v7984, %v7986
      %v7988 = vrot.slane %v7979, %v7987
      %v7990 = vunpack.c.l.s4 1983009808
      %v7991 = vunpack.c.0.s8 %v7990
      %v7992 = vlaneseq
      %v7993 = vshrl.u32 %v7992, 7
      %v7994 = vsub.s32 %v7991, %v7993
      %v7995 = vrot.slane %v7981, %v7994
      %v7996 = vcombine.high %v7988, %v7988
      %7997 = vrot.lane.b32.xlu0 %v7988, 26
      %v7998 = vpop.permute.xlu0 %7997
      %7999 = vrot.lane.b32.xlu0 %v7996, 26
      %v8000 = vpop.permute.xlu0 %7999
      %8001 = vrot.lane.b32.xlu0 %v7995, 26
      %v8002 = vpop.permute.xlu0 %8001
      %vm8003 = vcmask 211968
      %v8004 = vsel %vm8003, %v7998, %v8000
      %v8005 = vsel %vm8003, %v8000, %v8002
      %8008 = vst [vmem:[#allocation3 + $0xc0] sm:$0x3] %v8004
      %8009 = vst [vmem:[#allocation3 + $0xc8] sm:$0x3] %v8005
      %v8010 = vld [vmem:[%s45] sm:$0x7]
      %v8011 = vld [vmem:[#allocation3] sm:$0xff]
      %v8012 = vld [vmem:[#allocation3 + $0x8] sm:$0xff]
      %v8013 = vld [vmem:[#allocation3 + $0x10] sm:$0xff]
      %v8014 = vld [vmem:[#allocation3 + $0x18] sm:$0xff]
      %v8015 = vld [vmem:[#allocation3 + $0x20] sm:$0xff]
      %v8016 = vld [vmem:[#allocation3 + $0x28] sm:$0xff]
      %v8017 = vld [vmem:[#allocation3 + $0x30] sm:$0xff]
      %v8018 = vld [vmem:[#allocation3 + $0x38] sm:$0xff]
      %v8019 = vld [vmem:[#allocation3 + $0x40] sm:$0xff]
      %v8020 = vld [vmem:[#allocation3 + $0x48] sm:$0xff]
      %v8021 = vld [vmem:[#allocation3 + $0x50] sm:$0xff]
      %v8022 = vld [vmem:[#allocation3 + $0x58] sm:$0xff]
      %v8023 = vld [vmem:[#allocation3 + $0x60] sm:$0xff]
      %v8024 = vld [vmem:[#allocation3 + $0x68] sm:$0xff]
      %v8025 = vld [vmem:[#allocation3 + $0x70] sm:$0xff]
      %v8026 = vld [vmem:[#allocation3 + $0x78] sm:$0xff]
      %v8027 = vld [vmem:[#allocation3 + $0x80] sm:$0xff]
      %v8028 = vld [vmem:[#allocation3 + $0x88] sm:$0xff]
      %v8029 = vld [vmem:[#allocation3 + $0x90] sm:$0xff]
      %v8030 = vld [vmem:[#allocation3 + $0x98] sm:$0xff]
      %v8031 = vld [vmem:[#allocation3 + $0xa0] sm:$0xff]
      %v8032 = vld [vmem:[#allocation3 + $0xa8] sm:$0xff]
      %v8033 = vld [vmem:[#allocation3 + $0xb0] sm:$0xff]
      %v8034 = vld [vmem:[#allocation3 + $0xb8] sm:$0xff]
      %v8035 = vld [vmem:[#allocation3 + $0xc0] sm:$0x3]
      %v8036 = vld [vmem:[#allocation3 + $0xc8] sm:$0x3]
      %v8037 = vld [vmem:[%s47] sm:$0x7]
      %8039 = vset.pattern.permute.xlu0 0
      %8040 = vperm.xlu0 %8039, %v8037
      %v8041 = vpop.permute.xlu0 %8040
      %v8044 = vsel %vm7746, %v8010, 0
      %v8047 = vsel %vm5167, %v8035, 0
      %v8050 = vsel %vm5167, %v8036, 0
      %8052 = vmatprep.subr.mxu0 %v8012
      %8053 = vmatpush1.msra.mxu0 %v8011
      %8054 = vmatprep.subr.mxu0 %v8014
      %8055 = vmatpush1.msra.mxu0 %v8013
      %8056 = vmatprep.subr.mxu0 %v8016
      %8057 = vmatpush1.msra.mxu0 %v8015
      %8058 = vmatprep.subr.mxu0 %v8018
      %8059 = vmatpush1.msra.mxu0 %v8017
      %8060 = vmatprep.subr.mxu0 %v8020
      %8061 = vmatpush1.msra.mxu0 %v8019
      %8062 = vmatprep.subr.mxu0 %v8022
      %8063 = vmatpush1.msra.mxu0 %v8021
      %8064 = vmatprep.subr.mxu0 %v8024
      %8065 = vmatpush1.msra.mxu0 %v8023
      %8066 = vmatprep.subr.mxu0 %v8026
      %8067 = vmatpush1.msra.mxu0 %v8025
      %8068 = vmatprep.subr.mxu0 %v8028
      %8069 = vmatpush1.msra.mxu0 %v8027
      %8070 = vmatprep.subr.mxu0 %v8030
      %8071 = vmatpush1.msra.mxu0 %v8029
      %8072 = vmatprep.subr.mxu0 %v8032
      %8073 = vmatpush1.msra.mxu0 %v8031
      %8074 = vmatprep.subr.mxu0 %v8034
      %8075 = vmatpush1.msra.mxu0 %v8033
      %8076 = vmatprep.subr.mxu0 %v8050
      %8077 = vmatpush1.msra.mxu0 %v8047
      %8078 = vmatprep.subr.mxu0 0.0
      %8079 = vmatpush1.msra.mxu0 0.0
      %8080 = vmatprep.subr.mxu0 0.0
      %8081 = vmatpush1.msra.mxu0 0.0
      %8082 = vmatprep.subr.mxu0 0.0
      %8083 = vmatpush1.msra.mxu0 0.0
      %8084 = vmatprep.subr.mxu0 0.0
      %8085 = vmatpush1.msra.mxu0 0.0
      %8086 = vmatprep.subr.mxu0 0.0
      %8087 = vmatpush1.msra.mxu0 0.0
      %8088 = vmatprep.subr.mxu0 0.0
      %8089 = vmatpush1.msra.mxu0 0.0
      %8090 = vmatprep.subr.mxu0 0.0
      %8091 = vmatpush1.msra.mxu0 0.0
      %8092 = vmatprep.subr.mxu0 0.0
      %8093 = vmatpush1.msra.mxu0 0.0
      %8094 = vmatprep.subr.mxu0 0.0
      %8095 = vmatpush1.msra.mxu0 0.0
      %8096 = vmatprep.subr.mxu0 0.0
      %8097 = vmatpush1.msra.mxu0 0.0
      %8098 = vmatprep.subr.mxu0 0.0
      %8099 = vmatpush1.msra.mxu0 0.0
      %8100 = vmatprep.subr.mxu0 0.0
      %8101 = vmatpush1.msra.mxu0 0.0
      %8102 = vmatprep.subr.mxu0 0.0
      %8103 = vmatpush1.msra.mxu0 0.0
      %8104 = vmatprep.subr.mxu0 0.0
      %8105 = vmatpush1.msra.mxu0 0.0
      %8106 = vmatprep.subr.mxu0 0.0
      %8107 = vmatpush1.msra.mxu0 0.0
      %8108 = vmatprep.subr.mxu0 0.0
      %8109 = vmatpush1.msra.mxu0 0.0
      %8110 = vmatprep.subr.mxu0 0.0
      %8111 = vmatpush1.msra.mxu0 0.0
      %8112 = vmatprep.subr.mxu0 0.0
      %8113 = vmatpush1.msra.mxu0 0.0
      %8114 = vmatprep.subr.mxu0 0.0
      %8115 = vmatpush1.msra.mxu0 0.0
      %8116 = vmatprep.mubr.f32.mxu0 0.0
      %8117 = vmatmul.mubr.f32.gmra.mrb[0].mxu0 %v8044
      %v8118 = vpop.f32.mrb[0].mxu0
      %v8119 = vadd.f32 %v8041, %v8118
      %v8120 = vpop.f32.mrb[0].mxu0
      %v8121 = vadd.f32 %v8041, %v8120
      %8122 = vdwg.mxu0
      %v8123 = vsub.f32 0.0, %v8119
      %v8124 = vsub.f32 0.0, %v8121
      %v8125 = vmul.f32 %v8123, 1.442695
      %v8126 = vpow.pop %v8125
      %v8127 = vmul.f32 %v8124, 1.442695
      %v8128 = vpow.pop %v8127
      %v8129 = vadd.f32 %v8126, 1.0
      %v8130 = vadd.f32 %v8128, 1.0
      %v8131 = vrcp.pop %v8129
      %v8132 = vmul.f32 1.0, %v8131
      %v8133 = vrcp.pop %v8130
      %v8134 = vmul.f32 1.0, %v8133
      %v8135 = vlaneseq
      %v8136 = vshrl.u32 %v8135, 7
      %v8137 = vsub.s32 0, %v8136
      %v8138 = vrot.slane %v8132, %v8137
      %v8139 = vlaneseq
      %v8140 = vshrl.u32 %v8139, 7
      %v8141 = vsub.s32 0, %v8140
      %v8142 = vrot.slane %v8134, %v8141
      %v8143 = vmul.f32 %v4971, %v8138
      %v8144 = vmul.f32 %v4973, %v8142
      %v8145 = vlaneseq
      %v8146 = vshrl.u32 %v8145, 7
      %v8147 = vsub.s32 1, %v8146
      %v8148 = vrot.slane %v8132, %v8147
      %v8149 = vlaneseq
      %v8150 = vshrl.u32 %v8149, 7
      %v8151 = vsub.s32 1, %v8150
      %v8152 = vrot.slane %v8134, %v8151
      %v8153 = vmul.f32 %v5048, %v8148
      %v8154 = vmul.f32 %v5050, %v8152
      %v8155 = vadd.f32 %v8143, %v8153
      %v8156 = vadd.f32 %v8144, %v8154
      %v8157 = vlaneseq
      %v8158 = vshrl.u32 %v8157, 7
      %v8159 = vsub.s32 2, %v8158
      %v8160 = vrot.slane %v8132, %v8159
      %v8161 = vlaneseq
      %v8162 = vshrl.u32 %v8161, 7
      %v8163 = vsub.s32 2, %v8162
      %v8164 = vrot.slane %v8134, %v8163
      %v8165 = vmul.f32 %v5125, %v8160
      %v8166 = vmul.f32 %v5127, %v8164
      %v8167 = vadd.f32 %v8155, %v8165
      %v8168 = vadd.f32 %v8156, %v8166
      %v8169 = vld [vmem:[%s49] sm:$0xff]
      %v8170 = vld [vmem:[%s49 + $0x8] sm:$0xf]
      %v8171 = vld [vmem:[%s51] sm:$0xff]
      %v8172 = vld [vmem:[%s51 + $0x8] sm:$0xf]
      %8174 = vset.pattern.permute.xlu0 0
      %8175 = vperm.xlu0 %8174, %v8171
      %v8176 = vpop.permute.xlu0 %8175
      %8179 = vset.pattern.permute.xlu0 0
      %8180 = vperm.xlu0 %8179, %v8172
      %v8181 = vpop.permute.xlu0 %8180
      %v8184 = vsel %vm5455, %v8169, 0
      %v8187 = vsel %vm5455, %v8170, 0
      %v8190 = vsel %vm1127, %v8167, 0
      %v8193 = vsel %vm1127, %v8168, 0
      %8195 = vmatprep.subr.mxu0 %v8193
      %8196 = vmatpush1.msra.mxu0 %v8190
      %8197 = vmatprep.subr.mxu0 0.0
      %8198 = vmatpush1.msra.mxu0 0.0
      %8199 = vmatprep.subr.mxu0 0.0
      %8200 = vmatpush1.msra.mxu0 0.0
      %8201 = vmatprep.subr.mxu0 0.0
      %8202 = vmatpush1.msra.mxu0 0.0
      %8203 = vmatprep.subr.mxu0 0.0
      %8204 = vmatpush1.msra.mxu0 0.0
      %8205 = vmatprep.subr.mxu0 0.0
      %8206 = vmatpush1.msra.mxu0 0.0
      %8207 = vmatprep.subr.mxu0 0.0
      %8208 = vmatpush1.msra.mxu0 0.0
      %8209 = vmatprep.subr.mxu0 0.0
      %8210 = vmatpush1.msra.mxu0 0.0
      %8211 = vmatprep.subr.mxu0 0.0
      %8212 = vmatpush1.msra.mxu0 0.0
      %8213 = vmatprep.subr.mxu0 0.0
      %8214 = vmatpush1.msra.mxu0 0.0
      %8215 = vmatprep.subr.mxu0 0.0
      %8216 = vmatpush1.msra.mxu0 0.0
      %8217 = vmatprep.subr.mxu0 0.0
      %8218 = vmatpush1.msra.mxu0 0.0
      %8219 = vmatprep.subr.mxu0 0.0
      %8220 = vmatpush1.msra.mxu0 0.0
      %8221 = vmatprep.subr.mxu0 0.0
      %8222 = vmatpush1.msra.mxu0 0.0
      %8223 = vmatprep.subr.mxu0 0.0
      %8224 = vmatpush1.msra.mxu0 0.0
      %8225 = vmatprep.subr.mxu0 0.0
      %8226 = vmatpush1.msra.mxu0 0.0
      %8227 = vmatprep.subr.mxu0 0.0
      %8228 = vmatpush1.msra.mxu0 0.0
      %8229 = vmatprep.subr.mxu0 0.0
      %8230 = vmatpush1.msra.mxu0 0.0
      %8231 = vmatprep.subr.mxu0 0.0
      %8232 = vmatpush1.msra.mxu0 0.0
      %8233 = vmatprep.subr.mxu0 0.0
      %8234 = vmatpush1.msra.mxu0 0.0
      %8235 = vmatprep.subr.mxu0 0.0
      %8236 = vmatpush1.msra.mxu0 0.0
      %8237 = vmatprep.subr.mxu0 0.0
      %8238 = vmatpush1.msra.mxu0 0.0
      %8239 = vmatprep.subr.mxu0 0.0
      %8240 = vmatpush1.msra.mxu0 0.0
      %8241 = vmatprep.subr.mxu0 0.0
      %8242 = vmatpush1.msra.mxu0 0.0
      %8243 = vmatprep.subr.mxu0 0.0
      %8244 = vmatpush1.msra.mxu0 0.0
      %8245 = vmatprep.subr.mxu0 0.0
      %8246 = vmatpush1.msra.mxu0 0.0
      %8247 = vmatprep.subr.mxu0 0.0
      %8248 = vmatpush1.msra.mxu0 0.0
      %8249 = vmatprep.subr.mxu0 0.0
      %8250 = vmatpush1.msra.mxu0 0.0
      %8251 = vmatprep.subr.mxu0 0.0
      %8252 = vmatpush1.msra.mxu0 0.0
      %8253 = vmatprep.subr.mxu0 0.0
      %8254 = vmatpush1.msra.mxu0 0.0
      %8255 = vmatprep.subr.mxu0 0.0
      %8256 = vmatpush1.msra.mxu0 0.0
      %8257 = vmatprep.subr.mxu0 0.0
      %8258 = vmatpush1.msra.mxu0 0.0
      %8259 = vmatprep.mubr.f32.mxu0 0.0
      %8260 = vmatmul.mubr.f32.gmra.mrb[0].mxu0 %v8184
      %v8261 = vpop.f32.mrb[0].mxu0
      %v8262 = vadd.f32 %v8176, %v8261
      %v8263 = vpop.f32.mrb[0].mxu0
      %v8264 = vadd.f32 %v8176, %v8263
      %8265 = vmatprep.mubr.f32.mxu0 0.0
      %8266 = vmatmul.mubr.f32.gmra.mrb[0].mxu0 %v8187
      %v8267 = vpop.f32.mrb[0].mxu0
      %v8268 = vadd.f32 %v8181, %v8267
      %v8269 = vpop.f32.mrb[0].mxu0
      %v8270 = vadd.f32 %v8181, %v8269
      %8271 = vdwg.mxu0
      %v8272 = vmul.f32 %v8262, %v1205
      %v8273 = vmul.f32 %v8264, %v1206
      %v8274 = vmul.f32 %v8268, %v1207
      %v8275 = vmul.f32 %v8270, %v1208
      %v8276 = vadd.f32 %v1205, %v8272
      %v8277 = vadd.f32 %v1206, %v8273
      %v8278 = vadd.f32 %v1207, %v8274
      %v8279 = vadd.f32 %v1208, %v8275
      %v8280 = vadd.f32 %v8276, %v4878
      %v8281 = vadd.f32 %v8277, %v4880
      %v8282 = vadd.f32 %v8278, %v4884
      %v8283 = vadd.f32 %v8279, %v4886
      %v8284 = vld [vmem:[%s61] sm:$0xff]
      %v8285 = vld [vmem:[%s61 + $0x8] sm:$0xf]
      %v8286 = vld [vmem:[%s63] sm:$0xff]
      %v8287 = vld [vmem:[%s63 + $0x8] sm:$0xf]
      %v8288 = vsel %vm1127, %v8282, 0.0
      %v8289 = vadd.f32 %v8280, %v8288
      %v8290 = vrot.slane %v8289, 4
      %v8291 = vadd.f32 %v8289, %v8290
      %v8292 = vrot.slane %v8291, 2
      %v8293 = vadd.f32 %v8291, %v8292
      %v8294 = vrot.slane %v8293, 1
      %v8295 = vadd.f32 %v8293, %v8294
      %v8296 = vsel %vm1127, %v8283, 0.0
      %v8297 = vadd.f32 %v8281, %v8296
      %v8298 = vrot.slane %v8297, 4
      %v8299 = vadd.f32 %v8297, %v8298
      %v8300 = vrot.slane %v8299, 2
      %v8301 = vadd.f32 %v8299, %v8300
      %v8302 = vrot.slane %v8301, 1
      %v8303 = vadd.f32 %v8301, %v8302
      %v8304 = vmul.f32 %v8295, %v1144
      %v8305 = vmul.f32 %v8303, %v1144
      %v8306 = vsub.f32 %v8280, %v8304
      %v8307 = vsub.f32 %v8281, %v8305
      %v8308 = vsub.f32 %v8282, %v8304
      %v8309 = vsub.f32 %v8283, %v8305
      %v8310 = vmul.f32 %v8306, %v8306
      %v8311 = vmul.f32 %v8307, %v8307
      %v8312 = vmul.f32 %v8308, %v8308
      %v8313 = vmul.f32 %v8309, %v8309
      %v8314 = vsel %vm1127, %v8312, 0.0
      %v8315 = vadd.f32 %v8310, %v8314
      %v8316 = vrot.slane %v8315, 4
      %v8317 = vadd.f32 %v8315, %v8316
      %v8318 = vrot.slane %v8317, 2
      %v8319 = vadd.f32 %v8317, %v8318
      %v8320 = vrot.slane %v8319, 1
      %v8321 = vadd.f32 %v8319, %v8320
      %v8322 = vsel %vm1127, %v8313, 0.0
      %v8323 = vadd.f32 %v8311, %v8322
      %v8324 = vrot.slane %v8323, 4
      %v8325 = vadd.f32 %v8323, %v8324
      %v8326 = vrot.slane %v8325, 2
      %v8327 = vadd.f32 %v8325, %v8326
      %v8328 = vrot.slane %v8327, 1
      %v8329 = vadd.f32 %v8327, %v8328
      %v8330 = vmul.f32 %v8321, %v1144
      %v8331 = vmul.f32 %v8329, %v1144
      %v8332 = vadd.f32 %v8330, 1e-05
      %v8333 = vadd.f32 %v8331, 1e-05
      %v8334 = vrsqrt.pop %v8332
      %v8335 = vrsqrt.pop %v8333
      %v8336 = vmul.f32 %v8306, %v8334
      %v8337 = vmul.f32 %v8307, %v8335
      %v8338 = vmul.f32 %v8308, %v8334
      %v8339 = vmul.f32 %v8309, %v8335
      %8341 = vset.pattern.permute.xlu0 0
      %8342 = vperm.xlu0 %8341, %v8284
      %v8343 = vpop.permute.xlu0 %8342
      %8346 = vset.pattern.permute.xlu0 0
      %8347 = vperm.xlu0 %8346, %v8285
      %v8348 = vpop.permute.xlu0 %8347
      %v8350 = vmul.f32 %v8336, %v8343
      %v8351 = vmul.f32 %v8337, %v8343
      %v8352 = vmul.f32 %v8338, %v8348
      %v8353 = vmul.f32 %v8339, %v8348
      %8355 = vset.pattern.permute.xlu0 0
      %8356 = vperm.xlu0 %8355, %v8286
      %v8357 = vpop.permute.xlu0 %8356
      %8360 = vset.pattern.permute.xlu0 0
      %8361 = vperm.xlu0 %8360, %v8287
      %v8362 = vpop.permute.xlu0 %8361
      %v8364 = vadd.f32 %v8350, %v8357
      %v8365 = vadd.f32 %v8351, %v8357
      %v8366 = vadd.f32 %v8352, %v8362
      %v8367 = vadd.f32 %v8353, %v8362
      %v8368 = vld [vmem:[%s65] sm:$0xff]
      %v8369 = vld [vmem:[%s65 + $0x8] sm:$0xf]
      %v8370 = vld [vmem:[%s67] sm:$0xff]
      %v8371 = vld [vmem:[%s67 + $0x8] sm:$0xf]
      %8373 = vset.pattern.permute.xlu0 0
      %8374 = vperm.xlu0 %8373, %v8370
      %v8375 = vpop.permute.xlu0 %8374
      %8378 = vset.pattern.permute.xlu0 0
      %8379 = vperm.xlu0 %8378, %v8371
      %v8380 = vpop.permute.xlu0 %8379
      %v8383 = vsel %vm1278, %v8368, 0
      %v8386 = vsel %vm1278, %v8369, 0
      %v8389 = vsel %vm1127, %v8366, 0
      %v8392 = vsel %vm1127, %v8367, 0
      %8394 = vmatprep.subr.mxu0 %v8365
      %8395 = vmatpush1.msra.mxu0 %v8364
      %8396 = vmatprep.subr.mxu0 %v8392
      %8397 = vmatpush1.msra.mxu0 %v8389
      %8398 = vmatprep.subr.mxu0 0.0
      %8399 = vmatpush1.msra.mxu0 0.0
      %8400 = vmatprep.subr.mxu0 0.0
      %8401 = vmatpush1.msra.mxu0 0.0
      %8402 = vmatprep.subr.mxu0 0.0
      %8403 = vmatpush1.msra.mxu0 0.0
      %8404 = vmatprep.subr.mxu0 0.0
      %8405 = vmatpush1.msra.mxu0 0.0
      %8406 = vmatprep.subr.mxu0 0.0
      %8407 = vmatpush1.msra.mxu0 0.0
      %8408 = vmatprep.subr.mxu0 0.0
      %8409 = vmatpush1.msra.mxu0 0.0
      %8410 = vmatprep.subr.mxu0 0.0
      %8411 = vmatpush1.msra.mxu0 0.0
      %8412 = vmatprep.subr.mxu0 0.0
      %8413 = vmatpush1.msra.mxu0 0.0
      %8414 = vmatprep.subr.mxu0 0.0
      %8415 = vmatpush1.msra.mxu0 0.0
      %8416 = vmatprep.subr.mxu0 0.0
      %8417 = vmatpush1.msra.mxu0 0.0
      %8418 = vmatprep.subr.mxu0 0.0
      %8419 = vmatpush1.msra.mxu0 0.0
      %8420 = vmatprep.subr.mxu0 0.0
      %8421 = vmatpush1.msra.mxu0 0.0
      %8422 = vmatprep.subr.mxu0 0.0
      %8423 = vmatpush1.msra.mxu0 0.0
      %8424 = vmatprep.subr.mxu0 0.0
      %8425 = vmatpush1.msra.mxu0 0.0
      %8426 = vmatprep.subr.mxu0 0.0
      %8427 = vmatpush1.msra.mxu0 0.0
      %8428 = vmatprep.subr.mxu0 0.0
      %8429 = vmatpush1.msra.mxu0 0.0
      %8430 = vmatprep.subr.mxu0 0.0
      %8431 = vmatpush1.msra.mxu0 0.0
      %8432 = vmatprep.subr.mxu0 0.0
      %8433 = vmatpush1.msra.mxu0 0.0
      %8434 = vmatprep.subr.mxu0 0.0
      %8435 = vmatpush1.msra.mxu0 0.0
      %8436 = vmatprep.subr.mxu0 0.0
      %8437 = vmatpush1.msra.mxu0 0.0
      %8438 = vmatprep.subr.mxu0 0.0
      %8439 = vmatpush1.msra.mxu0 0.0
      %8440 = vmatprep.subr.mxu0 0.0
      %8441 = vmatpush1.msra.mxu0 0.0
      %8442 = vmatprep.subr.mxu0 0.0
      %8443 = vmatpush1.msra.mxu0 0.0
      %8444 = vmatprep.subr.mxu0 0.0
      %8445 = vmatpush1.msra.mxu0 0.0
      %8446 = vmatprep.subr.mxu0 0.0
      %8447 = vmatpush1.msra.mxu0 0.0
      %8448 = vmatprep.subr.mxu0 0.0
      %8449 = vmatpush1.msra.mxu0 0.0
      %8450 = vmatprep.subr.mxu0 0.0
      %8451 = vmatpush1.msra.mxu0 0.0
      %8452 = vmatprep.subr.mxu0 0.0
      %8453 = vmatpush1.msra.mxu0 0.0
      %8454 = vmatprep.subr.mxu0 0.0
      %8455 = vmatpush1.msra.mxu0 0.0
      %8456 = vmatprep.subr.mxu0 0.0
      %8457 = vmatpush1.msra.mxu0 0.0
      %8458 = vmatprep.mubr.f32.mxu0 0.0
      %8459 = vmatmul.mubr.f32.gmra.mrb[0].mxu0 %v8383
      %v8460 = vpop.f32.mrb[0].mxu0
      %v8461 = vadd.f32 %v8375, %v8460
      %v8462 = vpop.f32.mrb[0].mxu0
      %v8463 = vadd.f32 %v8375, %v8462
      %8464 = vmatprep.mubr.f32.mxu0 0.0
      %8465 = vmatmul.mubr.f32.gmra.mrb[0].mxu0 %v8386
      %v8466 = vpop.f32.mrb[0].mxu0
      %v8467 = vadd.f32 %v8380, %v8466
      %v8468 = vpop.f32.mrb[0].mxu0
      %v8469 = vadd.f32 %v8380, %v8468
      %8470 = vdwg.mxu0
      %v8471 = vmul.f32 %v8461, 0.5
      %v8472 = vmul.f32 %v8463, 0.5
      %v8473 = vmul.f32 %v8467, 0.5
      %v8474 = vmul.f32 %v8469, 0.5
      %v8475 = vmul.f32 %v8461, 0.70710677
      %v8476 = vmul.f32 %v8463, 0.70710677
      %v8477 = vmul.f32 %v8467, 0.70710677
      %v8478 = vmul.f32 %v8469, 0.70710677
      %vm8479 = vcmp.ge.f32.partialorder %v8475, 0.0
      %vm8480 = vcmp.ge.f32.partialorder %v8476, 0.0
      %vm8481 = vcmp.ge.f32.partialorder %v8477, 0.0
      %vm8482 = vcmp.ge.f32.partialorder %v8478, 0.0
      %v8483 = vsel %vm8479, 1.0, -1.0
      %v8484 = vsel %vm8480, 1.0, -1.0
      %v8485 = vsel %vm8481, 1.0, -1.0
      %v8486 = vsel %vm8482, 1.0, -1.0
      %v8487 = vand.u32 2147483647, %v8475
      %v8488 = vand.u32 2147483647, %v8476
      %v8489 = vand.u32 2147483647, %v8477
      %v8490 = vand.u32 2147483647, %v8478
      %v8491 = vmul.f32 %v8487, 0.3275911
      %v8492 = vmul.f32 %v8488, 0.3275911
      %v8493 = vmul.f32 %v8489, 0.3275911
      %v8494 = vmul.f32 %v8490, 0.3275911
      %v8495 = vadd.f32 %v8491, 1.0
      %v8496 = vadd.f32 %v8492, 1.0
      %v8497 = vadd.f32 %v8493, 1.0
      %v8498 = vadd.f32 %v8494, 1.0
      %v8499 = vrcp.pop %v8495
      %v8500 = vmul.f32 1.0, %v8499
      %v8501 = vrcp.pop %v8496
      %v8502 = vmul.f32 1.0, %v8501
      %v8503 = vrcp.pop %v8497
      %v8504 = vmul.f32 1.0, %v8503
      %v8505 = vrcp.pop %v8498
      %v8506 = vmul.f32 1.0, %v8505
      %v8507 = vmul.f32 %v8500, 1.0614054
      %v8508 = vmul.f32 %v8502, 1.0614054
      %v8509 = vmul.f32 %v8504, 1.0614054
      %v8510 = vmul.f32 %v8506, 1.0614054
      %v8511 = vadd.f32 %v8507, -1.4531521
      %v8512 = vadd.f32 %v8508, -1.4531521
      %v8513 = vadd.f32 %v8509, -1.4531521
      %v8514 = vadd.f32 %v8510, -1.4531521
      %v8515 = vmul.f32 %v8500, %v8511
      %v8516 = vmul.f32 %v8502, %v8512
      %v8517 = vmul.f32 %v8504, %v8513
      %v8518 = vmul.f32 %v8506, %v8514
      %v8519 = vadd.f32 %v8515, 1.4214138
      %v8520 = vadd.f32 %v8516, 1.4214138
      %v8521 = vadd.f32 %v8517, 1.4214138
      %v8522 = vadd.f32 %v8518, 1.4214138
      %v8523 = vmul.f32 %v8500, %v8519
      %v8524 = vmul.f32 %v8502, %v8520
      %v8525 = vmul.f32 %v8504, %v8521
      %v8526 = vmul.f32 %v8506, %v8522
      %v8527 = vadd.f32 %v8523, -0.28449672
      %v8528 = vadd.f32 %v8524, -0.28449672
      %v8529 = vadd.f32 %v8525, -0.28449672
      %v8530 = vadd.f32 %v8526, -0.28449672
      %v8531 = vmul.f32 %v8500, %v8527
      %v8532 = vmul.f32 %v8502, %v8528
      %v8533 = vmul.f32 %v8504, %v8529
      %v8534 = vmul.f32 %v8506, %v8530
      %v8535 = vadd.f32 %v8531, 0.2548296
      %v8536 = vadd.f32 %v8532, 0.2548296
      %v8537 = vadd.f32 %v8533, 0.2548296
      %v8538 = vadd.f32 %v8534, 0.2548296
      %v8539 = vmul.f32 %v8500, %v8535
      %v8540 = vmul.f32 %v8502, %v8536
      %v8541 = vmul.f32 %v8504, %v8537
      %v8542 = vmul.f32 %v8506, %v8538
      %v8543 = vsub.f32 0.0, %v8487
      %v8544 = vsub.f32 0.0, %v8488
      %v8545 = vsub.f32 0.0, %v8489
      %v8546 = vsub.f32 0.0, %v8490
      %v8547 = vmul.f32 %v8543, %v8487
      %v8548 = vmul.f32 %v8544, %v8488
      %v8549 = vmul.f32 %v8545, %v8489
      %v8550 = vmul.f32 %v8546, %v8490
      %v8551 = vmul.f32 %v8547, 1.442695
      %v8552 = vpow.pop %v8551
      %v8553 = vmul.f32 %v8548, 1.442695
      %v8554 = vpow.pop %v8553
      %v8555 = vmul.f32 %v8549, 1.442695
      %v8556 = vpow.pop %v8555
      %v8557 = vmul.f32 %v8550, 1.442695
      %v8558 = vpow.pop %v8557
      %v8559 = vmul.f32 %v8539, %v8552
      %v8560 = vmul.f32 %v8540, %v8554
      %v8561 = vmul.f32 %v8541, %v8556
      %v8562 = vmul.f32 %v8542, %v8558
      %v8563 = vsub.f32 1.0, %v8559
      %v8564 = vsub.f32 1.0, %v8560
      %v8565 = vsub.f32 1.0, %v8561
      %v8566 = vsub.f32 1.0, %v8562
      %v8567 = vmul.f32 %v8483, %v8563
      %v8568 = vmul.f32 %v8484, %v8564
      %v8569 = vmul.f32 %v8485, %v8565
      %v8570 = vmul.f32 %v8486, %v8566
      %v8571 = vadd.f32 %v8567, 1.0
      %v8572 = vadd.f32 %v8568, 1.0
      %v8573 = vadd.f32 %v8569, 1.0
      %v8574 = vadd.f32 %v8570, 1.0
      %v8575 = vmul.f32 %v8471, %v8571
      %v8576 = vmul.f32 %v8472, %v8572
      %v8577 = vmul.f32 %v8473, %v8573
      %v8578 = vmul.f32 %v8474, %v8574
      %v8579 = vld [vmem:[%s69] sm:$0xff]
      %v8580 = vld [vmem:[%s69 + $0x8] sm:$0xf]
      %v8581 = vld [vmem:[%s71] sm:$0xff]
      %v8582 = vld [vmem:[%s71 + $0x8] sm:$0xf]
      %8584 = vset.pattern.permute.xlu0 0
      %8585 = vperm.xlu0 %8584, %v8581
      %v8586 = vpop.permute.xlu0 %8585
      %8589 = vset.pattern.permute.xlu0 0
      %8590 = vperm.xlu0 %8589, %v8582
      %v8591 = vpop.permute.xlu0 %8590
      %v8594 = vsel %vm1278, %v8579, 0
      %v8597 = vsel %vm1278, %v8580, 0
      %v8600 = vsel %vm1127, %v8577, 0
      %v8603 = vsel %vm1127, %v8578, 0
      %8605 = vmatprep.subr.mxu0 %v8576
      %8606 = vmatpush1.msra.mxu0 %v8575
      %8607 = vmatprep.subr.mxu0 %v8603
      %8608 = vmatpush1.msra.mxu0 %v8600
      %8609 = vmatprep.subr.mxu0 0.0
      %8610 = vmatpush1.msra.mxu0 0.0
      %8611 = vmatprep.subr.mxu0 0.0
      %8612 = vmatpush1.msra.mxu0 0.0
      %8613 = vmatprep.subr.mxu0 0.0
      %8614 = vmatpush1.msra.mxu0 0.0
      %8615 = vmatprep.subr.mxu0 0.0
      %8616 = vmatpush1.msra.mxu0 0.0
      %8617 = vmatprep.subr.mxu0 0.0
      %8618 = vmatpush1.msra.mxu0 0.0
      %8619 = vmatprep.subr.mxu0 0.0
      %8620 = vmatpush1.msra.mxu0 0.0
      %8621 = vmatprep.subr.mxu0 0.0
      %8622 = vmatpush1.msra.mxu0 0.0
      %8623 = vmatprep.subr.mxu0 0.0
      %8624 = vmatpush1.msra.mxu0 0.0
      %8625 = vmatprep.subr.mxu0 0.0
      %8626 = vmatpush1.msra.mxu0 0.0
      %8627 = vmatprep.subr.mxu0 0.0
      %8628 = vmatpush1.msra.mxu0 0.0
      %8629 = vmatprep.subr.mxu0 0.0
      %8630 = vmatpush1.msra.mxu0 0.0
      %8631 = vmatprep.subr.mxu0 0.0
      %8632 = vmatpush1.msra.mxu0 0.0
      %8633 = vmatprep.subr.mxu0 0.0
      %8634 = vmatpush1.msra.mxu0 0.0
      %8635 = vmatprep.subr.mxu0 0.0
      %8636 = vmatpush1.msra.mxu0 0.0
      %8637 = vmatprep.subr.mxu0 0.0
      %8638 = vmatpush1.msra.mxu0 0.0
      %8639 = vmatprep.subr.mxu0 0.0
      %8640 = vmatpush1.msra.mxu0 0.0
      %8641 = vmatprep.subr.mxu0 0.0
      %8642 = vmatpush1.msra.mxu0 0.0
      %8643 = vmatprep.subr.mxu0 0.0
      %8644 = vmatpush1.msra.mxu0 0.0
      %8645 = vmatprep.subr.mxu0 0.0
      %8646 = vmatpush1.msra.mxu0 0.0
      %8647 = vmatprep.subr.mxu0 0.0
      %8648 = vmatpush1.msra.mxu0 0.0
      %8649 = vmatprep.subr.mxu0 0.0
      %8650 = vmatpush1.msra.mxu0 0.0
      %8651 = vmatprep.subr.mxu0 0.0
      %8652 = vmatpush1.msra.mxu0 0.0
      %8653 = vmatprep.subr.mxu0 0.0
      %8654 = vmatpush1.msra.mxu0 0.0
      %8655 = vmatprep.subr.mxu0 0.0
      %8656 = vmatpush1.msra.mxu0 0.0
      %8657 = vmatprep.subr.mxu0 0.0
      %8658 = vmatpush1.msra.mxu0 0.0
      %8659 = vmatprep.subr.mxu0 0.0
      %8660 = vmatpush1.msra.mxu0 0.0
      %8661 = vmatprep.subr.mxu0 0.0
      %8662 = vmatpush1.msra.mxu0 0.0
      %8663 = vmatprep.subr.mxu0 0.0
      %8664 = vmatpush1.msra.mxu0 0.0
      %8665 = vmatprep.subr.mxu0 0.0
      %8666 = vmatpush1.msra.mxu0 0.0
      %8667 = vmatprep.subr.mxu0 0.0
      %8668 = vmatpush1.msra.mxu0 0.0
      %8669 = vmatprep.mubr.f32.mxu0 0.0
      %8670 = vmatmul.mubr.f32.gmra.mrb[0].mxu0 %v8594
      %v8671 = vpop.f32.mrb[0].mxu0
      %v8672 = vadd.f32 %v8586, %v8671
      %v8673 = vpop.f32.mrb[0].mxu0
      %v8674 = vadd.f32 %v8586, %v8673
      %8675 = vmatprep.mubr.f32.mxu0 0.0
      %8676 = vmatmul.mubr.f32.gmra.mrb[0].mxu0 %v8597
      %v8677 = vpop.f32.mrb[0].mxu0
      %v8678 = vadd.f32 %v8591, %v8677
      %v8679 = vpop.f32.mrb[0].mxu0
      %v8680 = vadd.f32 %v8591, %v8679
      %8681 = vdwg.mxu0
      %v8682 = vadd.f32 %v8364, %v8672
      %v8683 = vadd.f32 %v8365, %v8674
      %v8684 = vadd.f32 %v8366, %v8678
      %v8685 = vadd.f32 %v8367, %v8680
      %8686 = vst [vmem:[%s1118] sm:$0xff] %v8682
      %8687 = vst [vmem:[%s1118 + $0x8] sm:$0xff] %v8683
      %8688 = vst [vmem:[%s1118 + $0x10] sm:$0xf] %v8684
      %8689 = vst [vmem:[%s1118 + $0x18] sm:$0xf] %v8685
      %p8690 = scmp.lt.s32.totalorder %s84, 1
      %s8691 = scalar_select %p8690, %s84, 1
      %s8692 = smul.addr %s8691, 4
      %s8693 = smul.addr %s8692, 8
      %s8694 = scalar_lea.vmem %s73, %s8693
      // Predicated region
      $region165: #{fastformer_forward.1} parent=163 // pred_check
        %p8695 = pneg %p868
      $region166: #{fastformer_forward.1} parent=163 // pred_check_branch
        %8697 = sbr.rel (%p8695) target = $region168
      $region167: #{fastformer_forward.1} parent=163 // pred_region
        _
      $region168: #{fastformer_forward.1} parent=163 // pred_fallthru
        _
    $region164: #{fastformer_forward.1} parent=5 // pred_fallthru
      _
    %p8698 = scmp.le.s32.totalorder 2, %s79
    // Predicated region
    $region169: #{fastformer_forward.1} parent=5 // pred_check
      %p8699 = pneg %p8698
    $region170: #{fastformer_forward.1} parent=5 // pred_check_branch
      %8701 = sbr.rel (%p8699) target = $region172
    $region171: #{fastformer_forward.1} parent=5 // pred_region
      %s8702 = ssub.s32 %s79, 2
      // Predicated region
      $region173: #{fastformer_forward.1} parent=171 // pred_check
        %p8703 = pneg %p874
      $region174: #{fastformer_forward.1} parent=171 // pred_check_branch
        %8705 = sbr.rel (%p8703) target = $region176
      $region175: #{fastformer_forward.1} parent=171 // pred_region
        %p8706 = scmp.lt.s32.totalorder %s85, 1
        %s8707 = scalar_select %p8706, %s85, 1
        %s8708 = smul.addr %s8707, 4
        %s8709 = smul.addr %s8708, 8
        %s8710 = scalar_lea.vmem %s73, %s8709
      $region176: #{fastformer_forward.1} parent=171 // pred_fallthru
        _
    $region172: #{fastformer_forward.1} parent=5 // pred_fallthru
      _
  $region6: #{fastformer_forward.1} parent=0 // loop_footer
    %s83 = sadd.s32 1, %s79
  $region7: #{fastformer_forward.1} parent=0 // loop_footer_branch
    %78 = sbr.rel target = $region3
  $region8: #{fastformer_forward.1} parent=0 // loop_exit
    _

</llo_original>
